<compile_context>
chip_gen: v5e
topology: v5e:2x2
jax: 0.10.0
libtpu: 0.0.40
codegen_flags: <defaults>
</compile_context>

<pallas_src>
import numpy as np
import jax
import jax.numpy as jnp
from jax import lax
from jax.experimental import pallas as pl
from jax.experimental.pallas import tpu as pltpu

# ----------------------------------------------------------------------------
# Shapes (small, consistent with the architecture)
# ----------------------------------------------------------------------------
BN_EPS = 1e-5
BN_SCALE = float(1.0 / np.sqrt(1.0 + BN_EPS))   # eval-mode BN with default stats

B = 2            # batch
L = 24           # token sequence length
E = 16           # embedding dim
V = 50           # vocab size
A = 24           # xyz first spatial dim
T = A - 10       # spatial sequence length after the (11,4) conv = 14
SK = 11          # spatial conv kernel length

KH = 17
KWS = (3, 5, 7, 9, 11, 13)            # branch concat order: conv2..conv6, conv1
KWMAX = max(KWS)                       # 13
HO = L - KH + 1                        # 8
WO_MAX = E - min(KWS) + 1              # 14
WPH = WO_MAX // 2                      # 7  (width after the (1,2)/stride-2 pool)
HP = (HO - 1) // 2 + 1                 # 4  (H rows kept by the pool: 0,2,4,6)
WPS = tuple((E - kw + 1) // 2 for kw in KWS)   # per-branch pooled widths

NC_REAL = 3 * len(KWS)                 # 18 real conv output channels
NC_PAD = 128                           # lane-dense conv output lanes
PAD_OUT = 128                          # lane-dense head widths

HID_MAIN = 256
HID_SPATIAL = 128
FLAT_MAIN_TORCH = 3 * HP * sum(WPS)    # 324 (PyTorch flatten size at these shapes)
FLAT_MAIN_RAW = HO * WPH * NC_PAD      # 7168 raw pooled features fed to linear1
FLAT_SPATIAL = 60 * T                  # 840


# ----------------------------------------------------------------------------
# Pallas kernels
# ----------------------------------------------------------------------------
def _main_conv_kernel(p_ref, w_ref, b_ref, o_ref):
    """Fused: all-branch conv matmul + bias + ReLU (+folded BN) + (1,2) max-pool.

    p_ref : (2*M2, K) bf16  patch rows ordered (wo parity, b, ho, wo//2)
    w_ref : (K, NC_PAD) bf16  zero-padded branch weight slab (BN scale folded)
    b_ref : (1, NC_PAD) f32
    o_ref : (M2, NC_PAD) bf16  pooled activations, rows ordered (b, ho, wp)
    """
    acc = jnp.dot(p_ref[...], w_ref[...], preferred_element_type=jnp.float32)
    acc = jnp.maximum(acc + b_ref[...], 0.0)
    m2 = o_ref.shape[0]
    o_ref[...] = jnp.maximum(acc[:m2, :], acc[m2:, :]).astype(o_ref.dtype)


def main_conv_pool(patches, wc, bc):
    m2 = patches.shape[0] // 2
    k = patches.shape[1]
    return pl.pallas_call(
        _main_conv_kernel,
        out_shape=jax.ShapeDtypeStruct((m2, NC_PAD), jnp.bfloat16),
        grid=(1,),
        in_specs=[
            pl.BlockSpec((2 * m2, k), lambda i: (0, 0)),
            pl.BlockSpec((k, NC_PAD), lambda i: (0, 0)),
            pl.BlockSpec((1, NC_PAD), lambda i: (0, 0)),
        ],
        out_specs=pl.BlockSpec((m2, NC_PAD), lambda i: (0, 0)),
    )(patches, wc, bc)


def _spatial_kernel(xs_ref, w1_ref, b1_ref, w2_ref, b2_ref,
                    w3a_ref, w3b_ref, b3_ref, o_ref, pad1_ref, pad2_ref):
    """Whole spatial conv chain for one sample (per-tap MXU matmuls).

    xs_ref : (A, 12) bf16      features (c*4 + kw) per position
    w1_ref : (SK, 12, 30) bf16 ; w2_ref : (SK, 30, 30) ; w3a/w3b : (SK, 30, 60)
    o_ref  : (T, 60) bf16      conv3 output (relu + folded BN)
    pad1/pad2 : VMEM (T+SK-1, 30) bf16 scratch ('same' zero padding buffers)
    """
    padl = (SK - 1) // 2

    # conv1: Conv2d(3, 30, (11, 4)) -- width fully consumed, valid along A.
    acc1 = jnp.zeros((T, 30), jnp.float32)
    for kh in range(SK):
        acc1 = acc1 + jnp.dot(xs_ref[kh:kh + T, :], w1_ref[kh],
                              preferred_element_type=jnp.float32)
    out1 = jnp.maximum(acc1 + b1_ref[...], 0.0)
    pad1_ref[...] = jnp.zeros(pad1_ref.shape, pad1_ref.dtype)
    pad1_ref[padl:padl + T, :] = out1.astype(pad1_ref.dtype)

    # conv2: Conv1d(30, 30, 11, padding='same')
    acc2 = jnp.zeros((T, 30), jnp.float32)
    for kh in range(SK):
        acc2 = acc2 + jnp.dot(pad1_ref[kh:kh + T, :], w2_ref[kh],
                              preferred_element_type=jnp.float32)
    out2 = jnp.maximum(acc2 + b2_ref[...], 0.0)
    pad2_ref[...] = jnp.zeros(pad2_ref.shape, pad2_ref.dtype)
    pad2_ref[padl:padl + T, :] = out2.astype(pad2_ref.dtype)

    # conv3: Conv1d(60, 60, 11, 'same') on concat([conv1, conv2], channel dim);
    # the concat is avoided by splitting the weight over the two channel halves.
    acc3 = jnp.zeros((T, 60), jnp.float32)
    for kh in range(SK):
        acc3 = acc3 + jnp.dot(pad1_ref[kh:kh + T, :], w3a_ref[kh],
                              preferred_element_type=jnp.float32)
        acc3 = acc3 + jnp.dot(pad2_ref[kh:kh + T, :], w3b_ref[kh],
                              preferred_element_type=jnp.float32)
    out3 = jnp.maximum(acc3 + b3_ref[...], 0.0)
    o_ref[...] = out3.astype(o_ref.dtype)


def spatial_convs(xs, p):
    return pl.pallas_call(
        _spatial_kernel,
        out_shape=jax.ShapeDtypeStruct((B, T, 60), jnp.bfloat16),
        grid=(B,),
        in_specs=[
            pl.BlockSpec((None, A, 12), lambda b: (b, 0, 0)),
            pl.BlockSpec((SK, 12, 30), lambda b: (0, 0, 0)),
            pl.BlockSpec((1, 30), lambda b: (0, 0)),
            pl.BlockSpec((SK, 30, 30), lambda b: (0, 0, 0)),
            pl.BlockSpec((1, 30), lambda b: (0, 0)),
            pl.BlockSpec((SK, 30, 60), lambda b: (0, 0, 0)),
            pl.BlockSpec((SK, 30, 60), lambda b: (0, 0, 0)),
            pl.BlockSpec((1, 60), lambda b: (0, 0)),
        ],
        out_specs=pl.BlockSpec((None, T, 60), lambda b: (b, 0, 0)),
        scratch_shapes=[pltpu.VMEM((T + SK - 1, 30), jnp.bfloat16),
                        pltpu.VMEM((T + SK - 1, 30), jnp.bfloat16)],
        compiler_params=pltpu.CompilerParams(dimension_semantics=("parallel",)),
    )(xs, p["s1_w"], p["s1_b"], p["s2_w"], p["s2_b"],
      p["s3_wa"], p["s3_wb"], p["s3_b"])


def _head_kernel(mf_ref, w1_ref, b1_ref, w2_ref, b2_ref,
                 sf_ref, ws1_ref, bs1_ref, ws2_ref, bs2_ref,
                 w3s_ref, w3m_ref, b3_ref, o_ref):
    """Fused head: main linear1/2, spatial linear1/2 and linear3 (concat folded)."""
    bf16 = jnp.bfloat16
    h1 = jnp.maximum(
        jnp.dot(mf_ref[...], w1_ref[...], preferred_element_type=jnp.float32)
        + b1_ref[...], 0.0)
    a1 = jnp.dot(h1.astype(bf16), w2_ref[...],
                 preferred_element_type=jnp.float32) + b2_ref[...]
    hs = jnp.maximum(
        jnp.dot(sf_ref[...], ws1_ref[...], preferred_element_type=jnp.float32)
        + bs1_ref[...], 0.0)
    a2 = jnp.dot(hs.astype(bf16), ws2_ref[...],
                 preferred_element_type=jnp.float32) + bs2_ref[...]
    # linear3 on concat([all2, all1]) without materializing the concat.
    out = (jnp.dot(a2.astype(bf16), w3s_ref[...], preferred_element_type=jnp.float32)
           + jnp.dot(a1.astype(bf16), w3m_ref[...], preferred_element_type=jnp.float32)
           + b3_ref[...])
    o_ref[...] = out


def head(main_flat, spat_flat, p):
    return pl.pallas_call(
        _head_kernel,
        out_shape=jax.ShapeDtypeStruct((B, PAD_OUT), jnp.float32),
        grid=(1,),
        in_specs=[
            pl.BlockSpec((B, FLAT_MAIN_RAW), lambda i: (0, 0)),
            pl.BlockSpec((FLAT_MAIN_RAW, HID_MAIN), lambda i: (0, 0)),
            pl.BlockSpec((1, HID_MAIN), lambda i: (0, 0)),
            pl.BlockSpec((HID_MAIN, PAD_OUT), lambda i: (0, 0)),
            pl.BlockSpec((1, PAD_OUT), lambda i: (0, 0)),
            pl.BlockSpec((B, FLAT_SPATIAL), lambda i: (0, 0)),
            pl.BlockSpec((FLAT_SPATIAL, HID_SPATIAL), lambda i: (0, 0)),
            pl.BlockSpec((1, HID_SPATIAL), lambda i: (0, 0)),
            pl.BlockSpec((HID_SPATIAL, PAD_OUT), lambda i: (0, 0)),
            pl.BlockSpec((1, PAD_OUT), lambda i: (0, 0)),
            pl.BlockSpec((PAD_OUT, PAD_OUT), lambda i: (0, 0)),
            pl.BlockSpec((PAD_OUT, PAD_OUT), lambda i: (0, 0)),
            pl.BlockSpec((1, PAD_OUT), lambda i: (0, 0)),
        ],
        out_specs=pl.BlockSpec((B, PAD_OUT), lambda i: (0, 0)),
    )(main_flat, p["lin1_w"], p["lin1_b"], p["lin2_w"], p["lin2_b"],
      spat_flat, p["sl1_w"], p["sl1_b"], p["sl2_w"], p["sl2_b"],
      p["lin3_ws"], p["lin3_wm"], p["lin3_b"])


# ----------------------------------------------------------------------------
# Parameter construction (xavier-normal like the PyTorch init, BN folded,
# weights padded / permuted / bf16-cast ONCE here).
# ----------------------------------------------------------------------------
def _xavier(key, shape, fan_in, fan_out, gain=1.0):
    std = gain * np.sqrt(2.0 / (fan_in + fan_out))
    return jax.random.normal(key, shape, jnp.float32) * std


def _bias(key, n, fan_in):
    bound = 1.0 / np.sqrt(fan_in)
    return jax.random.uniform(key, (n,), jnp.float32, -bound, bound)


def init_params(key):
    keys = iter(jax.random.split(key, 64))
    p = {}
    p["embedding"] = jax.random.normal(next(keys), (V, E), jnp.float32)

    # ---- six main conv branches -> one zero-padded weight slab (BN folded) ----
    wc = np.zeros((KH * KWMAX, NC_PAD), np.float32)
    bc = np.zeros((1, NC_PAD), np.float32)
    for i, kw in enumerate(KWS):
        fi, fo = 1 * KH * kw, 3 * KH * kw
        w = np.asarray(_xavier(next(keys), (3, 1, KH, kw), fi, fo))
        b = np.asarray(_bias(next(keys), 3, fi))
        wpad = np.zeros((3, KH, KWMAX), np.float32)
        wpad[:, :, :kw] = w[:, 0, :, :]
        wc[:, 3 * i:3 * i + 3] = wpad.reshape(3, KH * KWMAX).T * BN_SCALE
        bc[0, 3 * i:3 * i + 3] = b * BN_SCALE
    p["conv_w"] = jnp.asarray(wc, jnp.bfloat16)
    p["conv_b"] = jnp.asarray(bc, jnp.float32)

    # ---- main linear1: scatter torch flatten order into raw pooled layout ----
    w1t = np.asarray(_xavier(next(keys), (FLAT_MAIN_TORCH, HID_MAIN),
                             FLAT_MAIN_TORCH, HID_MAIN))
    b1 = np.asarray(_bias(next(keys), HID_MAIN, FLAT_MAIN_TORCH))
    w1raw = np.zeros((FLAT_MAIN_RAW, HID_MAIN), np.float32)
    woff = 0
    for i, kw in enumerate(KWS):
        wp_i = WPS[i]
        for c in range(3):
            for hp in range(HP):
                for wp in range(wp_i):
                    torch_idx = woff + (c * HP + hp) * wp_i + wp
                    raw_idx = ((2 * hp) * WPH + wp) * NC_PAD + (3 * i + c)
                    w1raw[raw_idx, :] = w1t[torch_idx, :]
        woff += 3 * HP * wp_i
    p["lin1_w"] = jnp.asarray(w1raw, jnp.bfloat16)
    p["lin1_b"] = jnp.asarray(b1[None, :], jnp.float32)

    # ---- main linear2 (HID_MAIN -> 2), zero-padded to 128 output lanes ----
    w2 = np.asarray(_xavier(next(keys), (HID_MAIN, 2), HID_MAIN, 2))
    b2 = np.asarray(_bias(next(keys), 2, HID_MAIN))
    w2p = np.zeros((HID_MAIN, PAD_OUT), np.float32); w2p[:, :2] = w2
    b2p = np.zeros((1, PAD_OUT), np.float32); b2p[0, :2] = b2
    p["lin2_w"] = jnp.asarray(w2p, jnp.bfloat16)
    p["lin2_b"] = jnp.asarray(b2p, jnp.float32)

    # ---- linear3 (4 -> 2), split over the [all2, all1] concat and lane-padded ----
    w3 = np.asarray(_xavier(next(keys), (4, 2), 4, 2))
    b3 = np.asarray(_bias(next(keys), 2, 4))
    w3s = np.zeros((PAD_OUT, PAD_OUT), np.float32); w3s[0:2, 0:2] = w3[0:2, :]
    w3m = np.zeros((PAD_OUT, PAD_OUT), np.float32); w3m[0:2, 0:2] = w3[2:4, :]
    b3p = np.zeros((1, PAD_OUT), np.float32); b3p[0, :2] = b3
    p["lin3_ws"] = jnp.asarray(w3s, jnp.bfloat16)
    p["lin3_wm"] = jnp.asarray(w3m, jnp.bfloat16)
    p["lin3_b"] = jnp.asarray(b3p, jnp.float32)

    # ---- spatial module (BN folded, per-tap slabs) ----
    w = np.asarray(_xavier(next(keys), (30, 3, SK, 4), 3 * SK * 4, 30 * SK * 4))
    b = np.asarray(_bias(next(keys), 30, 3 * SK * 4))
    p["s1_w"] = jnp.asarray(np.transpose(w, (2, 1, 3, 0)).reshape(SK, 12, 30)
                            * BN_SCALE, jnp.bfloat16)
    p["s1_b"] = jnp.asarray(b[None, :] * BN_SCALE, jnp.float32)

    w = np.asarray(_xavier(next(keys), (30, 30, SK), 30 * SK, 30 * SK))
    b = np.asarray(_bias(next(keys), 30, 30 * SK))
    p["s2_w"] = jnp.asarray(np.transpose(w, (2, 1, 0)) * BN_SCALE, jnp.bfloat16)
    p["s2_b"] = jnp.asarray(b[None, :] * BN_SCALE, jnp.float32)

    w = np.asarray(_xavier(next(keys), (60, 60, SK), 60 * SK, 60 * SK))
    b = np.asarray(_bias(next(keys), 60, 60 * SK))
    wt = np.transpose(w, (2, 1, 0)) * BN_SCALE            # (SK, c_in, c_out)
    p["s3_wa"] = jnp.asarray(wt[:, :30, :], jnp.bfloat16)
    p["s3_wb"] = jnp.asarray(wt[:, 30:, :], jnp.bfloat16)
    p["s3_b"] = jnp.asarray(b[None, :] * BN_SCALE, jnp.float32)

    # spatial linear1: permute rows from torch (c, t) flatten to this kernel's (t, c)
    ws1t = np.asarray(_xavier(next(keys), (FLAT_SPATIAL, HID_SPATIAL),
                              FLAT_SPATIAL, HID_SPATIAL))
    bs1 = np.asarray(_bias(next(keys), HID_SPATIAL, FLAT_SPATIAL))
    perm = (np.arange(T)[:, None] + np.arange(60)[None, :] * T).reshape(-1)
    p["sl1_w"] = jnp.asarray(ws1t[perm, :], jnp.bfloat16)
    p["sl1_b"] = jnp.asarray(bs1[None, :], jnp.float32)

    ws2 = np.asarray(_xavier(next(keys), (HID_SPATIAL, 2), HID_SPATIAL, 2))
    bs2 = np.asarray(_bias(next(keys), 2, HID_SPATIAL))
    ws2p = np.zeros((HID_SPATIAL, PAD_OUT), np.float32); ws2p[:, :2] = ws2
    bs2p = np.zeros((1, PAD_OUT), np.float32); bs2p[0, :2] = bs2
    p["sl2_w"] = jnp.asarray(ws2p, jnp.bfloat16)
    p["sl2_b"] = jnp.asarray(bs2p, jnp.float32)
    return p


# ----------------------------------------------------------------------------
# Forward pass
# ----------------------------------------------------------------------------
@jax.jit
def mdpr_forward(p, tokens, xyz):
    # ---------------- main (token) branch ----------------
    emb = p["embedding"][tokens].astype(jnp.bfloat16)            # (B, L, E)
    x4 = emb[:, None, :, :]                                      # (B, 1, L, E)
    # One (17, 13) im2col serves all six branches (narrower kernels are
    # zero-padded in the weight slab).  Patch channels are (kh, kw) row-major.
    patches = lax.conv_general_dilated_patches(
        x4, filter_shape=(KH, KWMAX), window_strides=(1, 1),
        padding=((0, 0), (0, KWMAX - min(KWS))))                 # (B, 221, HO, WO_MAX)
    pr = patches.transpose(0, 2, 3, 1).reshape(B, HO, WPH, 2, KH * KWMAX)
    pr = pr.transpose(3, 0, 1, 2, 4).reshape(2 * B * HO * WPH, KH * KWMAX)
    pooled = main_conv_pool(pr, p["conv_w"], p["conv_b"])        # (B*HO*WPH, 128)
    main_flat = pooled.reshape(B, FLAT_MAIN_RAW)                 # contiguous reshape

    # ---------------- spatial branch ----------------
    xs4 = xyz.reshape(B, 3, A, 4)     # PyTorch does a reshape (not permute) here
    xs = xs4.transpose(0, 2, 1, 3).reshape(B, A, 12).astype(jnp.bfloat16)
    s3 = spatial_convs(xs, p)                                    # (B, T, 60) bf16
    spat_flat = s3.reshape(B, FLAT_SPATIAL)

    # ---------------- fused head ----------------
    out_pad = head(main_flat, spat_flat, p)                      # (B, 128) f32
    return out_pad[:, :2]


# ----------------------------------------------------------------------------
if __name__ == "__main__":
    key = jax.random.PRNGKey(0)
    k_tok, k_xyz, k_par = jax.random.split(key, 3)
    tokens = jax.random.randint(k_tok, (B, L), 0, V, dtype=jnp.int32)
    xyz = jax.random.normal(k_xyz, (B, A, 3, 4), jnp.float32)

    params = init_params(k_par)

    out = mdpr_forward(params, tokens, xyz)
    out = jax.block_until_ready(out)
    assert out.shape == (B, 2), out.shape
    assert bool(jnp.all(jnp.isfinite(out)))
    print("KERNEL_OK")
</pallas_src>

<mosaic_0001>
module attributes {stable_mosaic.version = 11 : i64} {
  func.func @_main_conv_kernel(%arg0: i32, %arg1: memref<224x221xbf16, #tpu.memory_space<vmem>>, %arg2: memref<221x128xbf16, #tpu.memory_space<vmem>>, %arg3: memref<1x128xf32, #tpu.memory_space<vmem>>, %arg4: memref<112x128xbf16, #tpu.memory_space<vmem>>) attributes {dimension_semantics = [#tpu.dimension_semantics<arbitrary>], iteration_bounds = array<i64: 1>, scalar_prefetch = 0 : i64, scratch_operands = 0 : i64, tpu.core_type = #tpu.core_type<tc>, window_params = [{pipeline_mode = #tpu.pipeline_mode<synchronous>, transform_indices = @transform_0, window_bounds = array<i64: 224, 221>}, {pipeline_mode = #tpu.pipeline_mode<synchronous>, transform_indices = @transform_1, window_bounds = array<i64: 221, 128>}, {pipeline_mode = #tpu.pipeline_mode<synchronous>, transform_indices = @transform_2, window_bounds = array<i64: 1, 128>}, {pipeline_mode = #tpu.pipeline_mode<synchronous>, transform_indices = @transform_3, window_bounds = array<i64: 112, 128>}]} {
    %c0 = arith.constant 0 : index
    %c0_0 = arith.constant 0 : index
    %0 = vector.load %arg1[%c0, %c0_0] : memref<224x221xbf16, #tpu.memory_space<vmem>>, vector<224x221xbf16>
    %c0_1 = arith.constant 0 : index
    %c0_2 = arith.constant 0 : index
    %1 = vector.load %arg2[%c0_1, %c0_2] : memref<221x128xbf16, #tpu.memory_space<vmem>>, vector<221x128xbf16>
    %cst = arith.constant dense<0.000000e+00> : vector<224x128xf32>
    %2 = tpu.matmul %0, %1, %cst {dimension_numbers = #tpu.dot_dimension_numbers<[1], [0], [0], [1], [0, 0, 1, 1], [], []>} : vector<224x221xbf16>, vector<221x128xbf16>, vector<224x128xf32> -> vector<224x128xf32>
    %c0_3 = arith.constant 0 : index
    %c0_4 = arith.constant 0 : index
    %3 = vector.load %arg3[%c0_3, %c0_4] : memref<1x128xf32, #tpu.memory_space<vmem>>, vector<1x128xf32>
    %4 = vector.broadcast %3 : vector<1x128xf32> to vector<224x128xf32>
    %5 = arith.addf %2, %4 : vector<224x128xf32>
    %cst_5 = arith.constant 0.000000e+00 : f32
    %6 = vector.broadcast %cst_5 : f32 to vector<224x128xf32>
    %7 = arith.maximumf %5, %6 : vector<224x128xf32>
    %8 = vector.extract_strided_slice %7 {offsets = [0, 0], sizes = [112, 128], strides = [1, 1]} : vector<224x128xf32> to vector<112x128xf32>
    %9 = vector.extract_strided_slice %7 {offsets = [112, 0], sizes = [112, 128], strides = [1, 1]} : vector<224x128xf32> to vector<112x128xf32>
    %10 = arith.maximumf %8, %9 : vector<112x128xf32>
    %11 = arith.truncf %10 : vector<112x128xf32> to vector<112x128xbf16>
    %c0_6 = arith.constant 0 : index
    %c0_7 = arith.constant 0 : index
    %12 = vector.load %arg4[%c0_6, %c0_7] : memref<112x128xbf16, #tpu.memory_space<vmem>>, vector<112x128xbf16>
    tpu.vector_store %arg4[%c0_6, %c0_7], %11 {strides = array<i32>} : memref<112x128xbf16, #tpu.memory_space<vmem>>, vector<112x128xbf16>,
    return
  }
  func.func @transform_0(%arg0: i32) -> (i32, i32) {
    %c0_i32 = arith.constant 0 : i32
    %c0_i32_0 = arith.constant 0 : i32
    %c0_i32_1 = arith.constant 0 : i32
    return %c0_i32, %c0_i32_0 : i32, i32
  }
  func.func @transform_1(%arg0: i32) -> (i32, i32) {
    %c0_i32 = arith.constant 0 : i32
    %c0_i32_0 = arith.constant 0 : i32
    %c0_i32_1 = arith.constant 0 : i32
    return %c0_i32, %c0_i32_0 : i32, i32
  }
  func.func @transform_2(%arg0: i32) -> (i32, i32) {
    %c0_i32 = arith.constant 0 : i32
    %c0_i32_0 = arith.constant 0 : i32
    %c0_i32_1 = arith.constant 0 : i32
    return %c0_i32, %c0_i32_0 : i32, i32
  }
  func.func @transform_3(%arg0: i32) -> (i32, i32) {
    %c0_i32 = arith.constant 0 : i32
    %c0_i32_0 = arith.constant 0 : i32
    %c0_i32_1 = arith.constant 0 : i32
    return %c0_i32, %c0_i32_0 : i32, i32
  }
}

module attributes {stable_mosaic.version = 11 : i64} {
  func.func @_spatial_kernel(%arg0: i32, %arg1: memref<1x24x12xbf16, #tpu.memory_space<vmem>>, %arg2: memref<11x12x30xbf16, #tpu.memory_space<vmem>>, %arg3: memref<1x30xf32, #tpu.memory_space<vmem>>, %arg4: memref<11x30x30xbf16, #tpu.memory_space<vmem>>, %arg5: memref<1x30xf32, #tpu.memory_space<vmem>>, %arg6: memref<11x30x60xbf16, #tpu.memory_space<vmem>>, %arg7: memref<11x30x60xbf16, #tpu.memory_space<vmem>>, %arg8: memref<1x60xf32, #tpu.memory_space<vmem>>, %arg9: memref<1x14x60xbf16, #tpu.memory_space<vmem>>, %arg10: memref<24x30xbf16, #tpu.memory_space<vmem>>, %arg11: memref<24x30xbf16, #tpu.memory_space<vmem>>) attributes {dimension_semantics = [#tpu.dimension_semantics<parallel>], iteration_bounds = array<i64: 2>, scalar_prefetch = 0 : i64, scratch_operands = 2 : i64, tpu.core_type = #tpu.core_type<tc>, window_params = [{transform_indices = @transform_0, window_bounds = array<i64: 1, 24, 12>}, {pipeline_mode = #tpu.pipeline_mode<synchronous>, transform_indices = @transform_1, window_bounds = array<i64: 11, 12, 30>}, {pipeline_mode = #tpu.pipeline_mode<synchronous>, transform_indices = @transform_2, window_bounds = array<i64: 1, 30>}, {pipeline_mode = #tpu.pipeline_mode<synchronous>, transform_indices = @transform_3, window_bounds = array<i64: 11, 30, 30>}, {pipeline_mode = #tpu.pipeline_mode<synchronous>, transform_indices = @transform_4, window_bounds = array<i64: 1, 30>}, {pipeline_mode = #tpu.pipeline_mode<synchronous>, transform_indices = @transform_5, window_bounds = array<i64: 11, 30, 60>}, {pipeline_mode = #tpu.pipeline_mode<synchronous>, transform_indices = @transform_6, window_bounds = array<i64: 11, 30, 60>}, {pipeline_mode = #tpu.pipeline_mode<synchronous>, transform_indices = @transform_7, window_bounds = array<i64: 1, 60>}, {transform_indices = @transform_8, window_bounds = array<i64: 1, 14, 60>}]} {
    %cst = arith.constant 0.000000e+00 : f32
    %0 = vector.broadcast %cst : f32 to vector<14x30xf32>
    %c0 = arith.constant 0 : index
    %c0_0 = arith.constant 0 : index
    %c0_1 = arith.constant 0 : index
    %1 = vector.load %arg1[%c0, %c0_0, %c0_1] : memref<1x24x12xbf16, #tpu.memory_space<vmem>>, vector<1x14x12xbf16>
    %2 = vector.shape_cast %1 : vector<1x14x12xbf16> to vector<14x12xbf16>
    %c0_2 = arith.constant 0 : index
    %c0_3 = arith.constant 0 : index
    %c0_4 = arith.constant 0 : index
    %3 = vector.load %arg2[%c0_2, %c0_3, %c0_4] : memref<11x12x30xbf16, #tpu.memory_space<vmem>>, vector<1x12x30xbf16>
    %4 = vector.shape_cast %3 : vector<1x12x30xbf16> to vector<12x30xbf16>
    %cst_5 = arith.constant dense<0.000000e+00> : vector<14x30xf32>
    %5 = tpu.matmul %2, %4, %cst_5 {dimension_numbers = #tpu.dot_dimension_numbers<[1], [0], [0], [1], [0, 0, 1, 1], [], []>} : vector<14x12xbf16>, vector<12x30xbf16>, vector<14x30xf32> -> vector<14x30xf32>
    %6 = arith.addf %0, %5 : vector<14x30xf32>
    %c0_6 = arith.constant 0 : index
    %c1 = arith.constant 1 : index
    %c0_7 = arith.constant 0 : index
    %7 = vector.load %arg1[%c0_6, %c1, %c0_7] : memref<1x24x12xbf16, #tpu.memory_space<vmem>>, vector<1x14x12xbf16>
    %8 = vector.shape_cast %7 : vector<1x14x12xbf16> to vector<14x12xbf16>
    %c1_8 = arith.constant 1 : index
    %c0_9 = arith.constant 0 : index
    %c0_10 = arith.constant 0 : index
    %9 = vector.load %arg2[%c1_8, %c0_9, %c0_10] : memref<11x12x30xbf16, #tpu.memory_space<vmem>>, vector<1x12x30xbf16>
    %10 = vector.shape_cast %9 : vector<1x12x30xbf16> to vector<12x30xbf16>
    %cst_11 = arith.constant dense<0.000000e+00> : vector<14x30xf32>
    %11 = tpu.matmul %8, %10, %cst_11 {dimension_numbers = #tpu.dot_dimension_numbers<[1], [0], [0], [1], [0, 0, 1, 1], [], []>} : vector<14x12xbf16>, vector<12x30xbf16>, vector<14x30xf32> -> vector<14x30xf32>
    %12 = arith.addf %6, %11 : vector<14x30xf32>
    %c0_12 = arith.constant 0 : index
    %c2 = arith.constant 2 : index
    %c0_13 = arith.constant 0 : index
    %13 = vector.load %arg1[%c0_12, %c2, %c0_13] : memref<1x24x12xbf16, #tpu.memory_space<vmem>>, vector<1x14x12xbf16>
    %14 = vector.shape_cast %13 : vector<1x14x12xbf16> to vector<14x12xbf16>
    %c2_14 = arith.constant 2 : index
    %c0_15 = arith.constant 0 : index
    %c0_16 = arith.constant 0 : index
    %15 = vector.load %arg2[%c2_14, %c0_15, %c0_16] : memref<11x12x30xbf16, #tpu.memory_space<vmem>>, vector<1x12x30xbf16>
    %16 = vector.shape_cast %15 : vector<1x12x30xbf16> to vector<12x30xbf16>
    %cst_17 = arith.constant dense<0.000000e+00> : vector<14x30xf32>
    %17 = tpu.matmul %14, %16, %cst_17 {dimension_numbers = #tpu.dot_dimension_numbers<[1], [0], [0], [1], [0, 0, 1, 1], [], []>} : vector<14x12xbf16>, vector<12x30xbf16>, vector<14x30xf32> -> vector<14x30xf32>
    %18 = arith.addf %12, %17 : vector<14x30xf32>
    %c0_18 = arith.constant 0 : index
    %c3 = arith.constant 3 : index
    %c0_19 = arith.constant 0 : index
    %19 = vector.load %arg1[%c0_18, %c3, %c0_19] : memref<1x24x12xbf16, #tpu.memory_space<vmem>>, vector<1x14x12xbf16>
    %20 = vector.shape_cast %19 : vector<1x14x12xbf16> to vector<14x12xbf16>
    %c3_20 = arith.constant 3 : index
    %c0_21 = arith.constant 0 : index
    %c0_22 = arith.constant 0 : index
    %21 = vector.load %arg2[%c3_20, %c0_21, %c0_22] : memref<11x12x30xbf16, #tpu.memory_space<vmem>>, vector<1x12x30xbf16>
    %22 = vector.shape_cast %21 : vector<1x12x30xbf16> to vector<12x30xbf16>
    %cst_23 = arith.constant dense<0.000000e+00> : vector<14x30xf32>
    %23 = tpu.matmul %20, %22, %cst_23 {dimension_numbers = #tpu.dot_dimension_numbers<[1], [0], [0], [1], [0, 0, 1, 1], [], []>} : vector<14x12xbf16>, vector<12x30xbf16>, vector<14x30xf32> -> vector<14x30xf32>
    %24 = arith.addf %18, %23 : vector<14x30xf32>
    %c0_24 = arith.constant 0 : index
    %c4 = arith.constant 4 : index
    %c0_25 = arith.constant 0 : index
    %25 = vector.load %arg1[%c0_24, %c4, %c0_25] : memref<1x24x12xbf16, #tpu.memory_space<vmem>>, vector<1x14x12xbf16>
    %26 = vector.shape_cast %25 : vector<1x14x12xbf16> to vector<14x12xbf16>
    %c4_26 = arith.constant 4 : index
    %c0_27 = arith.constant 0 : index
    %c0_28 = arith.constant 0 : index
    %27 = vector.load %arg2[%c4_26, %c0_27, %c0_28] : memref<11x12x30xbf16, #tpu.memory_space<vmem>>, vector<1x12x30xbf16>
    %28 = vector.shape_cast %27 : vector<1x12x30xbf16> to vector<12x30xbf16>
    %cst_29 = arith.constant dense<0.000000e+00> : vector<14x30xf32>
    %29 = tpu.matmul %26, %28, %cst_29 {dimension_numbers = #tpu.dot_dimension_numbers<[1], [0], [0], [1], [0, 0, 1, 1], [], []>} : vector<14x12xbf16>, vector<12x30xbf16>, vector<14x30xf32> -> vector<14x30xf32>
    %30 = arith.addf %24, %29 : vector<14x30xf32>
    %c0_30 = arith.constant 0 : index
    %c5 = arith.constant 5 : index
    %c0_31 = arith.constant 0 : index
    %31 = vector.load %arg1[%c0_30, %c5, %c0_31] : memref<1x24x12xbf16, #tpu.memory_space<vmem>>, vector<1x14x12xbf16>
    %32 = vector.shape_cast %31 : vector<1x14x12xbf16> to vector<14x12xbf16>
    %c5_32 = arith.constant 5 : index
    %c0_33 = arith.constant 0 : index
    %c0_34 = arith.constant 0 : index
    %33 = vector.load %arg2[%c5_32, %c0_33, %c0_34] : memref<11x12x30xbf16, #tpu.memory_space<vmem>>, vector<1x12x30xbf16>
    %34 = vector.shape_cast %33 : vector<1x12x30xbf16> to vector<12x30xbf16>
    %cst_35 = arith.constant dense<0.000000e+00> : vector<14x30xf32>
    %35 = tpu.matmul %32, %34, %cst_35 {dimension_numbers = #tpu.dot_dimension_numbers<[1], [0], [0], [1], [0, 0, 1, 1], [], []>} : vector<14x12xbf16>, vector<12x30xbf16>, vector<14x30xf32> -> vector<14x30xf32>
    %36 = arith.addf %30, %35 : vector<14x30xf32>
    %c0_36 = arith.constant 0 : index
    %c6 = arith.constant 6 : index
    %c0_37 = arith.constant 0 : index
    %37 = vector.load %arg1[%c0_36, %c6, %c0_37] : memref<1x24x12xbf16, #tpu.memory_space<vmem>>, vector<1x14x12xbf16>
    %38 = vector.shape_cast %37 : vector<1x14x12xbf16> to vector<14x12xbf16>
    %c6_38 = arith.constant 6 : index
    %c0_39 = arith.constant 0 : index
    %c0_40 = arith.constant 0 : index
    %39 = vector.load %arg2[%c6_38, %c0_39, %c0_40] : memref<11x12x30xbf16, #tpu.memory_space<vmem>>, vector<1x12x30xbf16>
    %40 = vector.shape_cast %39 : vector<1x12x30xbf16> to vector<12x30xbf16>
    %cst_41 = arith.constant dense<0.000000e+00> : vector<14x30xf32>
    %41 = tpu.matmul %38, %40, %cst_41 {dimension_numbers = #tpu.dot_dimension_numbers<[1], [0], [0], [1], [0, 0, 1, 1], [], []>} : vector<14x12xbf16>, vector<12x30xbf16>, vector<14x30xf32> -> vector<14x30xf32>
    %42 = arith.addf %36, %41 : vector<14x30xf32>
    %c0_42 = arith.constant 0 : index
    %c7 = arith.constant 7 : index
    %c0_43 = arith.constant 0 : index
    %43 = vector.load %arg1[%c0_42, %c7, %c0_43] : memref<1x24x12xbf16, #tpu.memory_space<vmem>>, vector<1x14x12xbf16>
    %44 = vector.shape_cast %43 : vector<1x14x12xbf16> to vector<14x12xbf16>
    %c7_44 = arith.constant 7 : index
    %c0_45 = arith.constant 0 : index
    %c0_46 = arith.constant 0 : index
    %45 = vector.load %arg2[%c7_44, %c0_45, %c0_46] : memref<11x12x30xbf16, #tpu.memory_space<vmem>>, vector<1x12x30xbf16>
    %46 = vector.shape_cast %45 : vector<1x12x30xbf16> to vector<12x30xbf16>
    %cst_47 = arith.constant dense<0.000000e+00> : vector<14x30xf32>
    %47 = tpu.matmul %44, %46, %cst_47 {dimension_numbers = #tpu.dot_dimension_numbers<[1], [0], [0], [1], [0, 0, 1, 1], [], []>} : vector<14x12xbf16>, vector<12x30xbf16>, vector<14x30xf32> -> vector<14x30xf32>
    %48 = arith.addf %42, %47 : vector<14x30xf32>
    %c0_48 = arith.constant 0 : index
    %c8 = arith.constant 8 : index
    %c0_49 = arith.constant 0 : index
    %49 = vector.load %arg1[%c0_48, %c8, %c0_49] : memref<1x24x12xbf16, #tpu.memory_space<vmem>>, vector<1x14x12xbf16>
    %50 = vector.shape_cast %49 : vector<1x14x12xbf16> to vector<14x12xbf16>
    %c8_50 = arith.constant 8 : index
    %c0_51 = arith.constant 0 : index
    %c0_52 = arith.constant 0 : index
    %51 = vector.load %arg2[%c8_50, %c0_51, %c0_52] : memref<11x12x30xbf16, #tpu.memory_space<vmem>>, vector<1x12x30xbf16>
    %52 = vector.shape_cast %51 : vector<1x12x30xbf16> to vector<12x30xbf16>
    %cst_53 = arith.constant dense<0.000000e+00> : vector<14x30xf32>
    %53 = tpu.matmul %50, %52, %cst_53 {dimension_numbers = #tpu.dot_dimension_numbers<[1], [0], [0], [1], [0, 0, 1, 1], [], []>} : vector<14x12xbf16>, vector<12x30xbf16>, vector<14x30xf32> -> vector<14x30xf32>
    %54 = arith.addf %48, %53 : vector<14x30xf32>
    %c0_54 = arith.constant 0 : index
    %c9 = arith.constant 9 : index
    %c0_55 = arith.constant 0 : index
    %55 = vector.load %arg1[%c0_54, %c9, %c0_55] : memref<1x24x12xbf16, #tpu.memory_space<vmem>>, vector<1x14x12xbf16>
    %56 = vector.shape_cast %55 : vector<1x14x12xbf16> to vector<14x12xbf16>
    %c9_56 = arith.constant 9 : index
    %c0_57 = arith.constant 0 : index
    %c0_58 = arith.constant 0 : index
    %57 = vector.load %arg2[%c9_56, %c0_57, %c0_58] : memref<11x12x30xbf16, #tpu.memory_space<vmem>>, vector<1x12x30xbf16>
    %58 = vector.shape_cast %57 : vector<1x12x30xbf16> to vector<12x30xbf16>
    %cst_59 = arith.constant dense<0.000000e+00> : vector<14x30xf32>
    %59 = tpu.matmul %56, %58, %cst_59 {dimension_numbers = #tpu.dot_dimension_numbers<[1], [0], [0], [1], [0, 0, 1, 1], [], []>} : vector<14x12xbf16>, vector<12x30xbf16>, vector<14x30xf32> -> vector<14x30xf32>
    %60 = arith.addf %54, %59 : vector<14x30xf32>
    %c0_60 = arith.constant 0 : index
    %c10 = arith.constant 10 : index
    %c0_61 = arith.constant 0 : index
    %61 = vector.load %arg1[%c0_60, %c10, %c0_61] : memref<1x24x12xbf16, #tpu.memory_space<vmem>>, vector<1x14x12xbf16>
    %62 = vector.shape_cast %61 : vector<1x14x12xbf16> to vector<14x12xbf16>
    %c10_62 = arith.constant 10 : index
    %c0_63 = arith.constant 0 : index
    %c0_64 = arith.constant 0 : index
    %63 = vector.load %arg2[%c10_62, %c0_63, %c0_64] : memref<11x12x30xbf16, #tpu.memory_space<vmem>>, vector<1x12x30xbf16>
    %64 = vector.shape_cast %63 : vector<1x12x30xbf16> to vector<12x30xbf16>
    %cst_65 = arith.constant dense<0.000000e+00> : vector<14x30xf32>
    %65 = tpu.matmul %62, %64, %cst_65 {dimension_numbers = #tpu.dot_dimension_numbers<[1], [0], [0], [1], [0, 0, 1, 1], [], []>} : vector<14x12xbf16>, vector<12x30xbf16>, vector<14x30xf32> -> vector<14x30xf32>
    %66 = arith.addf %60, %65 : vector<14x30xf32>
    %c0_66 = arith.constant 0 : index
    %c0_67 = arith.constant 0 : index
    %67 = vector.load %arg3[%c0_66, %c0_67] : memref<1x30xf32, #tpu.memory_space<vmem>>, vector<1x30xf32>
    %68 = vector.broadcast %67 : vector<1x30xf32> to vector<14x30xf32>
    %69 = arith.addf %66, %68 : vector<14x30xf32>
    %cst_68 = arith.constant 0.000000e+00 : f32
    %70 = vector.broadcast %cst_68 : f32 to vector<14x30xf32>
    %71 = arith.maximumf %69, %70 : vector<14x30xf32>
    %cst_69 = arith.constant 0.000000e+00 : bf16
    %72 = vector.broadcast %cst_69 : bf16 to vector<24x30xbf16>
    %c0_70 = arith.constant 0 : index
    %c0_71 = arith.constant 0 : index
    %73 = vector.load %arg10[%c0_70, %c0_71] : memref<24x30xbf16, #tpu.memory_space<vmem>>, vector<24x30xbf16>
    tpu.vector_store %arg10[%c0_70, %c0_71], %72 {strides = array<i32>} : memref<24x30xbf16, #tpu.memory_space<vmem>>, vector<24x30xbf16>,
    %74 = arith.truncf %71 : vector<14x30xf32> to vector<14x30xbf16>
    %c5_72 = arith.constant 5 : index
    %c0_73 = arith.constant 0 : index
    %75 = vector.load %arg10[%c5_72, %c0_73] : memref<24x30xbf16, #tpu.memory_space<vmem>>, vector<14x30xbf16>
    tpu.vector_store %arg10[%c5_72, %c0_73], %74 {strides = array<i32>} : memref<24x30xbf16, #tpu.memory_space<vmem>>, vector<14x30xbf16>,
    %cst_74 = arith.constant 0.000000e+00 : f32
    %76 = vector.broadcast %cst_74 : f32 to vector<14x30xf32>
    %c0_75 = arith.constant 0 : index
    %c0_76 = arith.constant 0 : index
    %77 = vector.load %arg10[%c0_75, %c0_76] : memref<24x30xbf16, #tpu.memory_space<vmem>>, vector<14x30xbf16>
    %c0_77 = arith.constant 0 : index
    %c0_78 = arith.constant 0 : index
    %c0_79 = arith.constant 0 : index
    %78 = vector.load %arg4[%c0_77, %c0_78, %c0_79] : memref<11x30x30xbf16, #tpu.memory_space<vmem>>, vector<1x30x30xbf16>
    %79 = vector.shape_cast %78 : vector<1x30x30xbf16> to vector<30x30xbf16>
    %cst_80 = arith.constant dense<0.000000e+00> : vector<14x30xf32>
    %80 = tpu.matmul %77, %79, %cst_80 {dimension_numbers = #tpu.dot_dimension_numbers<[1], [0], [0], [1], [0, 0, 1, 1], [], []>} : vector<14x30xbf16>, vector<30x30xbf16>, vector<14x30xf32> -> vector<14x30xf32>
    %81 = arith.addf %76, %80 : vector<14x30xf32>
    %c1_81 = arith.constant 1 : index
    %c0_82 = arith.constant 0 : index
    %82 = vector.load %arg10[%c1_81, %c0_82] : memref<24x30xbf16, #tpu.memory_space<vmem>>, vector<14x30xbf16>
    %c1_83 = arith.constant 1 : index
    %c0_84 = arith.constant 0 : index
    %c0_85 = arith.constant 0 : index
    %83 = vector.load %arg4[%c1_83, %c0_84, %c0_85] : memref<11x30x30xbf16, #tpu.memory_space<vmem>>, vector<1x30x30xbf16>
    %84 = vector.shape_cast %83 : vector<1x30x30xbf16> to vector<30x30xbf16>
    %cst_86 = arith.constant dense<0.000000e+00> : vector<14x30xf32>
    %85 = tpu.matmul %82, %84, %cst_86 {dimension_numbers = #tpu.dot_dimension_numbers<[1], [0], [0], [1], [0, 0, 1, 1], [], []>} : vector<14x30xbf16>, vector<30x30xbf16>, vector<14x30xf32> -> vector<14x30xf32>
    %86 = arith.addf %81, %85 : vector<14x30xf32>
    %c2_87 = arith.constant 2 : index
    %c0_88 = arith.constant 0 : index
    %87 = vector.load %arg10[%c2_87, %c0_88] : memref<24x30xbf16, #tpu.memory_space<vmem>>, vector<14x30xbf16>
    %c2_89 = arith.constant 2 : index
    %c0_90 = arith.constant 0 : index
    %c0_91 = arith.constant 0 : index
    %88 = vector.load %arg4[%c2_89, %c0_90, %c0_91] : memref<11x30x30xbf16, #tpu.memory_space<vmem>>, vector<1x30x30xbf16>
    %89 = vector.shape_cast %88 : vector<1x30x30xbf16> to vector<30x30xbf16>
    %cst_92 = arith.constant dense<0.000000e+00> : vector<14x30xf32>
    %90 = tpu.matmul %87, %89, %cst_92 {dimension_numbers = #tpu.dot_dimension_numbers<[1], [0], [0], [1], [0, 0, 1, 1], [], []>} : vector<14x30xbf16>, vector<30x30xbf16>, vector<14x30xf32> -> vector<14x30xf32>
    %91 = arith.addf %86, %90 : vector<14x30xf32>
    %c3_93 = arith.constant 3 : index
    %c0_94 = arith.constant 0 : index
    %92 = vector.load %arg10[%c3_93, %c0_94] : memref<24x30xbf16, #tpu.memory_space<vmem>>, vector<14x30xbf16>
    %c3_95 = arith.constant 3 : index
    %c0_96 = arith.constant 0 : index
    %c0_97 = arith.constant 0 : index
    %93 = vector.load %arg4[%c3_95, %c0_96, %c0_97] : memref<11x30x30xbf16, #tpu.memory_space<vmem>>, vector<1x30x30xbf16>
    %94 = vector.shape_cast %93 : vector<1x30x30xbf16> to vector<30x30xbf16>
    %cst_98 = arith.constant dense<0.000000e+00> : vector<14x30xf32>
    %95 = tpu.matmul %92, %94, %cst_98 {dimension_numbers = #tpu.dot_dimension_numbers<[1], [0], [0], [1], [0, 0, 1, 1], [], []>} : vector<14x30xbf16>, vector<30x30xbf16>, vector<14x30xf32> -> vector<14x30xf32>
    %96 = arith.addf %91, %95 : vector<14x30xf32>
    %c4_99 = arith.constant 4 : index
    %c0_100 = arith.constant 0 : index
    %97 = vector.load %arg10[%c4_99, %c0_100] : memref<24x30xbf16, #tpu.memory_space<vmem>>, vector<14x30xbf16>
    %c4_101 = arith.constant 4 : index
    %c0_102 = arith.constant 0 : index
    %c0_103 = arith.constant 0 : index
    %98 = vector.load %arg4[%c4_101, %c0_102, %c0_103] : memref<11x30x30xbf16, #tpu.memory_space<vmem>>, vector<1x30x30xbf16>
    %99 = vector.shape_cast %98 : vector<1x30x30xbf16> to vector<30x30xbf16>
    %cst_104 = arith.constant dense<0.000000e+00> : vector<14x30xf32>
    %100 = tpu.matmul %97, %99, %cst_104 {dimension_numbers = #tpu.dot_dimension_numbers<[1], [0], [0], [1], [0, 0, 1, 1], [], []>} : vector<14x30xbf16>, vector<30x30xbf16>, vector<14x30xf32> -> vector<14x30xf32>
    %101 = arith.addf %96, %100 : vector<14x30xf32>
    %c5_105 = arith.constant 5 : index
    %c0_106 = arith.constant 0 : index
    %102 = vector.load %arg10[%c5_105, %c0_106] : memref<24x30xbf16, #tpu.memory_space<vmem>>, vector<14x30xbf16>
    %c5_107 = arith.constant 5 : index
    %c0_108 = arith.constant 0 : index
    %c0_109 = arith.constant 0 : index
    %103 = vector.load %arg4[%c5_107, %c0_108, %c0_109] : memref<11x30x30xbf16, #tpu.memory_space<vmem>>, vector<1x30x30xbf16>
    %104 = vector.shape_cast %103 : vector<1x30x30xbf16> to vector<30x30xbf16>
    %cst_110 = arith.constant dense<0.000000e+00> : vector<14x30xf32>
    %105 = tpu.matmul %102, %104, %cst_110 {dimension_numbers = #tpu.dot_dimension_numbers<[1], [0], [0], [1], [0, 0, 1, 1], [], []>} : vector<14x30xbf16>, vector<30x30xbf16>, vector<14x30xf32> -> vector<14x30xf32>
    %106 = arith.addf %101, %105 : vector<14x30xf32>
    %c6_111 = arith.constant 6 : index
    %c0_112 = arith.constant 0 : index
    %107 = vector.load %arg10[%c6_111, %c0_112] : memref<24x30xbf16, #tpu.memory_space<vmem>>, vector<14x30xbf16>
    %c6_113 = arith.constant 6 : index
    %c0_114 = arith.constant 0 : index
    %c0_115 = arith.constant 0 : index
    %108 = vector.load %arg4[%c6_113, %c0_114, %c0_115] : memref<11x30x30xbf16, #tpu.memory_space<vmem>>, vector<1x30x30xbf16>
    %109 = vector.shape_cast %108 : vector<1x30x30xbf16> to vector<30x30xbf16>
    %cst_116 = arith.constant dense<0.000000e+00> : vector<14x30xf32>
    %110 = tpu.matmul %107, %109, %cst_116 {dimension_numbers = #tpu.dot_dimension_numbers<[1], [0], [0], [1], [0, 0, 1, 1], [], []>} : vector<14x30xbf16>, vector<30x30xbf16>, vector<14x30xf32> -> vector<14x30xf32>
    %111 = arith.addf %106, %110 : vector<14x30xf32>
    %c7_117 = arith.constant 7 : index
    %c0_118 = arith.constant 0 : index
    %112 = vector.load %arg10[%c7_117, %c0_118] : memref<24x30xbf16, #tpu.memory_space<vmem>>, vector<14x30xbf16>
    %c7_119 = arith.constant 7 : index
    %c0_120 = arith.constant 0 : index
    %c0_121 = arith.constant 0 : index
    %113 = vector.load %arg4[%c7_119, %c0_120, %c0_121] : memref<11x30x30xbf16, #tpu.memory_space<vmem>>, vector<1x30x30xbf16>
    %114 = vector.shape_cast %113 : vector<1x30x30xbf16> to vector<30x30xbf16>
    %cst_122 = arith.constant dense<0.000000e+00> : vector<14x30xf32>
    %115 = tpu.matmul %112, %114, %cst_122 {dimension_numbers = #tpu.dot_dimension_numbers<[1], [0], [0], [1], [0, 0, 1, 1], [], []>} : vector<14x30xbf16>, vector<30x30xbf16>, vector<14x30xf32> -> vector<14x30xf32>
    %116 = arith.addf %111, %115 : vector<14x30xf32>
    %c8_123 = arith.constant 8 : index
    %c0_124 = arith.constant 0 : index
    %117 = vector.load %arg10[%c8_123, %c0_124] : memref<24x30xbf16, #tpu.memory_space<vmem>>, vector<14x30xbf16>
    %c8_125 = arith.constant 8 : index
    %c0_126 = arith.constant 0 : index
    %c0_127 = arith.constant 0 : index
    %118 = vector.load %arg4[%c8_125, %c0_126, %c0_127] : memref<11x30x30xbf16, #tpu.memory_space<vmem>>, vector<1x30x30xbf16>
    %119 = vector.shape_cast %118 : vector<1x30x30xbf16> to vector<30x30xbf16>
    %cst_128 = arith.constant dense<0.000000e+00> : vector<14x30xf32>
    %120 = tpu.matmul %117, %119, %cst_128 {dimension_numbers = #tpu.dot_dimension_numbers<[1], [0], [0], [1], [0, 0, 1, 1], [], []>} : vector<14x30xbf16>, vector<30x30xbf16>, vector<14x30xf32> -> vector<14x30xf32>
    %121 = arith.addf %116, %120 : vector<14x30xf32>
    %c9_129 = arith.constant 9 : index
    %c0_130 = arith.constant 0 : index
    %122 = vector.load %arg10[%c9_129, %c0_130] : memref<24x30xbf16, #tpu.memory_space<vmem>>, vector<14x30xbf16>
    %c9_131 = arith.constant 9 : index
    %c0_132 = arith.constant 0 : index
    %c0_133 = arith.constant 0 : index
    %123 = vector.load %arg4[%c9_131, %c0_132, %c0_133] : memref<11x30x30xbf16, #tpu.memory_space<vmem>>, vector<1x30x30xbf16>
    %124 = vector.shape_cast %123 : vector<1x30x30xbf16> to vector<30x30xbf16>
    %cst_134 = arith.constant dense<0.000000e+00> : vector<14x30xf32>
    %125 = tpu.matmul %122, %124, %cst_134 {dimension_numbers = #tpu.dot_dimension_numbers<[1], [0], [0], [1], [0, 0, 1, 1], [], []>} : vector<14x30xbf16>, vector<30x30xbf16>, vector<14x30xf32> -> vector<14x30xf32>
    %126 = arith.addf %121, %125 : vector<14x30xf32>
    %c10_135 = arith.constant 10 : index
    %c0_136 = arith.constant 0 : index
    %127 = vector.load %arg10[%c10_135, %c0_136] : memref<24x30xbf16, #tpu.memory_space<vmem>>, vector<14x30xbf16>
    %c10_137 = arith.constant 10 : index
    %c0_138 = arith.constant 0 : index
    %c0_139 = arith.constant 0 : index
    %128 = vector.load %arg4[%c10_137, %c0_138, %c0_139] : memref<11x30x30xbf16, #tpu.memory_space<vmem>>, vector<1x30x30xbf16>
    %129 = vector.shape_cast %128 : vector<1x30x30xbf16> to vector<30x30xbf16>
    %cst_140 = arith.constant dense<0.000000e+00> : vector<14x30xf32>
    %130 = tpu.matmul %127, %129, %cst_140 {dimension_numbers = #tpu.dot_dimension_numbers<[1], [0], [0], [1], [0, 0, 1, 1], [], []>} : vector<14x30xbf16>, vector<30x30xbf16>, vector<14x30xf32> -> vector<14x30xf32>
    %131 = arith.addf %126, %130 : vector<14x30xf32>
    %c0_141 = arith.constant 0 : index
    %c0_142 = arith.constant 0 : index
    %132 = vector.load %arg5[%c0_141, %c0_142] : memref<1x30xf32, #tpu.memory_space<vmem>>, vector<1x30xf32>
    %133 = vector.broadcast %132 : vector<1x30xf32> to vector<14x30xf32>
    %134 = arith.addf %131, %133 : vector<14x30xf32>
    %cst_143 = arith.constant 0.000000e+00 : f32
    %135 = vector.broadcast %cst_143 : f32 to vector<14x30xf32>
    %136 = arith.maximumf %134, %135 : vector<14x30xf32>
    %cst_144 = arith.constant 0.000000e+00 : bf16
    %137 = vector.broadcast %cst_144 : bf16 to vector<24x30xbf16>
    %c0_145 = arith.constant 0 : index
    %c0_146 = arith.constant 0 : index
    %138 = vector.load %arg11[%c0_145, %c0_146] : memref<24x30xbf16, #tpu.memory_space<vmem>>, vector<24x30xbf16>
    tpu.vector_store %arg11[%c0_145, %c0_146], %137 {strides = array<i32>} : memref<24x30xbf16, #tpu.memory_space<vmem>>, vector<24x30xbf16>,
    %139 = arith.truncf %136 : vector<14x30xf32> to vector<14x30xbf16>
    %c5_147 = arith.constant 5 : index
    %c0_148 = arith.constant 0 : index
    %140 = vector.load %arg11[%c5_147, %c0_148] : memref<24x30xbf16, #tpu.memory_space<vmem>>, vector<14x30xbf16>
    tpu.vector_store %arg11[%c5_147, %c0_148], %139 {strides = array<i32>} : memref<24x30xbf16, #tpu.memory_space<vmem>>, vector<14x30xbf16>,
    %cst_149 = arith.constant 0.000000e+00 : f32
    %141 = vector.broadcast %cst_149 : f32 to vector<14x60xf32>
    %c0_150 = arith.constant 0 : index
    %c0_151 = arith.constant 0 : index
    %142 = vector.load %arg10[%c0_150, %c0_151] : memref<24x30xbf16, #tpu.memory_space<vmem>>, vector<14x30xbf16>
    %c0_152 = arith.constant 0 : index
    %c0_153 = arith.constant 0 : index
    %c0_154 = arith.constant 0 : index
    %143 = vector.load %arg6[%c0_152, %c0_153, %c0_154] : memref<11x30x60xbf16, #tpu.memory_space<vmem>>, vector<1x30x60xbf16>
    %144 = vector.shape_cast %143 : vector<1x30x60xbf16> to vector<30x60xbf16>
    %cst_155 = arith.constant dense<0.000000e+00> : vector<14x60xf32>
    %145 = tpu.matmul %142, %144, %cst_155 {dimension_numbers = #tpu.dot_dimension_numbers<[1], [0], [0], [1], [0, 0, 1, 1], [], []>} : vector<14x30xbf16>, vector<30x60xbf16>, vector<14x60xf32> -> vector<14x60xf32>
    %146 = arith.addf %141, %145 : vector<14x60xf32>
    %c0_156 = arith.constant 0 : index
    %c0_157 = arith.constant 0 : index
    %147 = vector.load %arg11[%c0_156, %c0_157] : memref<24x30xbf16, #tpu.memory_space<vmem>>, vector<14x30xbf16>
    %c0_158 = arith.constant 0 : index
    %c0_159 = arith.constant 0 : index
    %c0_160 = arith.constant 0 : index
    %148 = vector.load %arg7[%c0_158, %c0_159, %c0_160] : memref<11x30x60xbf16, #tpu.memory_space<vmem>>, vector<1x30x60xbf16>
    %149 = vector.shape_cast %148 : vector<1x30x60xbf16> to vector<30x60xbf16>
    %cst_161 = arith.constant dense<0.000000e+00> : vector<14x60xf32>
    %150 = tpu.matmul %147, %149, %cst_161 {dimension_numbers = #tpu.dot_dimension_numbers<[1], [0], [0], [1], [0, 0, 1, 1], [], []>} : vector<14x30xbf16>, vector<30x60xbf16>, vector<14x60xf32> -> vector<14x60xf32>
    %151 = arith.addf %146, %150 : vector<14x60xf32>
    %c1_162 = arith.constant 1 : index
    %c0_163 = arith.constant 0 : index
    %152 = vector.load %arg10[%c1_162, %c0_163] : memref<24x30xbf16, #tpu.memory_space<vmem>>, vector<14x30xbf16>
    %c1_164 = arith.constant 1 : index
    %c0_165 = arith.constant 0 : index
    %c0_166 = arith.constant 0 : index
    %153 = vector.load %arg6[%c1_164, %c0_165, %c0_166] : memref<11x30x60xbf16, #tpu.memory_space<vmem>>, vector<1x30x60xbf16>
    %154 = vector.shape_cast %153 : vector<1x30x60xbf16> to vector<30x60xbf16>
    %cst_167 = arith.constant dense<0.000000e+00> : vector<14x60xf32>
    %155 = tpu.matmul %152, %154, %cst_167 {dimension_numbers = #tpu.dot_dimension_numbers<[1], [0], [0], [1], [0, 0, 1, 1], [], []>} : vector<14x30xbf16>, vector<30x60xbf16>, vector<14x60xf32> -> vector<14x60xf32>
    %156 = arith.addf %151, %155 : vector<14x60xf32>
    %c1_168 = arith.constant 1 : index
    %c0_169 = arith.constant 0 : index
    %157 = vector.load %arg11[%c1_168, %c0_169] : memref<24x30xbf16, #tpu.memory_space<vmem>>, vector<14x30xbf16>
    %c1_170 = arith.constant 1 : index
    %c0_171 = arith.constant 0 : index
    %c0_172 = arith.constant 0 : index
    %158 = vector.load %arg7[%c1_170, %c0_171, %c0_172] : memref<11x30x60xbf16, #tpu.memory_space<vmem>>, vector<1x30x60xbf16>
    %159 = vector.shape_cast %158 : vector<1x30x60xbf16> to vector<30x60xbf16>
    %cst_173 = arith.constant dense<0.000000e+00> : vector<14x60xf32>
    %160 = tpu.matmul %157, %159, %cst_173 {dimension_numbers = #tpu.dot_dimension_numbers<[1], [0], [0], [1], [0, 0, 1, 1], [], []>} : vector<14x30xbf16>, vector<30x60xbf16>, vector<14x60xf32> -> vector<14x60xf32>
    %161 = arith.addf %156, %160 : vector<14x60xf32>
    %c2_174 = arith.constant 2 : index
    %c0_175 = arith.constant 0 : index
    %162 = vector.load %arg10[%c2_174, %c0_175] : memref<24x30xbf16, #tpu.memory_space<vmem>>, vector<14x30xbf16>
    %c2_176 = arith.constant 2 : index
    %c0_177 = arith.constant 0 : index
    %c0_178 = arith.constant 0 : index
    %163 = vector.load %arg6[%c2_176, %c0_177, %c0_178] : memref<11x30x60xbf16, #tpu.memory_space<vmem>>, vector<1x30x60xbf16>
    %164 = vector.shape_cast %163 : vector<1x30x60xbf16> to vector<30x60xbf16>
    %cst_179 = arith.constant dense<0.000000e+00> : vector<14x60xf32>
    %165 = tpu.matmul %162, %164, %cst_179 {dimension_numbers = #tpu.dot_dimension_numbers<[1], [0], [0], [1], [0, 0, 1, 1], [], []>} : vector<14x30xbf16>, vector<30x60xbf16>, vector<14x60xf32> -> vector<14x60xf32>
    %166 = arith.addf %161, %165 : vector<14x60xf32>
    %c2_180 = arith.constant 2 : index
    %c0_181 = arith.constant 0 : index
    %167 = vector.load %arg11[%c2_180, %c0_181] : memref<24x30xbf16, #tpu.memory_space<vmem>>, vector<14x30xbf16>
    %c2_182 = arith.constant 2 : index
    %c0_183 = arith.constant 0 : index
    %c0_184 = arith.constant 0 : index
    %168 = vector.load %arg7[%c2_182, %c0_183, %c0_184] : memref<11x30x60xbf16, #tpu.memory_space<vmem>>, vector<1x30x60xbf16>
    %169 = vector.shape_cast %168 : vector<1x30x60xbf16> to vector<30x60xbf16>
    %cst_185 = arith.constant dense<0.000000e+00> : vector<14x60xf32>
    %170 = tpu.matmul %167, %169, %cst_185 {dimension_numbers = #tpu.dot_dimension_numbers<[1], [0], [0], [1], [0, 0, 1, 1], [], []>} : vector<14x30xbf16>, vector<30x60xbf16>, vector<14x60xf32> -> vector<14x60xf32>
    %171 = arith.addf %166, %170 : vector<14x60xf32>
    %c3_186 = arith.constant 3 : index
    %c0_187 = arith.constant 0 : index
    %172 = vector.load %arg10[%c3_186, %c0_187] : memref<24x30xbf16, #tpu.memory_space<vmem>>, vector<14x30xbf16>
    %c3_188 = arith.constant 3 : index
    %c0_189 = arith.constant 0 : index
    %c0_190 = arith.constant 0 : index
    %173 = vector.load %arg6[%c3_188, %c0_189, %c0_190] : memref<11x30x60xbf16, #tpu.memory_space<vmem>>, vector<1x30x60xbf16>
    %174 = vector.shape_cast %173 : vector<1x30x60xbf16> to vector<30x60xbf16>
    %cst_191 = arith.constant dense<0.000000e+00> : vector<14x60xf32>
    %175 = tpu.matmul %172, %174, %cst_191 {dimension_numbers = #tpu.dot_dimension_numbers<[1], [0], [0], [1], [0, 0, 1, 1], [], []>} : vector<14x30xbf16>, vector<30x60xbf16>, vector<14x60xf32> -> vector<14x60xf32>
    %176 = arith.addf %171, %175 : vector<14x60xf32>
    %c3_192 = arith.constant 3 : index
    %c0_193 = arith.constant 0 : index
    %177 = vector.load %arg11[%c3_192, %c0_193] : memref<24x30xbf16, #tpu.memory_space<vmem>>, vector<14x30xbf16>
    %c3_194 = arith.constant 3 : index
    %c0_195 = arith.constant 0 : index
    %c0_196 = arith.constant 0 : index
    %178 = vector.load %arg7[%c3_194, %c0_195, %c0_196] : memref<11x30x60xbf16, #tpu.memory_space<vmem>>, vector<1x30x60xbf16>
    %179 = vector.shape_cast %178 : vector<1x30x60xbf16> to vector<30x60xbf16>
    %cst_197 = arith.constant dense<0.000000e+00> : vector<14x60xf32>
    %180 = tpu.matmul %177, %179, %cst_197 {dimension_numbers = #tpu.dot_dimension_numbers<[1], [0], [0], [1], [0, 0, 1, 1], [], []>} : vector<14x30xbf16>, vector<30x60xbf16>, vector<14x60xf32> -> vector<14x60xf32>
    %181 = arith.addf %176, %180 : vector<14x60xf32>
    %c4_198 = arith.constant 4 : index
    %c0_199 = arith.constant 0 : index
    %182 = vector.load %arg10[%c4_198, %c0_199] : memref<24x30xbf16, #tpu.memory_space<vmem>>, vector<14x30xbf16>
    %c4_200 = arith.constant 4 : index
    %c0_201 = arith.constant 0 : index
    %c0_202 = arith.constant 0 : index
    %183 = vector.load %arg6[%c4_200, %c0_201, %c0_202] : memref<11x30x60xbf16, #tpu.memory_space<vmem>>, vector<1x30x60xbf16>
    %184 = vector.shape_cast %183 : vector<1x30x60xbf16> to vector<30x60xbf16>
    %cst_203 = arith.constant dense<0.000000e+00> : vector<14x60xf32>
    %185 = tpu.matmul %182, %184, %cst_203 {dimension_numbers = #tpu.dot_dimension_numbers<[1], [0], [0], [1], [0, 0, 1, 1], [], []>} : vector<14x30xbf16>, vector<30x60xbf16>, vector<14x60xf32> -> vector<14x60xf32>
    %186 = arith.addf %181, %185 : vector<14x60xf32>
    %c4_204 = arith.constant 4 : index
    %c0_205 = arith.constant 0 : index
    %187 = vector.load %arg11[%c4_204, %c0_205] : memref<24x30xbf16, #tpu.memory_space<vmem>>, vector<14x30xbf16>
    %c4_206 = arith.constant 4 : index
    %c0_207 = arith.constant 0 : index
    %c0_208 = arith.constant 0 : index
    %188 = vector.load %arg7[%c4_206, %c0_207, %c0_208] : memref<11x30x60xbf16, #tpu.memory_space<vmem>>, vector<1x30x60xbf16>
    %189 = vector.shape_cast %188 : vector<1x30x60xbf16> to vector<30x60xbf16>
    %cst_209 = arith.constant dense<0.000000e+00> : vector<14x60xf32>
    %190 = tpu.matmul %187, %189, %cst_209 {dimension_numbers = #tpu.dot_dimension_numbers<[1], [0], [0], [1], [0, 0, 1, 1], [], []>} : vector<14x30xbf16>, vector<30x60xbf16>, vector<14x60xf32> -> vector<14x60xf32>
    %191 = arith.addf %186, %190 : vector<14x60xf32>
    %c5_210 = arith.constant 5 : index
    %c0_211 = arith.constant 0 : index
    %192 = vector.load %arg10[%c5_210, %c0_211] : memref<24x30xbf16, #tpu.memory_space<vmem>>, vector<14x30xbf16>
    %c5_212 = arith.constant 5 : index
    %c0_213 = arith.constant 0 : index
    %c0_214 = arith.constant 0 : index
    %193 = vector.load %arg6[%c5_212, %c0_213, %c0_214] : memref<11x30x60xbf16, #tpu.memory_space<vmem>>, vector<1x30x60xbf16>
    %194 = vector.shape_cast %193 : vector<1x30x60xbf16> to vector<30x60xbf16>
    %cst_215 = arith.constant dense<0.000000e+00> : vector<14x60xf32>
    %195 = tpu.matmul %192, %194, %cst_215 {dimension_numbers = #tpu.dot_dimension_numbers<[1], [0], [0], [1], [0, 0, 1, 1], [], []>} : vector<14x30xbf16>, vector<30x60xbf16>, vector<14x60xf32> -> vector<14x60xf32>
    %196 = arith.addf %191, %195 : vector<14x60xf32>
    %c5_216 = arith.constant 5 : index
    %c0_217 = arith.constant 0 : index
    %197 = vector.load %arg11[%c5_216, %c0_217] : memref<24x30xbf16, #tpu.memory_space<vmem>>, vector<14x30xbf16>
    %c5_218 = arith.constant 5 : index
    %c0_219 = arith.constant 0 : index
    %c0_220 = arith.constant 0 : index
    %198 = vector.load %arg7[%c5_218, %c0_219, %c0_220] : memref<11x30x60xbf16, #tpu.memory_space<vmem>>, vector<1x30x60xbf16>
    %199 = vector.shape_cast %198 : vector<1x30x60xbf16> to vector<30x60xbf16>
    %cst_221 = arith.constant dense<0.000000e+00> : vector<14x60xf32>
    %200 = tpu.matmul %197, %199, %cst_221 {dimension_numbers = #tpu.dot_dimension_numbers<[1], [0], [0], [1], [0, 0, 1, 1], [], []>} : vector<14x30xbf16>, vector<30x60xbf16>, vector<14x60xf32> -> vector<14x60xf32>
    %201 = arith.addf %196, %200 : vector<14x60xf32>
    %c6_222 = arith.constant 6 : index
    %c0_223 = arith.constant 0 : index
    %202 = vector.load %arg10[%c6_222, %c0_223] : memref<24x30xbf16, #tpu.memory_space<vmem>>, vector<14x30xbf16>
    %c6_224 = arith.constant 6 : index
    %c0_225 = arith.constant 0 : index
    %c0_226 = arith.constant 0 : index
    %203 = vector.load %arg6[%c6_224, %c0_225, %c0_226] : memref<11x30x60xbf16, #tpu.memory_space<vmem>>, vector<1x30x60xbf16>
    %204 = vector.shape_cast %203 : vector<1x30x60xbf16> to vector<30x60xbf16>
    %cst_227 = arith.constant dense<0.000000e+00> : vector<14x60xf32>
    %205 = tpu.matmul %202, %204, %cst_227 {dimension_numbers = #tpu.dot_dimension_numbers<[1], [0], [0], [1], [0, 0, 1, 1], [], []>} : vector<14x30xbf16>, vector<30x60xbf16>, vector<14x60xf32> -> vector<14x60xf32>
    %206 = arith.addf %201, %205 : vector<14x60xf32>
    %c6_228 = arith.constant 6 : index
    %c0_229 = arith.constant 0 : index
    %207 = vector.load %arg11[%c6_228, %c0_229] : memref<24x30xbf16, #tpu.memory_space<vmem>>, vector<14x30xbf16>
    %c6_230 = arith.constant 6 : index
    %c0_231 = arith.constant 0 : index
    %c0_232 = arith.constant 0 : index
    %208 = vector.load %arg7[%c6_230, %c0_231, %c0_232] : memref<11x30x60xbf16, #tpu.memory_space<vmem>>, vector<1x30x60xbf16>
    %209 = vector.shape_cast %208 : vector<1x30x60xbf16> to vector<30x60xbf16>
    %cst_233 = arith.constant dense<0.000000e+00> : vector<14x60xf32>
    %210 = tpu.matmul %207, %209, %cst_233 {dimension_numbers = #tpu.dot_dimension_numbers<[1], [0], [0], [1], [0, 0, 1, 1], [], []>} : vector<14x30xbf16>, vector<30x60xbf16>, vector<14x60xf32> -> vector<14x60xf32>
    %211 = arith.addf %206, %210 : vector<14x60xf32>
    %c7_234 = arith.constant 7 : index
    %c0_235 = arith.constant 0 : index
    %212 = vector.load %arg10[%c7_234, %c0_235] : memref<24x30xbf16, #tpu.memory_space<vmem>>, vector<14x30xbf16>
    %c7_236 = arith.constant 7 : index
    %c0_237 = arith.constant 0 : index
    %c0_238 = arith.constant 0 : index
    %213 = vector.load %arg6[%c7_236, %c0_237, %c0_238] : memref<11x30x60xbf16, #tpu.memory_space<vmem>>, vector<1x30x60xbf16>
    %214 = vector.shape_cast %213 : vector<1x30x60xbf16> to vector<30x60xbf16>
    %cst_239 = arith.constant dense<0.000000e+00> : vector<14x60xf32>
    %215 = tpu.matmul %212, %214, %cst_239 {dimension_numbers = #tpu.dot_dimension_numbers<[1], [0], [0], [1], [0, 0, 1, 1], [], []>} : vector<14x30xbf16>, vector<30x60xbf16>, vector<14x60xf32> -> vector<14x60xf32>
    %216 = arith.addf %211, %215 : vector<14x60xf32>
    %c7_240 = arith.constant 7 : index
    %c0_241 = arith.constant 0 : index
    %217 = vector.load %arg11[%c7_240, %c0_241] : memref<24x30xbf16, #tpu.memory_space<vmem>>, vector<14x30xbf16>
    %c7_242 = arith.constant 7 : index
    %c0_243 = arith.constant 0 : index
    %c0_244 = arith.constant 0 : index
    %218 = vector.load %arg7[%c7_242, %c0_243, %c0_244] : memref<11x30x60xbf16, #tpu.memory_space<vmem>>, vector<1x30x60xbf16>
    %219 = vector.shape_cast %218 : vector<1x30x60xbf16> to vector<30x60xbf16>
    %cst_245 = arith.constant dense<0.000000e+00> : vector<14x60xf32>
    %220 = tpu.matmul %217, %219, %cst_245 {dimension_numbers = #tpu.dot_dimension_numbers<[1], [0], [0], [1], [0, 0, 1, 1], [], []>} : vector<14x30xbf16>, vector<30x60xbf16>, vector<14x60xf32> -> vector<14x60xf32>
    %221 = arith.addf %216, %220 : vector<14x60xf32>
    %c8_246 = arith.constant 8 : index
    %c0_247 = arith.constant 0 : index
    %222 = vector.load %arg10[%c8_246, %c0_247] : memref<24x30xbf16, #tpu.memory_space<vmem>>, vector<14x30xbf16>
    %c8_248 = arith.constant 8 : index
    %c0_249 = arith.constant 0 : index
    %c0_250 = arith.constant 0 : index
    %223 = vector.load %arg6[%c8_248, %c0_249, %c0_250] : memref<11x30x60xbf16, #tpu.memory_space<vmem>>, vector<1x30x60xbf16>
    %224 = vector.shape_cast %223 : vector<1x30x60xbf16> to vector<30x60xbf16>
    %cst_251 = arith.constant dense<0.000000e+00> : vector<14x60xf32>
    %225 = tpu.matmul %222, %224, %cst_251 {dimension_numbers = #tpu.dot_dimension_numbers<[1], [0], [0], [1], [0, 0, 1, 1], [], []>} : vector<14x30xbf16>, vector<30x60xbf16>, vector<14x60xf32> -> vector<14x60xf32>
    %226 = arith.addf %221, %225 : vector<14x60xf32>
    %c8_252 = arith.constant 8 : index
    %c0_253 = arith.constant 0 : index
    %227 = vector.load %arg11[%c8_252, %c0_253] : memref<24x30xbf16, #tpu.memory_space<vmem>>, vector<14x30xbf16>
    %c8_254 = arith.constant 8 : index
    %c0_255 = arith.constant 0 : index
    %c0_256 = arith.constant 0 : index
    %228 = vector.load %arg7[%c8_254, %c0_255, %c0_256] : memref<11x30x60xbf16, #tpu.memory_space<vmem>>, vector<1x30x60xbf16>
    %229 = vector.shape_cast %228 : vector<1x30x60xbf16> to vector<30x60xbf16>
    %cst_257 = arith.constant dense<0.000000e+00> : vector<14x60xf32>
    %230 = tpu.matmul %227, %229, %cst_257 {dimension_numbers = #tpu.dot_dimension_numbers<[1], [0], [0], [1], [0, 0, 1, 1], [], []>} : vector<14x30xbf16>, vector<30x60xbf16>, vector<14x60xf32> -> vector<14x60xf32>
    %231 = arith.addf %226, %230 : vector<14x60xf32>
    %c9_258 = arith.constant 9 : index
    %c0_259 = arith.constant 0 : index
    %232 = vector.load %arg10[%c9_258, %c0_259] : memref<24x30xbf16, #tpu.memory_space<vmem>>, vector<14x30xbf16>
    %c9_260 = arith.constant 9 : index
    %c0_261 = arith.constant 0 : index
    %c0_262 = arith.constant 0 : index
    %233 = vector.load %arg6[%c9_260, %c0_261, %c0_262] : memref<11x30x60xbf16, #tpu.memory_space<vmem>>, vector<1x30x60xbf16>
    %234 = vector.shape_cast %233 : vector<1x30x60xbf16> to vector<30x60xbf16>
    %cst_263 = arith.constant dense<0.000000e+00> : vector<14x60xf32>
    %235 = tpu.matmul %232, %234, %cst_263 {dimension_numbers = #tpu.dot_dimension_numbers<[1], [0], [0], [1], [0, 0, 1, 1], [], []>} : vector<14x30xbf16>, vector<30x60xbf16>, vector<14x60xf32> -> vector<14x60xf32>
    %236 = arith.addf %231, %235 : vector<14x60xf32>
    %c9_264 = arith.constant 9 : index
    %c0_265 = arith.constant 0 : index
    %237 = vector.load %arg11[%c9_264, %c0_265] : memref<24x30xbf16, #tpu.memory_space<vmem>>, vector<14x30xbf16>
    %c9_266 = arith.constant 9 : index
    %c0_267 = arith.constant 0 : index
    %c0_268 = arith.constant 0 : index
    %238 = vector.load %arg7[%c9_266, %c0_267, %c0_268] : memref<11x30x60xbf16, #tpu.memory_space<vmem>>, vector<1x30x60xbf16>
    %239 = vector.shape_cast %238 : vector<1x30x60xbf16> to vector<30x60xbf16>
    %cst_269 = arith.constant dense<0.000000e+00> : vector<14x60xf32>
    %240 = tpu.matmul %237, %239, %cst_269 {dimension_numbers = #tpu.dot_dimension_numbers<[1], [0], [0], [1], [0, 0, 1, 1], [], []>} : vector<14x30xbf16>, vector<30x60xbf16>, vector<14x60xf32> -> vector<14x60xf32>
    %241 = arith.addf %236, %240 : vector<14x60xf32>
    %c10_270 = arith.constant 10 : index
    %c0_271 = arith.constant 0 : index
    %242 = vector.load %arg10[%c10_270, %c0_271] : memref<24x30xbf16, #tpu.memory_space<vmem>>, vector<14x30xbf16>
    %c10_272 = arith.constant 10 : index
    %c0_273 = arith.constant 0 : index
    %c0_274 = arith.constant 0 : index
    %243 = vector.load %arg6[%c10_272, %c0_273, %c0_274] : memref<11x30x60xbf16, #tpu.memory_space<vmem>>, vector<1x30x60xbf16>
    %244 = vector.shape_cast %243 : vector<1x30x60xbf16> to vector<30x60xbf16>
    %cst_275 = arith.constant dense<0.000000e+00> : vector<14x60xf32>
    %245 = tpu.matmul %242, %244, %cst_275 {dimension_numbers = #tpu.dot_dimension_numbers<[1], [0], [0], [1], [0, 0, 1, 1], [], []>} : vector<14x30xbf16>, vector<30x60xbf16>, vector<14x60xf32> -> vector<14x60xf32>
    %246 = arith.addf %241, %245 : vector<14x60xf32>
    %c10_276 = arith.constant 10 : index
    %c0_277 = arith.constant 0 : index
    %247 = vector.load %arg11[%c10_276, %c0_277] : memref<24x30xbf16, #tpu.memory_space<vmem>>, vector<14x30xbf16>
    %c10_278 = arith.constant 10 : index
    %c0_279 = arith.constant 0 : index
    %c0_280 = arith.constant 0 : index
    %248 = vector.load %arg7[%c10_278, %c0_279, %c0_280] : memref<11x30x60xbf16, #tpu.memory_space<vmem>>, vector<1x30x60xbf16>
    %249 = vector.shape_cast %248 : vector<1x30x60xbf16> to vector<30x60xbf16>
    %cst_281 = arith.constant dense<0.000000e+00> : vector<14x60xf32>
    %250 = tpu.matmul %247, %249, %cst_281 {dimension_numbers = #tpu.dot_dimension_numbers<[1], [0], [0], [1], [0, 0, 1, 1], [], []>} : vector<14x30xbf16>, vector<30x60xbf16>, vector<14x60xf32> -> vector<14x60xf32>
    %251 = arith.addf %246, %250 : vector<14x60xf32>
    %c0_282 = arith.constant 0 : index
    %c0_283 = arith.constant 0 : index
    %252 = vector.load %arg8[%c0_282, %c0_283] : memref<1x60xf32, #tpu.memory_space<vmem>>, vector<1x60xf32>
    %253 = vector.broadcast %252 : vector<1x60xf32> to vector<14x60xf32>
    %254 = arith.addf %251, %253 : vector<14x60xf32>
    %cst_284 = arith.constant 0.000000e+00 : f32
    %255 = vector.broadcast %cst_284 : f32 to vector<14x60xf32>
    %256 = arith.maximumf %254, %255 : vector<14x60xf32>
    %257 = arith.truncf %256 : vector<14x60xf32> to vector<14x60xbf16>
    %c0_285 = arith.constant 0 : index
    %c0_286 = arith.constant 0 : index
    %c0_287 = arith.constant 0 : index
    %258 = vector.load %arg9[%c0_285, %c0_286, %c0_287] : memref<1x14x60xbf16, #tpu.memory_space<vmem>>, vector<1x14x60xbf16>
    %259 = vector.shape_cast %258 : vector<1x14x60xbf16> to vector<14x60xbf16>
    %260 = vector.shape_cast %257 : vector<14x60xbf16> to vector<1x14x60xbf16>
    tpu.vector_store %arg9[%c0_285, %c0_286, %c0_287], %260 {strides = array<i32>} : memref<1x14x60xbf16, #tpu.memory_space<vmem>>, vector<1x14x60xbf16>,
    return
  }
  func.func @transform_0(%arg0: i32) -> (i32, i32, i32) {
    %c0_i32 = arith.constant 0 : i32
    %c0_i32_0 = arith.constant 0 : i32
    %c0_i32_1 = arith.constant 0 : i32
    return %arg0, %c0_i32, %c0_i32_0 : i32, i32, i32
  }
  func.func @transform_1(%arg0: i32) -> (i32, i32, i32) {
    %c0_i32 = arith.constant 0 : i32
    %c0_i32_0 = arith.constant 0 : i32
    %c0_i32_1 = arith.constant 0 : i32
    %c0_i32_2 = arith.constant 0 : i32
    return %c0_i32, %c0_i32_0, %c0_i32_1 : i32, i32, i32
  }
  func.func @transform_2(%arg0: i32) -> (i32, i32) {
    %c0_i32 = arith.constant 0 : i32
    %c0_i32_0 = arith.constant 0 : i32
    %c0_i32_1 = arith.constant 0 : i32
    return %c0_i32, %c0_i32_0 : i32, i32
  }
  func.func @transform_3(%arg0: i32) -> (i32, i32, i32) {
    %c0_i32 = arith.constant 0 : i32
    %c0_i32_0 = arith.constant 0 : i32
    %c0_i32_1 = arith.constant 0 : i32
    %c0_i32_2 = arith.constant 0 : i32
    return %c0_i32, %c0_i32_0, %c0_i32_1 : i32, i32, i32
  }
  func.func @transform_4(%arg0: i32) -> (i32, i32) {
    %c0_i32 = arith.constant 0 : i32
    %c0_i32_0 = arith.constant 0 : i32
    %c0_i32_1 = arith.constant 0 : i32
    return %c0_i32, %c0_i32_0 : i32, i32
  }
  func.func @transform_5(%arg0: i32) -> (i32, i32, i32) {
    %c0_i32 = arith.constant 0 : i32
    %c0_i32_0 = arith.constant 0 : i32
    %c0_i32_1 = arith.constant 0 : i32
    %c0_i32_2 = arith.constant 0 : i32
    return %c0_i32, %c0_i32_0, %c0_i32_1 : i32, i32, i32
  }
  func.func @transform_6(%arg0: i32) -> (i32, i32, i32) {
    %c0_i32 = arith.constant 0 : i32
    %c0_i32_0 = arith.constant 0 : i32
    %c0_i32_1 = arith.constant 0 : i32
    %c0_i32_2 = arith.constant 0 : i32
    return %c0_i32, %c0_i32_0, %c0_i32_1 : i32, i32, i32
  }
  func.func @transform_7(%arg0: i32) -> (i32, i32) {
    %c0_i32 = arith.constant 0 : i32
    %c0_i32_0 = arith.constant 0 : i32
    %c0_i32_1 = arith.constant 0 : i32
    return %c0_i32, %c0_i32_0 : i32, i32
  }
  func.func @transform_8(%arg0: i32) -> (i32, i32, i32) {
    %c0_i32 = arith.constant 0 : i32
    %c0_i32_0 = arith.constant 0 : i32
    %c0_i32_1 = arith.constant 0 : i32
    return %arg0, %c0_i32, %c0_i32_0 : i32, i32, i32
  }
}

module attributes {stable_mosaic.version = 11 : i64} {
  func.func @_head_kernel(%arg0: i32, %arg1: memref<2x7168xbf16, #tpu.memory_space<vmem>>, %arg2: memref<7168x256xbf16, #tpu.memory_space<vmem>>, %arg3: memref<1x256xf32, #tpu.memory_space<vmem>>, %arg4: memref<256x128xbf16, #tpu.memory_space<vmem>>, %arg5: memref<1x128xf32, #tpu.memory_space<vmem>>, %arg6: memref<2x840xbf16, #tpu.memory_space<vmem>>, %arg7: memref<840x128xbf16, #tpu.memory_space<vmem>>, %arg8: memref<1x128xf32, #tpu.memory_space<vmem>>, %arg9: memref<128x128xbf16, #tpu.memory_space<vmem>>, %arg10: memref<1x128xf32, #tpu.memory_space<vmem>>, %arg11: memref<128x128xbf16, #tpu.memory_space<vmem>>, %arg12: memref<128x128xbf16, #tpu.memory_space<vmem>>, %arg13: memref<1x128xf32, #tpu.memory_space<vmem>>, %arg14: memref<2x128xf32, #tpu.memory_space<vmem>>) attributes {dimension_semantics = [#tpu.dimension_semantics<arbitrary>], iteration_bounds = array<i64: 1>, scalar_prefetch = 0 : i64, scratch_operands = 0 : i64, tpu.core_type = #tpu.core_type<tc>, window_params = [{pipeline_mode = #tpu.pipeline_mode<synchronous>, transform_indices = @transform_0, window_bounds = array<i64: 2, 7168>}, {pipeline_mode = #tpu.pipeline_mode<synchronous>, transform_indices = @transform_1, window_bounds = array<i64: 7168, 256>}, {pipeline_mode = #tpu.pipeline_mode<synchronous>, transform_indices = @transform_2, window_bounds = array<i64: 1, 256>}, {pipeline_mode = #tpu.pipeline_mode<synchronous>, transform_indices = @transform_3, window_bounds = array<i64: 256, 128>}, {pipeline_mode = #tpu.pipeline_mode<synchronous>, transform_indices = @transform_4, window_bounds = array<i64: 1, 128>}, {pipeline_mode = #tpu.pipeline_mode<synchronous>, transform_indices = @transform_5, window_bounds = array<i64: 2, 840>}, {pipeline_mode = #tpu.pipeline_mode<synchronous>, transform_indices = @transform_6, window_bounds = array<i64: 840, 128>}, {pipeline_mode = #tpu.pipeline_mode<synchronous>, transform_indices = @transform_7, window_bounds = array<i64: 1, 128>}, {pipeline_mode = #tpu.pipeline_mode<synchronous>, transform_indices = @transform_8, window_bounds = array<i64: 128, 128>}, {pipeline_mode = #tpu.pipeline_mode<synchronous>, transform_indices = @transform_9, window_bounds = array<i64: 1, 128>}, {pipeline_mode = #tpu.pipeline_mode<synchronous>, transform_indices = @transform_10, window_bounds = array<i64: 128, 128>}, {pipeline_mode = #tpu.pipeline_mode<synchronous>, transform_indices = @transform_11, window_bounds = array<i64: 128, 128>}, {pipeline_mode = #tpu.pipeline_mode<synchronous>, transform_indices = @transform_12, window_bounds = array<i64: 1, 128>}, {pipeline_mode = #tpu.pipeline_mode<synchronous>, transform_indices = @transform_13, window_bounds = array<i64: 2, 128>}]} {
    %c0 = arith.constant 0 : index
    %c0_0 = arith.constant 0 : index
    %0 = vector.load %arg1[%c0, %c0_0] : memref<2x7168xbf16, #tpu.memory_space<vmem>>, vector<2x7168xbf16>
    %c0_1 = arith.constant 0 : index
    %c0_2 = arith.constant 0 : index
    %1 = vector.load %arg2[%c0_1, %c0_2] : memref<7168x256xbf16, #tpu.memory_space<vmem>>, vector<7168x256xbf16>
    %cst = arith.constant dense<0.000000e+00> : vector<2x256xf32>
    %2 = tpu.matmul %0, %1, %cst {dimension_numbers = #tpu.dot_dimension_numbers<[1], [0], [0], [1], [0, 0, 1, 1], [], []>} : vector<2x7168xbf16>, vector<7168x256xbf16>, vector<2x256xf32> -> vector<2x256xf32>
    %c0_3 = arith.constant 0 : index
    %c0_4 = arith.constant 0 : index
    %3 = vector.load %arg3[%c0_3, %c0_4] : memref<1x256xf32, #tpu.memory_space<vmem>>, vector<1x256xf32>
    %4 = vector.broadcast %3 : vector<1x256xf32> to vector<2x256xf32>
    %5 = arith.addf %2, %4 : vector<2x256xf32>
    %cst_5 = arith.constant 0.000000e+00 : f32
    %6 = vector.broadcast %cst_5 : f32 to vector<2x256xf32>
    %7 = arith.maximumf %5, %6 : vector<2x256xf32>
    %8 = arith.truncf %7 : vector<2x256xf32> to vector<2x256xbf16>
    %c0_6 = arith.constant 0 : index
    %c0_7 = arith.constant 0 : index
    %9 = vector.load %arg4[%c0_6, %c0_7] : memref<256x128xbf16, #tpu.memory_space<vmem>>, vector<256x128xbf16>
    %cst_8 = arith.constant dense<0.000000e+00> : vector<2x128xf32>
    %10 = tpu.matmul %8, %9, %cst_8 {dimension_numbers = #tpu.dot_dimension_numbers<[1], [0], [0], [1], [0, 0, 1, 1], [], []>} : vector<2x256xbf16>, vector<256x128xbf16>, vector<2x128xf32> -> vector<2x128xf32>
    %c0_9 = arith.constant 0 : index
    %c0_10 = arith.constant 0 : index
    %11 = vector.load %arg5[%c0_9, %c0_10] : memref<1x128xf32, #tpu.memory_space<vmem>>, vector<1x128xf32>
    %12 = vector.broadcast %11 : vector<1x128xf32> to vector<2x128xf32>
    %13 = arith.addf %10, %12 : vector<2x128xf32>
    %c0_11 = arith.constant 0 : index
    %c0_12 = arith.constant 0 : index
    %14 = vector.load %arg6[%c0_11, %c0_12] : memref<2x840xbf16, #tpu.memory_space<vmem>>, vector<2x840xbf16>
    %c0_13 = arith.constant 0 : index
    %c0_14 = arith.constant 0 : index
    %15 = vector.load %arg7[%c0_13, %c0_14] : memref<840x128xbf16, #tpu.memory_space<vmem>>, vector<840x128xbf16>
    %cst_15 = arith.constant dense<0.000000e+00> : vector<2x128xf32>
    %16 = tpu.matmul %14, %15, %cst_15 {dimension_numbers = #tpu.dot_dimension_numbers<[1], [0], [0], [1], [0, 0, 1, 1], [], []>} : vector<2x840xbf16>, vector<840x128xbf16>, vector<2x128xf32> -> vector<2x128xf32>
    %c0_16 = arith.constant 0 : index
    %c0_17 = arith.constant 0 : index
    %17 = vector.load %arg8[%c0_16, %c0_17] : memref<1x128xf32, #tpu.memory_space<vmem>>, vector<1x128xf32>
    %18 = vector.broadcast %17 : vector<1x128xf32> to vector<2x128xf32>
    %19 = arith.addf %16, %18 : vector<2x128xf32>
    %cst_18 = arith.constant 0.000000e+00 : f32
    %20 = vector.broadcast %cst_18 : f32 to vector<2x128xf32>
    %21 = arith.maximumf %19, %20 : vector<2x128xf32>
    %22 = arith.truncf %21 : vector<2x128xf32> to vector<2x128xbf16>
    %c0_19 = arith.constant 0 : index
    %c0_20 = arith.constant 0 : index
    %23 = vector.load %arg9[%c0_19, %c0_20] : memref<128x128xbf16, #tpu.memory_space<vmem>>, vector<128x128xbf16>
    %cst_21 = arith.constant dense<0.000000e+00> : vector<2x128xf32>
    %24 = tpu.matmul %22, %23, %cst_21 {dimension_numbers = #tpu.dot_dimension_numbers<[1], [0], [0], [1], [0, 0, 1, 1], [], []>} : vector<2x128xbf16>, vector<128x128xbf16>, vector<2x128xf32> -> vector<2x128xf32>
    %c0_22 = arith.constant 0 : index
    %c0_23 = arith.constant 0 : index
    %25 = vector.load %arg10[%c0_22, %c0_23] : memref<1x128xf32, #tpu.memory_space<vmem>>, vector<1x128xf32>
    %26 = vector.broadcast %25 : vector<1x128xf32> to vector<2x128xf32>
    %27 = arith.addf %24, %26 : vector<2x128xf32>
    %28 = arith.truncf %27 : vector<2x128xf32> to vector<2x128xbf16>
    %c0_24 = arith.constant 0 : index
    %c0_25 = arith.constant 0 : index
    %29 = vector.load %arg11[%c0_24, %c0_25] : memref<128x128xbf16, #tpu.memory_space<vmem>>, vector<128x128xbf16>
    %cst_26 = arith.constant dense<0.000000e+00> : vector<2x128xf32>
    %30 = tpu.matmul %28, %29, %cst_26 {dimension_numbers = #tpu.dot_dimension_numbers<[1], [0], [0], [1], [0, 0, 1, 1], [], []>} : vector<2x128xbf16>, vector<128x128xbf16>, vector<2x128xf32> -> vector<2x128xf32>
    %31 = arith.truncf %13 : vector<2x128xf32> to vector<2x128xbf16>
    %c0_27 = arith.constant 0 : index
    %c0_28 = arith.constant 0 : index
    %32 = vector.load %arg12[%c0_27, %c0_28] : memref<128x128xbf16, #tpu.memory_space<vmem>>, vector<128x128xbf16>
    %cst_29 = arith.constant dense<0.000000e+00> : vector<2x128xf32>
    %33 = tpu.matmul %31, %32, %cst_29 {dimension_numbers = #tpu.dot_dimension_numbers<[1], [0], [0], [1], [0, 0, 1, 1], [], []>} : vector<2x128xbf16>, vector<128x128xbf16>, vector<2x128xf32> -> vector<2x128xf32>
    %34 = arith.addf %30, %33 : vector<2x128xf32>
    %c0_30 = arith.constant 0 : index
    %c0_31 = arith.constant 0 : index
    %35 = vector.load %arg13[%c0_30, %c0_31] : memref<1x128xf32, #tpu.memory_space<vmem>>, vector<1x128xf32>
    %36 = vector.broadcast %35 : vector<1x128xf32> to vector<2x128xf32>
    %37 = arith.addf %34, %36 : vector<2x128xf32>
    %c0_32 = arith.constant 0 : index
    %c0_33 = arith.constant 0 : index
    %38 = vector.load %arg14[%c0_32, %c0_33] : memref<2x128xf32, #tpu.memory_space<vmem>>, vector<2x128xf32>
    tpu.vector_store %arg14[%c0_32, %c0_33], %37 {strides = array<i32>} : memref<2x128xf32, #tpu.memory_space<vmem>>, vector<2x128xf32>,
    return
  }
  func.func @transform_0(%arg0: i32) -> (i32, i32) {
    %c0_i32 = arith.constant 0 : i32
    %c0_i32_0 = arith.constant 0 : i32
    %c0_i32_1 = arith.constant 0 : i32
    return %c0_i32, %c0_i32_0 : i32, i32
  }
  func.func @transform_1(%arg0: i32) -> (i32, i32) {
    %c0_i32 = arith.constant 0 : i32
    %c0_i32_0 = arith.constant 0 : i32
    %c0_i32_1 = arith.constant 0 : i32
    return %c0_i32, %c0_i32_0 : i32, i32
  }
  func.func @transform_2(%arg0: i32) -> (i32, i32) {
    %c0_i32 = arith.constant 0 : i32
    %c0_i32_0 = arith.constant 0 : i32
    %c0_i32_1 = arith.constant 0 : i32
    return %c0_i32, %c0_i32_0 : i32, i32
  }
  func.func @transform_3(%arg0: i32) -> (i32, i32) {
    %c0_i32 = arith.constant 0 : i32
    %c0_i32_0 = arith.constant 0 : i32
    %c0_i32_1 = arith.constant 0 : i32
    return %c0_i32, %c0_i32_0 : i32, i32
  }
  func.func @transform_4(%arg0: i32) -> (i32, i32) {
    %c0_i32 = arith.constant 0 : i32
    %c0_i32_0 = arith.constant 0 : i32
    %c0_i32_1 = arith.constant 0 : i32
    return %c0_i32, %c0_i32_0 : i32, i32
  }
  func.func @transform_5(%arg0: i32) -> (i32, i32) {
    %c0_i32 = arith.constant 0 : i32
    %c0_i32_0 = arith.constant 0 : i32
    %c0_i32_1 = arith.constant 0 : i32
    return %c0_i32, %c0_i32_0 : i32, i32
  }
  func.func @transform_6(%arg0: i32) -> (i32, i32) {
    %c0_i32 = arith.constant 0 : i32
    %c0_i32_0 = arith.constant 0 : i32
    %c0_i32_1 = arith.constant 0 : i32
    return %c0_i32, %c0_i32_0 : i32, i32
  }
  func.func @transform_7(%arg0: i32) -> (i32, i32) {
    %c0_i32 = arith.constant 0 : i32
    %c0_i32_0 = arith.constant 0 : i32
    %c0_i32_1 = arith.constant 0 : i32
    return %c0_i32, %c0_i32_0 : i32, i32
  }
  func.func @transform_8(%arg0: i32) -> (i32, i32) {
    %c0_i32 = arith.constant 0 : i32
    %c0_i32_0 = arith.constant 0 : i32
    %c0_i32_1 = arith.constant 0 : i32
    return %c0_i32, %c0_i32_0 : i32, i32
  }
  func.func @transform_9(%arg0: i32) -> (i32, i32) {
    %c0_i32 = arith.constant 0 : i32
    %c0_i32_0 = arith.constant 0 : i32
    %c0_i32_1 = arith.constant 0 : i32
    return %c0_i32, %c0_i32_0 : i32, i32
  }
  func.func @transform_10(%arg0: i32) -> (i32, i32) {
    %c0_i32 = arith.constant 0 : i32
    %c0_i32_0 = arith.constant 0 : i32
    %c0_i32_1 = arith.constant 0 : i32
    return %c0_i32, %c0_i32_0 : i32, i32
  }
  func.func @transform_11(%arg0: i32) -> (i32, i32) {
    %c0_i32 = arith.constant 0 : i32
    %c0_i32_0 = arith.constant 0 : i32
    %c0_i32_1 = arith.constant 0 : i32
    return %c0_i32, %c0_i32_0 : i32, i32
  }
  func.func @transform_12(%arg0: i32) -> (i32, i32) {
    %c0_i32 = arith.constant 0 : i32
    %c0_i32_0 = arith.constant 0 : i32
    %c0_i32_1 = arith.constant 0 : i32
    return %c0_i32, %c0_i32_0 : i32, i32
  }
  func.func @transform_13(%arg0: i32) -> (i32, i32) {
    %c0_i32 = arith.constant 0 : i32
    %c0_i32_0 = arith.constant 0 : i32
    %c0_i32_1 = arith.constant 0 : i32
    return %c0_i32, %c0_i32_0 : i32, i32
  }
}

</mosaic_0001>

<llo_original>
// kernel: mdpr_forward.3
$region0: #{mdpr_forward.3}
  #allocation0 [shape = 'u32[]', space=smem, size = 0x4, offset = 0x4, fixed_abs, tag = 'smem constant byte address 0x4 - core index']
  #allocation1 [shape = 'u32[72,128]{1,0:T(1,128)}', space=vmem, size = 0x9000, scoped, tag = 'internal scratch']
  %s0 = inlined_call_operand.vmem [shape: bf16[224,221], index: 0, kind: input, shape index: {}]
  %s1 = inlined_call_operand.hbm [shape: bf16[221,128], index: 1, kind: input, shape index: {}]
  %s2 = inlined_call_operand.hbm [shape: f32[1,128], index: 2, kind: input, shape index: {}]
  %s3 = inlined_call_operand.vmem [shape: bf16[112,128], index: 3, kind: output, shape index: {}]
  %s4 = sld [smem:[#allocation0]]
  $region30: #{mdpr_forward.3} parent=0
    _
  %s6 = ssub.s32 1, %s4
  %s7 = scalar_select 0, %s6, %s4
  $region1: #{mdpr_forward.3} parent=0
    #allocation2 [shape = 'u8[57344]{0}', space=vmem, size = 0xe000, scoped, tag = 'input window, operand 1, single buffered']
    #allocation3 [shape = 's32[1]{0}', space=sflag, size = 0x4, scoped, tag = 'scoped memory for mdpr_forward.3']
    #allocation4 [shape = 'u8[512]{0}', space=vmem, size = 0x400, scoped, tag = 'input window, operand 2, single buffered']
    #allocation5 [shape = 's32[1]{0}', space=sflag, size = 0x4, scoped, tag = 'scoped memory for mdpr_forward.3']
    %8 = vsyncpa [#allocation3], 0
    %9 = vsyncpa [#allocation5], 0
    // Predicated region
    $region2: #{mdpr_forward.3} parent=1 // pred_check
      _
    $region3: #{mdpr_forward.3} parent=1 // pred_check_branch
      %11 = sbr.rel (0) target = $region5
    $region4: #{mdpr_forward.3} parent=1 // pred_region
      _
    $region5: #{mdpr_forward.3} parent=1 // pred_fallthru
      _
    // Predicated region
    $region6: #{mdpr_forward.3} parent=1 // pred_check
      _
    $region7: #{mdpr_forward.3} parent=1 // pred_check_branch
      %13 = sbr.rel (0) target = $region9
    $region8: #{mdpr_forward.3} parent=1 // pred_region
      %15 = vsyncadd [#allocation3], 0
      %s16 = sshll.u32 %s1, 4
      %s17 = int_to_ptr.hbm [resolvable:$true] %s16
      %s18 = sshll.u32 [#allocation2], 4
      %s19 = int_to_ptr.vmem [resolvable:$true] %s18
      %24 = dma.hbm_to_vmem [thread:$0]  %s17, 1792, %s19, [#allocation3], 64, 64, 4
    $region9: #{mdpr_forward.3} parent=1 // pred_fallthru
      _
    // Predicated region
    $region10: #{mdpr_forward.3} parent=1 // pred_check
      _
    $region11: #{mdpr_forward.3} parent=1 // pred_check_branch
      %26 = sbr.rel (0) target = $region13
    $region12: #{mdpr_forward.3} parent=1 // pred_region
      %28 = vsyncadd [#allocation5], 0
      %s30 = sshll.u32 %s2, 4
      %s31 = int_to_ptr.hbm [resolvable:$true] %s30
      %s32 = sshll.u32 [#allocation4], 4
      %s33 = int_to_ptr.vmem [resolvable:$true] %s32
      %35 = dma.hbm_to_vmem [thread:$0]  %s31, 16, %s33, [#allocation5]
    $region13: #{mdpr_forward.3} parent=1 // pred_fallthru
      _
    // Predicated region
    $region14: #{mdpr_forward.3} parent=1 // pred_check
      _
    $region15: #{mdpr_forward.3} parent=1 // pred_check_branch
      %37 = sbr.rel (0) target = $region17
    $region16: #{mdpr_forward.3} parent=1 // pred_region
      %39 = dma.done [#allocation3], 1792
    $region17: #{mdpr_forward.3} parent=1 // pred_fallthru
      _
    // Predicated region
    $region18: #{mdpr_forward.3} parent=1 // pred_check
      _
    $region19: #{mdpr_forward.3} parent=1 // pred_check_branch
      %41 = sbr.rel (0) target = $region21
    $region20: #{mdpr_forward.3} parent=1 // pred_region
      %43 = dma.done [#allocation5], 16
    $region21: #{mdpr_forward.3} parent=1 // pred_fallthru
      _
    %v45 = vld [vmem:[%s0] sm:$0xff]
    %v46 = vld [vmem:[%s0 + $0x8] sm:$0xff]
    %v47 = vld [vmem:[%s0 + $0x10] sm:$0xff]
    %v48 = vld [vmem:[%s0 + $0x18] sm:$0xff]
    %v49 = vld [vmem:[%s0 + $0x20] sm:$0xff]
    %v50 = vld [vmem:[%s0 + $0x28] sm:$0xff]
    %v51 = vld [vmem:[%s0 + $0x30] sm:$0xff]
    %v52 = vld [vmem:[%s0 + $0x38] sm:$0xff]
    %v53 = vld [vmem:[%s0 + $0x40] sm:$0xff]
    %v54 = vld [vmem:[%s0 + $0x48] sm:$0xff]
    %v55 = vld [vmem:[%s0 + $0x50] sm:$0xff]
    %v56 = vld [vmem:[%s0 + $0x58] sm:$0xff]
    %v57 = vld [vmem:[%s0 + $0x60] sm:$0xff]
    %v58 = vld [vmem:[%s0 + $0x68] sm:$0xff]
    %v59 = vld [vmem:[%s0 + $0x70] sm:$0xff]
    %v60 = vld [vmem:[%s0 + $0x78] sm:$0xff]
    %v61 = vld [vmem:[%s0 + $0x80] sm:$0xff]
    %v62 = vld [vmem:[%s0 + $0x88] sm:$0xff]
    %v63 = vld [vmem:[%s0 + $0x90] sm:$0xff]
    %v64 = vld [vmem:[%s0 + $0x98] sm:$0xff]
    %v65 = vld [vmem:[%s0 + $0xa0] sm:$0xff]
    %v66 = vld [vmem:[%s0 + $0xa8] sm:$0xff]
    %v67 = vld [vmem:[%s0 + $0xb0] sm:$0xff]
    %v68 = vld [vmem:[%s0 + $0xb8] sm:$0xff]
    %v69 = vld [vmem:[%s0 + $0xc0] sm:$0xff]
    %v70 = vld [vmem:[%s0 + $0xc8] sm:$0xff]
    %v71 = vld [vmem:[%s0 + $0xd0] sm:$0xff]
    %v72 = vld [vmem:[%s0 + $0xd8] sm:$0xff]
    %v73 = vld [vmem:[#allocation2] sm:$0xf]
    %v74 = vld [vmem:[#allocation2 + $0x4] sm:$0xf]
    %v75 = vld [vmem:[#allocation2 + $0x8] sm:$0xf]
    %v76 = vld [vmem:[#allocation2 + $0xc] sm:$0xf]
    %v77 = vld [vmem:[#allocation2 + $0x10] sm:$0xf]
    %v78 = vld [vmem:[#allocation2 + $0x14] sm:$0xf]
    %v79 = vld [vmem:[#allocation2 + $0x18] sm:$0xf]
    %v80 = vld [vmem:[#allocation2 + $0x1c] sm:$0xf]
    %v81 = vld [vmem:[#allocation2 + $0x20] sm:$0xf]
    %v82 = vld [vmem:[#allocation2 + $0x24] sm:$0xf]
    %v83 = vld [vmem:[#allocation2 + $0x28] sm:$0xf]
    %v84 = vld [vmem:[#allocation2 + $0x2c] sm:$0xf]
    %v85 = vld [vmem:[#allocation2 + $0x30] sm:$0xf]
    %v86 = vld [vmem:[#allocation2 + $0x34] sm:$0xf]
    %v87 = vld [vmem:[#allocation2 + $0x38] sm:$0xf]
    %v88 = vld [vmem:[#allocation2 + $0x3c] sm:$0xf]
    %v89 = vld [vmem:[#allocation2 + $0x40] sm:$0xf]
    %v90 = vld [vmem:[#allocation2 + $0x44] sm:$0xf]
    %v91 = vld [vmem:[#allocation2 + $0x48] sm:$0xf]
    %v92 = vld [vmem:[#allocation2 + $0x4c] sm:$0xf]
    %v93 = vld [vmem:[#allocation2 + $0x50] sm:$0xf]
    %v94 = vld [vmem:[#allocation2 + $0x54] sm:$0xf]
    %v95 = vld [vmem:[#allocation2 + $0x58] sm:$0xf]
    %v96 = vld [vmem:[#allocation2 + $0x5c] sm:$0xf]
    %v97 = vld [vmem:[#allocation2 + $0x60] sm:$0xf]
    %v98 = vld [vmem:[#allocation2 + $0x64] sm:$0xf]
    %v99 = vld [vmem:[#allocation2 + $0x68] sm:$0xf]
    %v100 = vld [vmem:[#allocation2 + $0x6c] sm:$0x7]
    %v101 = vld [vmem:[#allocation4] sm:$0x1]
    %v103 = vperm.slane %v101, 0
    %v133 = vunpack.c.l.b16 %v45
    %v134 = vunpack.c.h.b16 %v45
    %v135 = vunpack.c.l.b16 %v46
    %v136 = vunpack.c.h.b16 %v46
    %v137 = vunpack.c.l.b16 %v47
    %v138 = vunpack.c.h.b16 %v47
    %v139 = vunpack.c.l.b16 %v48
    %v140 = vunpack.c.h.b16 %v48
    %v141 = vunpack.c.l.b16 %v49
    %v142 = vunpack.c.h.b16 %v49
    %v143 = vunpack.c.l.b16 %v50
    %v144 = vunpack.c.h.b16 %v50
    %v145 = vunpack.c.l.b16 %v51
    %v146 = vunpack.c.h.b16 %v51
    %v147 = vunpack.c.l.b16 %v52
    %v148 = vunpack.c.h.b16 %v52
    %v149 = vunpack.c.l.b16 %v53
    %v150 = vunpack.c.h.b16 %v53
    %v151 = vunpack.c.l.b16 %v54
    %v152 = vunpack.c.h.b16 %v54
    %v153 = vunpack.c.l.b16 %v55
    %v154 = vunpack.c.h.b16 %v55
    %v155 = vunpack.c.l.b16 %v56
    %v156 = vunpack.c.h.b16 %v56
    %v157 = vunpack.c.l.b16 %v57
    %v158 = vunpack.c.h.b16 %v57
    %v159 = vunpack.c.l.b16 %v58
    %v160 = vunpack.c.h.b16 %v58
    %v161 = vunpack.c.l.b16 %v59
    %v162 = vunpack.c.h.b16 %v59
    %v163 = vunpack.c.l.b16 %v60
    %v164 = vunpack.c.h.b16 %v60
    %v165 = vunpack.c.l.b16 %v61
    %v166 = vunpack.c.h.b16 %v61
    %v167 = vunpack.c.l.b16 %v62
    %v168 = vunpack.c.h.b16 %v62
    %v169 = vunpack.c.l.b16 %v63
    %v170 = vunpack.c.h.b16 %v63
    %v171 = vunpack.c.l.b16 %v64
    %v172 = vunpack.c.h.b16 %v64
    %v173 = vunpack.c.l.b16 %v65
    %v174 = vunpack.c.h.b16 %v65
    %v175 = vunpack.c.l.b16 %v66
    %v176 = vunpack.c.h.b16 %v66
    %v177 = vunpack.c.l.b16 %v67
    %v178 = vunpack.c.h.b16 %v67
    %v179 = vunpack.c.l.b16 %v68
    %v180 = vunpack.c.h.b16 %v68
    %v181 = vunpack.c.l.b16 %v69
    %v182 = vunpack.c.h.b16 %v69
    %v183 = vunpack.c.l.b16 %v70
    %v184 = vunpack.c.h.b16 %v70
    %v185 = vunpack.c.l.b16 %v71
    %v186 = vunpack.c.h.b16 %v71
    %v187 = vunpack.c.l.b16 %v72
    %v188 = vunpack.c.h.b16 %v72
    %v189 = vpack.c.b16 %v135, %v133
    %v190 = vpack.c.b16 %v136, %v134
    %v191 = vpack.c.b16 %v139, %v137
    %v192 = vpack.c.b16 %v140, %v138
    %v193 = vpack.c.b16 %v143, %v141
    %v194 = vpack.c.b16 %v144, %v142
    %v195 = vpack.c.b16 %v147, %v145
    %v196 = vpack.c.b16 %v148, %v146
    %v197 = vpack.c.b16 %v151, %v149
    %v198 = vpack.c.b16 %v152, %v150
    %v199 = vpack.c.b16 %v155, %v153
    %v200 = vpack.c.b16 %v156, %v154
    %v201 = vpack.c.b16 %v159, %v157
    %v202 = vpack.c.b16 %v160, %v158
    %v203 = vpack.c.b16 %v163, %v161
    %v204 = vpack.c.b16 %v164, %v162
    %v205 = vpack.c.b16 %v167, %v165
    %v206 = vpack.c.b16 %v168, %v166
    %v207 = vpack.c.b16 %v171, %v169
    %v208 = vpack.c.b16 %v172, %v170
    %v209 = vpack.c.b16 %v175, %v173
    %v210 = vpack.c.b16 %v176, %v174
    %v211 = vpack.c.b16 %v179, %v177
    %v212 = vpack.c.b16 %v180, %v178
    %v213 = vpack.c.b16 %v183, %v181
    %v214 = vpack.c.b16 %v184, %v182
    %v215 = vpack.c.b16 %v187, %v185
    %v216 = vpack.c.b16 %v188, %v186
    %v259 = vunpack.c.l.b16 %v73
    %v260 = vunpack.c.l.b16 %v74
    %v261 = vunpack.c.l.b16 %v75
    %v262 = vunpack.c.l.b16 %v76
    %v263 = vunpack.c.l.b16 %v77
    %v264 = vunpack.c.l.b16 %v78
    %v265 = vunpack.c.l.b16 %v79
    %v266 = vunpack.c.l.b16 %v80
    %v267 = vunpack.c.l.b16 %v81
    %v268 = vunpack.c.l.b16 %v82
    %v269 = vunpack.c.l.b16 %v83
    %v270 = vunpack.c.l.b16 %v84
    %v271 = vunpack.c.l.b16 %v85
    %v272 = vunpack.c.l.b16 %v86
    %v273 = vunpack.c.l.b16 %v87
    %v274 = vunpack.c.l.b16 %v88
    %v275 = vunpack.c.l.b16 %v89
    %v276 = vunpack.c.l.b16 %v90
    %v277 = vunpack.c.l.b16 %v91
    %v278 = vunpack.c.l.b16 %v92
    %v279 = vunpack.c.l.b16 %v93
    %v280 = vunpack.c.l.b16 %v94
    %v281 = vunpack.c.l.b16 %v95
    %v282 = vunpack.c.l.b16 %v96
    %v283 = vunpack.c.l.b16 %v97
    %v284 = vunpack.c.l.b16 %v98
    %v285 = vunpack.c.l.b16 %v99
    %v286 = vunpack.c.l.b16 %v100
    %v287 = vpack.c.b16 %v260, %v259
    %v288 = vpack.c.b16 %v262, %v261
    %v289 = vpack.c.b16 %v264, %v263
    %v290 = vpack.c.b16 %v266, %v265
    %v291 = vpack.c.b16 %v268, %v267
    %v292 = vpack.c.b16 %v270, %v269
    %v293 = vpack.c.b16 %v272, %v271
    %v294 = vpack.c.b16 %v274, %v273
    %v295 = vpack.c.b16 %v276, %v275
    %v296 = vpack.c.b16 %v278, %v277
    %v297 = vpack.c.b16 %v280, %v279
    %v298 = vpack.c.b16 %v282, %v281
    %v299 = vpack.c.b16 %v284, %v283
    %v300 = vpack.c.b16 %v286, %v285
    %vm314 = vcmask 760832
    %v316 = vsel %vm314, %v190, 0
    %v319 = vsel %vm314, %v192, 0
    %v322 = vsel %vm314, %v194, 0
    %v325 = vsel %vm314, %v196, 0
    %v328 = vsel %vm314, %v198, 0
    %v331 = vsel %vm314, %v200, 0
    %v334 = vsel %vm314, %v202, 0
    %v337 = vsel %vm314, %v204, 0
    %v340 = vsel %vm314, %v206, 0
    %v343 = vsel %vm314, %v208, 0
    %v346 = vsel %vm314, %v210, 0
    %v349 = vsel %vm314, %v212, 0
    %v352 = vsel %vm314, %v214, 0
    %v355 = vsel %vm314, %v216, 0
    %vm357 = vcmask 1045504
    %vm358 = vcmask 1046528
    %v359 = vsel %vm357, 4294967295, 65535
    %v360 = vsel %vm358, %v359, 0
    %v362 = vand.u32 %v300, %v360
    %364 = vmatpush.bf16.msra.mxu0 %v294
    %365 = vmatpush.bf16.msra.mxu0 %v293
    %366 = vmatpush.bf16.msra.mxu0 %v292
    %367 = vmatpush.bf16.msra.mxu0 %v291
    %368 = vmatpush.bf16.msra.mxu0 %v290
    %369 = vmatpush.bf16.msra.mxu0 %v289
    %370 = vmatpush.bf16.msra.mxu0 %v288
    %371 = vmatpush.bf16.msra.mxu0 %v287
    %372 = vmatmul.bf16.gmra.mxu0 %v189
    %v373 = vpop.f32.mrf.mxu0
    %v374 = vadd.f32 %v103, %v373
    %v375 = vpop.f32.mrf.mxu0
    %v376 = vadd.f32 %v103, %v375
    %377 = vmatmul.bf16.gmra.mxu0 %v191
    %v378 = vpop.f32.mrf.mxu0
    %v379 = vadd.f32 %v103, %v378
    %v380 = vpop.f32.mrf.mxu0
    %v381 = vadd.f32 %v103, %v380
    %382 = vmatmul.bf16.gmra.mxu0 %v193
    %v383 = vpop.f32.mrf.mxu0
    %v384 = vadd.f32 %v103, %v383
    %v385 = vpop.f32.mrf.mxu0
    %v386 = vadd.f32 %v103, %v385
    %387 = vmatmul.bf16.gmra.mxu0 %v195
    %v388 = vpop.f32.mrf.mxu0
    %v389 = vadd.f32 %v103, %v388
    %v390 = vpop.f32.mrf.mxu0
    %v391 = vadd.f32 %v103, %v390
    %392 = vmatmul.bf16.gmra.mxu0 %v197
    %v393 = vpop.f32.mrf.mxu0
    %v394 = vadd.f32 %v103, %v393
    %v395 = vpop.f32.mrf.mxu0
    %v396 = vadd.f32 %v103, %v395
    %397 = vmatmul.bf16.gmra.mxu0 %v199
    %v398 = vpop.f32.mrf.mxu0
    %v399 = vadd.f32 %v103, %v398
    %v400 = vpop.f32.mrf.mxu0
    %v401 = vadd.f32 %v103, %v400
    %402 = vmatmul.bf16.gmra.mxu0 %v201
    %v403 = vpop.f32.mrf.mxu0
    %v404 = vadd.f32 %v103, %v403
    %v405 = vpop.f32.mrf.mxu0
    %v406 = vadd.f32 %v103, %v405
    %407 = vmatmul.bf16.gmra.mxu0 %v203
    %v408 = vpop.f32.mrf.mxu0
    %v409 = vadd.f32 %v103, %v408
    %v410 = vpop.f32.mrf.mxu0
    %v411 = vadd.f32 %v103, %v410
    %412 = vmatmul.bf16.gmra.mxu0 %v205
    %v413 = vpop.f32.mrf.mxu0
    %v414 = vadd.f32 %v103, %v413
    %v415 = vpop.f32.mrf.mxu0
    %v416 = vadd.f32 %v103, %v415
    %417 = vmatmul.bf16.gmra.mxu0 %v207
    %v418 = vpop.f32.mrf.mxu0
    %v419 = vadd.f32 %v103, %v418
    %v420 = vpop.f32.mrf.mxu0
    %v421 = vadd.f32 %v103, %v420
    %422 = vmatmul.bf16.gmra.mxu0 %v209
    %v423 = vpop.f32.mrf.mxu0
    %v424 = vadd.f32 %v103, %v423
    %v425 = vpop.f32.mrf.mxu0
    %v426 = vadd.f32 %v103, %v425
    %427 = vmatmul.bf16.gmra.mxu0 %v211
    %v428 = vpop.f32.mrf.mxu0
    %v429 = vadd.f32 %v103, %v428
    %v430 = vpop.f32.mrf.mxu0
    %v431 = vadd.f32 %v103, %v430
    %432 = vmatmul.bf16.gmra.mxu0 %v213
    %v433 = vpop.f32.mrf.mxu0
    %v434 = vadd.f32 %v103, %v433
    %v435 = vpop.f32.mrf.mxu0
    %v436 = vadd.f32 %v103, %v435
    %437 = vmatmul.bf16.gmra.mxu0 %v215
    %v438 = vpop.f32.mrf.mxu0
    %v439 = vadd.f32 %v103, %v438
    %v440 = vpop.f32.mrf.mxu0
    %v441 = vadd.f32 %v103, %v440
    %442 = vdwg.mxu0
    %443 = vmatpush.bf16.msra.mxu0 0
    %444 = vmatpush.bf16.msra.mxu0 0
    %445 = vmatpush.bf16.msra.mxu0 %v362
    %446 = vmatpush.bf16.msra.mxu0 %v299
    %447 = vmatpush.bf16.msra.mxu0 %v298
    %448 = vmatpush.bf16.msra.mxu0 %v297
    %449 = vmatpush.bf16.msra.mxu0 %v296
    %450 = vmatpush.bf16.msra.mxu0 %v295
    %451 = vmatmul.bf16.gmra.mxu0 %v316
    %v452 = vpop.f32.mrf.mxu0
    %v453 = vadd.f32 %v374, %v452
    %v454 = vpop.f32.mrf.mxu0
    %v455 = vadd.f32 %v376, %v454
    %456 = vmatmul.bf16.gmra.mxu0 %v319
    %v457 = vpop.f32.mrf.mxu0
    %v458 = vadd.f32 %v379, %v457
    %v459 = vpop.f32.mrf.mxu0
    %v460 = vadd.f32 %v381, %v459
    %461 = vmatmul.bf16.gmra.mxu0 %v322
    %v462 = vpop.f32.mrf.mxu0
    %v463 = vadd.f32 %v384, %v462
    %v464 = vpop.f32.mrf.mxu0
    %v465 = vadd.f32 %v386, %v464
    %466 = vmatmul.bf16.gmra.mxu0 %v325
    %v467 = vpop.f32.mrf.mxu0
    %v468 = vadd.f32 %v389, %v467
    %v469 = vpop.f32.mrf.mxu0
    %v470 = vadd.f32 %v391, %v469
    %471 = vmatmul.bf16.gmra.mxu0 %v328
    %v472 = vpop.f32.mrf.mxu0
    %v473 = vadd.f32 %v394, %v472
    %v474 = vpop.f32.mrf.mxu0
    %v475 = vadd.f32 %v396, %v474
    %476 = vmatmul.bf16.gmra.mxu0 %v331
    %v477 = vpop.f32.mrf.mxu0
    %v478 = vadd.f32 %v399, %v477
    %v479 = vpop.f32.mrf.mxu0
    %v480 = vadd.f32 %v401, %v479
    %481 = vmatmul.bf16.gmra.mxu0 %v334
    %v482 = vpop.f32.mrf.mxu0
    %v483 = vadd.f32 %v404, %v482
    %v484 = vpop.f32.mrf.mxu0
    %v485 = vadd.f32 %v406, %v484
    %486 = vmatmul.bf16.gmra.mxu0 %v337
    %v487 = vpop.f32.mrf.mxu0
    %v488 = vadd.f32 %v409, %v487
    %v489 = vpop.f32.mrf.mxu0
    %v490 = vadd.f32 %v411, %v489
    %491 = vmatmul.bf16.gmra.mxu0 %v340
    %v492 = vpop.f32.mrf.mxu0
    %v493 = vadd.f32 %v414, %v492
    %v494 = vpop.f32.mrf.mxu0
    %v495 = vadd.f32 %v416, %v494
    %496 = vmatmul.bf16.gmra.mxu0 %v343
    %v497 = vpop.f32.mrf.mxu0
    %v498 = vadd.f32 %v419, %v497
    %v499 = vpop.f32.mrf.mxu0
    %v500 = vadd.f32 %v421, %v499
    %501 = vmatmul.bf16.gmra.mxu0 %v346
    %v502 = vpop.f32.mrf.mxu0
    %v503 = vadd.f32 %v424, %v502
    %v504 = vpop.f32.mrf.mxu0
    %v505 = vadd.f32 %v426, %v504
    %506 = vmatmul.bf16.gmra.mxu0 %v349
    %v507 = vpop.f32.mrf.mxu0
    %v508 = vadd.f32 %v429, %v507
    %v509 = vpop.f32.mrf.mxu0
    %v510 = vadd.f32 %v431, %v509
    %511 = vmatmul.bf16.gmra.mxu0 %v352
    %v512 = vpop.f32.mrf.mxu0
    %v513 = vadd.f32 %v434, %v512
    %v514 = vpop.f32.mrf.mxu0
    %v515 = vadd.f32 %v436, %v514
    %516 = vmatmul.bf16.gmra.mxu0 %v355
    %v517 = vpop.f32.mrf.mxu0
    %v518 = vadd.f32 %v439, %v517
    %v519 = vpop.f32.mrf.mxu0
    %v520 = vadd.f32 %v441, %v519
    %521 = vdwg.mxu0
    %v522 = vmax.f32 %v453, 0.0
    %v523 = vmax.f32 %v455, 0.0
    %v524 = vmax.f32 %v458, 0.0
    %v525 = vmax.f32 %v460, 0.0
    %v526 = vmax.f32 %v463, 0.0
    %v527 = vmax.f32 %v465, 0.0
    %v528 = vmax.f32 %v468, 0.0
    %v529 = vmax.f32 %v470, 0.0
    %v530 = vmax.f32 %v473, 0.0
    %v531 = vmax.f32 %v475, 0.0
    %v532 = vmax.f32 %v478, 0.0
    %v533 = vmax.f32 %v480, 0.0
    %v534 = vmax.f32 %v483, 0.0
    %v535 = vmax.f32 %v485, 0.0
    %v536 = vmax.f32 %v488, 0.0
    %v537 = vmax.f32 %v490, 0.0
    %v538 = vmax.f32 %v493, 0.0
    %v539 = vmax.f32 %v495, 0.0
    %v540 = vmax.f32 %v498, 0.0
    %v541 = vmax.f32 %v500, 0.0
    %v542 = vmax.f32 %v503, 0.0
    %v543 = vmax.f32 %v505, 0.0
    %v544 = vmax.f32 %v508, 0.0
    %v545 = vmax.f32 %v510, 0.0
    %v546 = vmax.f32 %v513, 0.0
    %v547 = vmax.f32 %v515, 0.0
    %v548 = vmax.f32 %v518, 0.0
    %v549 = vmax.f32 %v520, 0.0
    %v550 = vmax.f32 %v522, %v536
    %v551 = vmax.f32 %v523, %v537
    %v552 = vmax.f32 %v524, %v538
    %v553 = vmax.f32 %v525, %v539
    %v554 = vmax.f32 %v526, %v540
    %v555 = vmax.f32 %v527, %v541
    %v556 = vmax.f32 %v528, %v542
    %v557 = vmax.f32 %v529, %v543
    %v558 = vmax.f32 %v530, %v544
    %v559 = vmax.f32 %v531, %v545
    %v560 = vmax.f32 %v532, %v546
    %v561 = vmax.f32 %v533, %v547
    %v562 = vmax.f32 %v534, %v548
    %v563 = vmax.f32 %v535, %v549
    %v564 = vpack.c.bf16 %v550, %v550
    %v565 = vpack.c.bf16 %v551, %v551
    %v566 = vpack.c.bf16 %v552, %v552
    %v567 = vpack.c.bf16 %v553, %v553
    %v568 = vpack.c.bf16 %v554, %v554
    %v569 = vpack.c.bf16 %v555, %v555
    %v570 = vpack.c.bf16 %v556, %v556
    %v571 = vpack.c.bf16 %v557, %v557
    %v572 = vpack.c.bf16 %v558, %v558
    %v573 = vpack.c.bf16 %v559, %v559
    %v574 = vpack.c.bf16 %v560, %v560
    %v575 = vpack.c.bf16 %v561, %v561
    %v576 = vpack.c.bf16 %v562, %v562
    %v577 = vpack.c.bf16 %v563, %v563
    %578 = vst [vmem:[%s3] sm:$0xf] %v564
    %579 = vst [vmem:[%s3 + $0x4] sm:$0xf] %v565
    %580 = vst [vmem:[%s3 + $0x8] sm:$0xf] %v566
    %581 = vst [vmem:[%s3 + $0xc] sm:$0xf] %v567
    %582 = vst [vmem:[%s3 + $0x10] sm:$0xf] %v568
    %583 = vst [vmem:[%s3 + $0x14] sm:$0xf] %v569
    %584 = vst [vmem:[%s3 + $0x18] sm:$0xf] %v570
    %585 = vst [vmem:[%s3 + $0x1c] sm:$0xf] %v571
    %586 = vst [vmem:[%s3 + $0x20] sm:$0xf] %v572
    %587 = vst [vmem:[%s3 + $0x24] sm:$0xf] %v573
    %588 = vst [vmem:[%s3 + $0x28] sm:$0xf] %v574
    %589 = vst [vmem:[%s3 + $0x2c] sm:$0xf] %v575
    %590 = vst [vmem:[%s3 + $0x30] sm:$0xf] %v576
    %591 = vst [vmem:[%s3 + $0x34] sm:$0xf] %v577
    // Predicated region
    $region22: #{mdpr_forward.3} parent=1 // pred_check
      _
    $region23: #{mdpr_forward.3} parent=1 // pred_check_branch
      %593 = sbr.rel (0) target = $region25
    $region24: #{mdpr_forward.3} parent=1 // pred_region
      _
    $region25: #{mdpr_forward.3} parent=1 // pred_fallthru
      _
    // Predicated region
    $region26: #{mdpr_forward.3} parent=1 // pred_check
      _
    $region27: #{mdpr_forward.3} parent=1 // pred_check_branch
      %595 = sbr.rel (0) target = $region29
    $region28: #{mdpr_forward.3} parent=1 // pred_region
      _
    $region29: #{mdpr_forward.3} parent=1 // pred_fallthru
      _
    %596 = vsyncpa [#allocation3], 1
    %597 = vsyncpa [#allocation5], 1

// kernel: mdpr_forward.4
$region0: #{mdpr_forward.4}
  #allocation0 [shape = 'u32[]', space=smem, size = 0x4, offset = 0x4, fixed_abs, tag = 'smem constant byte address 0x4 - core index']
  #allocation1 [shape = 'u32[72,128]{1,0:T(1,128)}', space=vmem, size = 0x9000, scoped, tag = 'internal scratch']
  #allocation2 [shape = 'bf16[24,30]{1,0:T(8,128)(2,1)}', space=vmem, size = 0x1800, scoped, tag = 'scratch operand']
  #allocation3 [shape = 'bf16[24,30]{1,0:T(8,128)(2,1)}', space=vmem, size = 0x1800, scoped, tag = 'scratch operand']
  %s0 = inlined_call_operand.vmem [shape: bf16[2,24,12], index: 0, kind: input, shape index: {}]
  %s1 = inlined_call_operand.hbm [shape: bf16[11,12,30], index: 1, kind: input, shape index: {}]
  %s2 = inlined_call_operand.hbm [shape: f32[1,30], index: 2, kind: input, shape index: {}]
  %s3 = inlined_call_operand.hbm [shape: bf16[11,30,30], index: 3, kind: input, shape index: {}]
  %s4 = inlined_call_operand.hbm [shape: f32[1,30], index: 4, kind: input, shape index: {}]
  %s5 = inlined_call_operand.hbm [shape: bf16[11,30,60], index: 5, kind: input, shape index: {}]
  %s6 = inlined_call_operand.hbm [shape: bf16[11,30,60], index: 6, kind: input, shape index: {}]
  %s7 = inlined_call_operand.hbm [shape: f32[1,60], index: 7, kind: input, shape index: {}]
  %s8 = inlined_call_operand.vmem [shape: bf16[2,14,60], index: 8, kind: output, shape index: {}]
  %s9 = sld [smem:[#allocation0]]
  $region93: #{mdpr_forward.4} parent=0
    _
  %s11 = ssub.s32 1, %s9
  %s12 = scalar_select 0, %s11, %s9
  $region1: #{mdpr_forward.4} parent=0
    #allocation4 [shape = 'u8[45056]{0}', space=vmem, size = 0xb000, scoped, tag = 'input window, operand 1, single buffered']
    #allocation5 [shape = 's32[2]{0}', space=sflag, size = 0x8, scoped, tag = 'scoped memory for mdpr_forward.4']
    #allocation6 [shape = 'u8[512]{0}', space=vmem, size = 0x400, scoped, tag = 'input window, operand 2, single buffered']
    #allocation7 [shape = 's32[1]{0}', space=sflag, size = 0x4, scoped, tag = 'scoped memory for mdpr_forward.4']
    #allocation8 [shape = 'u8[90112]{0}', space=vmem, size = 0x16000, scoped, tag = 'input window, operand 3, single buffered']
    #allocation9 [shape = 'u8[512]{0}', space=vmem, size = 0x400, scoped, tag = 'input window, operand 4, single buffered']
    #allocation10 [shape = 's32[1]{0}', space=sflag, size = 0x4, scoped, tag = 'scoped memory for mdpr_forward.4']
    #allocation11 [shape = 'u8[90112]{0}', space=vmem, size = 0x16000, scoped, tag = 'input window, operand 5, single buffered']
    #allocation12 [shape = 'u8[90112]{0}', space=vmem, size = 0x16000, scoped, tag = 'input window, operand 6, single buffered']
    #allocation13 [shape = 's32[1]{0}', space=sflag, size = 0x4, scoped, tag = 'scoped memory for mdpr_forward.4']
    #allocation14 [shape = 'u8[512]{0}', space=vmem, size = 0x400, scoped, tag = 'input window, operand 7, single buffered']
    %13 = vsyncpa [#allocation5], 0
    %14 = vsyncpa [#allocation7], 0
    %15 = vsyncpa [#allocation10], 0
    %16 = vsyncpa [#allocation13], 0
    loop: start=0, step=1, limit=4
    $region2: #{mdpr_forward.4} parent=1 // loop_pre_header
      _
    $region3: #{mdpr_forward.4} parent=1 // loop_header
      %s18 = sphi 0, %s22
      %p19 = scmp.ge.s32.totalorder %s18, 4
      %s28 = sphi 0, %s30
      %s31 = sphi 0, %s28
      %s32 = sphi 0, %s31
      %s48 = sphi 0, %s32
      %s52 = sphi 0, %s52
      %s54 = sphi 0, %s52
      %s55 = sphi 0, %s54
      %s69 = sphi 0, %s55
      %s73 = sphi 0, %s73
      %s75 = sphi 0, %s73
      %s76 = sphi 0, %s75
      %s90 = sphi 0, %s76
      %s94 = sphi 0, %s94
      %s96 = sphi 0, %s94
      %s97 = sphi 0, %s96
      %s111 = sphi 0, %s97
      %s115 = sphi 0, %s115
      %s117 = sphi 0, %s115
      %s118 = sphi 0, %s117
      %s132 = sphi 0, %s118
      %s136 = sphi 0, %s136
      %s138 = sphi 0, %s136
      %s139 = sphi 0, %s138
      %s153 = sphi 0, %s139
      %s157 = sphi 0, %s157
      %s159 = sphi 0, %s157
      %s160 = sphi 0, %s159
      %s174 = sphi 0, %s160
      %s178 = sphi 0, %s178
      %s180 = sphi 0, %s178
      %s181 = sphi 0, %s180
      %s195 = sphi 0, %s181
      %s201 = sphi 0, %s203
      %s204 = sphi 0, %s201
      %s205 = sphi 0, %s204
      %s221 = sphi 0, %s205
    $region4: #{mdpr_forward.4} parent=1 // loop_header_branch
      %21 = sbr.rel (%p19) target = $region8
    $region5: #{mdpr_forward.4} parent=1 // loop_body
      %s23 = ssub.s32 %s18, 1
      %s24 = ssub.s32 %s18, 2
      %s25 = sadd.s32 %s18, 1
      %s26 = ssub.s32 %s18, %s25
      %p27 = scmp.eq.s32.totalorder %s26, 0
      %s29 = sadd.s32 %s28, 1
      %s30 = scalar_select %p27, %s28, %s29
      %p33 = pneg %p27
      %p34 = scmp.eq.s32.totalorder %s18, 1
      %p35 = por %p33, %p34
      %p36 = scmp.ne.s32.totalorder %s28, %s31
      %p37 = scmp.eq.s32.totalorder %s18, 0
      %p38 = por %p36, %p37
      %p39 = scmp.ne.s32.totalorder %s28, %s31
      %p40 = scmp.eq.s32.totalorder %s23, 1
      %p41 = por %p39, %p40
      %p42 = scmp.ne.s32.totalorder %s31, %s32
      %p43 = scmp.eq.s32.totalorder %s23, 0
      %p44 = por %p42, %p43
      %p45 = scmp.ne.s32.totalorder %s31, %s32
      %p46 = scmp.eq.s32.totalorder %s24, 1
      %p47 = por %p45, %p46
      %p49 = scmp.ne.s32.totalorder %s32, %s48
      %p50 = scmp.eq.s32.totalorder %s24, 0
      %p51 = por %p49, %p50
      %s53 = sadd.s32 %s52, 1
      %p56 = scmp.eq.s32.totalorder %s18, 1
      %p57 = scmp.ne.s32.totalorder %s52, %s54
      %p58 = scmp.eq.s32.totalorder %s18, 0
      %p59 = por %p57, %p58
      %p60 = scmp.ne.s32.totalorder %s52, %s54
      %p61 = scmp.eq.s32.totalorder %s23, 1
      %p62 = por %p60, %p61
      %p63 = scmp.ne.s32.totalorder %s54, %s55
      %p64 = scmp.eq.s32.totalorder %s23, 0
      %p65 = por %p63, %p64
      %p66 = scmp.ne.s32.totalorder %s54, %s55
      %p67 = scmp.eq.s32.totalorder %s24, 1
      %p68 = por %p66, %p67
      %p70 = scmp.ne.s32.totalorder %s55, %s69
      %p71 = scmp.eq.s32.totalorder %s24, 0
      %p72 = por %p70, %p71
      %s74 = sadd.s32 %s73, 1
      %p77 = scmp.eq.s32.totalorder %s18, 1
      %p78 = scmp.ne.s32.totalorder %s73, %s75
      %p79 = scmp.eq.s32.totalorder %s18, 0
      %p80 = por %p78, %p79
      %p81 = scmp.ne.s32.totalorder %s73, %s75
      %p82 = scmp.eq.s32.totalorder %s23, 1
      %p83 = por %p81, %p82
      %p84 = scmp.ne.s32.totalorder %s75, %s76
      %p85 = scmp.eq.s32.totalorder %s23, 0
      %p86 = por %p84, %p85
      %p87 = scmp.ne.s32.totalorder %s75, %s76
      %p88 = scmp.eq.s32.totalorder %s24, 1
      %p89 = por %p87, %p88
      %p91 = scmp.ne.s32.totalorder %s76, %s90
      %p92 = scmp.eq.s32.totalorder %s24, 0
      %p93 = por %p91, %p92
      %s95 = sadd.s32 %s94, 1
      %p98 = scmp.eq.s32.totalorder %s18, 1
      %p99 = scmp.ne.s32.totalorder %s94, %s96
      %p100 = scmp.eq.s32.totalorder %s18, 0
      %p101 = por %p99, %p100
      %p102 = scmp.ne.s32.totalorder %s94, %s96
      %p103 = scmp.eq.s32.totalorder %s23, 1
      %p104 = por %p102, %p103
      %p105 = scmp.ne.s32.totalorder %s96, %s97
      %p106 = scmp.eq.s32.totalorder %s23, 0
      %p107 = por %p105, %p106
      %p108 = scmp.ne.s32.totalorder %s96, %s97
      %p109 = scmp.eq.s32.totalorder %s24, 1
      %p110 = por %p108, %p109
      %p112 = scmp.ne.s32.totalorder %s97, %s111
      %p113 = scmp.eq.s32.totalorder %s24, 0
      %p114 = por %p112, %p113
      %s116 = sadd.s32 %s115, 1
      %p119 = scmp.eq.s32.totalorder %s18, 1
      %p120 = scmp.ne.s32.totalorder %s115, %s117
      %p121 = scmp.eq.s32.totalorder %s18, 0
      %p122 = por %p120, %p121
      %p123 = scmp.ne.s32.totalorder %s115, %s117
      %p124 = scmp.eq.s32.totalorder %s23, 1
      %p125 = por %p123, %p124
      %p126 = scmp.ne.s32.totalorder %s117, %s118
      %p127 = scmp.eq.s32.totalorder %s23, 0
      %p128 = por %p126, %p127
      %p129 = scmp.ne.s32.totalorder %s117, %s118
      %p130 = scmp.eq.s32.totalorder %s24, 1
      %p131 = por %p129, %p130
      %p133 = scmp.ne.s32.totalorder %s118, %s132
      %p134 = scmp.eq.s32.totalorder %s24, 0
      %p135 = por %p133, %p134
      %s137 = sadd.s32 %s136, 1
      %p140 = scmp.eq.s32.totalorder %s18, 1
      %p141 = scmp.ne.s32.totalorder %s136, %s138
      %p142 = scmp.eq.s32.totalorder %s18, 0
      %p143 = por %p141, %p142
      %p144 = scmp.ne.s32.totalorder %s136, %s138
      %p145 = scmp.eq.s32.totalorder %s23, 1
      %p146 = por %p144, %p145
      %p147 = scmp.ne.s32.totalorder %s138, %s139
      %p148 = scmp.eq.s32.totalorder %s23, 0
      %p149 = por %p147, %p148
      %p150 = scmp.ne.s32.totalorder %s138, %s139
      %p151 = scmp.eq.s32.totalorder %s24, 1
      %p152 = por %p150, %p151
      %p154 = scmp.ne.s32.totalorder %s139, %s153
      %p155 = scmp.eq.s32.totalorder %s24, 0
      %p156 = por %p154, %p155
      %s158 = sadd.s32 %s157, 1
      %p161 = scmp.eq.s32.totalorder %s18, 1
      %p162 = scmp.ne.s32.totalorder %s157, %s159
      %p163 = scmp.eq.s32.totalorder %s18, 0
      %p164 = por %p162, %p163
      %p165 = scmp.ne.s32.totalorder %s157, %s159
      %p166 = scmp.eq.s32.totalorder %s23, 1
      %p167 = por %p165, %p166
      %p168 = scmp.ne.s32.totalorder %s159, %s160
      %p169 = scmp.eq.s32.totalorder %s23, 0
      %p170 = por %p168, %p169
      %p171 = scmp.ne.s32.totalorder %s159, %s160
      %p172 = scmp.eq.s32.totalorder %s24, 1
      %p173 = por %p171, %p172
      %p175 = scmp.ne.s32.totalorder %s160, %s174
      %p176 = scmp.eq.s32.totalorder %s24, 0
      %p177 = por %p175, %p176
      %s179 = sadd.s32 %s178, 1
      %p182 = scmp.eq.s32.totalorder %s18, 1
      %p183 = scmp.ne.s32.totalorder %s178, %s180
      %p184 = scmp.eq.s32.totalorder %s18, 0
      %p185 = por %p183, %p184
      %p186 = scmp.ne.s32.totalorder %s178, %s180
      %p187 = scmp.eq.s32.totalorder %s23, 1
      %p188 = por %p186, %p187
      %p189 = scmp.ne.s32.totalorder %s180, %s181
      %p190 = scmp.eq.s32.totalorder %s23, 0
      %p191 = por %p189, %p190
      %p192 = scmp.ne.s32.totalorder %s180, %s181
      %p193 = scmp.eq.s32.totalorder %s24, 1
      %p194 = por %p192, %p193
      %p196 = scmp.ne.s32.totalorder %s181, %s195
      %p197 = scmp.eq.s32.totalorder %s24, 0
      %p198 = por %p196, %p197
      %s199 = ssub.s32 %s18, %s25
      %p200 = scmp.eq.s32.totalorder %s199, 0
      %s202 = sadd.s32 %s201, 1
      %s203 = scalar_select %p200, %s201, %s202
      %p206 = pneg %p200
      %p207 = scmp.eq.s32.totalorder %s18, 1
      %p208 = por %p206, %p207
      %p209 = scmp.ne.s32.totalorder %s201, %s204
      %p210 = scmp.eq.s32.totalorder %s18, 0
      %p211 = por %p209, %p210
      %p212 = scmp.ne.s32.totalorder %s201, %s204
      %p213 = scmp.eq.s32.totalorder %s23, 1
      %p214 = por %p212, %p213
      %p215 = scmp.ne.s32.totalorder %s204, %s205
      %p216 = scmp.eq.s32.totalorder %s23, 0
      %p217 = por %p215, %p216
      %p218 = scmp.ne.s32.totalorder %s204, %s205
      %p219 = scmp.eq.s32.totalorder %s24, 1
      %p220 = por %p218, %p219
      %p222 = scmp.ne.s32.totalorder %s205, %s221
      %p223 = scmp.eq.s32.totalorder %s24, 0
      %p224 = por %p222, %p223
      %p225 = scmp.le.s32.totalorder 1, %s18
      %p226 = scmp.lt.s32.totalorder %s18, 3
      %p227 = pnand %p225, %p226
      %p228 = pneg %p227
      // Predicated region
      $region9: #{mdpr_forward.4} parent=5 // pred_check
        _
      $region10: #{mdpr_forward.4} parent=5 // pred_check_branch
        %230 = sbr.rel (%p227) target = $region12
      $region11: #{mdpr_forward.4} parent=5 // pred_region
        %s231 = ssub.s32 %s18, 1
        // Predicated region
        $region13: #{mdpr_forward.4} parent=11 // pred_check
          %p232 = pneg %p65
        $region14: #{mdpr_forward.4} parent=11 // pred_check_branch
          %234 = sbr.rel (%p232) target = $region16
        $region15: #{mdpr_forward.4} parent=11 // pred_region
          %236 = vsyncadd [#allocation5], 0
          %s237 = sshll.u32 %s1, 4
          %s238 = int_to_ptr.hbm [resolvable:$true] %s237
          %s239 = sshll.u32 [#allocation4], 4
          %s240 = int_to_ptr.vmem [resolvable:$true] %s239
          %245 = dma.hbm_to_vmem [thread:$0]  %s238, 1408, %s240, [#allocation5], 64, 64, 4
        $region16: #{mdpr_forward.4} parent=11 // pred_fallthru
          _
        // Predicated region
        $region17: #{mdpr_forward.4} parent=11 // pred_check
          %p246 = pneg %p86
        $region18: #{mdpr_forward.4} parent=11 // pred_check_branch
          %248 = sbr.rel (%p246) target = $region20
        $region19: #{mdpr_forward.4} parent=11 // pred_region
          %250 = vsyncadd [#allocation7], 0
          %s252 = sshll.u32 %s2, 4
          %s253 = int_to_ptr.hbm [resolvable:$true] %s252
          %s254 = sshll.u32 [#allocation6], 4
          %s255 = int_to_ptr.vmem [resolvable:$true] %s254
          %257 = dma.hbm_to_vmem [thread:$0]  %s253, 16, %s255, [#allocation7]
        $region20: #{mdpr_forward.4} parent=11 // pred_fallthru
          _
        // Predicated region
        $region21: #{mdpr_forward.4} parent=11 // pred_check
          %p258 = pneg %p107
        $region22: #{mdpr_forward.4} parent=11 // pred_check_branch
          %260 = sbr.rel (%p258) target = $region24
        $region23: #{mdpr_forward.4} parent=11 // pred_region
          %262 = vsyncadd [#allocation7], 0
          %s263 = sshll.u32 %s3, 4
          %s264 = int_to_ptr.hbm [resolvable:$true] %s263
          %s265 = sshll.u32 [#allocation8], 4
          %s266 = int_to_ptr.vmem [resolvable:$true] %s265
          %271 = dma.hbm_to_vmem [thread:$0]  %s264, 2816, %s266, [#allocation7], 64, 64, 4
        $region24: #{mdpr_forward.4} parent=11 // pred_fallthru
          _
        // Predicated region
        $region25: #{mdpr_forward.4} parent=11 // pred_check
          %p272 = pneg %p128
        $region26: #{mdpr_forward.4} parent=11 // pred_check_branch
          %274 = sbr.rel (%p272) target = $region28
        $region27: #{mdpr_forward.4} parent=11 // pred_region
          %276 = vsyncadd [#allocation10], 0
          %s278 = sshll.u32 %s4, 4
          %s279 = int_to_ptr.hbm [resolvable:$true] %s278
          %s280 = sshll.u32 [#allocation9], 4
          %s281 = int_to_ptr.vmem [resolvable:$true] %s280
          %283 = dma.hbm_to_vmem [thread:$0]  %s279, 16, %s281, [#allocation10]
        $region28: #{mdpr_forward.4} parent=11 // pred_fallthru
          _
        // Predicated region
        $region29: #{mdpr_forward.4} parent=11 // pred_check
          %p284 = pneg %p149
        $region30: #{mdpr_forward.4} parent=11 // pred_check_branch
          %286 = sbr.rel (%p284) target = $region32
        $region31: #{mdpr_forward.4} parent=11 // pred_region
          %288 = vsyncadd [#allocation10], 0
          %s289 = sshll.u32 %s5, 4
          %s290 = int_to_ptr.hbm [resolvable:$true] %s289
          %s291 = sshll.u32 [#allocation11], 4
          %s292 = int_to_ptr.vmem [resolvable:$true] %s291
          %297 = dma.hbm_to_vmem [thread:$0]  %s290, 2816, %s292, [#allocation10], 64, 64, 4
        $region32: #{mdpr_forward.4} parent=11 // pred_fallthru
          _
        // Predicated region
        $region33: #{mdpr_forward.4} parent=11 // pred_check
          %p298 = pneg %p170
        $region34: #{mdpr_forward.4} parent=11 // pred_check_branch
          %300 = sbr.rel (%p298) target = $region36
        $region35: #{mdpr_forward.4} parent=11 // pred_region
          %302 = vsyncadd [#allocation13], 0
          %s303 = sshll.u32 %s6, 4
          %s304 = int_to_ptr.hbm [resolvable:$true] %s303
          %s305 = sshll.u32 [#allocation12], 4
          %s306 = int_to_ptr.vmem [resolvable:$true] %s305
          %311 = dma.hbm_to_vmem [thread:$0]  %s304, 2816, %s306, [#allocation13], 64, 64, 4
        $region36: #{mdpr_forward.4} parent=11 // pred_fallthru
          _
        // Predicated region
        $region37: #{mdpr_forward.4} parent=11 // pred_check
          %p312 = pneg %p191
        $region38: #{mdpr_forward.4} parent=11 // pred_check_branch
          %314 = sbr.rel (%p312) target = $region40
        $region39: #{mdpr_forward.4} parent=11 // pred_region
          %316 = vsyncadd [#allocation13], 0
          %s318 = sshll.u32 %s7, 4
          %s319 = int_to_ptr.hbm [resolvable:$true] %s318
          %s320 = sshll.u32 [#allocation14], 4
          %s321 = int_to_ptr.vmem [resolvable:$true] %s320
          %323 = dma.hbm_to_vmem [thread:$0]  %s319, 16, %s321, [#allocation13]
        $region40: #{mdpr_forward.4} parent=11 // pred_fallthru
          _
      $region12: #{mdpr_forward.4} parent=5 // pred_fallthru
        _
      %p324 = scmp.lt.s32.totalorder %s18, 2
      // Predicated region
      $region41: #{mdpr_forward.4} parent=5 // pred_check
        %p325 = pneg %p324
      $region42: #{mdpr_forward.4} parent=5 // pred_check_branch
        %327 = sbr.rel (%p325) target = $region44
      $region43: #{mdpr_forward.4} parent=5 // pred_region
        // Predicated region
        $region45: #{mdpr_forward.4} parent=43 // pred_check
          %p328 = pneg %p38
        $region46: #{mdpr_forward.4} parent=43 // pred_check_branch
          %330 = sbr.rel (%p328) target = $region48
        $region47: #{mdpr_forward.4} parent=43 // pred_region
          %p331 = scmp.lt.s32.totalorder %s18, 1
          %s332 = scalar_select %p331, %s18, 1
          %s333 = smul.addr %s332, 3
          %s334 = smul.addr %s333, 4
          %s335 = scalar_lea.vmem %s0, %s334
        $region48: #{mdpr_forward.4} parent=43 // pred_fallthru
          _
      $region44: #{mdpr_forward.4} parent=5 // pred_fallthru
        _
      %p336 = scmp.le.s32.totalorder 1, %s18
      %p337 = scmp.lt.s32.totalorder %s18, 3
      %p338 = pnand %p336, %p337
      %p339 = pneg %p338
      // Predicated region
      $region49: #{mdpr_forward.4} parent=5 // pred_check
        _
      $region50: #{mdpr_forward.4} parent=5 // pred_check_branch
        %341 = sbr.rel (%p338) target = $region52
      $region51: #{mdpr_forward.4} parent=5 // pred_region
        %s342 = ssub.s32 %s18, 1
        // Predicated region
        $region53: #{mdpr_forward.4} parent=51 // pred_check
          %p343 = pneg %p65
        $region54: #{mdpr_forward.4} parent=51 // pred_check_branch
          %345 = sbr.rel (%p343) target = $region56
        $region55: #{mdpr_forward.4} parent=51 // pred_region
          %347 = dma.done [#allocation5], 1408
        $region56: #{mdpr_forward.4} parent=51 // pred_fallthru
          _
        // Predicated region
        $region57: #{mdpr_forward.4} parent=51 // pred_check
          %p348 = pneg %p86
        $region58: #{mdpr_forward.4} parent=51 // pred_check_branch
          %350 = sbr.rel (%p348) target = $region60
        $region59: #{mdpr_forward.4} parent=51 // pred_region
          %352 = dma.done [#allocation7], 16
        $region60: #{mdpr_forward.4} parent=51 // pred_fallthru
          _
        // Predicated region
        $region61: #{mdpr_forward.4} parent=51 // pred_check
          %p353 = pneg %p107
        $region62: #{mdpr_forward.4} parent=51 // pred_check_branch
          %355 = sbr.rel (%p353) target = $region64
        $region63: #{mdpr_forward.4} parent=51 // pred_region
          %357 = dma.done [#allocation7], 2816
        $region64: #{mdpr_forward.4} parent=51 // pred_fallthru
          _
        // Predicated region
        $region65: #{mdpr_forward.4} parent=51 // pred_check
          %p358 = pneg %p128
        $region66: #{mdpr_forward.4} parent=51 // pred_check_branch
          %360 = sbr.rel (%p358) target = $region68
        $region67: #{mdpr_forward.4} parent=51 // pred_region
          %362 = dma.done [#allocation10], 16
        $region68: #{mdpr_forward.4} parent=51 // pred_fallthru
          _
        // Predicated region
        $region69: #{mdpr_forward.4} parent=51 // pred_check
          %p363 = pneg %p149
        $region70: #{mdpr_forward.4} parent=51 // pred_check_branch
          %365 = sbr.rel (%p363) target = $region72
        $region71: #{mdpr_forward.4} parent=51 // pred_region
          %367 = dma.done [#allocation10], 2816
        $region72: #{mdpr_forward.4} parent=51 // pred_fallthru
          _
        // Predicated region
        $region73: #{mdpr_forward.4} parent=51 // pred_check
          %p368 = pneg %p170
        $region74: #{mdpr_forward.4} parent=51 // pred_check_branch
          %370 = sbr.rel (%p368) target = $region76
        $region75: #{mdpr_forward.4} parent=51 // pred_region
          %372 = dma.done [#allocation13], 2816
        $region76: #{mdpr_forward.4} parent=51 // pred_fallthru
          _
        // Predicated region
        $region77: #{mdpr_forward.4} parent=51 // pred_check
          %p373 = pneg %p191
        $region78: #{mdpr_forward.4} parent=51 // pred_check_branch
          %375 = sbr.rel (%p373) target = $region80
        $region79: #{mdpr_forward.4} parent=51 // pred_region
          %377 = dma.done [#allocation13], 16
        $region80: #{mdpr_forward.4} parent=51 // pred_fallthru
          _
        %p378 = scmp.lt.s32.totalorder %s23, 1
        %s379 = scalar_select %p378, %s23, 1
        %s380 = smul.addr %s379, 3
        %s381 = smul.addr %s380, 4
        %s382 = scalar_lea.vmem %s0, %s381
        %p383 = pneg %p44
        %p384 = pneg %p41
        %p385 = pneg %p65
        %p386 = pneg %p62
        %p387 = pneg %p86
        %p388 = pneg %p83
        %p389 = pneg %p107
        %p390 = pneg %p104
        %p391 = pneg %p128
        %p392 = pneg %p125
        %p393 = pneg %p149
        %p394 = pneg %p146
        %p395 = pneg %p170
        %p396 = pneg %p167
        %p397 = pneg %p191
        %p398 = pneg %p188
        %p399 = pneg %p217
        %p400 = pneg %p214
        %p401 = scmp.lt.s32.totalorder %s23, 1
        %s402 = scalar_select %p401, %s23, 1
        %s403 = smul.addr %s402, 2
        %s404 = smul.addr %s403, 4
        %s405 = scalar_lea.vmem %s8, %s404
        %p406 = scmp.lt.s32.totalorder %s23, 1
        %s407 = scalar_select %p406, %s23, 1
        %s408 = smul.addr %s407, 3
        %s409 = smul.addr %s408, 4
        %s410 = scalar_lea.vmem %s0, %s409
        %p411 = scmp.lt.s32.totalorder %s23, 1
        %s412 = scalar_select %p411, %s23, 1
        %s413 = smul.addr %s412, 2
        %s414 = smul.addr %s413, 4
        %s415 = scalar_lea.vmem %s8, %s414
        %v417 = vld [vmem:[%s410] sm:$0xf]
        %v418 = vld [vmem:[%s410 + $0x4] sm:$0x7]
        %v419 = vld [vmem:[#allocation4] sm:$0xf]
        %v420 = vld [vmem:[#allocation4 + $0x4] sm:$0x3]
        %v421 = vld [vmem:[%s410 + $0x4] sm:$0xf]
        %s422 = scalar_lea.vmem [#allocation4], 8
        %v423 = vld [vmem:[%s422] sm:$0xf]
        %v424 = vld [vmem:[%s422 + $0x4] sm:$0x3]
        %v427 = vunpack.c.l.b16 %v417
        %v428 = vunpack.c.l.b16 %v421
        %v429 = vpack.c.b16 %v428, %v427
        %v431 = vshrl.u32 %v429, 16
        %v433 = vshll.u32 %v429, 16
        %v435 = vrot.slane %v433, 1
        %v436 = vor.u32 %v431, %v435
        %v439 = vunpack.c.l.b16 %v423
        %v440 = vunpack.c.l.b16 %v424
        %v441 = vpack.c.b16 %v440, %v439
        %vm442 = vcmask 97280
        %v444 = vsel %vm442, %v436, 0
        %vm446 = vcmask 1045504
        %v448 = vsel %vm446, %v441, 0
        %450 = vmatpush.bf16.msra.mxu0 0
        %451 = vmatpush.bf16.msra.mxu0 0
        %452 = vmatpush.bf16.msra.mxu0 0
        %453 = vmatpush.bf16.msra.mxu0 0
        %454 = vmatpush.bf16.msra.mxu0 0
        %455 = vmatpush.bf16.msra.mxu0 0
        %456 = vmatpush.bf16.msra.mxu0 0
        %457 = vmatpush.bf16.msra.mxu0 %v448
        %458 = vmatmul.bf16.gmra.mxu0 %v444
        %v459 = vpop.f32.mrf.mxu0
        %v460 = vadd.f32 0.0, %v459
        %v461 = vpop.f32.mrf.mxu0
        %v462 = vadd.f32 0.0, %v461
        %463 = vdwg.mxu0
        %v465 = vunpack.c.l.b16 %v418
        %v466 = vpack.c.b16 %v465, %v427
        %v469 = vunpack.c.l.b16 %v419
        %v470 = vunpack.c.l.b16 %v420
        %v471 = vpack.c.b16 %v470, %v469
        %v473 = vsel %vm442, %v466, 0
        %v476 = vsel %vm446, %v471, 0
        %478 = vmatpush.bf16.msra.mxu0 0
        %479 = vmatpush.bf16.msra.mxu0 0
        %480 = vmatpush.bf16.msra.mxu0 0
        %481 = vmatpush.bf16.msra.mxu0 0
        %482 = vmatpush.bf16.msra.mxu0 0
        %483 = vmatpush.bf16.msra.mxu0 0
        %484 = vmatpush.bf16.msra.mxu0 0
        %485 = vmatpush.bf16.msra.mxu0 %v476
        %486 = vmatmul.bf16.gmra.mxu0 %v473
        %v487 = vpop.f32.mrf.mxu0
        %v488 = vadd.f32 %v460, %v487
        %v489 = vpop.f32.mrf.mxu0
        %v490 = vadd.f32 %v462, %v489
        %491 = vdwg.mxu0
        %v492 = vld [vmem:[%s410] sm:$0xe]
        %s493 = scalar_lea.vmem [#allocation4], 16
        %v494 = vld [vmem:[%s493] sm:$0xf]
        %v495 = vld [vmem:[%s493 + $0x4] sm:$0x3]
        %v497 = vunpack.c.l.b16 %v492
        %v498 = vpack.c.b16 %v428, %v497
        %v499 = vrot.slane %v498, 1
        %v502 = vunpack.c.l.b16 %v494
        %v503 = vunpack.c.l.b16 %v495
        %v504 = vpack.c.b16 %v503, %v502
        %v506 = vsel %vm442, %v499, 0
        %v509 = vsel %vm446, %v504, 0
        %511 = vmatpush.bf16.msra.mxu0 0
        %512 = vmatpush.bf16.msra.mxu0 0
        %513 = vmatpush.bf16.msra.mxu0 0
        %514 = vmatpush.bf16.msra.mxu0 0
        %515 = vmatpush.bf16.msra.mxu0 0
        %516 = vmatpush.bf16.msra.mxu0 0
        %517 = vmatpush.bf16.msra.mxu0 0
        %518 = vmatpush.bf16.msra.mxu0 %v509
        %519 = vmatmul.bf16.gmra.mxu0 %v506
        %v520 = vpop.f32.mrf.mxu0
        %v521 = vadd.f32 0.0, %v520
        %v522 = vpop.f32.mrf.mxu0
        %v523 = vadd.f32 0.0, %v522
        %524 = vdwg.mxu0
        %v525 = vadd.f32 %v488, %v521
        %v526 = vadd.f32 %v490, %v523
        %v527 = vld [vmem:[%s410] sm:$0xe]
        %v528 = vld [vmem:[%s410 + $0x4] sm:$0xf]
        %v529 = vld [vmem:[%s410 + $0x8] sm:$0x1]
        %s530 = scalar_lea.vmem [#allocation4], 24
        %v531 = vld [vmem:[%s530] sm:$0xf]
        %v532 = vld [vmem:[%s530 + $0x4] sm:$0x3]
        %v536 = vunpack.c.l.b16 %v527
        %v537 = vunpack.c.l.b16 %v528
        %v538 = vunpack.c.l.b16 %v529
        %v539 = vpack.c.b16 %v537, %v536
        %v540 = vpack.c.b16 %v538, %v538
        %vm541 = vsmask.f32 6400
        %v543 = vshrl.u32 %v539, 16
        %v545 = vrot.slane %v543, 1
        %v546 = vshll.u32 %v539, 16
        %v548 = vrot.slane %v546, 2
        %v549 = vor.u32 %v545, %v548
        %v551 = vshll.u32 %v540, 16
        %v553 = vrot.slane %v551, 2
        %v554 = vsel %vm541, %v549, %v553
        %v557 = vunpack.c.l.b16 %v531
        %v558 = vunpack.c.l.b16 %v532
        %v559 = vpack.c.b16 %v558, %v557
        %v561 = vsel %vm442, %v554, 0
        %v564 = vsel %vm446, %v559, 0
        %566 = vmatpush.bf16.msra.mxu0 0
        %567 = vmatpush.bf16.msra.mxu0 0
        %568 = vmatpush.bf16.msra.mxu0 0
        %569 = vmatpush.bf16.msra.mxu0 0
        %570 = vmatpush.bf16.msra.mxu0 0
        %571 = vmatpush.bf16.msra.mxu0 0
        %572 = vmatpush.bf16.msra.mxu0 0
        %573 = vmatpush.bf16.msra.mxu0 %v564
        %574 = vmatmul.bf16.gmra.mxu0 %v561
        %v575 = vpop.f32.mrf.mxu0
        %v576 = vadd.f32 0.0, %v575
        %v577 = vpop.f32.mrf.mxu0
        %v578 = vadd.f32 0.0, %v577
        %579 = vdwg.mxu0
        %v580 = vadd.f32 %v525, %v576
        %v581 = vadd.f32 %v526, %v578
        %v582 = vld [vmem:[%s410] sm:$0xc]
        %s583 = scalar_lea.vmem [#allocation4], 32
        %v584 = vld [vmem:[%s583] sm:$0xf]
        %v585 = vld [vmem:[%s583 + $0x4] sm:$0x3]
        %v587 = vunpack.c.l.b16 %v582
        %v588 = vpack.c.b16 %v537, %v587
        %vm589 = vcmask 1045504
        %v590 = vrot.slane %v588, 2
        %v591 = vrot.slane %v540, 2
        %v592 = vsel %vm589, %v590, %v591
        %v595 = vunpack.c.l.b16 %v584
        %v596 = vunpack.c.l.b16 %v585
        %v597 = vpack.c.b16 %v596, %v595
        %v599 = vsel %vm442, %v592, 0
        %v602 = vsel %vm446, %v597, 0
        %604 = vmatpush.bf16.msra.mxu0 0
        %605 = vmatpush.bf16.msra.mxu0 0
        %606 = vmatpush.bf16.msra.mxu0 0
        %607 = vmatpush.bf16.msra.mxu0 0
        %608 = vmatpush.bf16.msra.mxu0 0
        %609 = vmatpush.bf16.msra.mxu0 0
        %610 = vmatpush.bf16.msra.mxu0 0
        %611 = vmatpush.bf16.msra.mxu0 %v602
        %612 = vmatmul.bf16.gmra.mxu0 %v599
        %v613 = vpop.f32.mrf.mxu0
        %v614 = vadd.f32 0.0, %v613
        %v615 = vpop.f32.mrf.mxu0
        %v616 = vadd.f32 0.0, %v615
        %617 = vdwg.mxu0
        %v618 = vadd.f32 %v580, %v614
        %v619 = vadd.f32 %v581, %v616
        %v620 = vld [vmem:[%s410 + $0x8] sm:$0x3]
        %s621 = scalar_lea.vmem [#allocation4], 40
        %v622 = vld [vmem:[%s621] sm:$0xf]
        %v623 = vld [vmem:[%s621 + $0x4] sm:$0x3]
        %v625 = vunpack.c.l.b16 %v620
        %v626 = vpack.c.b16 %v625, %v625
        %vm627 = vsmask.f32 5376
        %v629 = vshrl.u32 %v588, 16
        %v631 = vrot.slane %v629, 2
        %v632 = vshll.u32 %v588, 16
        %v634 = vrot.slane %v632, 3
        %v635 = vor.u32 %v631, %v634
        %v637 = vshrl.u32 %v626, 16
        %v639 = vrot.slane %v637, 2
        %v640 = vshll.u32 %v626, 16
        %v642 = vrot.slane %v640, 3
        %v643 = vor.u32 %v639, %v642
        %v644 = vsel %vm627, %v635, %v643
        %v647 = vunpack.c.l.b16 %v622
        %v648 = vunpack.c.l.b16 %v623
        %v649 = vpack.c.b16 %v648, %v647
        %v651 = vsel %vm442, %v644, 0
        %v654 = vsel %vm446, %v649, 0
        %656 = vmatpush.bf16.msra.mxu0 0
        %657 = vmatpush.bf16.msra.mxu0 0
        %658 = vmatpush.bf16.msra.mxu0 0
        %659 = vmatpush.bf16.msra.mxu0 0
        %660 = vmatpush.bf16.msra.mxu0 0
        %661 = vmatpush.bf16.msra.mxu0 0
        %662 = vmatpush.bf16.msra.mxu0 0
        %663 = vmatpush.bf16.msra.mxu0 %v654
        %664 = vmatmul.bf16.gmra.mxu0 %v651
        %v665 = vpop.f32.mrf.mxu0
        %v666 = vadd.f32 0.0, %v665
        %v667 = vpop.f32.mrf.mxu0
        %v668 = vadd.f32 0.0, %v667
        %669 = vdwg.mxu0
        %v670 = vadd.f32 %v618, %v666
        %v671 = vadd.f32 %v619, %v668
        %v672 = vld [vmem:[%s410] sm:$0x8]
        %s673 = scalar_lea.vmem [#allocation4], 48
        %v674 = vld [vmem:[%s673] sm:$0xf]
        %v675 = vld [vmem:[%s673 + $0x4] sm:$0x3]
        %v677 = vunpack.c.l.b16 %v672
        %v678 = vpack.c.b16 %v537, %v677
        %vm679 = vcmask 1044480
        %v680 = vrot.slane %v678, 3
        %v681 = vrot.slane %v626, 3
        %v682 = vsel %vm679, %v680, %v681
        %v685 = vunpack.c.l.b16 %v674
        %v686 = vunpack.c.l.b16 %v675
        %v687 = vpack.c.b16 %v686, %v685
        %v689 = vsel %vm442, %v682, 0
        %v692 = vsel %vm446, %v687, 0
        %694 = vmatpush.bf16.msra.mxu0 0
        %695 = vmatpush.bf16.msra.mxu0 0
        %696 = vmatpush.bf16.msra.mxu0 0
        %697 = vmatpush.bf16.msra.mxu0 0
        %698 = vmatpush.bf16.msra.mxu0 0
        %699 = vmatpush.bf16.msra.mxu0 0
        %700 = vmatpush.bf16.msra.mxu0 0
        %701 = vmatpush.bf16.msra.mxu0 %v692
        %702 = vmatmul.bf16.gmra.mxu0 %v689
        %v703 = vpop.f32.mrf.mxu0
        %v704 = vadd.f32 0.0, %v703
        %v705 = vpop.f32.mrf.mxu0
        %v706 = vadd.f32 0.0, %v705
        %707 = vdwg.mxu0
        %v708 = vadd.f32 %v670, %v704
        %v709 = vadd.f32 %v671, %v706
        %v710 = vld [vmem:[%s410 + $0x8] sm:$0x7]
        %s711 = scalar_lea.vmem [#allocation4], 56
        %v712 = vld [vmem:[%s711] sm:$0xf]
        %v713 = vld [vmem:[%s711 + $0x4] sm:$0x3]
        %v715 = vunpack.c.l.b16 %v710
        %v716 = vpack.c.b16 %v715, %v715
        %vm717 = vsmask.f32 4352
        %v719 = vshrl.u32 %v678, 16
        %v721 = vrot.slane %v719, 3
        %v722 = vshll.u32 %v678, 16
        %v724 = vrot.slane %v722, 4
        %v725 = vor.u32 %v721, %v724
        %v727 = vshrl.u32 %v716, 16
        %v729 = vrot.slane %v727, 3
        %v730 = vshll.u32 %v716, 16
        %v732 = vrot.slane %v730, 4
        %v733 = vor.u32 %v729, %v732
        %v734 = vsel %vm717, %v725, %v733
        %v737 = vunpack.c.l.b16 %v712
        %v738 = vunpack.c.l.b16 %v713
        %v739 = vpack.c.b16 %v738, %v737
        %v741 = vsel %vm442, %v734, 0
        %v744 = vsel %vm446, %v739, 0
        %746 = vmatpush.bf16.msra.mxu0 0
        %747 = vmatpush.bf16.msra.mxu0 0
        %748 = vmatpush.bf16.msra.mxu0 0
        %749 = vmatpush.bf16.msra.mxu0 0
        %750 = vmatpush.bf16.msra.mxu0 0
        %751 = vmatpush.bf16.msra.mxu0 0
        %752 = vmatpush.bf16.msra.mxu0 0
        %753 = vmatpush.bf16.msra.mxu0 %v744
        %754 = vmatmul.bf16.gmra.mxu0 %v741
        %v755 = vpop.f32.mrf.mxu0
        %v756 = vadd.f32 0.0, %v755
        %v757 = vpop.f32.mrf.mxu0
        %v758 = vadd.f32 0.0, %v757
        %759 = vdwg.mxu0
        %v760 = vadd.f32 %v708, %v756
        %v761 = vadd.f32 %v709, %v758
        %s762 = scalar_lea.vmem [#allocation4], 64
        %v763 = vld [vmem:[%s762] sm:$0xf]
        %v764 = vld [vmem:[%s762 + $0x4] sm:$0x3]
        %v765 = vpack.c.b16 %v715, %v537
        %v768 = vunpack.c.l.b16 %v763
        %v769 = vunpack.c.l.b16 %v764
        %v770 = vpack.c.b16 %v769, %v768
        %v772 = vsel %vm442, %v765, 0
        %v775 = vsel %vm446, %v770, 0
        %777 = vmatpush.bf16.msra.mxu0 0
        %778 = vmatpush.bf16.msra.mxu0 0
        %779 = vmatpush.bf16.msra.mxu0 0
        %780 = vmatpush.bf16.msra.mxu0 0
        %781 = vmatpush.bf16.msra.mxu0 0
        %782 = vmatpush.bf16.msra.mxu0 0
        %783 = vmatpush.bf16.msra.mxu0 0
        %784 = vmatpush.bf16.msra.mxu0 %v775
        %785 = vmatmul.bf16.gmra.mxu0 %v772
        %v786 = vpop.f32.mrf.mxu0
        %v787 = vadd.f32 0.0, %v786
        %v788 = vpop.f32.mrf.mxu0
        %v789 = vadd.f32 0.0, %v788
        %790 = vdwg.mxu0
        %v791 = vadd.f32 %v760, %v787
        %v792 = vadd.f32 %v761, %v789
        %v793 = vld [vmem:[%s410 + $0x8] sm:$0xf]
        %s794 = scalar_lea.vmem [#allocation4], 72
        %v795 = vld [vmem:[%s794] sm:$0xf]
        %v796 = vld [vmem:[%s794 + $0x4] sm:$0x3]
        %v798 = vunpack.c.l.b16 %v793
        %v799 = vpack.c.b16 %v798, %v537
        %v801 = vshrl.u32 %v799, 16
        %v803 = vshll.u32 %v799, 16
        %v805 = vrot.slane %v803, 1
        %v806 = vor.u32 %v801, %v805
        %v809 = vunpack.c.l.b16 %v795
        %v810 = vunpack.c.l.b16 %v796
        %v811 = vpack.c.b16 %v810, %v809
        %v813 = vsel %vm442, %v806, 0
        %v816 = vsel %vm446, %v811, 0
        %818 = vmatpush.bf16.msra.mxu0 0
        %819 = vmatpush.bf16.msra.mxu0 0
        %820 = vmatpush.bf16.msra.mxu0 0
        %821 = vmatpush.bf16.msra.mxu0 0
        %822 = vmatpush.bf16.msra.mxu0 0
        %823 = vmatpush.bf16.msra.mxu0 0
        %824 = vmatpush.bf16.msra.mxu0 0
        %825 = vmatpush.bf16.msra.mxu0 %v816
        %826 = vmatmul.bf16.gmra.mxu0 %v813
        %v827 = vpop.f32.mrf.mxu0
        %v828 = vadd.f32 0.0, %v827
        %v829 = vpop.f32.mrf.mxu0
        %v830 = vadd.f32 0.0, %v829
        %831 = vdwg.mxu0
        %v832 = vadd.f32 %v791, %v828
        %v833 = vadd.f32 %v792, %v830
        %v834 = vld [vmem:[%s410 + $0x4] sm:$0xe]
        %s835 = scalar_lea.vmem [#allocation4], 80
        %v836 = vld [vmem:[%s835] sm:$0xf]
        %v837 = vld [vmem:[%s835 + $0x4] sm:$0x3]
        %v839 = vunpack.c.l.b16 %v834
        %v840 = vpack.c.b16 %v798, %v839
        %v841 = vrot.slane %v840, 1
        %v844 = vunpack.c.l.b16 %v836
        %v845 = vunpack.c.l.b16 %v837
        %v846 = vpack.c.b16 %v845, %v844
        %v848 = vsel %vm442, %v841, 0
        %v851 = vsel %vm446, %v846, 0
        %853 = vmatpush.bf16.msra.mxu0 0
        %854 = vmatpush.bf16.msra.mxu0 0
        %855 = vmatpush.bf16.msra.mxu0 0
        %856 = vmatpush.bf16.msra.mxu0 0
        %857 = vmatpush.bf16.msra.mxu0 0
        %858 = vmatpush.bf16.msra.mxu0 0
        %859 = vmatpush.bf16.msra.mxu0 0
        %860 = vmatpush.bf16.msra.mxu0 %v851
        %861 = vmatmul.bf16.gmra.mxu0 %v848
        %v862 = vpop.f32.mrf.mxu0
        %v863 = vadd.f32 0.0, %v862
        %v864 = vpop.f32.mrf.mxu0
        %v865 = vadd.f32 0.0, %v864
        %866 = vdwg.mxu0
        %v867 = vadd.f32 %v832, %v863
        %v868 = vadd.f32 %v833, %v865
        %v869 = vld [vmem:[#allocation6] sm:$0x1]
        %v871 = vperm.slane %v869, 0
        %v873 = vadd.f32 %v867, %v871
        %v874 = vadd.f32 %v868, %v871
        %v875 = vmax.f32 %v873, 0.0
        %v876 = vmax.f32 %v874, 0.0
        %vm877 = vcmask 240640
        %878 = vst.msk [vmem:[#allocation2] sm:$0xf] %vm877, 0
        %879 = vst.msk [vmem:[#allocation2 + $0x4] sm:$0xf] %vm877, 0
        %880 = vst.msk [vmem:[#allocation2 + $0x8] sm:$0xf] %vm877, 0
        %v881 = vpack.c.bf16 %v875, %v875
        %v882 = vpack.c.bf16 %v876, %v876
        %vm883 = vsmask.f32 2304
        %vm884 = vsmask.f32 6416
        %vm885 = vmor %vm883, %vm884
        %v887 = vshrl.u32 %v881, 16
        %v889 = vrot.slane %v887, 5
        %v890 = vshll.u32 %v881, 16
        %v892 = vrot.slane %v890, 6
        %v893 = vor.u32 %v889, %v892
        %v894 = vrot.slane %v893, 4
        %v896 = vshrl.u32 %v882, 16
        %v898 = vrot.slane %v896, 5
        %v899 = vshll.u32 %v882, 16
        %v901 = vrot.slane %v899, 6
        %v902 = vor.u32 %v898, %v901
        %v903 = vsel %vm885, %v894, %v902
        %v904 = vrot.slane %v902, 4
        %vm908 = vcmask 240642
        %vm909 = vsmask.f32 7946
        %vm910 = vmand %vm908, %vm909
        %v911 = vld [vmem:[#allocation2] sm:$0xc]
        %v912 = vsel %vm910, %v893, %v911
        %913 = vst [vmem:[#allocation2] sm:$0xc] %v912
        %914 = vst.msk [vmem:[#allocation2 + $0x4] sm:$0xf] %vm877, %v903
        %vm915 = vcmask 238592
        %vm916 = vsmask.f32 1280
        %vm917 = vmand %vm915, %vm916
        %v918 = vld [vmem:[#allocation2 + $0x8] sm:$0x3]
        %v919 = vsel %vm917, %v904, %v918
        %920 = vst [vmem:[#allocation2 + $0x8] sm:$0x3] %v919
        %v921 = vld [vmem:[#allocation2] sm:$0xf]
        %v922 = vld [vmem:[#allocation2 + $0x4] sm:$0x7]
        %v923 = vld [vmem:[#allocation8] sm:$0xf]
        %v924 = vld [vmem:[#allocation8 + $0x4] sm:$0xf]
        %v925 = vld [vmem:[#allocation8 + $0x8] sm:$0xf]
        %v926 = vld [vmem:[#allocation8 + $0xc] sm:$0x7]
        %v927 = vld [vmem:[#allocation2 + $0x4] sm:$0xf]
        %s928 = scalar_lea.vmem [#allocation8], 16
        %v929 = vld [vmem:[%s928] sm:$0xf]
        %v930 = vld [vmem:[%s928 + $0x4] sm:$0xf]
        %v931 = vld [vmem:[%s928 + $0x8] sm:$0xf]
        %v932 = vld [vmem:[%s928 + $0xc] sm:$0x7]
        %v935 = vunpack.c.l.b16 %v921
        %v936 = vunpack.c.l.b16 %v927
        %v937 = vpack.c.b16 %v936, %v935
        %v939 = vshrl.u32 %v937, 16
        %v941 = vshll.u32 %v937, 16
        %v943 = vrot.slane %v941, 1
        %v944 = vor.u32 %v939, %v943
        %v949 = vunpack.c.l.b16 %v929
        %v950 = vunpack.c.l.b16 %v930
        %v951 = vunpack.c.l.b16 %v931
        %v952 = vunpack.c.l.b16 %v932
        %v953 = vpack.c.b16 %v950, %v949
        %v954 = vpack.c.b16 %v952, %v951
        %vm956 = vcmask 244736
        %v958 = vsel %vm956, %v944, 0
        %vm960 = vcmask 1046528
        %v962 = vsel %vm960, %v954, 0
        %964 = vmatpush.bf16.msra.mxu0 0
        %965 = vmatpush.bf16.msra.mxu0 0
        %966 = vmatpush.bf16.msra.mxu0 0
        %967 = vmatpush.bf16.msra.mxu0 0
        %968 = vmatpush.bf16.msra.mxu0 0
        %969 = vmatpush.bf16.msra.mxu0 0
        %970 = vmatpush.bf16.msra.mxu0 %v962
        %971 = vmatpush.bf16.msra.mxu0 %v953
        %972 = vmatmul.bf16.gmra.mxu0 %v958
        %v973 = vpop.f32.mrf.mxu0
        %v974 = vadd.f32 0.0, %v973
        %v975 = vpop.f32.mrf.mxu0
        %v976 = vadd.f32 0.0, %v975
        %977 = vdwg.mxu0
        %v979 = vunpack.c.l.b16 %v922
        %v980 = vpack.c.b16 %v979, %v935
        %v985 = vunpack.c.l.b16 %v923
        %v986 = vunpack.c.l.b16 %v924
        %v987 = vunpack.c.l.b16 %v925
        %v988 = vunpack.c.l.b16 %v926
        %v989 = vpack.c.b16 %v986, %v985
        %v990 = vpack.c.b16 %v988, %v987
        %v993 = vsel %vm956, %v980, 0
        %v996 = vsel %vm960, %v990, 0
        %998 = vmatpush.bf16.msra.mxu0 0
        %999 = vmatpush.bf16.msra.mxu0 0
        %1000 = vmatpush.bf16.msra.mxu0 0
        %1001 = vmatpush.bf16.msra.mxu0 0
        %1002 = vmatpush.bf16.msra.mxu0 0
        %1003 = vmatpush.bf16.msra.mxu0 0
        %1004 = vmatpush.bf16.msra.mxu0 %v996
        %1005 = vmatpush.bf16.msra.mxu0 %v989
        %1006 = vmatmul.bf16.gmra.mxu0 %v993
        %v1007 = vpop.f32.mrf.mxu0
        %v1008 = vadd.f32 %v974, %v1007
        %v1009 = vpop.f32.mrf.mxu0
        %v1010 = vadd.f32 %v976, %v1009
        %1011 = vdwg.mxu0
        %v1012 = vld [vmem:[#allocation2] sm:$0xe]
        %s1013 = scalar_lea.vmem [#allocation8], 32
        %v1014 = vld [vmem:[%s1013] sm:$0xf]
        %v1015 = vld [vmem:[%s1013 + $0x4] sm:$0xf]
        %v1016 = vld [vmem:[%s1013 + $0x8] sm:$0xf]
        %v1017 = vld [vmem:[%s1013 + $0xc] sm:$0x7]
        %v1019 = vunpack.c.l.b16 %v1012
        %v1020 = vpack.c.b16 %v936, %v1019
        %v1021 = vrot.slane %v1020, 1
        %v1026 = vunpack.c.l.b16 %v1014
        %v1027 = vunpack.c.l.b16 %v1015
        %v1028 = vunpack.c.l.b16 %v1016
        %v1029 = vunpack.c.l.b16 %v1017
        %v1030 = vpack.c.b16 %v1027, %v1026
        %v1031 = vpack.c.b16 %v1029, %v1028
        %v1034 = vsel %vm956, %v1021, 0
        %v1037 = vsel %vm960, %v1031, 0
        %1039 = vmatpush.bf16.msra.mxu0 0
        %1040 = vmatpush.bf16.msra.mxu0 0
        %1041 = vmatpush.bf16.msra.mxu0 0
        %1042 = vmatpush.bf16.msra.mxu0 0
        %1043 = vmatpush.bf16.msra.mxu0 0
        %1044 = vmatpush.bf16.msra.mxu0 0
        %1045 = vmatpush.bf16.msra.mxu0 %v1037
        %1046 = vmatpush.bf16.msra.mxu0 %v1030
        %1047 = vmatmul.bf16.gmra.mxu0 %v1034
        %v1048 = vpop.f32.mrf.mxu0
        %v1049 = vadd.f32 0.0, %v1048
        %v1050 = vpop.f32.mrf.mxu0
        %v1051 = vadd.f32 0.0, %v1050
        %1052 = vdwg.mxu0
        %v1053 = vadd.f32 %v1008, %v1049
        %v1054 = vadd.f32 %v1010, %v1051
        %v1055 = vld [vmem:[#allocation2] sm:$0xe]
        %v1056 = vld [vmem:[#allocation2 + $0x4] sm:$0xf]
        %v1057 = vld [vmem:[#allocation2 + $0x8] sm:$0x1]
        %s1058 = scalar_lea.vmem [#allocation8], 48
        %v1059 = vld [vmem:[%s1058] sm:$0xf]
        %v1060 = vld [vmem:[%s1058 + $0x4] sm:$0xf]
        %v1061 = vld [vmem:[%s1058 + $0x8] sm:$0xf]
        %v1062 = vld [vmem:[%s1058 + $0xc] sm:$0x7]
        %v1066 = vunpack.c.l.b16 %v1055
        %v1067 = vunpack.c.l.b16 %v1056
        %v1068 = vunpack.c.l.b16 %v1057
        %v1069 = vpack.c.b16 %v1067, %v1066
        %v1070 = vpack.c.b16 %v1068, %v1068
        %v1072 = vshrl.u32 %v1069, 16
        %v1074 = vrot.slane %v1072, 1
        %v1075 = vshll.u32 %v1069, 16
        %v1077 = vrot.slane %v1075, 2
        %v1078 = vor.u32 %v1074, %v1077
        %v1080 = vshll.u32 %v1070, 16
        %v1082 = vrot.slane %v1080, 2
        %v1083 = vsel %vm541, %v1078, %v1082
        %v1088 = vunpack.c.l.b16 %v1059
        %v1089 = vunpack.c.l.b16 %v1060
        %v1090 = vunpack.c.l.b16 %v1061
        %v1091 = vunpack.c.l.b16 %v1062
        %v1092 = vpack.c.b16 %v1089, %v1088
        %v1093 = vpack.c.b16 %v1091, %v1090
        %v1096 = vsel %vm956, %v1083, 0
        %v1099 = vsel %vm960, %v1093, 0
        %1101 = vmatpush.bf16.msra.mxu0 0
        %1102 = vmatpush.bf16.msra.mxu0 0
        %1103 = vmatpush.bf16.msra.mxu0 0
        %1104 = vmatpush.bf16.msra.mxu0 0
        %1105 = vmatpush.bf16.msra.mxu0 0
        %1106 = vmatpush.bf16.msra.mxu0 0
        %1107 = vmatpush.bf16.msra.mxu0 %v1099
        %1108 = vmatpush.bf16.msra.mxu0 %v1092
        %1109 = vmatmul.bf16.gmra.mxu0 %v1096
        %v1110 = vpop.f32.mrf.mxu0
        %v1111 = vadd.f32 0.0, %v1110
        %v1112 = vpop.f32.mrf.mxu0
        %v1113 = vadd.f32 0.0, %v1112
        %1114 = vdwg.mxu0
        %v1115 = vadd.f32 %v1053, %v1111
        %v1116 = vadd.f32 %v1054, %v1113
        %v1117 = vld [vmem:[#allocation2] sm:$0xc]
        %s1118 = scalar_lea.vmem [#allocation8], 64
        %v1119 = vld [vmem:[%s1118] sm:$0xf]
        %v1120 = vld [vmem:[%s1118 + $0x4] sm:$0xf]
        %v1121 = vld [vmem:[%s1118 + $0x8] sm:$0xf]
        %v1122 = vld [vmem:[%s1118 + $0xc] sm:$0x7]
        %v1124 = vunpack.c.l.b16 %v1117
        %v1125 = vpack.c.b16 %v1067, %v1124
        %v1126 = vrot.slane %v1125, 2
        %v1127 = vrot.slane %v1070, 2
        %v1128 = vsel %vm589, %v1126, %v1127
        %v1133 = vunpack.c.l.b16 %v1119
        %v1134 = vunpack.c.l.b16 %v1120
        %v1135 = vunpack.c.l.b16 %v1121
        %v1136 = vunpack.c.l.b16 %v1122
        %v1137 = vpack.c.b16 %v1134, %v1133
        %v1138 = vpack.c.b16 %v1136, %v1135
        %v1141 = vsel %vm956, %v1128, 0
        %v1144 = vsel %vm960, %v1138, 0
        %1146 = vmatpush.bf16.msra.mxu0 0
        %1147 = vmatpush.bf16.msra.mxu0 0
        %1148 = vmatpush.bf16.msra.mxu0 0
        %1149 = vmatpush.bf16.msra.mxu0 0
        %1150 = vmatpush.bf16.msra.mxu0 0
        %1151 = vmatpush.bf16.msra.mxu0 0
        %1152 = vmatpush.bf16.msra.mxu0 %v1144
        %1153 = vmatpush.bf16.msra.mxu0 %v1137
        %1154 = vmatmul.bf16.gmra.mxu0 %v1141
        %v1155 = vpop.f32.mrf.mxu0
        %v1156 = vadd.f32 0.0, %v1155
        %v1157 = vpop.f32.mrf.mxu0
        %v1158 = vadd.f32 0.0, %v1157
        %1159 = vdwg.mxu0
        %v1160 = vadd.f32 %v1115, %v1156
        %v1161 = vadd.f32 %v1116, %v1158
        %v1162 = vld [vmem:[#allocation2 + $0x8] sm:$0x3]
        %s1163 = scalar_lea.vmem [#allocation8], 80
        %v1164 = vld [vmem:[%s1163] sm:$0xf]
        %v1165 = vld [vmem:[%s1163 + $0x4] sm:$0xf]
        %v1166 = vld [vmem:[%s1163 + $0x8] sm:$0xf]
        %v1167 = vld [vmem:[%s1163 + $0xc] sm:$0x7]
        %v1169 = vunpack.c.l.b16 %v1162
        %v1170 = vpack.c.b16 %v1169, %v1169
        %v1172 = vshrl.u32 %v1125, 16
        %v1174 = vrot.slane %v1172, 2
        %v1175 = vshll.u32 %v1125, 16
        %v1177 = vrot.slane %v1175, 3
        %v1178 = vor.u32 %v1174, %v1177
        %v1180 = vshrl.u32 %v1170, 16
        %v1182 = vrot.slane %v1180, 2
        %v1183 = vshll.u32 %v1170, 16
        %v1185 = vrot.slane %v1183, 3
        %v1186 = vor.u32 %v1182, %v1185
        %v1187 = vsel %vm627, %v1178, %v1186
        %v1192 = vunpack.c.l.b16 %v1164
        %v1193 = vunpack.c.l.b16 %v1165
        %v1194 = vunpack.c.l.b16 %v1166
        %v1195 = vunpack.c.l.b16 %v1167
        %v1196 = vpack.c.b16 %v1193, %v1192
        %v1197 = vpack.c.b16 %v1195, %v1194
        %v1200 = vsel %vm956, %v1187, 0
        %v1203 = vsel %vm960, %v1197, 0
        %1205 = vmatpush.bf16.msra.mxu0 0
        %1206 = vmatpush.bf16.msra.mxu0 0
        %1207 = vmatpush.bf16.msra.mxu0 0
        %1208 = vmatpush.bf16.msra.mxu0 0
        %1209 = vmatpush.bf16.msra.mxu0 0
        %1210 = vmatpush.bf16.msra.mxu0 0
        %1211 = vmatpush.bf16.msra.mxu0 %v1203
        %1212 = vmatpush.bf16.msra.mxu0 %v1196
        %1213 = vmatmul.bf16.gmra.mxu0 %v1200
        %v1214 = vpop.f32.mrf.mxu0
        %v1215 = vadd.f32 0.0, %v1214
        %v1216 = vpop.f32.mrf.mxu0
        %v1217 = vadd.f32 0.0, %v1216
        %1218 = vdwg.mxu0
        %v1219 = vadd.f32 %v1160, %v1215
        %v1220 = vadd.f32 %v1161, %v1217
        %v1221 = vld [vmem:[#allocation2] sm:$0x8]
        %s1222 = scalar_lea.vmem [#allocation8], 96
        %v1223 = vld [vmem:[%s1222] sm:$0xf]
        %v1224 = vld [vmem:[%s1222 + $0x4] sm:$0xf]
        %v1225 = vld [vmem:[%s1222 + $0x8] sm:$0xf]
        %v1226 = vld [vmem:[%s1222 + $0xc] sm:$0x7]
        %v1228 = vunpack.c.l.b16 %v1221
        %v1229 = vpack.c.b16 %v1067, %v1228
        %v1230 = vrot.slane %v1229, 3
        %v1231 = vrot.slane %v1170, 3
        %v1232 = vsel %vm679, %v1230, %v1231
        %v1237 = vunpack.c.l.b16 %v1223
        %v1238 = vunpack.c.l.b16 %v1224
        %v1239 = vunpack.c.l.b16 %v1225
        %v1240 = vunpack.c.l.b16 %v1226
        %v1241 = vpack.c.b16 %v1238, %v1237
        %v1242 = vpack.c.b16 %v1240, %v1239
        %v1245 = vsel %vm956, %v1232, 0
        %v1248 = vsel %vm960, %v1242, 0
        %1250 = vmatpush.bf16.msra.mxu0 0
        %1251 = vmatpush.bf16.msra.mxu0 0
        %1252 = vmatpush.bf16.msra.mxu0 0
        %1253 = vmatpush.bf16.msra.mxu0 0
        %1254 = vmatpush.bf16.msra.mxu0 0
        %1255 = vmatpush.bf16.msra.mxu0 0
        %1256 = vmatpush.bf16.msra.mxu0 %v1248
        %1257 = vmatpush.bf16.msra.mxu0 %v1241
        %1258 = vmatmul.bf16.gmra.mxu0 %v1245
        %v1259 = vpop.f32.mrf.mxu0
        %v1260 = vadd.f32 0.0, %v1259
        %v1261 = vpop.f32.mrf.mxu0
        %v1262 = vadd.f32 0.0, %v1261
        %1263 = vdwg.mxu0
        %v1264 = vadd.f32 %v1219, %v1260
        %v1265 = vadd.f32 %v1220, %v1262
        %v1266 = vld [vmem:[#allocation2 + $0x8] sm:$0x7]
        %s1267 = scalar_lea.vmem [#allocation8], 112
        %v1268 = vld [vmem:[%s1267] sm:$0xf]
        %v1269 = vld [vmem:[%s1267 + $0x4] sm:$0xf]
        %v1270 = vld [vmem:[%s1267 + $0x8] sm:$0xf]
        %v1271 = vld [vmem:[%s1267 + $0xc] sm:$0x7]
        %v1273 = vunpack.c.l.b16 %v1266
        %v1274 = vpack.c.b16 %v1273, %v1273
        %v1276 = vshrl.u32 %v1229, 16
        %v1278 = vrot.slane %v1276, 3
        %v1279 = vshll.u32 %v1229, 16
        %v1281 = vrot.slane %v1279, 4
        %v1282 = vor.u32 %v1278, %v1281
        %v1284 = vshrl.u32 %v1274, 16
        %v1286 = vrot.slane %v1284, 3
        %v1287 = vshll.u32 %v1274, 16
        %v1289 = vrot.slane %v1287, 4
        %v1290 = vor.u32 %v1286, %v1289
        %v1291 = vsel %vm717, %v1282, %v1290
        %v1296 = vunpack.c.l.b16 %v1268
        %v1297 = vunpack.c.l.b16 %v1269
        %v1298 = vunpack.c.l.b16 %v1270
        %v1299 = vunpack.c.l.b16 %v1271
        %v1300 = vpack.c.b16 %v1297, %v1296
        %v1301 = vpack.c.b16 %v1299, %v1298
        %v1304 = vsel %vm956, %v1291, 0
        %v1307 = vsel %vm960, %v1301, 0
        %1309 = vmatpush.bf16.msra.mxu0 0
        %1310 = vmatpush.bf16.msra.mxu0 0
        %1311 = vmatpush.bf16.msra.mxu0 0
        %1312 = vmatpush.bf16.msra.mxu0 0
        %1313 = vmatpush.bf16.msra.mxu0 0
        %1314 = vmatpush.bf16.msra.mxu0 0
        %1315 = vmatpush.bf16.msra.mxu0 %v1307
        %1316 = vmatpush.bf16.msra.mxu0 %v1300
        %1317 = vmatmul.bf16.gmra.mxu0 %v1304
        %v1318 = vpop.f32.mrf.mxu0
        %v1319 = vadd.f32 0.0, %v1318
        %v1320 = vpop.f32.mrf.mxu0
        %v1321 = vadd.f32 0.0, %v1320
        %1322 = vdwg.mxu0
        %v1323 = vadd.f32 %v1264, %v1319
        %v1324 = vadd.f32 %v1265, %v1321
        %s1325 = scalar_lea.vmem [#allocation8], 128
        %v1326 = vld [vmem:[%s1325] sm:$0xf]
        %v1327 = vld [vmem:[%s1325 + $0x4] sm:$0xf]
        %v1328 = vld [vmem:[%s1325 + $0x8] sm:$0xf]
        %v1329 = vld [vmem:[%s1325 + $0xc] sm:$0x7]
        %v1330 = vpack.c.b16 %v1273, %v1067
        %v1335 = vunpack.c.l.b16 %v1326
        %v1336 = vunpack.c.l.b16 %v1327
        %v1337 = vunpack.c.l.b16 %v1328
        %v1338 = vunpack.c.l.b16 %v1329
        %v1339 = vpack.c.b16 %v1336, %v1335
        %v1340 = vpack.c.b16 %v1338, %v1337
        %v1343 = vsel %vm956, %v1330, 0
        %v1346 = vsel %vm960, %v1340, 0
        %1348 = vmatpush.bf16.msra.mxu0 0
        %1349 = vmatpush.bf16.msra.mxu0 0
        %1350 = vmatpush.bf16.msra.mxu0 0
        %1351 = vmatpush.bf16.msra.mxu0 0
        %1352 = vmatpush.bf16.msra.mxu0 0
        %1353 = vmatpush.bf16.msra.mxu0 0
        %1354 = vmatpush.bf16.msra.mxu0 %v1346
        %1355 = vmatpush.bf16.msra.mxu0 %v1339
        %1356 = vmatmul.bf16.gmra.mxu0 %v1343
        %v1357 = vpop.f32.mrf.mxu0
        %v1358 = vadd.f32 0.0, %v1357
        %v1359 = vpop.f32.mrf.mxu0
        %v1360 = vadd.f32 0.0, %v1359
        %1361 = vdwg.mxu0
        %v1362 = vadd.f32 %v1323, %v1358
        %v1363 = vadd.f32 %v1324, %v1360
        %v1364 = vld [vmem:[#allocation2 + $0x8] sm:$0xf]
        %s1365 = scalar_lea.vmem [#allocation8], 144
        %v1366 = vld [vmem:[%s1365] sm:$0xf]
        %v1367 = vld [vmem:[%s1365 + $0x4] sm:$0xf]
        %v1368 = vld [vmem:[%s1365 + $0x8] sm:$0xf]
        %v1369 = vld [vmem:[%s1365 + $0xc] sm:$0x7]
        %v1371 = vunpack.c.l.b16 %v1364
        %v1372 = vpack.c.b16 %v1371, %v1067
        %v1374 = vshrl.u32 %v1372, 16
        %v1376 = vshll.u32 %v1372, 16
        %v1378 = vrot.slane %v1376, 1
        %v1379 = vor.u32 %v1374, %v1378
        %v1384 = vunpack.c.l.b16 %v1366
        %v1385 = vunpack.c.l.b16 %v1367
        %v1386 = vunpack.c.l.b16 %v1368
        %v1387 = vunpack.c.l.b16 %v1369
        %v1388 = vpack.c.b16 %v1385, %v1384
        %v1389 = vpack.c.b16 %v1387, %v1386
        %v1392 = vsel %vm956, %v1379, 0
        %v1395 = vsel %vm960, %v1389, 0
        %1397 = vmatpush.bf16.msra.mxu0 0
        %1398 = vmatpush.bf16.msra.mxu0 0
        %1399 = vmatpush.bf16.msra.mxu0 0
        %1400 = vmatpush.bf16.msra.mxu0 0
        %1401 = vmatpush.bf16.msra.mxu0 0
        %1402 = vmatpush.bf16.msra.mxu0 0
        %1403 = vmatpush.bf16.msra.mxu0 %v1395
        %1404 = vmatpush.bf16.msra.mxu0 %v1388
        %1405 = vmatmul.bf16.gmra.mxu0 %v1392
        %v1406 = vpop.f32.mrf.mxu0
        %v1407 = vadd.f32 0.0, %v1406
        %v1408 = vpop.f32.mrf.mxu0
        %v1409 = vadd.f32 0.0, %v1408
        %1410 = vdwg.mxu0
        %v1411 = vadd.f32 %v1362, %v1407
        %v1412 = vadd.f32 %v1363, %v1409
        %v1413 = vld [vmem:[#allocation2 + $0x4] sm:$0xe]
        %s1414 = scalar_lea.vmem [#allocation8], 160
        %v1415 = vld [vmem:[%s1414] sm:$0xf]
        %v1416 = vld [vmem:[%s1414 + $0x4] sm:$0xf]
        %v1417 = vld [vmem:[%s1414 + $0x8] sm:$0xf]
        %v1418 = vld [vmem:[%s1414 + $0xc] sm:$0x7]
        %v1420 = vunpack.c.l.b16 %v1413
        %v1421 = vpack.c.b16 %v1371, %v1420
        %v1422 = vrot.slane %v1421, 1
        %v1427 = vunpack.c.l.b16 %v1415
        %v1428 = vunpack.c.l.b16 %v1416
        %v1429 = vunpack.c.l.b16 %v1417
        %v1430 = vunpack.c.l.b16 %v1418
        %v1431 = vpack.c.b16 %v1428, %v1427
        %v1432 = vpack.c.b16 %v1430, %v1429
        %v1435 = vsel %vm956, %v1422, 0
        %v1438 = vsel %vm960, %v1432, 0
        %1440 = vmatpush.bf16.msra.mxu0 0
        %1441 = vmatpush.bf16.msra.mxu0 0
        %1442 = vmatpush.bf16.msra.mxu0 0
        %1443 = vmatpush.bf16.msra.mxu0 0
        %1444 = vmatpush.bf16.msra.mxu0 0
        %1445 = vmatpush.bf16.msra.mxu0 0
        %1446 = vmatpush.bf16.msra.mxu0 %v1438
        %1447 = vmatpush.bf16.msra.mxu0 %v1431
        %1448 = vmatmul.bf16.gmra.mxu0 %v1435
        %v1449 = vpop.f32.mrf.mxu0
        %v1450 = vadd.f32 0.0, %v1449
        %v1451 = vpop.f32.mrf.mxu0
        %v1452 = vadd.f32 0.0, %v1451
        %1453 = vdwg.mxu0
        %v1454 = vadd.f32 %v1411, %v1450
        %v1455 = vadd.f32 %v1412, %v1452
        %v1456 = vld [vmem:[#allocation9] sm:$0x1]
        %v1458 = vperm.slane %v1456, 0
        %v1460 = vadd.f32 %v1454, %v1458
        %v1461 = vadd.f32 %v1455, %v1458
        %v1462 = vmax.f32 %v1460, 0.0
        %v1463 = vmax.f32 %v1461, 0.0
        %1464 = vst.msk [vmem:[#allocation3] sm:$0xf] %vm877, 0
        %1465 = vst.msk [vmem:[#allocation3 + $0x4] sm:$0xf] %vm877, 0
        %1466 = vst.msk [vmem:[#allocation3 + $0x8] sm:$0xf] %vm877, 0
        %v1467 = vpack.c.bf16 %v1462, %v1462
        %v1468 = vpack.c.bf16 %v1463, %v1463
        %v1470 = vshrl.u32 %v1467, 16
        %v1472 = vrot.slane %v1470, 5
        %v1473 = vshll.u32 %v1467, 16
        %v1475 = vrot.slane %v1473, 6
        %v1476 = vor.u32 %v1472, %v1475
        %v1477 = vrot.slane %v1476, 4
        %v1479 = vshrl.u32 %v1468, 16
        %v1481 = vrot.slane %v1479, 5
        %v1482 = vshll.u32 %v1468, 16
        %v1484 = vrot.slane %v1482, 6
        %v1485 = vor.u32 %v1481, %v1484
        %v1486 = vsel %vm885, %v1477, %v1485
        %v1487 = vrot.slane %v1485, 4
        %v1491 = vld [vmem:[#allocation3] sm:$0xc]
        %v1492 = vsel %vm910, %v1476, %v1491
        %1493 = vst [vmem:[#allocation3] sm:$0xc] %v1492
        %1494 = vst.msk [vmem:[#allocation3 + $0x4] sm:$0xf] %vm877, %v1486
        %v1495 = vld [vmem:[#allocation3 + $0x8] sm:$0x3]
        %v1496 = vsel %vm917, %v1487, %v1495
        %1497 = vst [vmem:[#allocation3 + $0x8] sm:$0x3] %v1496
        %v1498 = vld [vmem:[#allocation2] sm:$0xf]
        %v1499 = vld [vmem:[#allocation2 + $0x4] sm:$0x7]
        %v1500 = vld [vmem:[#allocation11] sm:$0xf]
        %v1501 = vld [vmem:[#allocation11 + $0x4] sm:$0xf]
        %v1502 = vld [vmem:[#allocation11 + $0x8] sm:$0xf]
        %v1503 = vld [vmem:[#allocation11 + $0xc] sm:$0x7]
        %v1504 = vld [vmem:[#allocation3] sm:$0xf]
        %v1505 = vld [vmem:[#allocation3 + $0x4] sm:$0x7]
        %v1506 = vld [vmem:[#allocation12] sm:$0xf]
        %v1507 = vld [vmem:[#allocation12 + $0x4] sm:$0xf]
        %v1508 = vld [vmem:[#allocation12 + $0x8] sm:$0xf]
        %v1509 = vld [vmem:[#allocation12 + $0xc] sm:$0x7]
        %v1512 = vunpack.c.l.b16 %v1504
        %v1513 = vunpack.c.l.b16 %v1505
        %v1514 = vpack.c.b16 %v1513, %v1512
        %v1519 = vunpack.c.l.b16 %v1506
        %v1520 = vunpack.c.l.b16 %v1507
        %v1521 = vunpack.c.l.b16 %v1508
        %v1522 = vunpack.c.l.b16 %v1509
        %v1523 = vpack.c.b16 %v1520, %v1519
        %v1524 = vpack.c.b16 %v1522, %v1521
        %v1527 = vsel %vm956, %v1514, 0
        %v1530 = vsel %vm960, %v1524, 0
        %1532 = vmatpush.bf16.msra.mxu0 0
        %1533 = vmatpush.bf16.msra.mxu0 0
        %1534 = vmatpush.bf16.msra.mxu0 0
        %1535 = vmatpush.bf16.msra.mxu0 0
        %1536 = vmatpush.bf16.msra.mxu0 0
        %1537 = vmatpush.bf16.msra.mxu0 0
        %1538 = vmatpush.bf16.msra.mxu0 %v1530
        %1539 = vmatpush.bf16.msra.mxu0 %v1523
        %1540 = vmatmul.bf16.gmra.mxu0 %v1527
        %v1541 = vpop.f32.mrf.mxu0
        %v1542 = vadd.f32 0.0, %v1541
        %v1543 = vpop.f32.mrf.mxu0
        %v1544 = vadd.f32 0.0, %v1543
        %1545 = vdwg.mxu0
        %v1548 = vunpack.c.l.b16 %v1498
        %v1549 = vunpack.c.l.b16 %v1499
        %v1550 = vpack.c.b16 %v1549, %v1548
        %v1555 = vunpack.c.l.b16 %v1500
        %v1556 = vunpack.c.l.b16 %v1501
        %v1557 = vunpack.c.l.b16 %v1502
        %v1558 = vunpack.c.l.b16 %v1503
        %v1559 = vpack.c.b16 %v1556, %v1555
        %v1560 = vpack.c.b16 %v1558, %v1557
        %v1563 = vsel %vm956, %v1550, 0
        %v1566 = vsel %vm960, %v1560, 0
        %1568 = vmatpush.bf16.msra.mxu0 0
        %1569 = vmatpush.bf16.msra.mxu0 0
        %1570 = vmatpush.bf16.msra.mxu0 0
        %1571 = vmatpush.bf16.msra.mxu0 0
        %1572 = vmatpush.bf16.msra.mxu0 0
        %1573 = vmatpush.bf16.msra.mxu0 0
        %1574 = vmatpush.bf16.msra.mxu0 %v1566
        %1575 = vmatpush.bf16.msra.mxu0 %v1559
        %1576 = vmatmul.bf16.gmra.mxu0 %v1563
        %v1577 = vpop.f32.mrf.mxu0
        %v1578 = vadd.f32 %v1542, %v1577
        %v1579 = vpop.f32.mrf.mxu0
        %v1580 = vadd.f32 %v1544, %v1579
        %1581 = vdwg.mxu0
        %v1582 = vld [vmem:[#allocation2 + $0x4] sm:$0xf]
        %s1583 = scalar_lea.vmem [#allocation11], 16
        %v1584 = vld [vmem:[%s1583] sm:$0xf]
        %v1585 = vld [vmem:[%s1583 + $0x4] sm:$0xf]
        %v1586 = vld [vmem:[%s1583 + $0x8] sm:$0xf]
        %v1587 = vld [vmem:[%s1583 + $0xc] sm:$0x7]
        %v1589 = vunpack.c.l.b16 %v1582
        %v1590 = vpack.c.b16 %v1589, %v1548
        %v1592 = vshrl.u32 %v1590, 16
        %v1594 = vshll.u32 %v1590, 16
        %v1596 = vrot.slane %v1594, 1
        %v1597 = vor.u32 %v1592, %v1596
        %v1602 = vunpack.c.l.b16 %v1584
        %v1603 = vunpack.c.l.b16 %v1585
        %v1604 = vunpack.c.l.b16 %v1586
        %v1605 = vunpack.c.l.b16 %v1587
        %v1606 = vpack.c.b16 %v1603, %v1602
        %v1607 = vpack.c.b16 %v1605, %v1604
        %v1610 = vsel %vm956, %v1597, 0
        %v1613 = vsel %vm960, %v1607, 0
        %1615 = vmatpush.bf16.msra.mxu0 0
        %1616 = vmatpush.bf16.msra.mxu0 0
        %1617 = vmatpush.bf16.msra.mxu0 0
        %1618 = vmatpush.bf16.msra.mxu0 0
        %1619 = vmatpush.bf16.msra.mxu0 0
        %1620 = vmatpush.bf16.msra.mxu0 0
        %1621 = vmatpush.bf16.msra.mxu0 %v1613
        %1622 = vmatpush.bf16.msra.mxu0 %v1606
        %1623 = vmatmul.bf16.gmra.mxu0 %v1610
        %v1624 = vpop.f32.mrf.mxu0
        %v1625 = vadd.f32 0.0, %v1624
        %v1626 = vpop.f32.mrf.mxu0
        %v1627 = vadd.f32 0.0, %v1626
        %1628 = vdwg.mxu0
        %v1629 = vadd.f32 %v1578, %v1625
        %v1630 = vadd.f32 %v1580, %v1627
        %v1631 = vld [vmem:[#allocation3 + $0x4] sm:$0xf]
        %s1632 = scalar_lea.vmem [#allocation12], 16
        %v1633 = vld [vmem:[%s1632] sm:$0xf]
        %v1634 = vld [vmem:[%s1632 + $0x4] sm:$0xf]
        %v1635 = vld [vmem:[%s1632 + $0x8] sm:$0xf]
        %v1636 = vld [vmem:[%s1632 + $0xc] sm:$0x7]
        %v1638 = vunpack.c.l.b16 %v1631
        %v1639 = vpack.c.b16 %v1638, %v1512
        %v1641 = vshrl.u32 %v1639, 16
        %v1643 = vshll.u32 %v1639, 16
        %v1645 = vrot.slane %v1643, 1
        %v1646 = vor.u32 %v1641, %v1645
        %v1651 = vunpack.c.l.b16 %v1633
        %v1652 = vunpack.c.l.b16 %v1634
        %v1653 = vunpack.c.l.b16 %v1635
        %v1654 = vunpack.c.l.b16 %v1636
        %v1655 = vpack.c.b16 %v1652, %v1651
        %v1656 = vpack.c.b16 %v1654, %v1653
        %v1659 = vsel %vm956, %v1646, 0
        %v1662 = vsel %vm960, %v1656, 0
        %1664 = vmatpush.bf16.msra.mxu0 0
        %1665 = vmatpush.bf16.msra.mxu0 0
        %1666 = vmatpush.bf16.msra.mxu0 0
        %1667 = vmatpush.bf16.msra.mxu0 0
        %1668 = vmatpush.bf16.msra.mxu0 0
        %1669 = vmatpush.bf16.msra.mxu0 0
        %1670 = vmatpush.bf16.msra.mxu0 %v1662
        %1671 = vmatpush.bf16.msra.mxu0 %v1655
        %1672 = vmatmul.bf16.gmra.mxu0 %v1659
        %v1673 = vpop.f32.mrf.mxu0
        %v1674 = vadd.f32 0.0, %v1673
        %v1675 = vpop.f32.mrf.mxu0
        %v1676 = vadd.f32 0.0, %v1675
        %1677 = vdwg.mxu0
        %v1678 = vadd.f32 %v1629, %v1674
        %v1679 = vadd.f32 %v1630, %v1676
        %v1680 = vld [vmem:[#allocation2] sm:$0xe]
        %s1681 = scalar_lea.vmem [#allocation11], 32
        %v1682 = vld [vmem:[%s1681] sm:$0xf]
        %v1683 = vld [vmem:[%s1681 + $0x4] sm:$0xf]
        %v1684 = vld [vmem:[%s1681 + $0x8] sm:$0xf]
        %v1685 = vld [vmem:[%s1681 + $0xc] sm:$0x7]
        %v1687 = vunpack.c.l.b16 %v1680
        %v1688 = vpack.c.b16 %v1589, %v1687
        %v1689 = vrot.slane %v1688, 1
        %v1694 = vunpack.c.l.b16 %v1682
        %v1695 = vunpack.c.l.b16 %v1683
        %v1696 = vunpack.c.l.b16 %v1684
        %v1697 = vunpack.c.l.b16 %v1685
        %v1698 = vpack.c.b16 %v1695, %v1694
        %v1699 = vpack.c.b16 %v1697, %v1696
        %v1702 = vsel %vm956, %v1689, 0
        %v1705 = vsel %vm960, %v1699, 0
        %1707 = vmatpush.bf16.msra.mxu0 0
        %1708 = vmatpush.bf16.msra.mxu0 0
        %1709 = vmatpush.bf16.msra.mxu0 0
        %1710 = vmatpush.bf16.msra.mxu0 0
        %1711 = vmatpush.bf16.msra.mxu0 0
        %1712 = vmatpush.bf16.msra.mxu0 0
        %1713 = vmatpush.bf16.msra.mxu0 %v1705
        %1714 = vmatpush.bf16.msra.mxu0 %v1698
        %1715 = vmatmul.bf16.gmra.mxu0 %v1702
        %v1716 = vpop.f32.mrf.mxu0
        %v1717 = vadd.f32 0.0, %v1716
        %v1718 = vpop.f32.mrf.mxu0
        %v1719 = vadd.f32 0.0, %v1718
        %1720 = vdwg.mxu0
        %v1721 = vadd.f32 %v1678, %v1717
        %v1722 = vadd.f32 %v1679, %v1719
        %v1723 = vld [vmem:[#allocation3] sm:$0xe]
        %s1724 = scalar_lea.vmem [#allocation12], 32
        %v1725 = vld [vmem:[%s1724] sm:$0xf]
        %v1726 = vld [vmem:[%s1724 + $0x4] sm:$0xf]
        %v1727 = vld [vmem:[%s1724 + $0x8] sm:$0xf]
        %v1728 = vld [vmem:[%s1724 + $0xc] sm:$0x7]
        %v1730 = vunpack.c.l.b16 %v1723
        %v1731 = vpack.c.b16 %v1638, %v1730
        %v1732 = vrot.slane %v1731, 1
        %v1737 = vunpack.c.l.b16 %v1725
        %v1738 = vunpack.c.l.b16 %v1726
        %v1739 = vunpack.c.l.b16 %v1727
        %v1740 = vunpack.c.l.b16 %v1728
        %v1741 = vpack.c.b16 %v1738, %v1737
        %v1742 = vpack.c.b16 %v1740, %v1739
        %v1745 = vsel %vm956, %v1732, 0
        %v1748 = vsel %vm960, %v1742, 0
        %1750 = vmatpush.bf16.msra.mxu0 0
        %1751 = vmatpush.bf16.msra.mxu0 0
        %1752 = vmatpush.bf16.msra.mxu0 0
        %1753 = vmatpush.bf16.msra.mxu0 0
        %1754 = vmatpush.bf16.msra.mxu0 0
        %1755 = vmatpush.bf16.msra.mxu0 0
        %1756 = vmatpush.bf16.msra.mxu0 %v1748
        %1757 = vmatpush.bf16.msra.mxu0 %v1741
        %1758 = vmatmul.bf16.gmra.mxu0 %v1745
        %v1759 = vpop.f32.mrf.mxu0
        %v1760 = vadd.f32 0.0, %v1759
        %v1761 = vpop.f32.mrf.mxu0
        %v1762 = vadd.f32 0.0, %v1761
        %1763 = vdwg.mxu0
        %v1764 = vadd.f32 %v1721, %v1760
        %v1765 = vadd.f32 %v1722, %v1762
        %v1766 = vld [vmem:[#allocation2] sm:$0xe]
        %v1767 = vld [vmem:[#allocation2 + $0x4] sm:$0xf]
        %v1768 = vld [vmem:[#allocation2 + $0x8] sm:$0x1]
        %s1769 = scalar_lea.vmem [#allocation11], 48
        %v1770 = vld [vmem:[%s1769] sm:$0xf]
        %v1771 = vld [vmem:[%s1769 + $0x4] sm:$0xf]
        %v1772 = vld [vmem:[%s1769 + $0x8] sm:$0xf]
        %v1773 = vld [vmem:[%s1769 + $0xc] sm:$0x7]
        %v1777 = vunpack.c.l.b16 %v1766
        %v1778 = vunpack.c.l.b16 %v1767
        %v1779 = vunpack.c.l.b16 %v1768
        %v1780 = vpack.c.b16 %v1778, %v1777
        %v1781 = vpack.c.b16 %v1779, %v1779
        %v1783 = vshrl.u32 %v1780, 16
        %v1785 = vrot.slane %v1783, 1
        %v1786 = vshll.u32 %v1780, 16
        %v1788 = vrot.slane %v1786, 2
        %v1789 = vor.u32 %v1785, %v1788
        %v1791 = vshll.u32 %v1781, 16
        %v1793 = vrot.slane %v1791, 2
        %v1794 = vsel %vm541, %v1789, %v1793
        %v1799 = vunpack.c.l.b16 %v1770
        %v1800 = vunpack.c.l.b16 %v1771
        %v1801 = vunpack.c.l.b16 %v1772
        %v1802 = vunpack.c.l.b16 %v1773
        %v1803 = vpack.c.b16 %v1800, %v1799
        %v1804 = vpack.c.b16 %v1802, %v1801
        %v1807 = vsel %vm956, %v1794, 0
        %v1810 = vsel %vm960, %v1804, 0
        %1812 = vmatpush.bf16.msra.mxu0 0
        %1813 = vmatpush.bf16.msra.mxu0 0
        %1814 = vmatpush.bf16.msra.mxu0 0
        %1815 = vmatpush.bf16.msra.mxu0 0
        %1816 = vmatpush.bf16.msra.mxu0 0
        %1817 = vmatpush.bf16.msra.mxu0 0
        %1818 = vmatpush.bf16.msra.mxu0 %v1810
        %1819 = vmatpush.bf16.msra.mxu0 %v1803
        %1820 = vmatmul.bf16.gmra.mxu0 %v1807
        %v1821 = vpop.f32.mrf.mxu0
        %v1822 = vadd.f32 0.0, %v1821
        %v1823 = vpop.f32.mrf.mxu0
        %v1824 = vadd.f32 0.0, %v1823
        %1825 = vdwg.mxu0
        %v1826 = vadd.f32 %v1764, %v1822
        %v1827 = vadd.f32 %v1765, %v1824
        %v1828 = vld [vmem:[#allocation3] sm:$0xe]
        %v1829 = vld [vmem:[#allocation3 + $0x4] sm:$0xf]
        %v1830 = vld [vmem:[#allocation3 + $0x8] sm:$0x1]
        %s1831 = scalar_lea.vmem [#allocation12], 48
        %v1832 = vld [vmem:[%s1831] sm:$0xf]
        %v1833 = vld [vmem:[%s1831 + $0x4] sm:$0xf]
        %v1834 = vld [vmem:[%s1831 + $0x8] sm:$0xf]
        %v1835 = vld [vmem:[%s1831 + $0xc] sm:$0x7]
        %v1839 = vunpack.c.l.b16 %v1828
        %v1840 = vunpack.c.l.b16 %v1829
        %v1841 = vunpack.c.l.b16 %v1830
        %v1842 = vpack.c.b16 %v1840, %v1839
        %v1843 = vpack.c.b16 %v1841, %v1841
        %v1845 = vshrl.u32 %v1842, 16
        %v1847 = vrot.slane %v1845, 1
        %v1848 = vshll.u32 %v1842, 16
        %v1850 = vrot.slane %v1848, 2
        %v1851 = vor.u32 %v1847, %v1850
        %v1853 = vshll.u32 %v1843, 16
        %v1855 = vrot.slane %v1853, 2
        %v1856 = vsel %vm541, %v1851, %v1855
        %v1861 = vunpack.c.l.b16 %v1832
        %v1862 = vunpack.c.l.b16 %v1833
        %v1863 = vunpack.c.l.b16 %v1834
        %v1864 = vunpack.c.l.b16 %v1835
        %v1865 = vpack.c.b16 %v1862, %v1861
        %v1866 = vpack.c.b16 %v1864, %v1863
        %v1869 = vsel %vm956, %v1856, 0
        %v1872 = vsel %vm960, %v1866, 0
        %1874 = vmatpush.bf16.msra.mxu0 0
        %1875 = vmatpush.bf16.msra.mxu0 0
        %1876 = vmatpush.bf16.msra.mxu0 0
        %1877 = vmatpush.bf16.msra.mxu0 0
        %1878 = vmatpush.bf16.msra.mxu0 0
        %1879 = vmatpush.bf16.msra.mxu0 0
        %1880 = vmatpush.bf16.msra.mxu0 %v1872
        %1881 = vmatpush.bf16.msra.mxu0 %v1865
        %1882 = vmatmul.bf16.gmra.mxu0 %v1869
        %v1883 = vpop.f32.mrf.mxu0
        %v1884 = vadd.f32 0.0, %v1883
        %v1885 = vpop.f32.mrf.mxu0
        %v1886 = vadd.f32 0.0, %v1885
        %1887 = vdwg.mxu0
        %v1888 = vadd.f32 %v1826, %v1884
        %v1889 = vadd.f32 %v1827, %v1886
        %v1890 = vld [vmem:[#allocation2] sm:$0xc]
        %s1891 = scalar_lea.vmem [#allocation11], 64
        %v1892 = vld [vmem:[%s1891] sm:$0xf]
        %v1893 = vld [vmem:[%s1891 + $0x4] sm:$0xf]
        %v1894 = vld [vmem:[%s1891 + $0x8] sm:$0xf]
        %v1895 = vld [vmem:[%s1891 + $0xc] sm:$0x7]
        %v1897 = vunpack.c.l.b16 %v1890
        %v1898 = vpack.c.b16 %v1778, %v1897
        %v1899 = vrot.slane %v1898, 2
        %v1900 = vrot.slane %v1781, 2
        %v1901 = vsel %vm589, %v1899, %v1900
        %v1906 = vunpack.c.l.b16 %v1892
        %v1907 = vunpack.c.l.b16 %v1893
        %v1908 = vunpack.c.l.b16 %v1894
        %v1909 = vunpack.c.l.b16 %v1895
        %v1910 = vpack.c.b16 %v1907, %v1906
        %v1911 = vpack.c.b16 %v1909, %v1908
        %v1914 = vsel %vm956, %v1901, 0
        %v1917 = vsel %vm960, %v1911, 0
        %1919 = vmatpush.bf16.msra.mxu0 0
        %1920 = vmatpush.bf16.msra.mxu0 0
        %1921 = vmatpush.bf16.msra.mxu0 0
        %1922 = vmatpush.bf16.msra.mxu0 0
        %1923 = vmatpush.bf16.msra.mxu0 0
        %1924 = vmatpush.bf16.msra.mxu0 0
        %1925 = vmatpush.bf16.msra.mxu0 %v1917
        %1926 = vmatpush.bf16.msra.mxu0 %v1910
        %1927 = vmatmul.bf16.gmra.mxu0 %v1914
        %v1928 = vpop.f32.mrf.mxu0
        %v1929 = vadd.f32 0.0, %v1928
        %v1930 = vpop.f32.mrf.mxu0
        %v1931 = vadd.f32 0.0, %v1930
        %1932 = vdwg.mxu0
        %v1933 = vadd.f32 %v1888, %v1929
        %v1934 = vadd.f32 %v1889, %v1931
        %v1935 = vld [vmem:[#allocation3] sm:$0xc]
        %s1936 = scalar_lea.vmem [#allocation12], 64
        %v1937 = vld [vmem:[%s1936] sm:$0xf]
        %v1938 = vld [vmem:[%s1936 + $0x4] sm:$0xf]
        %v1939 = vld [vmem:[%s1936 + $0x8] sm:$0xf]
        %v1940 = vld [vmem:[%s1936 + $0xc] sm:$0x7]
        %v1942 = vunpack.c.l.b16 %v1935
        %v1943 = vpack.c.b16 %v1840, %v1942
        %v1944 = vrot.slane %v1943, 2
        %v1945 = vrot.slane %v1843, 2
        %v1946 = vsel %vm589, %v1944, %v1945
        %v1951 = vunpack.c.l.b16 %v1937
        %v1952 = vunpack.c.l.b16 %v1938
        %v1953 = vunpack.c.l.b16 %v1939
        %v1954 = vunpack.c.l.b16 %v1940
        %v1955 = vpack.c.b16 %v1952, %v1951
        %v1956 = vpack.c.b16 %v1954, %v1953
        %v1959 = vsel %vm956, %v1946, 0
        %v1962 = vsel %vm960, %v1956, 0
        %1964 = vmatpush.bf16.msra.mxu0 0
        %1965 = vmatpush.bf16.msra.mxu0 0
        %1966 = vmatpush.bf16.msra.mxu0 0
        %1967 = vmatpush.bf16.msra.mxu0 0
        %1968 = vmatpush.bf16.msra.mxu0 0
        %1969 = vmatpush.bf16.msra.mxu0 0
        %1970 = vmatpush.bf16.msra.mxu0 %v1962
        %1971 = vmatpush.bf16.msra.mxu0 %v1955
        %1972 = vmatmul.bf16.gmra.mxu0 %v1959
        %v1973 = vpop.f32.mrf.mxu0
        %v1974 = vadd.f32 0.0, %v1973
        %v1975 = vpop.f32.mrf.mxu0
        %v1976 = vadd.f32 0.0, %v1975
        %1977 = vdwg.mxu0
        %v1978 = vadd.f32 %v1933, %v1974
        %v1979 = vadd.f32 %v1934, %v1976
        %v1980 = vld [vmem:[#allocation2 + $0x8] sm:$0x3]
        %s1981 = scalar_lea.vmem [#allocation11], 80
        %v1982 = vld [vmem:[%s1981] sm:$0xf]
        %v1983 = vld [vmem:[%s1981 + $0x4] sm:$0xf]
        %v1984 = vld [vmem:[%s1981 + $0x8] sm:$0xf]
        %v1985 = vld [vmem:[%s1981 + $0xc] sm:$0x7]
        %v1987 = vunpack.c.l.b16 %v1980
        %v1988 = vpack.c.b16 %v1987, %v1987
        %v1990 = vshrl.u32 %v1898, 16
        %v1992 = vrot.slane %v1990, 2
        %v1993 = vshll.u32 %v1898, 16
        %v1995 = vrot.slane %v1993, 3
        %v1996 = vor.u32 %v1992, %v1995
        %v1998 = vshrl.u32 %v1988, 16
        %v2000 = vrot.slane %v1998, 2
        %v2001 = vshll.u32 %v1988, 16
        %v2003 = vrot.slane %v2001, 3
        %v2004 = vor.u32 %v2000, %v2003
        %v2005 = vsel %vm627, %v1996, %v2004
        %v2010 = vunpack.c.l.b16 %v1982
        %v2011 = vunpack.c.l.b16 %v1983
        %v2012 = vunpack.c.l.b16 %v1984
        %v2013 = vunpack.c.l.b16 %v1985
        %v2014 = vpack.c.b16 %v2011, %v2010
        %v2015 = vpack.c.b16 %v2013, %v2012
        %v2018 = vsel %vm956, %v2005, 0
        %v2021 = vsel %vm960, %v2015, 0
        %2023 = vmatpush.bf16.msra.mxu0 0
        %2024 = vmatpush.bf16.msra.mxu0 0
        %2025 = vmatpush.bf16.msra.mxu0 0
        %2026 = vmatpush.bf16.msra.mxu0 0
        %2027 = vmatpush.bf16.msra.mxu0 0
        %2028 = vmatpush.bf16.msra.mxu0 0
        %2029 = vmatpush.bf16.msra.mxu0 %v2021
        %2030 = vmatpush.bf16.msra.mxu0 %v2014
        %2031 = vmatmul.bf16.gmra.mxu0 %v2018
        %v2032 = vpop.f32.mrf.mxu0
        %v2033 = vadd.f32 0.0, %v2032
        %v2034 = vpop.f32.mrf.mxu0
        %v2035 = vadd.f32 0.0, %v2034
        %2036 = vdwg.mxu0
        %v2037 = vadd.f32 %v1978, %v2033
        %v2038 = vadd.f32 %v1979, %v2035
        %v2039 = vld [vmem:[#allocation3 + $0x8] sm:$0x3]
        %s2040 = scalar_lea.vmem [#allocation12], 80
        %v2041 = vld [vmem:[%s2040] sm:$0xf]
        %v2042 = vld [vmem:[%s2040 + $0x4] sm:$0xf]
        %v2043 = vld [vmem:[%s2040 + $0x8] sm:$0xf]
        %v2044 = vld [vmem:[%s2040 + $0xc] sm:$0x7]
        %v2046 = vunpack.c.l.b16 %v2039
        %v2047 = vpack.c.b16 %v2046, %v2046
        %v2049 = vshrl.u32 %v1943, 16
        %v2051 = vrot.slane %v2049, 2
        %v2052 = vshll.u32 %v1943, 16
        %v2054 = vrot.slane %v2052, 3
        %v2055 = vor.u32 %v2051, %v2054
        %v2057 = vshrl.u32 %v2047, 16
        %v2059 = vrot.slane %v2057, 2
        %v2060 = vshll.u32 %v2047, 16
        %v2062 = vrot.slane %v2060, 3
        %v2063 = vor.u32 %v2059, %v2062
        %v2064 = vsel %vm627, %v2055, %v2063
        %v2069 = vunpack.c.l.b16 %v2041
        %v2070 = vunpack.c.l.b16 %v2042
        %v2071 = vunpack.c.l.b16 %v2043
        %v2072 = vunpack.c.l.b16 %v2044
        %v2073 = vpack.c.b16 %v2070, %v2069
        %v2074 = vpack.c.b16 %v2072, %v2071
        %v2077 = vsel %vm956, %v2064, 0
        %v2080 = vsel %vm960, %v2074, 0
        %2082 = vmatpush.bf16.msra.mxu0 0
        %2083 = vmatpush.bf16.msra.mxu0 0
        %2084 = vmatpush.bf16.msra.mxu0 0
        %2085 = vmatpush.bf16.msra.mxu0 0
        %2086 = vmatpush.bf16.msra.mxu0 0
        %2087 = vmatpush.bf16.msra.mxu0 0
        %2088 = vmatpush.bf16.msra.mxu0 %v2080
        %2089 = vmatpush.bf16.msra.mxu0 %v2073
        %2090 = vmatmul.bf16.gmra.mxu0 %v2077
        %v2091 = vpop.f32.mrf.mxu0
        %v2092 = vadd.f32 0.0, %v2091
        %v2093 = vpop.f32.mrf.mxu0
        %v2094 = vadd.f32 0.0, %v2093
        %2095 = vdwg.mxu0
        %v2096 = vadd.f32 %v2037, %v2092
        %v2097 = vadd.f32 %v2038, %v2094
        %v2098 = vld [vmem:[#allocation2] sm:$0x8]
        %s2099 = scalar_lea.vmem [#allocation11], 96
        %v2100 = vld [vmem:[%s2099] sm:$0xf]
        %v2101 = vld [vmem:[%s2099 + $0x4] sm:$0xf]
        %v2102 = vld [vmem:[%s2099 + $0x8] sm:$0xf]
        %v2103 = vld [vmem:[%s2099 + $0xc] sm:$0x7]
        %v2105 = vunpack.c.l.b16 %v2098
        %v2106 = vpack.c.b16 %v1778, %v2105
        %v2107 = vrot.slane %v2106, 3
        %v2108 = vrot.slane %v1988, 3
        %v2109 = vsel %vm679, %v2107, %v2108
        %v2114 = vunpack.c.l.b16 %v2100
        %v2115 = vunpack.c.l.b16 %v2101
        %v2116 = vunpack.c.l.b16 %v2102
        %v2117 = vunpack.c.l.b16 %v2103
        %v2118 = vpack.c.b16 %v2115, %v2114
        %v2119 = vpack.c.b16 %v2117, %v2116
        %v2122 = vsel %vm956, %v2109, 0
        %v2125 = vsel %vm960, %v2119, 0
        %2127 = vmatpush.bf16.msra.mxu0 0
        %2128 = vmatpush.bf16.msra.mxu0 0
        %2129 = vmatpush.bf16.msra.mxu0 0
        %2130 = vmatpush.bf16.msra.mxu0 0
        %2131 = vmatpush.bf16.msra.mxu0 0
        %2132 = vmatpush.bf16.msra.mxu0 0
        %2133 = vmatpush.bf16.msra.mxu0 %v2125
        %2134 = vmatpush.bf16.msra.mxu0 %v2118
        %2135 = vmatmul.bf16.gmra.mxu0 %v2122
        %v2136 = vpop.f32.mrf.mxu0
        %v2137 = vadd.f32 0.0, %v2136
        %v2138 = vpop.f32.mrf.mxu0
        %v2139 = vadd.f32 0.0, %v2138
        %2140 = vdwg.mxu0
        %v2141 = vadd.f32 %v2096, %v2137
        %v2142 = vadd.f32 %v2097, %v2139
        %v2143 = vld [vmem:[#allocation3] sm:$0x8]
        %s2144 = scalar_lea.vmem [#allocation12], 96
        %v2145 = vld [vmem:[%s2144] sm:$0xf]
        %v2146 = vld [vmem:[%s2144 + $0x4] sm:$0xf]
        %v2147 = vld [vmem:[%s2144 + $0x8] sm:$0xf]
        %v2148 = vld [vmem:[%s2144 + $0xc] sm:$0x7]
        %v2150 = vunpack.c.l.b16 %v2143
        %v2151 = vpack.c.b16 %v1840, %v2150
        %v2152 = vrot.slane %v2151, 3
        %v2153 = vrot.slane %v2047, 3
        %v2154 = vsel %vm679, %v2152, %v2153
        %v2159 = vunpack.c.l.b16 %v2145
        %v2160 = vunpack.c.l.b16 %v2146
        %v2161 = vunpack.c.l.b16 %v2147
        %v2162 = vunpack.c.l.b16 %v2148
        %v2163 = vpack.c.b16 %v2160, %v2159
        %v2164 = vpack.c.b16 %v2162, %v2161
        %v2167 = vsel %vm956, %v2154, 0
        %v2170 = vsel %vm960, %v2164, 0
        %2172 = vmatpush.bf16.msra.mxu0 0
        %2173 = vmatpush.bf16.msra.mxu0 0
        %2174 = vmatpush.bf16.msra.mxu0 0
        %2175 = vmatpush.bf16.msra.mxu0 0
        %2176 = vmatpush.bf16.msra.mxu0 0
        %2177 = vmatpush.bf16.msra.mxu0 0
        %2178 = vmatpush.bf16.msra.mxu0 %v2170
        %2179 = vmatpush.bf16.msra.mxu0 %v2163
        %2180 = vmatmul.bf16.gmra.mxu0 %v2167
        %v2181 = vpop.f32.mrf.mxu0
        %v2182 = vadd.f32 0.0, %v2181
        %v2183 = vpop.f32.mrf.mxu0
        %v2184 = vadd.f32 0.0, %v2183
        %2185 = vdwg.mxu0
        %v2186 = vadd.f32 %v2141, %v2182
        %v2187 = vadd.f32 %v2142, %v2184
        %v2188 = vld [vmem:[#allocation2 + $0x8] sm:$0x7]
        %s2189 = scalar_lea.vmem [#allocation11], 112
        %v2190 = vld [vmem:[%s2189] sm:$0xf]
        %v2191 = vld [vmem:[%s2189 + $0x4] sm:$0xf]
        %v2192 = vld [vmem:[%s2189 + $0x8] sm:$0xf]
        %v2193 = vld [vmem:[%s2189 + $0xc] sm:$0x7]
        %v2195 = vunpack.c.l.b16 %v2188
        %v2196 = vpack.c.b16 %v2195, %v2195
        %v2198 = vshrl.u32 %v2106, 16
        %v2200 = vrot.slane %v2198, 3
        %v2201 = vshll.u32 %v2106, 16
        %v2203 = vrot.slane %v2201, 4
        %v2204 = vor.u32 %v2200, %v2203
        %v2206 = vshrl.u32 %v2196, 16
        %v2208 = vrot.slane %v2206, 3
        %v2209 = vshll.u32 %v2196, 16
        %v2211 = vrot.slane %v2209, 4
        %v2212 = vor.u32 %v2208, %v2211
        %v2213 = vsel %vm717, %v2204, %v2212
        %v2218 = vunpack.c.l.b16 %v2190
        %v2219 = vunpack.c.l.b16 %v2191
        %v2220 = vunpack.c.l.b16 %v2192
        %v2221 = vunpack.c.l.b16 %v2193
        %v2222 = vpack.c.b16 %v2219, %v2218
        %v2223 = vpack.c.b16 %v2221, %v2220
        %v2226 = vsel %vm956, %v2213, 0
        %v2229 = vsel %vm960, %v2223, 0
        %2231 = vmatpush.bf16.msra.mxu0 0
        %2232 = vmatpush.bf16.msra.mxu0 0
        %2233 = vmatpush.bf16.msra.mxu0 0
        %2234 = vmatpush.bf16.msra.mxu0 0
        %2235 = vmatpush.bf16.msra.mxu0 0
        %2236 = vmatpush.bf16.msra.mxu0 0
        %2237 = vmatpush.bf16.msra.mxu0 %v2229
        %2238 = vmatpush.bf16.msra.mxu0 %v2222
        %2239 = vmatmul.bf16.gmra.mxu0 %v2226
        %v2240 = vpop.f32.mrf.mxu0
        %v2241 = vadd.f32 0.0, %v2240
        %v2242 = vpop.f32.mrf.mxu0
        %v2243 = vadd.f32 0.0, %v2242
        %2244 = vdwg.mxu0
        %v2245 = vadd.f32 %v2186, %v2241
        %v2246 = vadd.f32 %v2187, %v2243
        %v2247 = vld [vmem:[#allocation3 + $0x8] sm:$0x7]
        %s2248 = scalar_lea.vmem [#allocation12], 112
        %v2249 = vld [vmem:[%s2248] sm:$0xf]
        %v2250 = vld [vmem:[%s2248 + $0x4] sm:$0xf]
        %v2251 = vld [vmem:[%s2248 + $0x8] sm:$0xf]
        %v2252 = vld [vmem:[%s2248 + $0xc] sm:$0x7]
        %v2254 = vunpack.c.l.b16 %v2247
        %v2255 = vpack.c.b16 %v2254, %v2254
        %v2257 = vshrl.u32 %v2151, 16
        %v2259 = vrot.slane %v2257, 3
        %v2260 = vshll.u32 %v2151, 16
        %v2262 = vrot.slane %v2260, 4
        %v2263 = vor.u32 %v2259, %v2262
        %v2265 = vshrl.u32 %v2255, 16
        %v2267 = vrot.slane %v2265, 3
        %v2268 = vshll.u32 %v2255, 16
        %v2270 = vrot.slane %v2268, 4
        %v2271 = vor.u32 %v2267, %v2270
        %v2272 = vsel %vm717, %v2263, %v2271
        %v2277 = vunpack.c.l.b16 %v2249
        %v2278 = vunpack.c.l.b16 %v2250
        %v2279 = vunpack.c.l.b16 %v2251
        %v2280 = vunpack.c.l.b16 %v2252
        %v2281 = vpack.c.b16 %v2278, %v2277
        %v2282 = vpack.c.b16 %v2280, %v2279
        %v2285 = vsel %vm956, %v2272, 0
        %v2288 = vsel %vm960, %v2282, 0
        %2290 = vmatpush.bf16.msra.mxu0 0
        %2291 = vmatpush.bf16.msra.mxu0 0
        %2292 = vmatpush.bf16.msra.mxu0 0
        %2293 = vmatpush.bf16.msra.mxu0 0
        %2294 = vmatpush.bf16.msra.mxu0 0
        %2295 = vmatpush.bf16.msra.mxu0 0
        %2296 = vmatpush.bf16.msra.mxu0 %v2288
        %2297 = vmatpush.bf16.msra.mxu0 %v2281
        %2298 = vmatmul.bf16.gmra.mxu0 %v2285
        %v2299 = vpop.f32.mrf.mxu0
        %v2300 = vadd.f32 0.0, %v2299
        %v2301 = vpop.f32.mrf.mxu0
        %v2302 = vadd.f32 0.0, %v2301
        %2303 = vdwg.mxu0
        %v2304 = vadd.f32 %v2245, %v2300
        %v2305 = vadd.f32 %v2246, %v2302
        %s2306 = scalar_lea.vmem [#allocation11], 128
        %v2307 = vld [vmem:[%s2306] sm:$0xf]
        %v2308 = vld [vmem:[%s2306 + $0x4] sm:$0xf]
        %v2309 = vld [vmem:[%s2306 + $0x8] sm:$0xf]
        %v2310 = vld [vmem:[%s2306 + $0xc] sm:$0x7]
        %v2311 = vpack.c.b16 %v2195, %v1778
        %v2316 = vunpack.c.l.b16 %v2307
        %v2317 = vunpack.c.l.b16 %v2308
        %v2318 = vunpack.c.l.b16 %v2309
        %v2319 = vunpack.c.l.b16 %v2310
        %v2320 = vpack.c.b16 %v2317, %v2316
        %v2321 = vpack.c.b16 %v2319, %v2318
        %v2324 = vsel %vm956, %v2311, 0
        %v2327 = vsel %vm960, %v2321, 0
        %2329 = vmatpush.bf16.msra.mxu0 0
        %2330 = vmatpush.bf16.msra.mxu0 0
        %2331 = vmatpush.bf16.msra.mxu0 0
        %2332 = vmatpush.bf16.msra.mxu0 0
        %2333 = vmatpush.bf16.msra.mxu0 0
        %2334 = vmatpush.bf16.msra.mxu0 0
        %2335 = vmatpush.bf16.msra.mxu0 %v2327
        %2336 = vmatpush.bf16.msra.mxu0 %v2320
        %2337 = vmatmul.bf16.gmra.mxu0 %v2324
        %v2338 = vpop.f32.mrf.mxu0
        %v2339 = vadd.f32 0.0, %v2338
        %v2340 = vpop.f32.mrf.mxu0
        %v2341 = vadd.f32 0.0, %v2340
        %2342 = vdwg.mxu0
        %v2343 = vadd.f32 %v2304, %v2339
        %v2344 = vadd.f32 %v2305, %v2341
        %s2345 = scalar_lea.vmem [#allocation12], 128
        %v2346 = vld [vmem:[%s2345] sm:$0xf]
        %v2347 = vld [vmem:[%s2345 + $0x4] sm:$0xf]
        %v2348 = vld [vmem:[%s2345 + $0x8] sm:$0xf]
        %v2349 = vld [vmem:[%s2345 + $0xc] sm:$0x7]
        %v2350 = vpack.c.b16 %v2254, %v1840
        %v2355 = vunpack.c.l.b16 %v2346
        %v2356 = vunpack.c.l.b16 %v2347
        %v2357 = vunpack.c.l.b16 %v2348
        %v2358 = vunpack.c.l.b16 %v2349
        %v2359 = vpack.c.b16 %v2356, %v2355
        %v2360 = vpack.c.b16 %v2358, %v2357
        %v2363 = vsel %vm956, %v2350, 0
        %v2366 = vsel %vm960, %v2360, 0
        %2368 = vmatpush.bf16.msra.mxu0 0
        %2369 = vmatpush.bf16.msra.mxu0 0
        %2370 = vmatpush.bf16.msra.mxu0 0
        %2371 = vmatpush.bf16.msra.mxu0 0
        %2372 = vmatpush.bf16.msra.mxu0 0
        %2373 = vmatpush.bf16.msra.mxu0 0
        %2374 = vmatpush.bf16.msra.mxu0 %v2366
        %2375 = vmatpush.bf16.msra.mxu0 %v2359
        %2376 = vmatmul.bf16.gmra.mxu0 %v2363
        %v2377 = vpop.f32.mrf.mxu0
        %v2378 = vadd.f32 0.0, %v2377
        %v2379 = vpop.f32.mrf.mxu0
        %v2380 = vadd.f32 0.0, %v2379
        %2381 = vdwg.mxu0
        %v2382 = vadd.f32 %v2343, %v2378
        %v2383 = vadd.f32 %v2344, %v2380
        %v2384 = vld [vmem:[#allocation2 + $0x8] sm:$0xf]
        %s2385 = scalar_lea.vmem [#allocation11], 144
        %v2386 = vld [vmem:[%s2385] sm:$0xf]
        %v2387 = vld [vmem:[%s2385 + $0x4] sm:$0xf]
        %v2388 = vld [vmem:[%s2385 + $0x8] sm:$0xf]
        %v2389 = vld [vmem:[%s2385 + $0xc] sm:$0x7]
        %v2391 = vunpack.c.l.b16 %v2384
        %v2392 = vpack.c.b16 %v2391, %v1778
        %v2394 = vshrl.u32 %v2392, 16
        %v2396 = vshll.u32 %v2392, 16
        %v2398 = vrot.slane %v2396, 1
        %v2399 = vor.u32 %v2394, %v2398
        %v2404 = vunpack.c.l.b16 %v2386
        %v2405 = vunpack.c.l.b16 %v2387
        %v2406 = vunpack.c.l.b16 %v2388
        %v2407 = vunpack.c.l.b16 %v2389
        %v2408 = vpack.c.b16 %v2405, %v2404
        %v2409 = vpack.c.b16 %v2407, %v2406
        %v2412 = vsel %vm956, %v2399, 0
        %v2415 = vsel %vm960, %v2409, 0
        %2417 = vmatpush.bf16.msra.mxu0 0
        %2418 = vmatpush.bf16.msra.mxu0 0
        %2419 = vmatpush.bf16.msra.mxu0 0
        %2420 = vmatpush.bf16.msra.mxu0 0
        %2421 = vmatpush.bf16.msra.mxu0 0
        %2422 = vmatpush.bf16.msra.mxu0 0
        %2423 = vmatpush.bf16.msra.mxu0 %v2415
        %2424 = vmatpush.bf16.msra.mxu0 %v2408
        %2425 = vmatmul.bf16.gmra.mxu0 %v2412
        %v2426 = vpop.f32.mrf.mxu0
        %v2427 = vadd.f32 0.0, %v2426
        %v2428 = vpop.f32.mrf.mxu0
        %v2429 = vadd.f32 0.0, %v2428
        %2430 = vdwg.mxu0
        %v2431 = vadd.f32 %v2382, %v2427
        %v2432 = vadd.f32 %v2383, %v2429
        %v2433 = vld [vmem:[#allocation3 + $0x8] sm:$0xf]
        %s2434 = scalar_lea.vmem [#allocation12], 144
        %v2435 = vld [vmem:[%s2434] sm:$0xf]
        %v2436 = vld [vmem:[%s2434 + $0x4] sm:$0xf]
        %v2437 = vld [vmem:[%s2434 + $0x8] sm:$0xf]
        %v2438 = vld [vmem:[%s2434 + $0xc] sm:$0x7]
        %v2440 = vunpack.c.l.b16 %v2433
        %v2441 = vpack.c.b16 %v2440, %v1840
        %v2443 = vshrl.u32 %v2441, 16
        %v2445 = vshll.u32 %v2441, 16
        %v2447 = vrot.slane %v2445, 1
        %v2448 = vor.u32 %v2443, %v2447
        %v2453 = vunpack.c.l.b16 %v2435
        %v2454 = vunpack.c.l.b16 %v2436
        %v2455 = vunpack.c.l.b16 %v2437
        %v2456 = vunpack.c.l.b16 %v2438
        %v2457 = vpack.c.b16 %v2454, %v2453
        %v2458 = vpack.c.b16 %v2456, %v2455
        %v2461 = vsel %vm956, %v2448, 0
        %v2464 = vsel %vm960, %v2458, 0
        %2466 = vmatpush.bf16.msra.mxu0 0
        %2467 = vmatpush.bf16.msra.mxu0 0
        %2468 = vmatpush.bf16.msra.mxu0 0
        %2469 = vmatpush.bf16.msra.mxu0 0
        %2470 = vmatpush.bf16.msra.mxu0 0
        %2471 = vmatpush.bf16.msra.mxu0 0
        %2472 = vmatpush.bf16.msra.mxu0 %v2464
        %2473 = vmatpush.bf16.msra.mxu0 %v2457
        %2474 = vmatmul.bf16.gmra.mxu0 %v2461
        %v2475 = vpop.f32.mrf.mxu0
        %v2476 = vadd.f32 0.0, %v2475
        %v2477 = vpop.f32.mrf.mxu0
        %v2478 = vadd.f32 0.0, %v2477
        %2479 = vdwg.mxu0
        %v2480 = vadd.f32 %v2431, %v2476
        %v2481 = vadd.f32 %v2432, %v2478
        %v2482 = vld [vmem:[#allocation2 + $0x4] sm:$0xe]
        %s2483 = scalar_lea.vmem [#allocation11], 160
        %v2484 = vld [vmem:[%s2483] sm:$0xf]
        %v2485 = vld [vmem:[%s2483 + $0x4] sm:$0xf]
        %v2486 = vld [vmem:[%s2483 + $0x8] sm:$0xf]
        %v2487 = vld [vmem:[%s2483 + $0xc] sm:$0x7]
        %v2489 = vunpack.c.l.b16 %v2482
        %v2490 = vpack.c.b16 %v2391, %v2489
        %v2491 = vrot.slane %v2490, 1
        %v2496 = vunpack.c.l.b16 %v2484
        %v2497 = vunpack.c.l.b16 %v2485
        %v2498 = vunpack.c.l.b16 %v2486
        %v2499 = vunpack.c.l.b16 %v2487
        %v2500 = vpack.c.b16 %v2497, %v2496
        %v2501 = vpack.c.b16 %v2499, %v2498
        %v2504 = vsel %vm956, %v2491, 0
        %v2507 = vsel %vm960, %v2501, 0
        %2509 = vmatpush.bf16.msra.mxu0 0
        %2510 = vmatpush.bf16.msra.mxu0 0
        %2511 = vmatpush.bf16.msra.mxu0 0
        %2512 = vmatpush.bf16.msra.mxu0 0
        %2513 = vmatpush.bf16.msra.mxu0 0
        %2514 = vmatpush.bf16.msra.mxu0 0
        %2515 = vmatpush.bf16.msra.mxu0 %v2507
        %2516 = vmatpush.bf16.msra.mxu0 %v2500
        %2517 = vmatmul.bf16.gmra.mxu0 %v2504
        %v2518 = vpop.f32.mrf.mxu0
        %v2519 = vadd.f32 0.0, %v2518
        %v2520 = vpop.f32.mrf.mxu0
        %v2521 = vadd.f32 0.0, %v2520
        %2522 = vdwg.mxu0
        %v2523 = vadd.f32 %v2480, %v2519
        %v2524 = vadd.f32 %v2481, %v2521
        %v2525 = vld [vmem:[#allocation3 + $0x4] sm:$0xe]
        %s2526 = scalar_lea.vmem [#allocation12], 160
        %v2527 = vld [vmem:[%s2526] sm:$0xf]
        %v2528 = vld [vmem:[%s2526 + $0x4] sm:$0xf]
        %v2529 = vld [vmem:[%s2526 + $0x8] sm:$0xf]
        %v2530 = vld [vmem:[%s2526 + $0xc] sm:$0x7]
        %v2532 = vunpack.c.l.b16 %v2525
        %v2533 = vpack.c.b16 %v2440, %v2532
        %v2534 = vrot.slane %v2533, 1
        %v2539 = vunpack.c.l.b16 %v2527
        %v2540 = vunpack.c.l.b16 %v2528
        %v2541 = vunpack.c.l.b16 %v2529
        %v2542 = vunpack.c.l.b16 %v2530
        %v2543 = vpack.c.b16 %v2540, %v2539
        %v2544 = vpack.c.b16 %v2542, %v2541
        %v2547 = vsel %vm956, %v2534, 0
        %v2550 = vsel %vm960, %v2544, 0
        %2552 = vmatpush.bf16.msra.mxu0 0
        %2553 = vmatpush.bf16.msra.mxu0 0
        %2554 = vmatpush.bf16.msra.mxu0 0
        %2555 = vmatpush.bf16.msra.mxu0 0
        %2556 = vmatpush.bf16.msra.mxu0 0
        %2557 = vmatpush.bf16.msra.mxu0 0
        %2558 = vmatpush.bf16.msra.mxu0 %v2550
        %2559 = vmatpush.bf16.msra.mxu0 %v2543
        %2560 = vmatmul.bf16.gmra.mxu0 %v2547
        %v2561 = vpop.f32.mrf.mxu0
        %v2562 = vadd.f32 0.0, %v2561
        %v2563 = vpop.f32.mrf.mxu0
        %v2564 = vadd.f32 0.0, %v2563
        %2565 = vdwg.mxu0
        %v2566 = vadd.f32 %v2523, %v2562
        %v2567 = vadd.f32 %v2524, %v2564
        %v2568 = vld [vmem:[#allocation14] sm:$0x1]
        %v2570 = vperm.slane %v2568, 0
        %v2572 = vadd.f32 %v2566, %v2570
        %v2573 = vadd.f32 %v2567, %v2570
        %v2574 = vmax.f32 %v2572, 0.0
        %v2575 = vmax.f32 %v2573, 0.0
        %v2576 = vpack.c.bf16 %v2574, %v2574
        %v2577 = vpack.c.bf16 %v2575, %v2575
        %vm2578 = vcmask 486400
        %2579 = vst.msk [vmem:[%s415] sm:$0xf] %vm2578, %v2576
        %vm2580 = vcmask 485376
        %2581 = vst.msk [vmem:[%s415 + $0x4] sm:$0x7] %vm2580, %v2577
        %p2582 = scmp.lt.s32.totalorder %s23, 1
        %s2583 = scalar_select %p2582, %s23, 1
        %s2584 = smul.addr %s2583, 2
        %s2585 = smul.addr %s2584, 4
        %s2586 = scalar_lea.vmem %s8, %s2585
        // Predicated region
        $region81: #{mdpr_forward.4} parent=51 // pred_check
          %p2587 = pneg %p214
        $region82: #{mdpr_forward.4} parent=51 // pred_check_branch
          %2589 = sbr.rel (%p2587) target = $region84
        $region83: #{mdpr_forward.4} parent=51 // pred_region
          _
        $region84: #{mdpr_forward.4} parent=51 // pred_fallthru
          _
      $region52: #{mdpr_forward.4} parent=5 // pred_fallthru
        _
      %p2590 = scmp.le.s32.totalorder 2, %s18
      // Predicated region
      $region85: #{mdpr_forward.4} parent=5 // pred_check
        %p2591 = pneg %p2590
      $region86: #{mdpr_forward.4} parent=5 // pred_check_branch
        %2593 = sbr.rel (%p2591) target = $region88
      $region87: #{mdpr_forward.4} parent=5 // pred_region
        %s2594 = ssub.s32 %s18, 2
        // Predicated region
        $region89: #{mdpr_forward.4} parent=87 // pred_check
          %p2595 = pneg %p220
        $region90: #{mdpr_forward.4} parent=87 // pred_check_branch
          %2597 = sbr.rel (%p2595) target = $region92
        $region91: #{mdpr_forward.4} parent=87 // pred_region
          %p2598 = scmp.lt.s32.totalorder %s24, 1
          %s2599 = scalar_select %p2598, %s24, 1
          %s2600 = smul.addr %s2599, 2
          %s2601 = smul.addr %s2600, 4
          %s2602 = scalar_lea.vmem %s8, %s2601
        $region92: #{mdpr_forward.4} parent=87 // pred_fallthru
          _
      $region88: #{mdpr_forward.4} parent=5 // pred_fallthru
        _
    $region6: #{mdpr_forward.4} parent=1 // loop_footer
      %s22 = sadd.s32 1, %s18
    $region7: #{mdpr_forward.4} parent=1 // loop_footer_branch
      %17 = sbr.rel target = $region3
    $region8: #{mdpr_forward.4} parent=1 // loop_exit
      _
    %2603 = vsyncpa [#allocation5], 1
    %s2604 = scalar_lea.sflag [#allocation5], 1
    %2605 = vsyncpa %s2604, 1
    %2606 = vsyncpa [#allocation7], 1
    %2607 = vsyncpa [#allocation10], 1
    %2608 = vsyncpa [#allocation13], 1

// kernel: mdpr_forward.5
$region0: #{mdpr_forward.5}
  #allocation0 [shape = 'u32[]', space=smem, size = 0x4, offset = 0x4, fixed_abs, tag = 'smem constant byte address 0x4 - core index']
  #allocation1 [shape = 'u32[72,128]{1,0:T(1,128)}', space=vmem, size = 0x9000, scoped, tag = 'internal scratch']
  %s0 = inlined_call_operand.vmem [shape: bf16[2,7168], index: 0, kind: input, shape index: {}]
  %s1 = inlined_call_operand.hbm [shape: bf16[7168,256], index: 1, kind: input, shape index: {}]
  %s2 = inlined_call_operand.hbm [shape: f32[1,256], index: 2, kind: input, shape index: {}]
  %s3 = inlined_call_operand.hbm [shape: bf16[256,128], index: 3, kind: input, shape index: {}]
  %s4 = inlined_call_operand.hbm [shape: f32[1,128], index: 4, kind: input, shape index: {}]
  %s5 = inlined_call_operand.vmem [shape: bf16[2,840], index: 5, kind: input, shape index: {}]
  %s6 = inlined_call_operand.hbm [shape: bf16[840,128], index: 6, kind: input, shape index: {}]
  %s7 = inlined_call_operand.hbm [shape: f32[1,128], index: 7, kind: input, shape index: {}]
  %s8 = inlined_call_operand.hbm [shape: bf16[128,128], index: 8, kind: input, shape index: {}]
  %s9 = inlined_call_operand.hbm [shape: f32[1,128], index: 9, kind: input, shape index: {}]
  %s10 = inlined_call_operand.hbm [shape: bf16[128,128], index: 10, kind: input, shape index: {}]
  %s11 = inlined_call_operand.hbm [shape: bf16[128,128], index: 11, kind: input, shape index: {}]
  %s12 = inlined_call_operand.hbm [shape: f32[1,128], index: 12, kind: input, shape index: {}]
  %s13 = inlined_call_operand.hbm [shape: f32[2,128], index: 13, kind: output, shape index: {}]
  %s14 = sld [smem:[#allocation0]]
  $region106: #{mdpr_forward.5} parent=0
    _
  %s16 = ssub.s32 1, %s14
  %s17 = scalar_select 0, %s16, %s14
  $region1: #{mdpr_forward.5} parent=0
    #allocation2 [shape = 'u8[3670016]{0}', space=vmem, size = 0x380000, scoped, tag = 'input window, operand 1, single buffered']
    #allocation3 [shape = 's32[1]{0}', space=sflag, size = 0x4, scoped, tag = 'scoped memory for mdpr_forward.5']
    #allocation4 [shape = 's32[1]{0}', space=sflag, size = 0x4, scoped, tag = 'scoped memory for mdpr_forward.5']
    #allocation5 [shape = 'u8[1024]{0}', space=vmem, size = 0x400, scoped, tag = 'input window, operand 2, single buffered']
    #allocation6 [shape = 's32[1]{0}', space=sflag, size = 0x4, scoped, tag = 'scoped memory for mdpr_forward.5']
    #allocation7 [shape = 'u8[65536]{0}', space=vmem, size = 0x10000, scoped, tag = 'input window, operand 3, single buffered']
    #allocation8 [shape = 'u8[512]{0}', space=vmem, size = 0x400, scoped, tag = 'input window, operand 4, single buffered']
    #allocation9 [shape = 's32[1]{0}', space=sflag, size = 0x4, scoped, tag = 'scoped memory for mdpr_forward.5']
    #allocation10 [shape = 'u8[215040]{0}', space=vmem, size = 0x34800, scoped, tag = 'input window, operand 6, single buffered']
    #allocation11 [shape = 'u8[512]{0}', space=vmem, size = 0x400, scoped, tag = 'input window, operand 7, single buffered']
    #allocation12 [shape = 's32[1]{0}', space=sflag, size = 0x4, scoped, tag = 'scoped memory for mdpr_forward.5']
    #allocation13 [shape = 'u8[32768]{0}', space=vmem, size = 0x8000, scoped, tag = 'input window, operand 8, single buffered']
    #allocation14 [shape = 'u8[512]{0}', space=vmem, size = 0x400, scoped, tag = 'input window, operand 9, single buffered']
    #allocation15 [shape = 's32[1]{0}', space=sflag, size = 0x4, scoped, tag = 'scoped memory for mdpr_forward.5']
    #allocation16 [shape = 'u8[32768]{0}', space=vmem, size = 0x8000, scoped, tag = 'input window, operand 10, single buffered']
    #allocation17 [shape = 'u8[32768]{0}', space=vmem, size = 0x8000, scoped, tag = 'input window, operand 11, single buffered']
    #allocation18 [shape = 's32[1]{0}', space=sflag, size = 0x4, scoped, tag = 'scoped memory for mdpr_forward.5']
    #allocation19 [shape = 'u8[512]{0}', space=vmem, size = 0x400, scoped, tag = 'input window, operand 12, single buffered']
    #allocation20 [shape = 'u8[1024]{0}', space=vmem, size = 0x400, scoped, tag = 'output window, operand 0, single buffered']
    %18 = vsyncpa [#allocation3], 0
    %19 = vsyncpa [#allocation6], 0
    %20 = vsyncpa [#allocation9], 0
    %21 = vsyncpa [#allocation12], 0
    %22 = vsyncpa [#allocation15], 0
    %23 = vsyncpa [#allocation18], 0
    %24 = vsyncpa [#allocation4], 0
    // Predicated region
    $region2: #{mdpr_forward.5} parent=1 // pred_check
      _
    $region3: #{mdpr_forward.5} parent=1 // pred_check_branch
      %26 = sbr.rel (0) target = $region5
    $region4: #{mdpr_forward.5} parent=1 // pred_region
      _
    $region5: #{mdpr_forward.5} parent=1 // pred_fallthru
      _
    // Predicated region
    $region6: #{mdpr_forward.5} parent=1 // pred_check
      _
    $region7: #{mdpr_forward.5} parent=1 // pred_check_branch
      %28 = sbr.rel (0) target = $region9
    $region8: #{mdpr_forward.5} parent=1 // pred_region
      %30 = vsyncadd [#allocation3], 0
      %s31 = sshll.u32 %s1, 4
      %s32 = int_to_ptr.hbm [resolvable:$true] %s31
      %s33 = sshll.u32 [#allocation2], 4
      %s34 = int_to_ptr.vmem [resolvable:$true] %s33
      %39 = dma.hbm_to_vmem [thread:$0]  %s32, 114688, %s34, [#allocation3], 128, 128, 8
    $region9: #{mdpr_forward.5} parent=1 // pred_fallthru
      _
    // Predicated region
    $region10: #{mdpr_forward.5} parent=1 // pred_check
      _
    $region11: #{mdpr_forward.5} parent=1 // pred_check_branch
      %41 = sbr.rel (0) target = $region13
    $region12: #{mdpr_forward.5} parent=1 // pred_region
      %43 = vsyncadd [#allocation6], 0
      %s45 = sshll.u32 %s2, 4
      %s46 = int_to_ptr.hbm [resolvable:$true] %s45
      %s47 = sshll.u32 [#allocation5], 4
      %s48 = int_to_ptr.vmem [resolvable:$true] %s47
      %50 = dma.hbm_to_vmem [thread:$0]  %s46, 32, %s48, [#allocation6]
    $region13: #{mdpr_forward.5} parent=1 // pred_fallthru
      _
    // Predicated region
    $region14: #{mdpr_forward.5} parent=1 // pred_check
      _
    $region15: #{mdpr_forward.5} parent=1 // pred_check_branch
      %52 = sbr.rel (0) target = $region17
    $region16: #{mdpr_forward.5} parent=1 // pred_region
      %54 = vsyncadd [#allocation6], 0
      %s55 = sshll.u32 %s3, 4
      %s56 = int_to_ptr.hbm [resolvable:$true] %s55
      %s57 = sshll.u32 [#allocation7], 4
      %s58 = int_to_ptr.vmem [resolvable:$true] %s57
      %63 = dma.hbm_to_vmem [thread:$0]  %s56, 2048, %s58, [#allocation6], 64, 64, 4
    $region17: #{mdpr_forward.5} parent=1 // pred_fallthru
      _
    // Predicated region
    $region18: #{mdpr_forward.5} parent=1 // pred_check
      _
    $region19: #{mdpr_forward.5} parent=1 // pred_check_branch
      %65 = sbr.rel (0) target = $region21
    $region20: #{mdpr_forward.5} parent=1 // pred_region
      %67 = vsyncadd [#allocation9], 0
      %s69 = sshll.u32 %s4, 4
      %s70 = int_to_ptr.hbm [resolvable:$true] %s69
      %s71 = sshll.u32 [#allocation8], 4
      %s72 = int_to_ptr.vmem [resolvable:$true] %s71
      %74 = dma.hbm_to_vmem [thread:$0]  %s70, 16, %s72, [#allocation9]
    $region21: #{mdpr_forward.5} parent=1 // pred_fallthru
      _
    // Predicated region
    $region22: #{mdpr_forward.5} parent=1 // pred_check
      _
    $region23: #{mdpr_forward.5} parent=1 // pred_check_branch
      %76 = sbr.rel (0) target = $region25
    $region24: #{mdpr_forward.5} parent=1 // pred_region
      _
    $region25: #{mdpr_forward.5} parent=1 // pred_fallthru
      _
    // Predicated region
    $region26: #{mdpr_forward.5} parent=1 // pred_check
      _
    $region27: #{mdpr_forward.5} parent=1 // pred_check_branch
      %78 = sbr.rel (0) target = $region29
    $region28: #{mdpr_forward.5} parent=1 // pred_region
      %80 = vsyncadd [#allocation9], 0
      %s81 = sshll.u32 %s6, 4
      %s82 = int_to_ptr.hbm [resolvable:$true] %s81
      %s83 = sshll.u32 [#allocation10], 4
      %s84 = int_to_ptr.vmem [resolvable:$true] %s83
      %89 = dma.hbm_to_vmem [thread:$0]  %s82, 6720, %s84, [#allocation9], 64, 64, 4
    $region29: #{mdpr_forward.5} parent=1 // pred_fallthru
      _
    // Predicated region
    $region30: #{mdpr_forward.5} parent=1 // pred_check
      _
    $region31: #{mdpr_forward.5} parent=1 // pred_check_branch
      %91 = sbr.rel (0) target = $region33
    $region32: #{mdpr_forward.5} parent=1 // pred_region
      %93 = vsyncadd [#allocation12], 0
      %s95 = sshll.u32 %s7, 4
      %s96 = int_to_ptr.hbm [resolvable:$true] %s95
      %s97 = sshll.u32 [#allocation11], 4
      %s98 = int_to_ptr.vmem [resolvable:$true] %s97
      %100 = dma.hbm_to_vmem [thread:$0]  %s96, 16, %s98, [#allocation12]
    $region33: #{mdpr_forward.5} parent=1 // pred_fallthru
      _
    // Predicated region
    $region34: #{mdpr_forward.5} parent=1 // pred_check
      _
    $region35: #{mdpr_forward.5} parent=1 // pred_check_branch
      %102 = sbr.rel (0) target = $region37
    $region36: #{mdpr_forward.5} parent=1 // pred_region
      %104 = vsyncadd [#allocation12], 0
      %s105 = sshll.u32 %s8, 4
      %s106 = int_to_ptr.hbm [resolvable:$true] %s105
      %s107 = sshll.u32 [#allocation13], 4
      %s108 = int_to_ptr.vmem [resolvable:$true] %s107
      %113 = dma.hbm_to_vmem [thread:$0]  %s106, 1024, %s108, [#allocation12], 64, 64, 4
    $region37: #{mdpr_forward.5} parent=1 // pred_fallthru
      _
    // Predicated region
    $region38: #{mdpr_forward.5} parent=1 // pred_check
      _
    $region39: #{mdpr_forward.5} parent=1 // pred_check_branch
      %115 = sbr.rel (0) target = $region41
    $region40: #{mdpr_forward.5} parent=1 // pred_region
      %117 = vsyncadd [#allocation15], 0
      %s119 = sshll.u32 %s9, 4
      %s120 = int_to_ptr.hbm [resolvable:$true] %s119
      %s121 = sshll.u32 [#allocation14], 4
      %s122 = int_to_ptr.vmem [resolvable:$true] %s121
      %124 = dma.hbm_to_vmem [thread:$0]  %s120, 16, %s122, [#allocation15]
    $region41: #{mdpr_forward.5} parent=1 // pred_fallthru
      _
    // Predicated region
    $region42: #{mdpr_forward.5} parent=1 // pred_check
      _
    $region43: #{mdpr_forward.5} parent=1 // pred_check_branch
      %126 = sbr.rel (0) target = $region45
    $region44: #{mdpr_forward.5} parent=1 // pred_region
      %128 = vsyncadd [#allocation15], 0
      %s129 = sshll.u32 %s10, 4
      %s130 = int_to_ptr.hbm [resolvable:$true] %s129
      %s131 = sshll.u32 [#allocation16], 4
      %s132 = int_to_ptr.vmem [resolvable:$true] %s131
      %137 = dma.hbm_to_vmem [thread:$0]  %s130, 1024, %s132, [#allocation15], 64, 64, 4
    $region45: #{mdpr_forward.5} parent=1 // pred_fallthru
      _
    // Predicated region
    $region46: #{mdpr_forward.5} parent=1 // pred_check
      _
    $region47: #{mdpr_forward.5} parent=1 // pred_check_branch
      %139 = sbr.rel (0) target = $region49
    $region48: #{mdpr_forward.5} parent=1 // pred_region
      %141 = vsyncadd [#allocation18], 0
      %s142 = sshll.u32 %s11, 4
      %s143 = int_to_ptr.hbm [resolvable:$true] %s142
      %s144 = sshll.u32 [#allocation17], 4
      %s145 = int_to_ptr.vmem [resolvable:$true] %s144
      %150 = dma.hbm_to_vmem [thread:$0]  %s143, 1024, %s145, [#allocation18], 64, 64, 4
    $region49: #{mdpr_forward.5} parent=1 // pred_fallthru
      _
    // Predicated region
    $region50: #{mdpr_forward.5} parent=1 // pred_check
      _
    $region51: #{mdpr_forward.5} parent=1 // pred_check_branch
      %152 = sbr.rel (0) target = $region53
    $region52: #{mdpr_forward.5} parent=1 // pred_region
      %154 = vsyncadd [#allocation18], 0
      %s156 = sshll.u32 %s12, 4
      %s157 = int_to_ptr.hbm [resolvable:$true] %s156
      %s158 = sshll.u32 [#allocation19], 4
      %s159 = int_to_ptr.vmem [resolvable:$true] %s158
      %161 = dma.hbm_to_vmem [thread:$0]  %s157, 16, %s159, [#allocation18]
    $region53: #{mdpr_forward.5} parent=1 // pred_fallthru
      _
    // Predicated region
    $region54: #{mdpr_forward.5} parent=1 // pred_check
      _
    $region55: #{mdpr_forward.5} parent=1 // pred_check_branch
      %163 = sbr.rel (0) target = $region57
    $region56: #{mdpr_forward.5} parent=1 // pred_region
      %165 = dma.done [#allocation3], 114688
    $region57: #{mdpr_forward.5} parent=1 // pred_fallthru
      _
    // Predicated region
    $region58: #{mdpr_forward.5} parent=1 // pred_check
      _
    $region59: #{mdpr_forward.5} parent=1 // pred_check_branch
      %167 = sbr.rel (0) target = $region61
    $region60: #{mdpr_forward.5} parent=1 // pred_region
      %169 = dma.done [#allocation6], 32
    $region61: #{mdpr_forward.5} parent=1 // pred_fallthru
      _
    // Predicated region
    $region62: #{mdpr_forward.5} parent=1 // pred_check
      _
    $region63: #{mdpr_forward.5} parent=1 // pred_check_branch
      %171 = sbr.rel (0) target = $region65
    $region64: #{mdpr_forward.5} parent=1 // pred_region
      %173 = dma.done [#allocation6], 2048
    $region65: #{mdpr_forward.5} parent=1 // pred_fallthru
      _
    // Predicated region
    $region66: #{mdpr_forward.5} parent=1 // pred_check
      _
    $region67: #{mdpr_forward.5} parent=1 // pred_check_branch
      %175 = sbr.rel (0) target = $region69
    $region68: #{mdpr_forward.5} parent=1 // pred_region
      %177 = dma.done [#allocation9], 16
    $region69: #{mdpr_forward.5} parent=1 // pred_fallthru
      _
    // Predicated region
    $region70: #{mdpr_forward.5} parent=1 // pred_check
      _
    $region71: #{mdpr_forward.5} parent=1 // pred_check_branch
      %179 = sbr.rel (0) target = $region73
    $region72: #{mdpr_forward.5} parent=1 // pred_region
      %181 = dma.done [#allocation9], 6720
    $region73: #{mdpr_forward.5} parent=1 // pred_fallthru
      _
    // Predicated region
    $region74: #{mdpr_forward.5} parent=1 // pred_check
      _
    $region75: #{mdpr_forward.5} parent=1 // pred_check_branch
      %183 = sbr.rel (0) target = $region77
    $region76: #{mdpr_forward.5} parent=1 // pred_region
      %185 = dma.done [#allocation12], 16
    $region77: #{mdpr_forward.5} parent=1 // pred_fallthru
      _
    // Predicated region
    $region78: #{mdpr_forward.5} parent=1 // pred_check
      _
    $region79: #{mdpr_forward.5} parent=1 // pred_check_branch
      %187 = sbr.rel (0) target = $region81
    $region80: #{mdpr_forward.5} parent=1 // pred_region
      %189 = dma.done [#allocation12], 1024
    $region81: #{mdpr_forward.5} parent=1 // pred_fallthru
      _
    // Predicated region
    $region82: #{mdpr_forward.5} parent=1 // pred_check
      _
    $region83: #{mdpr_forward.5} parent=1 // pred_check_branch
      %191 = sbr.rel (0) target = $region85
    $region84: #{mdpr_forward.5} parent=1 // pred_region
      %193 = dma.done [#allocation15], 16
    $region85: #{mdpr_forward.5} parent=1 // pred_fallthru
      _
    // Predicated region
    $region86: #{mdpr_forward.5} parent=1 // pred_check
      _
    $region87: #{mdpr_forward.5} parent=1 // pred_check_branch
      %195 = sbr.rel (0) target = $region89
    $region88: #{mdpr_forward.5} parent=1 // pred_region
      %197 = dma.done [#allocation15], 1024
    $region89: #{mdpr_forward.5} parent=1 // pred_fallthru
      _
    // Predicated region
    $region90: #{mdpr_forward.5} parent=1 // pred_check
      _
    $region91: #{mdpr_forward.5} parent=1 // pred_check_branch
      %199 = sbr.rel (0) target = $region93
    $region92: #{mdpr_forward.5} parent=1 // pred_region
      %201 = dma.done [#allocation18], 1024
    $region93: #{mdpr_forward.5} parent=1 // pred_fallthru
      _
    // Predicated region
    $region94: #{mdpr_forward.5} parent=1 // pred_check
      _
    $region95: #{mdpr_forward.5} parent=1 // pred_check_branch
      %203 = sbr.rel (0) target = $region97
    $region96: #{mdpr_forward.5} parent=1 // pred_region
      %205 = dma.done [#allocation18], 16
    $region97: #{mdpr_forward.5} parent=1 // pred_fallthru
      _
    %v207 = vld [vmem:[%s0] sm:$0xff]
    %v208 = vld [vmem:[%s0 + $0x8] sm:$0xff]
    %v209 = vld [vmem:[%s0 + $0x10] sm:$0xff]
    %v210 = vld [vmem:[%s0 + $0x18] sm:$0xff]
    %v211 = vld [vmem:[%s0 + $0x20] sm:$0xff]
    %v212 = vld [vmem:[%s0 + $0x28] sm:$0xff]
    %v213 = vld [vmem:[%s0 + $0x30] sm:$0xff]
    %v214 = vld [vmem:[#allocation2] sm:$0xff]
    %v215 = vld [vmem:[#allocation2 + $0x8] sm:$0xff]
    %v216 = vld [vmem:[#allocation2 + $0x10] sm:$0xff]
    %v217 = vld [vmem:[#allocation2 + $0x18] sm:$0xff]
    %v218 = vld [vmem:[#allocation2 + $0x20] sm:$0xff]
    %v219 = vld [vmem:[#allocation2 + $0x28] sm:$0xff]
    %v220 = vld [vmem:[#allocation2 + $0x30] sm:$0xff]
    %v221 = vld [vmem:[#allocation2 + $0x38] sm:$0xff]
    %v222 = vld [vmem:[#allocation2 + $0x40] sm:$0xff]
    %v223 = vld [vmem:[#allocation2 + $0x48] sm:$0xff]
    %v224 = vld [vmem:[#allocation2 + $0x50] sm:$0xff]
    %v225 = vld [vmem:[#allocation2 + $0x58] sm:$0xff]
    %v226 = vld [vmem:[#allocation2 + $0x60] sm:$0xff]
    %v227 = vld [vmem:[#allocation2 + $0x68] sm:$0xff]
    %v228 = vld [vmem:[#allocation2 + $0x70] sm:$0xff]
    %v229 = vld [vmem:[#allocation2 + $0x78] sm:$0xff]
    %v230 = vld [vmem:[#allocation2 + $0x80] sm:$0xff]
    %v231 = vld [vmem:[#allocation2 + $0x88] sm:$0xff]
    %v232 = vld [vmem:[#allocation2 + $0x90] sm:$0xff]
    %v233 = vld [vmem:[#allocation2 + $0x98] sm:$0xff]
    %v234 = vld [vmem:[#allocation2 + $0xa0] sm:$0xff]
    %v235 = vld [vmem:[#allocation2 + $0xa8] sm:$0xff]
    %v236 = vld [vmem:[#allocation2 + $0xb0] sm:$0xff]
    %v237 = vld [vmem:[#allocation2 + $0xb8] sm:$0xff]
    %v238 = vld [vmem:[#allocation2 + $0xc0] sm:$0xff]
    %v239 = vld [vmem:[#allocation2 + $0xc8] sm:$0xff]
    %v240 = vld [vmem:[#allocation2 + $0xd0] sm:$0xff]
    %v241 = vld [vmem:[#allocation2 + $0xd8] sm:$0xff]
    %v242 = vld [vmem:[#allocation2 + $0xe0] sm:$0xff]
    %v243 = vld [vmem:[#allocation2 + $0xe8] sm:$0xff]
    %v244 = vld [vmem:[#allocation2 + $0xf0] sm:$0xff]
    %v245 = vld [vmem:[#allocation2 + $0xf8] sm:$0xff]
    %v246 = vld [vmem:[#allocation2 + $0x100] sm:$0xff]
    %v247 = vld [vmem:[#allocation2 + $0x108] sm:$0xff]
    %v248 = vld [vmem:[#allocation2 + $0x110] sm:$0xff]
    %v249 = vld [vmem:[#allocation2 + $0x118] sm:$0xff]
    %v250 = vld [vmem:[#allocation2 + $0x120] sm:$0xff]
    %v251 = vld [vmem:[#allocation2 + $0x128] sm:$0xff]
    %v252 = vld [vmem:[#allocation2 + $0x130] sm:$0xff]
    %v253 = vld [vmem:[#allocation2 + $0x138] sm:$0xff]
    %v254 = vld [vmem:[#allocation2 + $0x140] sm:$0xff]
    %v255 = vld [vmem:[#allocation2 + $0x148] sm:$0xff]
    %v256 = vld [vmem:[#allocation2 + $0x150] sm:$0xff]
    %v257 = vld [vmem:[#allocation2 + $0x158] sm:$0xff]
    %v258 = vld [vmem:[#allocation2 + $0x160] sm:$0xff]
    %v259 = vld [vmem:[#allocation2 + $0x168] sm:$0xff]
    %v260 = vld [vmem:[#allocation2 + $0x170] sm:$0xff]
    %v261 = vld [vmem:[#allocation2 + $0x178] sm:$0xff]
    %v262 = vld [vmem:[#allocation2 + $0x180] sm:$0xff]
    %v263 = vld [vmem:[#allocation2 + $0x188] sm:$0xff]
    %v264 = vld [vmem:[#allocation2 + $0x190] sm:$0xff]
    %v265 = vld [vmem:[#allocation2 + $0x198] sm:$0xff]
    %v266 = vld [vmem:[#allocation2 + $0x1a0] sm:$0xff]
    %v267 = vld [vmem:[#allocation2 + $0x1a8] sm:$0xff]
    %v268 = vld [vmem:[#allocation2 + $0x1b0] sm:$0xff]
    %v269 = vld [vmem:[#allocation2 + $0x1b8] sm:$0xff]
    %v270 = vld [vmem:[#allocation2 + $0x1c0] sm:$0xff]
    %v271 = vld [vmem:[#allocation2 + $0x1c8] sm:$0xff]
    %v272 = vld [vmem:[#allocation2 + $0x1d0] sm:$0xff]
    %v273 = vld [vmem:[#allocation2 + $0x1d8] sm:$0xff]
    %v274 = vld [vmem:[#allocation2 + $0x1e0] sm:$0xff]
    %v275 = vld [vmem:[#allocation2 + $0x1e8] sm:$0xff]
    %v276 = vld [vmem:[#allocation2 + $0x1f0] sm:$0xff]
    %v277 = vld [vmem:[#allocation2 + $0x1f8] sm:$0xff]
    %v278 = vld [vmem:[#allocation2 + $0x200] sm:$0xff]
    %v279 = vld [vmem:[#allocation2 + $0x208] sm:$0xff]
    %v280 = vld [vmem:[#allocation2 + $0x210] sm:$0xff]
    %v281 = vld [vmem:[#allocation2 + $0x218] sm:$0xff]
    %v282 = vld [vmem:[#allocation2 + $0x220] sm:$0xff]
    %v283 = vld [vmem:[#allocation2 + $0x228] sm:$0xff]
    %v284 = vld [vmem:[#allocation2 + $0x230] sm:$0xff]
    %v285 = vld [vmem:[#allocation2 + $0x238] sm:$0xff]
    %v286 = vld [vmem:[#allocation2 + $0x240] sm:$0xff]
    %v287 = vld [vmem:[#allocation2 + $0x248] sm:$0xff]
    %v288 = vld [vmem:[#allocation2 + $0x250] sm:$0xff]
    %v289 = vld [vmem:[#allocation2 + $0x258] sm:$0xff]
    %v290 = vld [vmem:[#allocation2 + $0x260] sm:$0xff]
    %v291 = vld [vmem:[#allocation2 + $0x268] sm:$0xff]
    %v292 = vld [vmem:[#allocation2 + $0x270] sm:$0xff]
    %v293 = vld [vmem:[#allocation2 + $0x278] sm:$0xff]
    %v294 = vld [vmem:[#allocation2 + $0x280] sm:$0xff]
    %v295 = vld [vmem:[#allocation2 + $0x288] sm:$0xff]
    %v296 = vld [vmem:[#allocation2 + $0x290] sm:$0xff]
    %v297 = vld [vmem:[#allocation2 + $0x298] sm:$0xff]
    %v298 = vld [vmem:[#allocation2 + $0x2a0] sm:$0xff]
    %v299 = vld [vmem:[#allocation2 + $0x2a8] sm:$0xff]
    %v300 = vld [vmem:[#allocation2 + $0x2b0] sm:$0xff]
    %v301 = vld [vmem:[#allocation2 + $0x2b8] sm:$0xff]
    %v302 = vld [vmem:[#allocation2 + $0x2c0] sm:$0xff]
    %v303 = vld [vmem:[#allocation2 + $0x2c8] sm:$0xff]
    %v304 = vld [vmem:[#allocation2 + $0x2d0] sm:$0xff]
    %v305 = vld [vmem:[#allocation2 + $0x2d8] sm:$0xff]
    %v306 = vld [vmem:[#allocation2 + $0x2e0] sm:$0xff]
    %v307 = vld [vmem:[#allocation2 + $0x2e8] sm:$0xff]
    %v308 = vld [vmem:[#allocation2 + $0x2f0] sm:$0xff]
    %v309 = vld [vmem:[#allocation2 + $0x2f8] sm:$0xff]
    %v310 = vld [vmem:[#allocation2 + $0x300] sm:$0xff]
    %v311 = vld [vmem:[#allocation2 + $0x308] sm:$0xff]
    %v312 = vld [vmem:[#allocation2 + $0x310] sm:$0xff]
    %v313 = vld [vmem:[#allocation2 + $0x318] sm:$0xff]
    %v314 = vld [vmem:[#allocation2 + $0x320] sm:$0xff]
    %v315 = vld [vmem:[#allocation2 + $0x328] sm:$0xff]
    %v316 = vld [vmem:[#allocation2 + $0x330] sm:$0xff]
    %v317 = vld [vmem:[#allocation2 + $0x338] sm:$0xff]
    %v318 = vld [vmem:[#allocation2 + $0x340] sm:$0xff]
    %v319 = vld [vmem:[#allocation2 + $0x348] sm:$0xff]
    %v320 = vld [vmem:[#allocation2 + $0x350] sm:$0xff]
    %v321 = vld [vmem:[#allocation2 + $0x358] sm:$0xff]
    %v322 = vld [vmem:[#allocation2 + $0x360] sm:$0xff]
    %v323 = vld [vmem:[#allocation2 + $0x368] sm:$0xff]
    %v324 = vld [vmem:[#allocation2 + $0x370] sm:$0xff]
    %v325 = vld [vmem:[#allocation2 + $0x378] sm:$0xff]
    %v326 = vld [vmem:[#allocation2 + $0x380] sm:$0xff]
    %v327 = vld [vmem:[#allocation2 + $0x388] sm:$0xff]
    %v328 = vld [vmem:[#allocation2 + $0x390] sm:$0xff]
    %v329 = vld [vmem:[#allocation2 + $0x398] sm:$0xff]
    %v330 = vld [vmem:[#allocation2 + $0x3a0] sm:$0xff]
    %v331 = vld [vmem:[#allocation2 + $0x3a8] sm:$0xff]
    %v332 = vld [vmem:[#allocation2 + $0x3b0] sm:$0xff]
    %v333 = vld [vmem:[#allocation2 + $0x3b8] sm:$0xff]
    %v334 = vld [vmem:[#allocation2 + $0x3c0] sm:$0xff]
    %v335 = vld [vmem:[#allocation2 + $0x3c8] sm:$0xff]
    %v336 = vld [vmem:[#allocation2 + $0x3d0] sm:$0xff]
    %v337 = vld [vmem:[#allocation2 + $0x3d8] sm:$0xff]
    %v338 = vld [vmem:[#allocation2 + $0x3e0] sm:$0xff]
    %v339 = vld [vmem:[#allocation2 + $0x3e8] sm:$0xff]
    %v340 = vld [vmem:[#allocation2 + $0x3f0] sm:$0xff]
    %v341 = vld [vmem:[#allocation2 + $0x3f8] sm:$0xff]
    %v342 = vld [vmem:[#allocation2 + $0x400] sm:$0xff]
    %v343 = vld [vmem:[#allocation2 + $0x408] sm:$0xff]
    %v344 = vld [vmem:[#allocation2 + $0x410] sm:$0xff]
    %v345 = vld [vmem:[#allocation2 + $0x418] sm:$0xff]
    %v346 = vld [vmem:[#allocation2 + $0x420] sm:$0xff]
    %v347 = vld [vmem:[#allocation2 + $0x428] sm:$0xff]
    %v348 = vld [vmem:[#allocation2 + $0x430] sm:$0xff]
    %v349 = vld [vmem:[#allocation2 + $0x438] sm:$0xff]
    %v350 = vld [vmem:[#allocation2 + $0x440] sm:$0xff]
    %v351 = vld [vmem:[#allocation2 + $0x448] sm:$0xff]
    %v352 = vld [vmem:[#allocation2 + $0x450] sm:$0xff]
    %v353 = vld [vmem:[#allocation2 + $0x458] sm:$0xff]
    %v354 = vld [vmem:[#allocation2 + $0x460] sm:$0xff]
    %v355 = vld [vmem:[#allocation2 + $0x468] sm:$0xff]
    %v356 = vld [vmem:[#allocation2 + $0x470] sm:$0xff]
    %v357 = vld [vmem:[#allocation2 + $0x478] sm:$0xff]
    %v358 = vld [vmem:[#allocation2 + $0x480] sm:$0xff]
    %v359 = vld [vmem:[#allocation2 + $0x488] sm:$0xff]
    %v360 = vld [vmem:[#allocation2 + $0x490] sm:$0xff]
    %v361 = vld [vmem:[#allocation2 + $0x498] sm:$0xff]
    %v362 = vld [vmem:[#allocation2 + $0x4a0] sm:$0xff]
    %v363 = vld [vmem:[#allocation2 + $0x4a8] sm:$0xff]
    %v364 = vld [vmem:[#allocation2 + $0x4b0] sm:$0xff]
    %v365 = vld [vmem:[#allocation2 + $0x4b8] sm:$0xff]
    %v366 = vld [vmem:[#allocation2 + $0x4c0] sm:$0xff]
    %v367 = vld [vmem:[#allocation2 + $0x4c8] sm:$0xff]
    %v368 = vld [vmem:[#allocation2 + $0x4d0] sm:$0xff]
    %v369 = vld [vmem:[#allocation2 + $0x4d8] sm:$0xff]
    %v370 = vld [vmem:[#allocation2 + $0x4e0] sm:$0xff]
    %v371 = vld [vmem:[#allocation2 + $0x4e8] sm:$0xff]
    %v372 = vld [vmem:[#allocation2 + $0x4f0] sm:$0xff]
    %v373 = vld [vmem:[#allocation2 + $0x4f8] sm:$0xff]
    %v374 = vld [vmem:[#allocation2 + $0x500] sm:$0xff]
    %v375 = vld [vmem:[#allocation2 + $0x508] sm:$0xff]
    %v376 = vld [vmem:[#allocation2 + $0x510] sm:$0xff]
    %v377 = vld [vmem:[#allocation2 + $0x518] sm:$0xff]
    %v378 = vld [vmem:[#allocation2 + $0x520] sm:$0xff]
    %v379 = vld [vmem:[#allocation2 + $0x528] sm:$0xff]
    %v380 = vld [vmem:[#allocation2 + $0x530] sm:$0xff]
    %v381 = vld [vmem:[#allocation2 + $0x538] sm:$0xff]
    %v382 = vld [vmem:[#allocation2 + $0x540] sm:$0xff]
    %v383 = vld [vmem:[#allocation2 + $0x548] sm:$0xff]
    %v384 = vld [vmem:[#allocation2 + $0x550] sm:$0xff]
    %v385 = vld [vmem:[#allocation2 + $0x558] sm:$0xff]
    %v386 = vld [vmem:[#allocation2 + $0x560] sm:$0xff]
    %v387 = vld [vmem:[#allocation2 + $0x568] sm:$0xff]
    %v388 = vld [vmem:[#allocation2 + $0x570] sm:$0xff]
    %v389 = vld [vmem:[#allocation2 + $0x578] sm:$0xff]
    %v390 = vld [vmem:[#allocation2 + $0x580] sm:$0xff]
    %v391 = vld [vmem:[#allocation2 + $0x588] sm:$0xff]
    %v392 = vld [vmem:[#allocation2 + $0x590] sm:$0xff]
    %v393 = vld [vmem:[#allocation2 + $0x598] sm:$0xff]
    %v394 = vld [vmem:[#allocation2 + $0x5a0] sm:$0xff]
    %v395 = vld [vmem:[#allocation2 + $0x5a8] sm:$0xff]
    %v396 = vld [vmem:[#allocation2 + $0x5b0] sm:$0xff]
    %v397 = vld [vmem:[#allocation2 + $0x5b8] sm:$0xff]
    %v398 = vld [vmem:[#allocation2 + $0x5c0] sm:$0xff]
    %v399 = vld [vmem:[#allocation2 + $0x5c8] sm:$0xff]
    %v400 = vld [vmem:[#allocation2 + $0x5d0] sm:$0xff]
    %v401 = vld [vmem:[#allocation2 + $0x5d8] sm:$0xff]
    %v402 = vld [vmem:[#allocation2 + $0x5e0] sm:$0xff]
    %v403 = vld [vmem:[#allocation2 + $0x5e8] sm:$0xff]
    %v404 = vld [vmem:[#allocation2 + $0x5f0] sm:$0xff]
    %v405 = vld [vmem:[#allocation2 + $0x5f8] sm:$0xff]
    %v406 = vld [vmem:[#allocation2 + $0x600] sm:$0xff]
    %v407 = vld [vmem:[#allocation2 + $0x608] sm:$0xff]
    %v408 = vld [vmem:[#allocation2 + $0x610] sm:$0xff]
    %v409 = vld [vmem:[#allocation2 + $0x618] sm:$0xff]
    %v410 = vld [vmem:[#allocation2 + $0x620] sm:$0xff]
    %v411 = vld [vmem:[#allocation2 + $0x628] sm:$0xff]
    %v412 = vld [vmem:[#allocation2 + $0x630] sm:$0xff]
    %v413 = vld [vmem:[#allocation2 + $0x638] sm:$0xff]
    %v414 = vld [vmem:[#allocation2 + $0x640] sm:$0xff]
    %v415 = vld [vmem:[#allocation2 + $0x648] sm:$0xff]
    %v416 = vld [vmem:[#allocation2 + $0x650] sm:$0xff]
    %v417 = vld [vmem:[#allocation2 + $0x658] sm:$0xff]
    %v418 = vld [vmem:[#allocation2 + $0x660] sm:$0xff]
    %v419 = vld [vmem:[#allocation2 + $0x668] sm:$0xff]
    %v420 = vld [vmem:[#allocation2 + $0x670] sm:$0xff]
    %v421 = vld [vmem:[#allocation2 + $0x678] sm:$0xff]
    %v422 = vld [vmem:[#allocation2 + $0x680] sm:$0xff]
    %v423 = vld [vmem:[#allocation2 + $0x688] sm:$0xff]
    %v424 = vld [vmem:[#allocation2 + $0x690] sm:$0xff]
    %v425 = vld [vmem:[#allocation2 + $0x698] sm:$0xff]
    %v426 = vld [vmem:[#allocation2 + $0x6a0] sm:$0xff]
    %v427 = vld [vmem:[#allocation2 + $0x6a8] sm:$0xff]
    %v428 = vld [vmem:[#allocation2 + $0x6b0] sm:$0xff]
    %v429 = vld [vmem:[#allocation2 + $0x6b8] sm:$0xff]
    %v430 = vld [vmem:[#allocation2 + $0x6c0] sm:$0xff]
    %v431 = vld [vmem:[#allocation2 + $0x6c8] sm:$0xff]
    %v432 = vld [vmem:[#allocation2 + $0x6d0] sm:$0xff]
    %v433 = vld [vmem:[#allocation2 + $0x6d8] sm:$0xff]
    %v434 = vld [vmem:[#allocation2 + $0x6e0] sm:$0xff]
    %v435 = vld [vmem:[#allocation2 + $0x6e8] sm:$0xff]
    %v436 = vld [vmem:[#allocation2 + $0x6f0] sm:$0xff]
    %v437 = vld [vmem:[#allocation2 + $0x6f8] sm:$0xff]
    %v438 = vld [vmem:[#allocation2 + $0x700] sm:$0xff]
    %v439 = vld [vmem:[#allocation2 + $0x708] sm:$0xff]
    %v440 = vld [vmem:[#allocation2 + $0x710] sm:$0xff]
    %v441 = vld [vmem:[#allocation2 + $0x718] sm:$0xff]
    %v442 = vld [vmem:[#allocation2 + $0x720] sm:$0xff]
    %v443 = vld [vmem:[#allocation2 + $0x728] sm:$0xff]
    %v444 = vld [vmem:[#allocation2 + $0x730] sm:$0xff]
    %v445 = vld [vmem:[#allocation2 + $0x738] sm:$0xff]
    %v446 = vld [vmem:[#allocation2 + $0x740] sm:$0xff]
    %v447 = vld [vmem:[#allocation2 + $0x748] sm:$0xff]
    %v448 = vld [vmem:[#allocation2 + $0x750] sm:$0xff]
    %v449 = vld [vmem:[#allocation2 + $0x758] sm:$0xff]
    %v450 = vld [vmem:[#allocation2 + $0x760] sm:$0xff]
    %v451 = vld [vmem:[#allocation2 + $0x768] sm:$0xff]
    %v452 = vld [vmem:[#allocation2 + $0x770] sm:$0xff]
    %v453 = vld [vmem:[#allocation2 + $0x778] sm:$0xff]
    %v454 = vld [vmem:[#allocation2 + $0x780] sm:$0xff]
    %v455 = vld [vmem:[#allocation2 + $0x788] sm:$0xff]
    %v456 = vld [vmem:[#allocation2 + $0x790] sm:$0xff]
    %v457 = vld [vmem:[#allocation2 + $0x798] sm:$0xff]
    %v458 = vld [vmem:[#allocation2 + $0x7a0] sm:$0xff]
    %v459 = vld [vmem:[#allocation2 + $0x7a8] sm:$0xff]
    %v460 = vld [vmem:[#allocation2 + $0x7b0] sm:$0xff]
    %v461 = vld [vmem:[#allocation2 + $0x7b8] sm:$0xff]
    %v462 = vld [vmem:[#allocation2 + $0x7c0] sm:$0xff]
    %v463 = vld [vmem:[#allocation2 + $0x7c8] sm:$0xff]
    %v464 = vld [vmem:[#allocation2 + $0x7d0] sm:$0xff]
    %v465 = vld [vmem:[#allocation2 + $0x7d8] sm:$0xff]
    %v466 = vld [vmem:[#allocation2 + $0x7e0] sm:$0xff]
    %v467 = vld [vmem:[#allocation2 + $0x7e8] sm:$0xff]
    %v468 = vld [vmem:[#allocation2 + $0x7f0] sm:$0xff]
    %v469 = vld [vmem:[#allocation2 + $0x7f8] sm:$0xff]
    %v470 = vld [vmem:[#allocation2 + $0x800] sm:$0xff]
    %v471 = vld [vmem:[#allocation2 + $0x808] sm:$0xff]
    %v472 = vld [vmem:[#allocation2 + $0x810] sm:$0xff]
    %v473 = vld [vmem:[#allocation2 + $0x818] sm:$0xff]
    %v474 = vld [vmem:[#allocation2 + $0x820] sm:$0xff]
    %v475 = vld [vmem:[#allocation2 + $0x828] sm:$0xff]
    %v476 = vld [vmem:[#allocation2 + $0x830] sm:$0xff]
    %v477 = vld [vmem:[#allocation2 + $0x838] sm:$0xff]
    %v478 = vld [vmem:[#allocation2 + $0x840] sm:$0xff]
    %v479 = vld [vmem:[#allocation2 + $0x848] sm:$0xff]
    %v480 = vld [vmem:[#allocation2 + $0x850] sm:$0xff]
    %v481 = vld [vmem:[#allocation2 + $0x858] sm:$0xff]
    %v482 = vld [vmem:[#allocation2 + $0x860] sm:$0xff]
    %v483 = vld [vmem:[#allocation2 + $0x868] sm:$0xff]
    %v484 = vld [vmem:[#allocation2 + $0x870] sm:$0xff]
    %v485 = vld [vmem:[#allocation2 + $0x878] sm:$0xff]
    %v486 = vld [vmem:[#allocation2 + $0x880] sm:$0xff]
    %v487 = vld [vmem:[#allocation2 + $0x888] sm:$0xff]
    %v488 = vld [vmem:[#allocation2 + $0x890] sm:$0xff]
    %v489 = vld [vmem:[#allocation2 + $0x898] sm:$0xff]
    %v490 = vld [vmem:[#allocation2 + $0x8a0] sm:$0xff]
    %v491 = vld [vmem:[#allocation2 + $0x8a8] sm:$0xff]
    %v492 = vld [vmem:[#allocation2 + $0x8b0] sm:$0xff]
    %v493 = vld [vmem:[#allocation2 + $0x8b8] sm:$0xff]
    %v494 = vld [vmem:[#allocation2 + $0x8c0] sm:$0xff]
    %v495 = vld [vmem:[#allocation2 + $0x8c8] sm:$0xff]
    %v496 = vld [vmem:[#allocation2 + $0x8d0] sm:$0xff]
    %v497 = vld [vmem:[#allocation2 + $0x8d8] sm:$0xff]
    %v498 = vld [vmem:[#allocation2 + $0x8e0] sm:$0xff]
    %v499 = vld [vmem:[#allocation2 + $0x8e8] sm:$0xff]
    %v500 = vld [vmem:[#allocation2 + $0x8f0] sm:$0xff]
    %v501 = vld [vmem:[#allocation2 + $0x8f8] sm:$0xff]
    %v502 = vld [vmem:[#allocation2 + $0x900] sm:$0xff]
    %v503 = vld [vmem:[#allocation2 + $0x908] sm:$0xff]
    %v504 = vld [vmem:[#allocation2 + $0x910] sm:$0xff]
    %v505 = vld [vmem:[#allocation2 + $0x918] sm:$0xff]
    %v506 = vld [vmem:[#allocation2 + $0x920] sm:$0xff]
    %v507 = vld [vmem:[#allocation2 + $0x928] sm:$0xff]
    %v508 = vld [vmem:[#allocation2 + $0x930] sm:$0xff]
    %v509 = vld [vmem:[#allocation2 + $0x938] sm:$0xff]
    %v510 = vld [vmem:[#allocation2 + $0x940] sm:$0xff]
    %v511 = vld [vmem:[#allocation2 + $0x948] sm:$0xff]
    %v512 = vld [vmem:[#allocation2 + $0x950] sm:$0xff]
    %v513 = vld [vmem:[#allocation2 + $0x958] sm:$0xff]
    %v514 = vld [vmem:[#allocation2 + $0x960] sm:$0xff]
    %v515 = vld [vmem:[#allocation2 + $0x968] sm:$0xff]
    %v516 = vld [vmem:[#allocation2 + $0x970] sm:$0xff]
    %v517 = vld [vmem:[#allocation2 + $0x978] sm:$0xff]
    %v518 = vld [vmem:[#allocation2 + $0x980] sm:$0xff]
    %v519 = vld [vmem:[#allocation2 + $0x988] sm:$0xff]
    %v520 = vld [vmem:[#allocation2 + $0x990] sm:$0xff]
    %v521 = vld [vmem:[#allocation2 + $0x998] sm:$0xff]
    %v522 = vld [vmem:[#allocation2 + $0x9a0] sm:$0xff]
    %v523 = vld [vmem:[#allocation2 + $0x9a8] sm:$0xff]
    %v524 = vld [vmem:[#allocation2 + $0x9b0] sm:$0xff]
    %v525 = vld [vmem:[#allocation2 + $0x9b8] sm:$0xff]
    %v526 = vld [vmem:[#allocation2 + $0x9c0] sm:$0xff]
    %v527 = vld [vmem:[#allocation2 + $0x9c8] sm:$0xff]
    %v528 = vld [vmem:[#allocation2 + $0x9d0] sm:$0xff]
    %v529 = vld [vmem:[#allocation2 + $0x9d8] sm:$0xff]
    %v530 = vld [vmem:[#allocation2 + $0x9e0] sm:$0xff]
    %v531 = vld [vmem:[#allocation2 + $0x9e8] sm:$0xff]
    %v532 = vld [vmem:[#allocation2 + $0x9f0] sm:$0xff]
    %v533 = vld [vmem:[#allocation2 + $0x9f8] sm:$0xff]
    %v534 = vld [vmem:[#allocation2 + $0xa00] sm:$0xff]
    %v535 = vld [vmem:[#allocation2 + $0xa08] sm:$0xff]
    %v536 = vld [vmem:[#allocation2 + $0xa10] sm:$0xff]
    %v537 = vld [vmem:[#allocation2 + $0xa18] sm:$0xff]
    %v538 = vld [vmem:[#allocation2 + $0xa20] sm:$0xff]
    %v539 = vld [vmem:[#allocation2 + $0xa28] sm:$0xff]
    %v540 = vld [vmem:[#allocation2 + $0xa30] sm:$0xff]
    %v541 = vld [vmem:[#allocation2 + $0xa38] sm:$0xff]
    %v542 = vld [vmem:[#allocation2 + $0xa40] sm:$0xff]
    %v543 = vld [vmem:[#allocation2 + $0xa48] sm:$0xff]
    %v544 = vld [vmem:[#allocation2 + $0xa50] sm:$0xff]
    %v545 = vld [vmem:[#allocation2 + $0xa58] sm:$0xff]
    %v546 = vld [vmem:[#allocation2 + $0xa60] sm:$0xff]
    %v547 = vld [vmem:[#allocation2 + $0xa68] sm:$0xff]
    %v548 = vld [vmem:[#allocation2 + $0xa70] sm:$0xff]
    %v549 = vld [vmem:[#allocation2 + $0xa78] sm:$0xff]
    %v550 = vld [vmem:[#allocation2 + $0xa80] sm:$0xff]
    %v551 = vld [vmem:[#allocation2 + $0xa88] sm:$0xff]
    %v552 = vld [vmem:[#allocation2 + $0xa90] sm:$0xff]
    %v553 = vld [vmem:[#allocation2 + $0xa98] sm:$0xff]
    %v554 = vld [vmem:[#allocation2 + $0xaa0] sm:$0xff]
    %v555 = vld [vmem:[#allocation2 + $0xaa8] sm:$0xff]
    %v556 = vld [vmem:[#allocation2 + $0xab0] sm:$0xff]
    %v557 = vld [vmem:[#allocation2 + $0xab8] sm:$0xff]
    %v558 = vld [vmem:[#allocation2 + $0xac0] sm:$0xff]
    %v559 = vld [vmem:[#allocation2 + $0xac8] sm:$0xff]
    %v560 = vld [vmem:[#allocation2 + $0xad0] sm:$0xff]
    %v561 = vld [vmem:[#allocation2 + $0xad8] sm:$0xff]
    %v562 = vld [vmem:[#allocation2 + $0xae0] sm:$0xff]
    %v563 = vld [vmem:[#allocation2 + $0xae8] sm:$0xff]
    %v564 = vld [vmem:[#allocation2 + $0xaf0] sm:$0xff]
    %v565 = vld [vmem:[#allocation2 + $0xaf8] sm:$0xff]
    %v566 = vld [vmem:[#allocation2 + $0xb00] sm:$0xff]
    %v567 = vld [vmem:[#allocation2 + $0xb08] sm:$0xff]
    %v568 = vld [vmem:[#allocation2 + $0xb10] sm:$0xff]
    %v569 = vld [vmem:[#allocation2 + $0xb18] sm:$0xff]
    %v570 = vld [vmem:[#allocation2 + $0xb20] sm:$0xff]
    %v571 = vld [vmem:[#allocation2 + $0xb28] sm:$0xff]
    %v572 = vld [vmem:[#allocation2 + $0xb30] sm:$0xff]
    %v573 = vld [vmem:[#allocation2 + $0xb38] sm:$0xff]
    %v574 = vld [vmem:[#allocation2 + $0xb40] sm:$0xff]
    %v575 = vld [vmem:[#allocation2 + $0xb48] sm:$0xff]
    %v576 = vld [vmem:[#allocation2 + $0xb50] sm:$0xff]
    %v577 = vld [vmem:[#allocation2 + $0xb58] sm:$0xff]
    %v578 = vld [vmem:[#allocation2 + $0xb60] sm:$0xff]
    %v579 = vld [vmem:[#allocation2 + $0xb68] sm:$0xff]
    %v580 = vld [vmem:[#allocation2 + $0xb70] sm:$0xff]
    %v581 = vld [vmem:[#allocation2 + $0xb78] sm:$0xff]
    %v582 = vld [vmem:[#allocation2 + $0xb80] sm:$0xff]
    %v583 = vld [vmem:[#allocation2 + $0xb88] sm:$0xff]
    %v584 = vld [vmem:[#allocation2 + $0xb90] sm:$0xff]
    %v585 = vld [vmem:[#allocation2 + $0xb98] sm:$0xff]
    %v586 = vld [vmem:[#allocation2 + $0xba0] sm:$0xff]
    %v587 = vld [vmem:[#allocation2 + $0xba8] sm:$0xff]
    %v588 = vld [vmem:[#allocation2 + $0xbb0] sm:$0xff]
    %v589 = vld [vmem:[#allocation2 + $0xbb8] sm:$0xff]
    %v590 = vld [vmem:[#allocation2 + $0xbc0] sm:$0xff]
    %v591 = vld [vmem:[#allocation2 + $0xbc8] sm:$0xff]
    %v592 = vld [vmem:[#allocation2 + $0xbd0] sm:$0xff]
    %v593 = vld [vmem:[#allocation2 + $0xbd8] sm:$0xff]
    %v594 = vld [vmem:[#allocation2 + $0xbe0] sm:$0xff]
    %v595 = vld [vmem:[#allocation2 + $0xbe8] sm:$0xff]
    %v596 = vld [vmem:[#allocation2 + $0xbf0] sm:$0xff]
    %v597 = vld [vmem:[#allocation2 + $0xbf8] sm:$0xff]
    %v598 = vld [vmem:[#allocation2 + $0xc00] sm:$0xff]
    %v599 = vld [vmem:[#allocation2 + $0xc08] sm:$0xff]
    %v600 = vld [vmem:[#allocation2 + $0xc10] sm:$0xff]
    %v601 = vld [vmem:[#allocation2 + $0xc18] sm:$0xff]
    %v602 = vld [vmem:[#allocation2 + $0xc20] sm:$0xff]
    %v603 = vld [vmem:[#allocation2 + $0xc28] sm:$0xff]
    %v604 = vld [vmem:[#allocation2 + $0xc30] sm:$0xff]
    %v605 = vld [vmem:[#allocation2 + $0xc38] sm:$0xff]
    %v606 = vld [vmem:[#allocation2 + $0xc40] sm:$0xff]
    %v607 = vld [vmem:[#allocation2 + $0xc48] sm:$0xff]
    %v608 = vld [vmem:[#allocation2 + $0xc50] sm:$0xff]
    %v609 = vld [vmem:[#allocation2 + $0xc58] sm:$0xff]
    %v610 = vld [vmem:[#allocation2 + $0xc60] sm:$0xff]
    %v611 = vld [vmem:[#allocation2 + $0xc68] sm:$0xff]
    %v612 = vld [vmem:[#allocation2 + $0xc70] sm:$0xff]
    %v613 = vld [vmem:[#allocation2 + $0xc78] sm:$0xff]
    %v614 = vld [vmem:[#allocation2 + $0xc80] sm:$0xff]
    %v615 = vld [vmem:[#allocation2 + $0xc88] sm:$0xff]
    %v616 = vld [vmem:[#allocation2 + $0xc90] sm:$0xff]
    %v617 = vld [vmem:[#allocation2 + $0xc98] sm:$0xff]
    %v618 = vld [vmem:[#allocation2 + $0xca0] sm:$0xff]
    %v619 = vld [vmem:[#allocation2 + $0xca8] sm:$0xff]
    %v620 = vld [vmem:[#allocation2 + $0xcb0] sm:$0xff]
    %v621 = vld [vmem:[#allocation2 + $0xcb8] sm:$0xff]
    %v622 = vld [vmem:[#allocation2 + $0xcc0] sm:$0xff]
    %v623 = vld [vmem:[#allocation2 + $0xcc8] sm:$0xff]
    %v624 = vld [vmem:[#allocation2 + $0xcd0] sm:$0xff]
    %v625 = vld [vmem:[#allocation2 + $0xcd8] sm:$0xff]
    %v626 = vld [vmem:[#allocation2 + $0xce0] sm:$0xff]
    %v627 = vld [vmem:[#allocation2 + $0xce8] sm:$0xff]
    %v628 = vld [vmem:[#allocation2 + $0xcf0] sm:$0xff]
    %v629 = vld [vmem:[#allocation2 + $0xcf8] sm:$0xff]
    %v630 = vld [vmem:[#allocation2 + $0xd00] sm:$0xff]
    %v631 = vld [vmem:[#allocation2 + $0xd08] sm:$0xff]
    %v632 = vld [vmem:[#allocation2 + $0xd10] sm:$0xff]
    %v633 = vld [vmem:[#allocation2 + $0xd18] sm:$0xff]
    %v634 = vld [vmem:[#allocation2 + $0xd20] sm:$0xff]
    %v635 = vld [vmem:[#allocation2 + $0xd28] sm:$0xff]
    %v636 = vld [vmem:[#allocation2 + $0xd30] sm:$0xff]
    %v637 = vld [vmem:[#allocation2 + $0xd38] sm:$0xff]
    %v638 = vld [vmem:[#allocation2 + $0xd40] sm:$0xff]
    %v639 = vld [vmem:[#allocation2 + $0xd48] sm:$0xff]
    %v640 = vld [vmem:[#allocation2 + $0xd50] sm:$0xff]
    %v641 = vld [vmem:[#allocation2 + $0xd58] sm:$0xff]
    %v642 = vld [vmem:[#allocation2 + $0xd60] sm:$0xff]
    %v643 = vld [vmem:[#allocation2 + $0xd68] sm:$0xff]
    %v644 = vld [vmem:[#allocation2 + $0xd70] sm:$0xff]
    %v645 = vld [vmem:[#allocation2 + $0xd78] sm:$0xff]
    %v646 = vld [vmem:[#allocation2 + $0xd80] sm:$0xff]
    %v647 = vld [vmem:[#allocation2 + $0xd88] sm:$0xff]
    %v648 = vld [vmem:[#allocation2 + $0xd90] sm:$0xff]
    %v649 = vld [vmem:[#allocation2 + $0xd98] sm:$0xff]
    %v650 = vld [vmem:[#allocation2 + $0xda0] sm:$0xff]
    %v651 = vld [vmem:[#allocation2 + $0xda8] sm:$0xff]
    %v652 = vld [vmem:[#allocation2 + $0xdb0] sm:$0xff]
    %v653 = vld [vmem:[#allocation2 + $0xdb8] sm:$0xff]
    %v654 = vld [vmem:[#allocation2 + $0xdc0] sm:$0xff]
    %v655 = vld [vmem:[#allocation2 + $0xdc8] sm:$0xff]
    %v656 = vld [vmem:[#allocation2 + $0xdd0] sm:$0xff]
    %v657 = vld [vmem:[#allocation2 + $0xdd8] sm:$0xff]
    %v658 = vld [vmem:[#allocation2 + $0xde0] sm:$0xff]
    %v659 = vld [vmem:[#allocation2 + $0xde8] sm:$0xff]
    %v660 = vld [vmem:[#allocation2 + $0xdf0] sm:$0xff]
    %v661 = vld [vmem:[#allocation2 + $0xdf8] sm:$0xff]
    %v662 = vld [vmem:[#allocation2 + $0xe00] sm:$0xff]
    %v663 = vld [vmem:[#allocation2 + $0xe08] sm:$0xff]
    %v664 = vld [vmem:[#allocation2 + $0xe10] sm:$0xff]
    %v665 = vld [vmem:[#allocation2 + $0xe18] sm:$0xff]
    %v666 = vld [vmem:[#allocation2 + $0xe20] sm:$0xff]
    %v667 = vld [vmem:[#allocation2 + $0xe28] sm:$0xff]
    %v668 = vld [vmem:[#allocation2 + $0xe30] sm:$0xff]
    %v669 = vld [vmem:[#allocation2 + $0xe38] sm:$0xff]
    %v670 = vld [vmem:[#allocation2 + $0xe40] sm:$0xff]
    %v671 = vld [vmem:[#allocation2 + $0xe48] sm:$0xff]
    %v672 = vld [vmem:[#allocation2 + $0xe50] sm:$0xff]
    %v673 = vld [vmem:[#allocation2 + $0xe58] sm:$0xff]
    %v674 = vld [vmem:[#allocation2 + $0xe60] sm:$0xff]
    %v675 = vld [vmem:[#allocation2 + $0xe68] sm:$0xff]
    %v676 = vld [vmem:[#allocation2 + $0xe70] sm:$0xff]
    %v677 = vld [vmem:[#allocation2 + $0xe78] sm:$0xff]
    %v678 = vld [vmem:[#allocation2 + $0xe80] sm:$0xff]
    %v679 = vld [vmem:[#allocation2 + $0xe88] sm:$0xff]
    %v680 = vld [vmem:[#allocation2 + $0xe90] sm:$0xff]
    %v681 = vld [vmem:[#allocation2 + $0xe98] sm:$0xff]
    %v682 = vld [vmem:[#allocation2 + $0xea0] sm:$0xff]
    %v683 = vld [vmem:[#allocation2 + $0xea8] sm:$0xff]
    %v684 = vld [vmem:[#allocation2 + $0xeb0] sm:$0xff]
    %v685 = vld [vmem:[#allocation2 + $0xeb8] sm:$0xff]
    %v686 = vld [vmem:[#allocation2 + $0xec0] sm:$0xff]
    %v687 = vld [vmem:[#allocation2 + $0xec8] sm:$0xff]
    %v688 = vld [vmem:[#allocation2 + $0xed0] sm:$0xff]
    %v689 = vld [vmem:[#allocation2 + $0xed8] sm:$0xff]
    %v690 = vld [vmem:[#allocation2 + $0xee0] sm:$0xff]
    %v691 = vld [vmem:[#allocation2 + $0xee8] sm:$0xff]
    %v692 = vld [vmem:[#allocation2 + $0xef0] sm:$0xff]
    %v693 = vld [vmem:[#allocation2 + $0xef8] sm:$0xff]
    %v694 = vld [vmem:[#allocation2 + $0xf00] sm:$0xff]
    %v695 = vld [vmem:[#allocation2 + $0xf08] sm:$0xff]
    %v696 = vld [vmem:[#allocation2 + $0xf10] sm:$0xff]
    %v697 = vld [vmem:[#allocation2 + $0xf18] sm:$0xff]
    %v698 = vld [vmem:[#allocation2 + $0xf20] sm:$0xff]
    %v699 = vld [vmem:[#allocation2 + $0xf28] sm:$0xff]
    %v700 = vld [vmem:[#allocation2 + $0xf30] sm:$0xff]
    %v701 = vld [vmem:[#allocation2 + $0xf38] sm:$0xff]
    %v702 = vld [vmem:[#allocation2 + $0xf40] sm:$0xff]
    %v703 = vld [vmem:[#allocation2 + $0xf48] sm:$0xff]
    %v704 = vld [vmem:[#allocation2 + $0xf50] sm:$0xff]
    %v705 = vld [vmem:[#allocation2 + $0xf58] sm:$0xff]
    %v706 = vld [vmem:[#allocation2 + $0xf60] sm:$0xff]
    %v707 = vld [vmem:[#allocation2 + $0xf68] sm:$0xff]
    %v708 = vld [vmem:[#allocation2 + $0xf70] sm:$0xff]
    %v709 = vld [vmem:[#allocation2 + $0xf78] sm:$0xff]
    %v710 = vld [vmem:[#allocation2 + $0xf80] sm:$0xff]
    %v711 = vld [vmem:[#allocation2 + $0xf88] sm:$0xff]
    %v712 = vld [vmem:[#allocation2 + $0xf90] sm:$0xff]
    %v713 = vld [vmem:[#allocation2 + $0xf98] sm:$0xff]
    %v714 = vld [vmem:[#allocation2 + $0xfa0] sm:$0xff]
    %v715 = vld [vmem:[#allocation2 + $0xfa8] sm:$0xff]
    %v716 = vld [vmem:[#allocation2 + $0xfb0] sm:$0xff]
    %v717 = vld [vmem:[#allocation2 + $0xfb8] sm:$0xff]
    %v718 = vld [vmem:[#allocation2 + $0xfc0] sm:$0xff]
    %v719 = vld [vmem:[#allocation2 + $0xfc8] sm:$0xff]
    %v720 = vld [vmem:[#allocation2 + $0xfd0] sm:$0xff]
    %v721 = vld [vmem:[#allocation2 + $0xfd8] sm:$0xff]
    %v722 = vld [vmem:[#allocation2 + $0xfe0] sm:$0xff]
    %v723 = vld [vmem:[#allocation2 + $0xfe8] sm:$0xff]
    %v724 = vld [vmem:[#allocation2 + $0xff0] sm:$0xff]
    %v725 = vld [vmem:[#allocation2 + $0xff8] sm:$0xff]
    %v726 = vld [vmem:[#allocation2 + $0x1000] sm:$0xff]
    %v727 = vld [vmem:[#allocation2 + $0x1008] sm:$0xff]
    %v728 = vld [vmem:[#allocation2 + $0x1010] sm:$0xff]
    %v729 = vld [vmem:[#allocation2 + $0x1018] sm:$0xff]
    %v730 = vld [vmem:[#allocation2 + $0x1020] sm:$0xff]
    %v731 = vld [vmem:[#allocation2 + $0x1028] sm:$0xff]
    %v732 = vld [vmem:[#allocation2 + $0x1030] sm:$0xff]
    %v733 = vld [vmem:[#allocation2 + $0x1038] sm:$0xff]
    %v734 = vld [vmem:[#allocation2 + $0x1040] sm:$0xff]
    %v735 = vld [vmem:[#allocation2 + $0x1048] sm:$0xff]
    %v736 = vld [vmem:[#allocation2 + $0x1050] sm:$0xff]
    %v737 = vld [vmem:[#allocation2 + $0x1058] sm:$0xff]
    %v738 = vld [vmem:[#allocation2 + $0x1060] sm:$0xff]
    %v739 = vld [vmem:[#allocation2 + $0x1068] sm:$0xff]
    %v740 = vld [vmem:[#allocation2 + $0x1070] sm:$0xff]
    %v741 = vld [vmem:[#allocation2 + $0x1078] sm:$0xff]
    %v742 = vld [vmem:[#allocation2 + $0x1080] sm:$0xff]
    %v743 = vld [vmem:[#allocation2 + $0x1088] sm:$0xff]
    %v744 = vld [vmem:[#allocation2 + $0x1090] sm:$0xff]
    %v745 = vld [vmem:[#allocation2 + $0x1098] sm:$0xff]
    %v746 = vld [vmem:[#allocation2 + $0x10a0] sm:$0xff]
    %v747 = vld [vmem:[#allocation2 + $0x10a8] sm:$0xff]
    %v748 = vld [vmem:[#allocation2 + $0x10b0] sm:$0xff]
    %v749 = vld [vmem:[#allocation2 + $0x10b8] sm:$0xff]
    %v750 = vld [vmem:[#allocation2 + $0x10c0] sm:$0xff]
    %v751 = vld [vmem:[#allocation2 + $0x10c8] sm:$0xff]
    %v752 = vld [vmem:[#allocation2 + $0x10d0] sm:$0xff]
    %v753 = vld [vmem:[#allocation2 + $0x10d8] sm:$0xff]
    %v754 = vld [vmem:[#allocation2 + $0x10e0] sm:$0xff]
    %v755 = vld [vmem:[#allocation2 + $0x10e8] sm:$0xff]
    %v756 = vld [vmem:[#allocation2 + $0x10f0] sm:$0xff]
    %v757 = vld [vmem:[#allocation2 + $0x10f8] sm:$0xff]
    %v758 = vld [vmem:[#allocation2 + $0x1100] sm:$0xff]
    %v759 = vld [vmem:[#allocation2 + $0x1108] sm:$0xff]
    %v760 = vld [vmem:[#allocation2 + $0x1110] sm:$0xff]
    %v761 = vld [vmem:[#allocation2 + $0x1118] sm:$0xff]
    %v762 = vld [vmem:[#allocation2 + $0x1120] sm:$0xff]
    %v763 = vld [vmem:[#allocation2 + $0x1128] sm:$0xff]
    %v764 = vld [vmem:[#allocation2 + $0x1130] sm:$0xff]
    %v765 = vld [vmem:[#allocation2 + $0x1138] sm:$0xff]
    %v766 = vld [vmem:[#allocation2 + $0x1140] sm:$0xff]
    %v767 = vld [vmem:[#allocation2 + $0x1148] sm:$0xff]
    %v768 = vld [vmem:[#allocation2 + $0x1150] sm:$0xff]
    %v769 = vld [vmem:[#allocation2 + $0x1158] sm:$0xff]
    %v770 = vld [vmem:[#allocation2 + $0x1160] sm:$0xff]
    %v771 = vld [vmem:[#allocation2 + $0x1168] sm:$0xff]
    %v772 = vld [vmem:[#allocation2 + $0x1170] sm:$0xff]
    %v773 = vld [vmem:[#allocation2 + $0x1178] sm:$0xff]
    %v774 = vld [vmem:[#allocation2 + $0x1180] sm:$0xff]
    %v775 = vld [vmem:[#allocation2 + $0x1188] sm:$0xff]
    %v776 = vld [vmem:[#allocation2 + $0x1190] sm:$0xff]
    %v777 = vld [vmem:[#allocation2 + $0x1198] sm:$0xff]
    %v778 = vld [vmem:[#allocation2 + $0x11a0] sm:$0xff]
    %v779 = vld [vmem:[#allocation2 + $0x11a8] sm:$0xff]
    %v780 = vld [vmem:[#allocation2 + $0x11b0] sm:$0xff]
    %v781 = vld [vmem:[#allocation2 + $0x11b8] sm:$0xff]
    %v782 = vld [vmem:[#allocation2 + $0x11c0] sm:$0xff]
    %v783 = vld [vmem:[#allocation2 + $0x11c8] sm:$0xff]
    %v784 = vld [vmem:[#allocation2 + $0x11d0] sm:$0xff]
    %v785 = vld [vmem:[#allocation2 + $0x11d8] sm:$0xff]
    %v786 = vld [vmem:[#allocation2 + $0x11e0] sm:$0xff]
    %v787 = vld [vmem:[#allocation2 + $0x11e8] sm:$0xff]
    %v788 = vld [vmem:[#allocation2 + $0x11f0] sm:$0xff]
    %v789 = vld [vmem:[#allocation2 + $0x11f8] sm:$0xff]
    %v790 = vld [vmem:[#allocation2 + $0x1200] sm:$0xff]
    %v791 = vld [vmem:[#allocation2 + $0x1208] sm:$0xff]
    %v792 = vld [vmem:[#allocation2 + $0x1210] sm:$0xff]
    %v793 = vld [vmem:[#allocation2 + $0x1218] sm:$0xff]
    %v794 = vld [vmem:[#allocation2 + $0x1220] sm:$0xff]
    %v795 = vld [vmem:[#allocation2 + $0x1228] sm:$0xff]
    %v796 = vld [vmem:[#allocation2 + $0x1230] sm:$0xff]
    %v797 = vld [vmem:[#allocation2 + $0x1238] sm:$0xff]
    %v798 = vld [vmem:[#allocation2 + $0x1240] sm:$0xff]
    %v799 = vld [vmem:[#allocation2 + $0x1248] sm:$0xff]
    %v800 = vld [vmem:[#allocation2 + $0x1250] sm:$0xff]
    %v801 = vld [vmem:[#allocation2 + $0x1258] sm:$0xff]
    %v802 = vld [vmem:[#allocation2 + $0x1260] sm:$0xff]
    %v803 = vld [vmem:[#allocation2 + $0x1268] sm:$0xff]
    %v804 = vld [vmem:[#allocation2 + $0x1270] sm:$0xff]
    %v805 = vld [vmem:[#allocation2 + $0x1278] sm:$0xff]
    %v806 = vld [vmem:[#allocation2 + $0x1280] sm:$0xff]
    %v807 = vld [vmem:[#allocation2 + $0x1288] sm:$0xff]
    %v808 = vld [vmem:[#allocation2 + $0x1290] sm:$0xff]
    %v809 = vld [vmem:[#allocation2 + $0x1298] sm:$0xff]
    %v810 = vld [vmem:[#allocation2 + $0x12a0] sm:$0xff]
    %v811 = vld [vmem:[#allocation2 + $0x12a8] sm:$0xff]
    %v812 = vld [vmem:[#allocation2 + $0x12b0] sm:$0xff]
    %v813 = vld [vmem:[#allocation2 + $0x12b8] sm:$0xff]
    %v814 = vld [vmem:[#allocation2 + $0x12c0] sm:$0xff]
    %v815 = vld [vmem:[#allocation2 + $0x12c8] sm:$0xff]
    %v816 = vld [vmem:[#allocation2 + $0x12d0] sm:$0xff]
    %v817 = vld [vmem:[#allocation2 + $0x12d8] sm:$0xff]
    %v818 = vld [vmem:[#allocation2 + $0x12e0] sm:$0xff]
    %v819 = vld [vmem:[#allocation2 + $0x12e8] sm:$0xff]
    %v820 = vld [vmem:[#allocation2 + $0x12f0] sm:$0xff]
    %v821 = vld [vmem:[#allocation2 + $0x12f8] sm:$0xff]
    %v822 = vld [vmem:[#allocation2 + $0x1300] sm:$0xff]
    %v823 = vld [vmem:[#allocation2 + $0x1308] sm:$0xff]
    %v824 = vld [vmem:[#allocation2 + $0x1310] sm:$0xff]
    %v825 = vld [vmem:[#allocation2 + $0x1318] sm:$0xff]
    %v826 = vld [vmem:[#allocation2 + $0x1320] sm:$0xff]
    %v827 = vld [vmem:[#allocation2 + $0x1328] sm:$0xff]
    %v828 = vld [vmem:[#allocation2 + $0x1330] sm:$0xff]
    %v829 = vld [vmem:[#allocation2 + $0x1338] sm:$0xff]
    %v830 = vld [vmem:[#allocation2 + $0x1340] sm:$0xff]
    %v831 = vld [vmem:[#allocation2 + $0x1348] sm:$0xff]
    %v832 = vld [vmem:[#allocation2 + $0x1350] sm:$0xff]
    %v833 = vld [vmem:[#allocation2 + $0x1358] sm:$0xff]
    %v834 = vld [vmem:[#allocation2 + $0x1360] sm:$0xff]
    %v835 = vld [vmem:[#allocation2 + $0x1368] sm:$0xff]
    %v836 = vld [vmem:[#allocation2 + $0x1370] sm:$0xff]
    %v837 = vld [vmem:[#allocation2 + $0x1378] sm:$0xff]
    %v838 = vld [vmem:[#allocation2 + $0x1380] sm:$0xff]
    %v839 = vld [vmem:[#allocation2 + $0x1388] sm:$0xff]
    %v840 = vld [vmem:[#allocation2 + $0x1390] sm:$0xff]
    %v841 = vld [vmem:[#allocation2 + $0x1398] sm:$0xff]
    %v842 = vld [vmem:[#allocation2 + $0x13a0] sm:$0xff]
    %v843 = vld [vmem:[#allocation2 + $0x13a8] sm:$0xff]
    %v844 = vld [vmem:[#allocation2 + $0x13b0] sm:$0xff]
    %v845 = vld [vmem:[#allocation2 + $0x13b8] sm:$0xff]
    %v846 = vld [vmem:[#allocation2 + $0x13c0] sm:$0xff]
    %v847 = vld [vmem:[#allocation2 + $0x13c8] sm:$0xff]
    %v848 = vld [vmem:[#allocation2 + $0x13d0] sm:$0xff]
    %v849 = vld [vmem:[#allocation2 + $0x13d8] sm:$0xff]
    %v850 = vld [vmem:[#allocation2 + $0x13e0] sm:$0xff]
    %v851 = vld [vmem:[#allocation2 + $0x13e8] sm:$0xff]
    %v852 = vld [vmem:[#allocation2 + $0x13f0] sm:$0xff]
    %v853 = vld [vmem:[#allocation2 + $0x13f8] sm:$0xff]
    %v854 = vld [vmem:[#allocation2 + $0x1400] sm:$0xff]
    %v855 = vld [vmem:[#allocation2 + $0x1408] sm:$0xff]
    %v856 = vld [vmem:[#allocation2 + $0x1410] sm:$0xff]
    %v857 = vld [vmem:[#allocation2 + $0x1418] sm:$0xff]
    %v858 = vld [vmem:[#allocation2 + $0x1420] sm:$0xff]
    %v859 = vld [vmem:[#allocation2 + $0x1428] sm:$0xff]
    %v860 = vld [vmem:[#allocation2 + $0x1430] sm:$0xff]
    %v861 = vld [vmem:[#allocation2 + $0x1438] sm:$0xff]
    %v862 = vld [vmem:[#allocation2 + $0x1440] sm:$0xff]
    %v863 = vld [vmem:[#allocation2 + $0x1448] sm:$0xff]
    %v864 = vld [vmem:[#allocation2 + $0x1450] sm:$0xff]
    %v865 = vld [vmem:[#allocation2 + $0x1458] sm:$0xff]
    %v866 = vld [vmem:[#allocation2 + $0x1460] sm:$0xff]
    %v867 = vld [vmem:[#allocation2 + $0x1468] sm:$0xff]
    %v868 = vld [vmem:[#allocation2 + $0x1470] sm:$0xff]
    %v869 = vld [vmem:[#allocation2 + $0x1478] sm:$0xff]
    %v870 = vld [vmem:[#allocation2 + $0x1480] sm:$0xff]
    %v871 = vld [vmem:[#allocation2 + $0x1488] sm:$0xff]
    %v872 = vld [vmem:[#allocation2 + $0x1490] sm:$0xff]
    %v873 = vld [vmem:[#allocation2 + $0x1498] sm:$0xff]
    %v874 = vld [vmem:[#allocation2 + $0x14a0] sm:$0xff]
    %v875 = vld [vmem:[#allocation2 + $0x14a8] sm:$0xff]
    %v876 = vld [vmem:[#allocation2 + $0x14b0] sm:$0xff]
    %v877 = vld [vmem:[#allocation2 + $0x14b8] sm:$0xff]
    %v878 = vld [vmem:[#allocation2 + $0x14c0] sm:$0xff]
    %v879 = vld [vmem:[#allocation2 + $0x14c8] sm:$0xff]
    %v880 = vld [vmem:[#allocation2 + $0x14d0] sm:$0xff]
    %v881 = vld [vmem:[#allocation2 + $0x14d8] sm:$0xff]
    %v882 = vld [vmem:[#allocation2 + $0x14e0] sm:$0xff]
    %v883 = vld [vmem:[#allocation2 + $0x14e8] sm:$0xff]
    %v884 = vld [vmem:[#allocation2 + $0x14f0] sm:$0xff]
    %v885 = vld [vmem:[#allocation2 + $0x14f8] sm:$0xff]
    %v886 = vld [vmem:[#allocation2 + $0x1500] sm:$0xff]
    %v887 = vld [vmem:[#allocation2 + $0x1508] sm:$0xff]
    %v888 = vld [vmem:[#allocation2 + $0x1510] sm:$0xff]
    %v889 = vld [vmem:[#allocation2 + $0x1518] sm:$0xff]
    %v890 = vld [vmem:[#allocation2 + $0x1520] sm:$0xff]
    %v891 = vld [vmem:[#allocation2 + $0x1528] sm:$0xff]
    %v892 = vld [vmem:[#allocation2 + $0x1530] sm:$0xff]
    %v893 = vld [vmem:[#allocation2 + $0x1538] sm:$0xff]
    %v894 = vld [vmem:[#allocation2 + $0x1540] sm:$0xff]
    %v895 = vld [vmem:[#allocation2 + $0x1548] sm:$0xff]
    %v896 = vld [vmem:[#allocation2 + $0x1550] sm:$0xff]
    %v897 = vld [vmem:[#allocation2 + $0x1558] sm:$0xff]
    %v898 = vld [vmem:[#allocation2 + $0x1560] sm:$0xff]
    %v899 = vld [vmem:[#allocation2 + $0x1568] sm:$0xff]
    %v900 = vld [vmem:[#allocation2 + $0x1570] sm:$0xff]
    %v901 = vld [vmem:[#allocation2 + $0x1578] sm:$0xff]
    %v902 = vld [vmem:[#allocation2 + $0x1580] sm:$0xff]
    %v903 = vld [vmem:[#allocation2 + $0x1588] sm:$0xff]
    %v904 = vld [vmem:[#allocation2 + $0x1590] sm:$0xff]
    %v905 = vld [vmem:[#allocation2 + $0x1598] sm:$0xff]
    %v906 = vld [vmem:[#allocation2 + $0x15a0] sm:$0xff]
    %v907 = vld [vmem:[#allocation2 + $0x15a8] sm:$0xff]
    %v908 = vld [vmem:[#allocation2 + $0x15b0] sm:$0xff]
    %v909 = vld [vmem:[#allocation2 + $0x15b8] sm:$0xff]
    %v910 = vld [vmem:[#allocation2 + $0x15c0] sm:$0xff]
    %v911 = vld [vmem:[#allocation2 + $0x15c8] sm:$0xff]
    %v912 = vld [vmem:[#allocation2 + $0x15d0] sm:$0xff]
    %v913 = vld [vmem:[#allocation2 + $0x15d8] sm:$0xff]
    %v914 = vld [vmem:[#allocation2 + $0x15e0] sm:$0xff]
    %v915 = vld [vmem:[#allocation2 + $0x15e8] sm:$0xff]
    %v916 = vld [vmem:[#allocation2 + $0x15f0] sm:$0xff]
    %v917 = vld [vmem:[#allocation2 + $0x15f8] sm:$0xff]
    %v918 = vld [vmem:[#allocation2 + $0x1600] sm:$0xff]
    %v919 = vld [vmem:[#allocation2 + $0x1608] sm:$0xff]
    %v920 = vld [vmem:[#allocation2 + $0x1610] sm:$0xff]
    %v921 = vld [vmem:[#allocation2 + $0x1618] sm:$0xff]
    %v922 = vld [vmem:[#allocation2 + $0x1620] sm:$0xff]
    %v923 = vld [vmem:[#allocation2 + $0x1628] sm:$0xff]
    %v924 = vld [vmem:[#allocation2 + $0x1630] sm:$0xff]
    %v925 = vld [vmem:[#allocation2 + $0x1638] sm:$0xff]
    %v926 = vld [vmem:[#allocation2 + $0x1640] sm:$0xff]
    %v927 = vld [vmem:[#allocation2 + $0x1648] sm:$0xff]
    %v928 = vld [vmem:[#allocation2 + $0x1650] sm:$0xff]
    %v929 = vld [vmem:[#allocation2 + $0x1658] sm:$0xff]
    %v930 = vld [vmem:[#allocation2 + $0x1660] sm:$0xff]
    %v931 = vld [vmem:[#allocation2 + $0x1668] sm:$0xff]
    %v932 = vld [vmem:[#allocation2 + $0x1670] sm:$0xff]
    %v933 = vld [vmem:[#allocation2 + $0x1678] sm:$0xff]
    %v934 = vld [vmem:[#allocation2 + $0x1680] sm:$0xff]
    %v935 = vld [vmem:[#allocation2 + $0x1688] sm:$0xff]
    %v936 = vld [vmem:[#allocation2 + $0x1690] sm:$0xff]
    %v937 = vld [vmem:[#allocation2 + $0x1698] sm:$0xff]
    %v938 = vld [vmem:[#allocation2 + $0x16a0] sm:$0xff]
    %v939 = vld [vmem:[#allocation2 + $0x16a8] sm:$0xff]
    %v940 = vld [vmem:[#allocation2 + $0x16b0] sm:$0xff]
    %v941 = vld [vmem:[#allocation2 + $0x16b8] sm:$0xff]
    %v942 = vld [vmem:[#allocation2 + $0x16c0] sm:$0xff]
    %v943 = vld [vmem:[#allocation2 + $0x16c8] sm:$0xff]
    %v944 = vld [vmem:[#allocation2 + $0x16d0] sm:$0xff]
    %v945 = vld [vmem:[#allocation2 + $0x16d8] sm:$0xff]
    %v946 = vld [vmem:[#allocation2 + $0x16e0] sm:$0xff]
    %v947 = vld [vmem:[#allocation2 + $0x16e8] sm:$0xff]
    %v948 = vld [vmem:[#allocation2 + $0x16f0] sm:$0xff]
    %v949 = vld [vmem:[#allocation2 + $0x16f8] sm:$0xff]
    %v950 = vld [vmem:[#allocation2 + $0x1700] sm:$0xff]
    %v951 = vld [vmem:[#allocation2 + $0x1708] sm:$0xff]
    %v952 = vld [vmem:[#allocation2 + $0x1710] sm:$0xff]
    %v953 = vld [vmem:[#allocation2 + $0x1718] sm:$0xff]
    %v954 = vld [vmem:[#allocation2 + $0x1720] sm:$0xff]
    %v955 = vld [vmem:[#allocation2 + $0x1728] sm:$0xff]
    %v956 = vld [vmem:[#allocation2 + $0x1730] sm:$0xff]
    %v957 = vld [vmem:[#allocation2 + $0x1738] sm:$0xff]
    %v958 = vld [vmem:[#allocation2 + $0x1740] sm:$0xff]
    %v959 = vld [vmem:[#allocation2 + $0x1748] sm:$0xff]
    %v960 = vld [vmem:[#allocation2 + $0x1750] sm:$0xff]
    %v961 = vld [vmem:[#allocation2 + $0x1758] sm:$0xff]
    %v962 = vld [vmem:[#allocation2 + $0x1760] sm:$0xff]
    %v963 = vld [vmem:[#allocation2 + $0x1768] sm:$0xff]
    %v964 = vld [vmem:[#allocation2 + $0x1770] sm:$0xff]
    %v965 = vld [vmem:[#allocation2 + $0x1778] sm:$0xff]
    %v966 = vld [vmem:[#allocation2 + $0x1780] sm:$0xff]
    %v967 = vld [vmem:[#allocation2 + $0x1788] sm:$0xff]
    %v968 = vld [vmem:[#allocation2 + $0x1790] sm:$0xff]
    %v969 = vld [vmem:[#allocation2 + $0x1798] sm:$0xff]
    %v970 = vld [vmem:[#allocation2 + $0x17a0] sm:$0xff]
    %v971 = vld [vmem:[#allocation2 + $0x17a8] sm:$0xff]
    %v972 = vld [vmem:[#allocation2 + $0x17b0] sm:$0xff]
    %v973 = vld [vmem:[#allocation2 + $0x17b8] sm:$0xff]
    %v974 = vld [vmem:[#allocation2 + $0x17c0] sm:$0xff]
    %v975 = vld [vmem:[#allocation2 + $0x17c8] sm:$0xff]
    %v976 = vld [vmem:[#allocation2 + $0x17d0] sm:$0xff]
    %v977 = vld [vmem:[#allocation2 + $0x17d8] sm:$0xff]
    %v978 = vld [vmem:[#allocation2 + $0x17e0] sm:$0xff]
    %v979 = vld [vmem:[#allocation2 + $0x17e8] sm:$0xff]
    %v980 = vld [vmem:[#allocation2 + $0x17f0] sm:$0xff]
    %v981 = vld [vmem:[#allocation2 + $0x17f8] sm:$0xff]
    %v982 = vld [vmem:[#allocation2 + $0x1800] sm:$0xff]
    %v983 = vld [vmem:[#allocation2 + $0x1808] sm:$0xff]
    %v984 = vld [vmem:[#allocation2 + $0x1810] sm:$0xff]
    %v985 = vld [vmem:[#allocation2 + $0x1818] sm:$0xff]
    %v986 = vld [vmem:[#allocation2 + $0x1820] sm:$0xff]
    %v987 = vld [vmem:[#allocation2 + $0x1828] sm:$0xff]
    %v988 = vld [vmem:[#allocation2 + $0x1830] sm:$0xff]
    %v989 = vld [vmem:[#allocation2 + $0x1838] sm:$0xff]
    %v990 = vld [vmem:[#allocation2 + $0x1840] sm:$0xff]
    %v991 = vld [vmem:[#allocation2 + $0x1848] sm:$0xff]
    %v992 = vld [vmem:[#allocation2 + $0x1850] sm:$0xff]
    %v993 = vld [vmem:[#allocation2 + $0x1858] sm:$0xff]
    %v994 = vld [vmem:[#allocation2 + $0x1860] sm:$0xff]
    %v995 = vld [vmem:[#allocation2 + $0x1868] sm:$0xff]
    %v996 = vld [vmem:[#allocation2 + $0x1870] sm:$0xff]
    %v997 = vld [vmem:[#allocation2 + $0x1878] sm:$0xff]
    %v998 = vld [vmem:[#allocation2 + $0x1880] sm:$0xff]
    %v999 = vld [vmem:[#allocation2 + $0x1888] sm:$0xff]
    %v1000 = vld [vmem:[#allocation2 + $0x1890] sm:$0xff]
    %v1001 = vld [vmem:[#allocation2 + $0x1898] sm:$0xff]
    %v1002 = vld [vmem:[#allocation2 + $0x18a0] sm:$0xff]
    %v1003 = vld [vmem:[#allocation2 + $0x18a8] sm:$0xff]
    %v1004 = vld [vmem:[#allocation2 + $0x18b0] sm:$0xff]
    %v1005 = vld [vmem:[#allocation2 + $0x18b8] sm:$0xff]
    %v1006 = vld [vmem:[#allocation2 + $0x18c0] sm:$0xff]
    %v1007 = vld [vmem:[#allocation2 + $0x18c8] sm:$0xff]
    %v1008 = vld [vmem:[#allocation2 + $0x18d0] sm:$0xff]
    %v1009 = vld [vmem:[#allocation2 + $0x18d8] sm:$0xff]
    %v1010 = vld [vmem:[#allocation2 + $0x18e0] sm:$0xff]
    %v1011 = vld [vmem:[#allocation2 + $0x18e8] sm:$0xff]
    %v1012 = vld [vmem:[#allocation2 + $0x18f0] sm:$0xff]
    %v1013 = vld [vmem:[#allocation2 + $0x18f8] sm:$0xff]
    %v1014 = vld [vmem:[#allocation2 + $0x1900] sm:$0xff]
    %v1015 = vld [vmem:[#allocation2 + $0x1908] sm:$0xff]
    %v1016 = vld [vmem:[#allocation2 + $0x1910] sm:$0xff]
    %v1017 = vld [vmem:[#allocation2 + $0x1918] sm:$0xff]
    %v1018 = vld [vmem:[#allocation2 + $0x1920] sm:$0xff]
    %v1019 = vld [vmem:[#allocation2 + $0x1928] sm:$0xff]
    %v1020 = vld [vmem:[#allocation2 + $0x1930] sm:$0xff]
    %v1021 = vld [vmem:[#allocation2 + $0x1938] sm:$0xff]
    %v1022 = vld [vmem:[#allocation2 + $0x1940] sm:$0xff]
    %v1023 = vld [vmem:[#allocation2 + $0x1948] sm:$0xff]
    %v1024 = vld [vmem:[#allocation2 + $0x1950] sm:$0xff]
    %v1025 = vld [vmem:[#allocation2 + $0x1958] sm:$0xff]
    %v1026 = vld [vmem:[#allocation2 + $0x1960] sm:$0xff]
    %v1027 = vld [vmem:[#allocation2 + $0x1968] sm:$0xff]
    %v1028 = vld [vmem:[#allocation2 + $0x1970] sm:$0xff]
    %v1029 = vld [vmem:[#allocation2 + $0x1978] sm:$0xff]
    %v1030 = vld [vmem:[#allocation2 + $0x1980] sm:$0xff]
    %v1031 = vld [vmem:[#allocation2 + $0x1988] sm:$0xff]
    %v1032 = vld [vmem:[#allocation2 + $0x1990] sm:$0xff]
    %v1033 = vld [vmem:[#allocation2 + $0x1998] sm:$0xff]
    %v1034 = vld [vmem:[#allocation2 + $0x19a0] sm:$0xff]
    %v1035 = vld [vmem:[#allocation2 + $0x19a8] sm:$0xff]
    %v1036 = vld [vmem:[#allocation2 + $0x19b0] sm:$0xff]
    %v1037 = vld [vmem:[#allocation2 + $0x19b8] sm:$0xff]
    %v1038 = vld [vmem:[#allocation2 + $0x19c0] sm:$0xff]
    %v1039 = vld [vmem:[#allocation2 + $0x19c8] sm:$0xff]
    %v1040 = vld [vmem:[#allocation2 + $0x19d0] sm:$0xff]
    %v1041 = vld [vmem:[#allocation2 + $0x19d8] sm:$0xff]
    %v1042 = vld [vmem:[#allocation2 + $0x19e0] sm:$0xff]
    %v1043 = vld [vmem:[#allocation2 + $0x19e8] sm:$0xff]
    %v1044 = vld [vmem:[#allocation2 + $0x19f0] sm:$0xff]
    %v1045 = vld [vmem:[#allocation2 + $0x19f8] sm:$0xff]
    %v1046 = vld [vmem:[#allocation2 + $0x1a00] sm:$0xff]
    %v1047 = vld [vmem:[#allocation2 + $0x1a08] sm:$0xff]
    %v1048 = vld [vmem:[#allocation2 + $0x1a10] sm:$0xff]
    %v1049 = vld [vmem:[#allocation2 + $0x1a18] sm:$0xff]
    %v1050 = vld [vmem:[#allocation2 + $0x1a20] sm:$0xff]
    %v1051 = vld [vmem:[#allocation2 + $0x1a28] sm:$0xff]
    %v1052 = vld [vmem:[#allocation2 + $0x1a30] sm:$0xff]
    %v1053 = vld [vmem:[#allocation2 + $0x1a38] sm:$0xff]
    %v1054 = vld [vmem:[#allocation2 + $0x1a40] sm:$0xff]
    %v1055 = vld [vmem:[#allocation2 + $0x1a48] sm:$0xff]
    %v1056 = vld [vmem:[#allocation2 + $0x1a50] sm:$0xff]
    %v1057 = vld [vmem:[#allocation2 + $0x1a58] sm:$0xff]
    %v1058 = vld [vmem:[#allocation2 + $0x1a60] sm:$0xff]
    %v1059 = vld [vmem:[#allocation2 + $0x1a68] sm:$0xff]
    %v1060 = vld [vmem:[#allocation2 + $0x1a70] sm:$0xff]
    %v1061 = vld [vmem:[#allocation2 + $0x1a78] sm:$0xff]
    %v1062 = vld [vmem:[#allocation2 + $0x1a80] sm:$0xff]
    %v1063 = vld [vmem:[#allocation2 + $0x1a88] sm:$0xff]
    %v1064 = vld [vmem:[#allocation2 + $0x1a90] sm:$0xff]
    %v1065 = vld [vmem:[#allocation2 + $0x1a98] sm:$0xff]
    %v1066 = vld [vmem:[#allocation2 + $0x1aa0] sm:$0xff]
    %v1067 = vld [vmem:[#allocation2 + $0x1aa8] sm:$0xff]
    %v1068 = vld [vmem:[#allocation2 + $0x1ab0] sm:$0xff]
    %v1069 = vld [vmem:[#allocation2 + $0x1ab8] sm:$0xff]
    %v1070 = vld [vmem:[#allocation2 + $0x1ac0] sm:$0xff]
    %v1071 = vld [vmem:[#allocation2 + $0x1ac8] sm:$0xff]
    %v1072 = vld [vmem:[#allocation2 + $0x1ad0] sm:$0xff]
    %v1073 = vld [vmem:[#allocation2 + $0x1ad8] sm:$0xff]
    %v1074 = vld [vmem:[#allocation2 + $0x1ae0] sm:$0xff]
    %v1075 = vld [vmem:[#allocation2 + $0x1ae8] sm:$0xff]
    %v1076 = vld [vmem:[#allocation2 + $0x1af0] sm:$0xff]
    %v1077 = vld [vmem:[#allocation2 + $0x1af8] sm:$0xff]
    %v1078 = vld [vmem:[#allocation2 + $0x1b00] sm:$0xff]
    %v1079 = vld [vmem:[#allocation2 + $0x1b08] sm:$0xff]
    %v1080 = vld [vmem:[#allocation2 + $0x1b10] sm:$0xff]
    %v1081 = vld [vmem:[#allocation2 + $0x1b18] sm:$0xff]
    %v1082 = vld [vmem:[#allocation2 + $0x1b20] sm:$0xff]
    %v1083 = vld [vmem:[#allocation2 + $0x1b28] sm:$0xff]
    %v1084 = vld [vmem:[#allocation2 + $0x1b30] sm:$0xff]
    %v1085 = vld [vmem:[#allocation2 + $0x1b38] sm:$0xff]
    %v1086 = vld [vmem:[#allocation2 + $0x1b40] sm:$0xff]
    %v1087 = vld [vmem:[#allocation2 + $0x1b48] sm:$0xff]
    %v1088 = vld [vmem:[#allocation2 + $0x1b50] sm:$0xff]
    %v1089 = vld [vmem:[#allocation2 + $0x1b58] sm:$0xff]
    %v1090 = vld [vmem:[#allocation2 + $0x1b60] sm:$0xff]
    %v1091 = vld [vmem:[#allocation2 + $0x1b68] sm:$0xff]
    %v1092 = vld [vmem:[#allocation2 + $0x1b70] sm:$0xff]
    %v1093 = vld [vmem:[#allocation2 + $0x1b78] sm:$0xff]
    %v1094 = vld [vmem:[#allocation2 + $0x1b80] sm:$0xff]
    %v1095 = vld [vmem:[#allocation2 + $0x1b88] sm:$0xff]
    %v1096 = vld [vmem:[#allocation2 + $0x1b90] sm:$0xff]
    %v1097 = vld [vmem:[#allocation2 + $0x1b98] sm:$0xff]
    %v1098 = vld [vmem:[#allocation2 + $0x1ba0] sm:$0xff]
    %v1099 = vld [vmem:[#allocation2 + $0x1ba8] sm:$0xff]
    %v1100 = vld [vmem:[#allocation2 + $0x1bb0] sm:$0xff]
    %v1101 = vld [vmem:[#allocation2 + $0x1bb8] sm:$0xff]
    %v1102 = vld [vmem:[#allocation2 + $0x1bc0] sm:$0xff]
    %v1103 = vld [vmem:[#allocation2 + $0x1bc8] sm:$0xff]
    %v1104 = vld [vmem:[#allocation2 + $0x1bd0] sm:$0xff]
    %v1105 = vld [vmem:[#allocation2 + $0x1bd8] sm:$0xff]
    %v1106 = vld [vmem:[#allocation2 + $0x1be0] sm:$0xff]
    %v1107 = vld [vmem:[#allocation2 + $0x1be8] sm:$0xff]
    %v1108 = vld [vmem:[#allocation2 + $0x1bf0] sm:$0xff]
    %v1109 = vld [vmem:[#allocation2 + $0x1bf8] sm:$0xff]
    %v1110 = vld [vmem:[#allocation5] sm:$0x3]
    %v1112 = vperm.slane %v1110, 0
    %v1113 = vperm.slane %v1110, 1
    %1117 = vst [vmem:[#allocation1] ss:$9 sm:$0xff] %v207
    %v1118 = vld [vmem:[#allocation1] sm:$0xff]
    %v1119 = vld [vmem:[#allocation1 + $0x9] sm:$0xff]
    %v1120 = vld [vmem:[#allocation1 + $0x12] sm:$0xff]
    %v1121 = vld [vmem:[#allocation1 + $0x1b] sm:$0xff]
    %v1122 = vld [vmem:[#allocation1 + $0x24] sm:$0xff]
    %v1123 = vld [vmem:[#allocation1 + $0x2d] sm:$0xff]
    %v1124 = vld [vmem:[#allocation1 + $0x36] sm:$0xff]
    %v1125 = vld [vmem:[#allocation1 + $0x3f] sm:$0xff]
    %1127 = vst [vmem:[#allocation1] ss:$9 sm:$0xff] %v208
    %v1128 = vld [vmem:[#allocation1] sm:$0xff]
    %v1129 = vld [vmem:[#allocation1 + $0x9] sm:$0xff]
    %v1130 = vld [vmem:[#allocation1 + $0x12] sm:$0xff]
    %v1131 = vld [vmem:[#allocation1 + $0x1b] sm:$0xff]
    %v1132 = vld [vmem:[#allocation1 + $0x24] sm:$0xff]
    %v1133 = vld [vmem:[#allocation1 + $0x2d] sm:$0xff]
    %v1134 = vld [vmem:[#allocation1 + $0x36] sm:$0xff]
    %v1135 = vld [vmem:[#allocation1 + $0x3f] sm:$0xff]
    %1137 = vst [vmem:[#allocation1] ss:$9 sm:$0xff] %v209
    %v1138 = vld [vmem:[#allocation1] sm:$0xff]
    %v1139 = vld [vmem:[#allocation1 + $0x9] sm:$0xff]
    %v1140 = vld [vmem:[#allocation1 + $0x12] sm:$0xff]
    %v1141 = vld [vmem:[#allocation1 + $0x1b] sm:$0xff]
    %v1142 = vld [vmem:[#allocation1 + $0x24] sm:$0xff]
    %v1143 = vld [vmem:[#allocation1 + $0x2d] sm:$0xff]
    %v1144 = vld [vmem:[#allocation1 + $0x36] sm:$0xff]
    %v1145 = vld [vmem:[#allocation1 + $0x3f] sm:$0xff]
    %1147 = vst [vmem:[#allocation1] ss:$9 sm:$0xff] %v210
    %v1148 = vld [vmem:[#allocation1] sm:$0xff]
    %v1149 = vld [vmem:[#allocation1 + $0x9] sm:$0xff]
    %v1150 = vld [vmem:[#allocation1 + $0x12] sm:$0xff]
    %v1151 = vld [vmem:[#allocation1 + $0x1b] sm:$0xff]
    %v1152 = vld [vmem:[#allocation1 + $0x24] sm:$0xff]
    %v1153 = vld [vmem:[#allocation1 + $0x2d] sm:$0xff]
    %v1154 = vld [vmem:[#allocation1 + $0x36] sm:$0xff]
    %v1155 = vld [vmem:[#allocation1 + $0x3f] sm:$0xff]
    %1157 = vst [vmem:[#allocation1] ss:$9 sm:$0xff] %v211
    %v1158 = vld [vmem:[#allocation1] sm:$0xff]
    %v1159 = vld [vmem:[#allocation1 + $0x9] sm:$0xff]
    %v1160 = vld [vmem:[#allocation1 + $0x12] sm:$0xff]
    %v1161 = vld [vmem:[#allocation1 + $0x1b] sm:$0xff]
    %v1162 = vld [vmem:[#allocation1 + $0x24] sm:$0xff]
    %v1163 = vld [vmem:[#allocation1 + $0x2d] sm:$0xff]
    %v1164 = vld [vmem:[#allocation1 + $0x36] sm:$0xff]
    %v1165 = vld [vmem:[#allocation1 + $0x3f] sm:$0xff]
    %1167 = vst [vmem:[#allocation1] ss:$9 sm:$0xff] %v212
    %v1168 = vld [vmem:[#allocation1] sm:$0xff]
    %v1169 = vld [vmem:[#allocation1 + $0x9] sm:$0xff]
    %v1170 = vld [vmem:[#allocation1 + $0x12] sm:$0xff]
    %v1171 = vld [vmem:[#allocation1 + $0x1b] sm:$0xff]
    %v1172 = vld [vmem:[#allocation1 + $0x24] sm:$0xff]
    %v1173 = vld [vmem:[#allocation1 + $0x2d] sm:$0xff]
    %v1174 = vld [vmem:[#allocation1 + $0x36] sm:$0xff]
    %v1175 = vld [vmem:[#allocation1 + $0x3f] sm:$0xff]
    %1177 = vst [vmem:[#allocation1] ss:$9 sm:$0xff] %v213
    %v1178 = vld [vmem:[#allocation1] sm:$0xff]
    %v1179 = vld [vmem:[#allocation1 + $0x9] sm:$0xff]
    %v1180 = vld [vmem:[#allocation1 + $0x12] sm:$0xff]
    %v1181 = vld [vmem:[#allocation1 + $0x1b] sm:$0xff]
    %v1182 = vld [vmem:[#allocation1 + $0x24] sm:$0xff]
    %v1183 = vld [vmem:[#allocation1 + $0x2d] sm:$0xff]
    %v1184 = vld [vmem:[#allocation1 + $0x36] sm:$0xff]
    %v1185 = vld [vmem:[#allocation1 + $0x3f] sm:$0xff]
    %v2138 = vunpack.c.l.b16 %v214
    %v2139 = vunpack.c.h.b16 %v214
    %v2140 = vunpack.c.l.b16 %v215
    %v2141 = vunpack.c.h.b16 %v215
    %v2142 = vunpack.c.l.b16 %v216
    %v2143 = vunpack.c.h.b16 %v216
    %v2144 = vunpack.c.l.b16 %v217
    %v2145 = vunpack.c.h.b16 %v217
    %v2146 = vunpack.c.l.b16 %v218
    %v2147 = vunpack.c.h.b16 %v218
    %v2148 = vunpack.c.l.b16 %v219
    %v2149 = vunpack.c.h.b16 %v219
    %v2150 = vunpack.c.l.b16 %v220
    %v2151 = vunpack.c.h.b16 %v220
    %v2152 = vunpack.c.l.b16 %v221
    %v2153 = vunpack.c.h.b16 %v221
    %v2154 = vunpack.c.l.b16 %v222
    %v2155 = vunpack.c.h.b16 %v222
    %v2156 = vunpack.c.l.b16 %v223
    %v2157 = vunpack.c.h.b16 %v223
    %v2158 = vunpack.c.l.b16 %v224
    %v2159 = vunpack.c.h.b16 %v224
    %v2160 = vunpack.c.l.b16 %v225
    %v2161 = vunpack.c.h.b16 %v225
    %v2162 = vunpack.c.l.b16 %v226
    %v2163 = vunpack.c.h.b16 %v226
    %v2164 = vunpack.c.l.b16 %v227
    %v2165 = vunpack.c.h.b16 %v227
    %v2166 = vunpack.c.l.b16 %v228
    %v2167 = vunpack.c.h.b16 %v228
    %v2168 = vunpack.c.l.b16 %v229
    %v2169 = vunpack.c.h.b16 %v229
    %v2170 = vunpack.c.l.b16 %v230
    %v2171 = vunpack.c.h.b16 %v230
    %v2172 = vunpack.c.l.b16 %v231
    %v2173 = vunpack.c.h.b16 %v231
    %v2174 = vunpack.c.l.b16 %v232
    %v2175 = vunpack.c.h.b16 %v232
    %v2176 = vunpack.c.l.b16 %v233
    %v2177 = vunpack.c.h.b16 %v233
    %v2178 = vunpack.c.l.b16 %v234
    %v2179 = vunpack.c.h.b16 %v234
    %v2180 = vunpack.c.l.b16 %v235
    %v2181 = vunpack.c.h.b16 %v235
    %v2182 = vunpack.c.l.b16 %v236
    %v2183 = vunpack.c.h.b16 %v236
    %v2184 = vunpack.c.l.b16 %v237
    %v2185 = vunpack.c.h.b16 %v237
    %v2186 = vunpack.c.l.b16 %v238
    %v2187 = vunpack.c.h.b16 %v238
    %v2188 = vunpack.c.l.b16 %v239
    %v2189 = vunpack.c.h.b16 %v239
    %v2190 = vunpack.c.l.b16 %v240
    %v2191 = vunpack.c.h.b16 %v240
    %v2192 = vunpack.c.l.b16 %v241
    %v2193 = vunpack.c.h.b16 %v241
    %v2194 = vunpack.c.l.b16 %v242
    %v2195 = vunpack.c.h.b16 %v242
    %v2196 = vunpack.c.l.b16 %v243
    %v2197 = vunpack.c.h.b16 %v243
    %v2198 = vunpack.c.l.b16 %v244
    %v2199 = vunpack.c.h.b16 %v244
    %v2200 = vunpack.c.l.b16 %v245
    %v2201 = vunpack.c.h.b16 %v245
    %v2202 = vunpack.c.l.b16 %v246
    %v2203 = vunpack.c.h.b16 %v246
    %v2204 = vunpack.c.l.b16 %v247
    %v2205 = vunpack.c.h.b16 %v247
    %v2206 = vunpack.c.l.b16 %v248
    %v2207 = vunpack.c.h.b16 %v248
    %v2208 = vunpack.c.l.b16 %v249
    %v2209 = vunpack.c.h.b16 %v249
    %v2210 = vunpack.c.l.b16 %v250
    %v2211 = vunpack.c.h.b16 %v250
    %v2212 = vunpack.c.l.b16 %v251
    %v2213 = vunpack.c.h.b16 %v251
    %v2214 = vunpack.c.l.b16 %v252
    %v2215 = vunpack.c.h.b16 %v252
    %v2216 = vunpack.c.l.b16 %v253
    %v2217 = vunpack.c.h.b16 %v253
    %v2218 = vunpack.c.l.b16 %v254
    %v2219 = vunpack.c.h.b16 %v254
    %v2220 = vunpack.c.l.b16 %v255
    %v2221 = vunpack.c.h.b16 %v255
    %v2222 = vunpack.c.l.b16 %v256
    %v2223 = vunpack.c.h.b16 %v256
    %v2224 = vunpack.c.l.b16 %v257
    %v2225 = vunpack.c.h.b16 %v257
    %v2226 = vunpack.c.l.b16 %v258
    %v2227 = vunpack.c.h.b16 %v258
    %v2228 = vunpack.c.l.b16 %v259
    %v2229 = vunpack.c.h.b16 %v259
    %v2230 = vunpack.c.l.b16 %v260
    %v2231 = vunpack.c.h.b16 %v260
    %v2232 = vunpack.c.l.b16 %v261
    %v2233 = vunpack.c.h.b16 %v261
    %v2234 = vunpack.c.l.b16 %v262
    %v2235 = vunpack.c.h.b16 %v262
    %v2236 = vunpack.c.l.b16 %v263
    %v2237 = vunpack.c.h.b16 %v263
    %v2238 = vunpack.c.l.b16 %v264
    %v2239 = vunpack.c.h.b16 %v264
    %v2240 = vunpack.c.l.b16 %v265
    %v2241 = vunpack.c.h.b16 %v265
    %v2242 = vunpack.c.l.b16 %v266
    %v2243 = vunpack.c.h.b16 %v266
    %v2244 = vunpack.c.l.b16 %v267
    %v2245 = vunpack.c.h.b16 %v267
    %v2246 = vunpack.c.l.b16 %v268
    %v2247 = vunpack.c.h.b16 %v268
    %v2248 = vunpack.c.l.b16 %v269
    %v2249 = vunpack.c.h.b16 %v269
    %v2250 = vunpack.c.l.b16 %v270
    %v2251 = vunpack.c.h.b16 %v270
    %v2252 = vunpack.c.l.b16 %v271
    %v2253 = vunpack.c.h.b16 %v271
    %v2254 = vunpack.c.l.b16 %v272
    %v2255 = vunpack.c.h.b16 %v272
    %v2256 = vunpack.c.l.b16 %v273
    %v2257 = vunpack.c.h.b16 %v273
    %v2258 = vunpack.c.l.b16 %v274
    %v2259 = vunpack.c.h.b16 %v274
    %v2260 = vunpack.c.l.b16 %v275
    %v2261 = vunpack.c.h.b16 %v275
    %v2262 = vunpack.c.l.b16 %v276
    %v2263 = vunpack.c.h.b16 %v276
    %v2264 = vunpack.c.l.b16 %v277
    %v2265 = vunpack.c.h.b16 %v277
    %v2266 = vunpack.c.l.b16 %v278
    %v2267 = vunpack.c.h.b16 %v278
    %v2268 = vunpack.c.l.b16 %v279
    %v2269 = vunpack.c.h.b16 %v279
    %v2270 = vunpack.c.l.b16 %v280
    %v2271 = vunpack.c.h.b16 %v280
    %v2272 = vunpack.c.l.b16 %v281
    %v2273 = vunpack.c.h.b16 %v281
    %v2274 = vunpack.c.l.b16 %v282
    %v2275 = vunpack.c.h.b16 %v282
    %v2276 = vunpack.c.l.b16 %v283
    %v2277 = vunpack.c.h.b16 %v283
    %v2278 = vunpack.c.l.b16 %v284
    %v2279 = vunpack.c.h.b16 %v284
    %v2280 = vunpack.c.l.b16 %v285
    %v2281 = vunpack.c.h.b16 %v285
    %v2282 = vunpack.c.l.b16 %v286
    %v2283 = vunpack.c.h.b16 %v286
    %v2284 = vunpack.c.l.b16 %v287
    %v2285 = vunpack.c.h.b16 %v287
    %v2286 = vunpack.c.l.b16 %v288
    %v2287 = vunpack.c.h.b16 %v288
    %v2288 = vunpack.c.l.b16 %v289
    %v2289 = vunpack.c.h.b16 %v289
    %v2290 = vunpack.c.l.b16 %v290
    %v2291 = vunpack.c.h.b16 %v290
    %v2292 = vunpack.c.l.b16 %v291
    %v2293 = vunpack.c.h.b16 %v291
    %v2294 = vunpack.c.l.b16 %v292
    %v2295 = vunpack.c.h.b16 %v292
    %v2296 = vunpack.c.l.b16 %v293
    %v2297 = vunpack.c.h.b16 %v293
    %v2298 = vunpack.c.l.b16 %v294
    %v2299 = vunpack.c.h.b16 %v294
    %v2300 = vunpack.c.l.b16 %v295
    %v2301 = vunpack.c.h.b16 %v295
    %v2302 = vunpack.c.l.b16 %v296
    %v2303 = vunpack.c.h.b16 %v296
    %v2304 = vunpack.c.l.b16 %v297
    %v2305 = vunpack.c.h.b16 %v297
    %v2306 = vunpack.c.l.b16 %v298
    %v2307 = vunpack.c.h.b16 %v298
    %v2308 = vunpack.c.l.b16 %v299
    %v2309 = vunpack.c.h.b16 %v299
    %v2310 = vunpack.c.l.b16 %v300
    %v2311 = vunpack.c.h.b16 %v300
    %v2312 = vunpack.c.l.b16 %v301
    %v2313 = vunpack.c.h.b16 %v301
    %v2314 = vunpack.c.l.b16 %v302
    %v2315 = vunpack.c.h.b16 %v302
    %v2316 = vunpack.c.l.b16 %v303
    %v2317 = vunpack.c.h.b16 %v303
    %v2318 = vunpack.c.l.b16 %v304
    %v2319 = vunpack.c.h.b16 %v304
    %v2320 = vunpack.c.l.b16 %v305
    %v2321 = vunpack.c.h.b16 %v305
    %v2322 = vunpack.c.l.b16 %v306
    %v2323 = vunpack.c.h.b16 %v306
    %v2324 = vunpack.c.l.b16 %v307
    %v2325 = vunpack.c.h.b16 %v307
    %v2326 = vunpack.c.l.b16 %v308
    %v2327 = vunpack.c.h.b16 %v308
    %v2328 = vunpack.c.l.b16 %v309
    %v2329 = vunpack.c.h.b16 %v309
    %v2330 = vunpack.c.l.b16 %v310
    %v2331 = vunpack.c.h.b16 %v310
    %v2332 = vunpack.c.l.b16 %v311
    %v2333 = vunpack.c.h.b16 %v311
    %v2334 = vunpack.c.l.b16 %v312
    %v2335 = vunpack.c.h.b16 %v312
    %v2336 = vunpack.c.l.b16 %v313
    %v2337 = vunpack.c.h.b16 %v313
    %v2338 = vunpack.c.l.b16 %v314
    %v2339 = vunpack.c.h.b16 %v314
    %v2340 = vunpack.c.l.b16 %v315
    %v2341 = vunpack.c.h.b16 %v315
    %v2342 = vunpack.c.l.b16 %v316
    %v2343 = vunpack.c.h.b16 %v316
    %v2344 = vunpack.c.l.b16 %v317
    %v2345 = vunpack.c.h.b16 %v317
    %v2346 = vunpack.c.l.b16 %v318
    %v2347 = vunpack.c.h.b16 %v318
    %v2348 = vunpack.c.l.b16 %v319
    %v2349 = vunpack.c.h.b16 %v319
    %v2350 = vunpack.c.l.b16 %v320
    %v2351 = vunpack.c.h.b16 %v320
    %v2352 = vunpack.c.l.b16 %v321
    %v2353 = vunpack.c.h.b16 %v321
    %v2354 = vunpack.c.l.b16 %v322
    %v2355 = vunpack.c.h.b16 %v322
    %v2356 = vunpack.c.l.b16 %v323
    %v2357 = vunpack.c.h.b16 %v323
    %v2358 = vunpack.c.l.b16 %v324
    %v2359 = vunpack.c.h.b16 %v324
    %v2360 = vunpack.c.l.b16 %v325
    %v2361 = vunpack.c.h.b16 %v325
    %v2362 = vunpack.c.l.b16 %v326
    %v2363 = vunpack.c.h.b16 %v326
    %v2364 = vunpack.c.l.b16 %v327
    %v2365 = vunpack.c.h.b16 %v327
    %v2366 = vunpack.c.l.b16 %v328
    %v2367 = vunpack.c.h.b16 %v328
    %v2368 = vunpack.c.l.b16 %v329
    %v2369 = vunpack.c.h.b16 %v329
    %v2370 = vunpack.c.l.b16 %v330
    %v2371 = vunpack.c.h.b16 %v330
    %v2372 = vunpack.c.l.b16 %v331
    %v2373 = vunpack.c.h.b16 %v331
    %v2374 = vunpack.c.l.b16 %v332
    %v2375 = vunpack.c.h.b16 %v332
    %v2376 = vunpack.c.l.b16 %v333
    %v2377 = vunpack.c.h.b16 %v333
    %v2378 = vunpack.c.l.b16 %v334
    %v2379 = vunpack.c.h.b16 %v334
    %v2380 = vunpack.c.l.b16 %v335
    %v2381 = vunpack.c.h.b16 %v335
    %v2382 = vunpack.c.l.b16 %v336
    %v2383 = vunpack.c.h.b16 %v336
    %v2384 = vunpack.c.l.b16 %v337
    %v2385 = vunpack.c.h.b16 %v337
    %v2386 = vunpack.c.l.b16 %v338
    %v2387 = vunpack.c.h.b16 %v338
    %v2388 = vunpack.c.l.b16 %v339
    %v2389 = vunpack.c.h.b16 %v339
    %v2390 = vunpack.c.l.b16 %v340
    %v2391 = vunpack.c.h.b16 %v340
    %v2392 = vunpack.c.l.b16 %v341
    %v2393 = vunpack.c.h.b16 %v341
    %v2394 = vunpack.c.l.b16 %v342
    %v2395 = vunpack.c.h.b16 %v342
    %v2396 = vunpack.c.l.b16 %v343
    %v2397 = vunpack.c.h.b16 %v343
    %v2398 = vunpack.c.l.b16 %v344
    %v2399 = vunpack.c.h.b16 %v344
    %v2400 = vunpack.c.l.b16 %v345
    %v2401 = vunpack.c.h.b16 %v345
    %v2402 = vunpack.c.l.b16 %v346
    %v2403 = vunpack.c.h.b16 %v346
    %v2404 = vunpack.c.l.b16 %v347
    %v2405 = vunpack.c.h.b16 %v347
    %v2406 = vunpack.c.l.b16 %v348
    %v2407 = vunpack.c.h.b16 %v348
    %v2408 = vunpack.c.l.b16 %v349
    %v2409 = vunpack.c.h.b16 %v349
    %v2410 = vunpack.c.l.b16 %v350
    %v2411 = vunpack.c.h.b16 %v350
    %v2412 = vunpack.c.l.b16 %v351
    %v2413 = vunpack.c.h.b16 %v351
    %v2414 = vunpack.c.l.b16 %v352
    %v2415 = vunpack.c.h.b16 %v352
    %v2416 = vunpack.c.l.b16 %v353
    %v2417 = vunpack.c.h.b16 %v353
    %v2418 = vunpack.c.l.b16 %v354
    %v2419 = vunpack.c.h.b16 %v354
    %v2420 = vunpack.c.l.b16 %v355
    %v2421 = vunpack.c.h.b16 %v355
    %v2422 = vunpack.c.l.b16 %v356
    %v2423 = vunpack.c.h.b16 %v356
    %v2424 = vunpack.c.l.b16 %v357
    %v2425 = vunpack.c.h.b16 %v357
    %v2426 = vunpack.c.l.b16 %v358
    %v2427 = vunpack.c.h.b16 %v358
    %v2428 = vunpack.c.l.b16 %v359
    %v2429 = vunpack.c.h.b16 %v359
    %v2430 = vunpack.c.l.b16 %v360
    %v2431 = vunpack.c.h.b16 %v360
    %v2432 = vunpack.c.l.b16 %v361
    %v2433 = vunpack.c.h.b16 %v361
    %v2434 = vunpack.c.l.b16 %v362
    %v2435 = vunpack.c.h.b16 %v362
    %v2436 = vunpack.c.l.b16 %v363
    %v2437 = vunpack.c.h.b16 %v363
    %v2438 = vunpack.c.l.b16 %v364
    %v2439 = vunpack.c.h.b16 %v364
    %v2440 = vunpack.c.l.b16 %v365
    %v2441 = vunpack.c.h.b16 %v365
    %v2442 = vunpack.c.l.b16 %v366
    %v2443 = vunpack.c.h.b16 %v366
    %v2444 = vunpack.c.l.b16 %v367
    %v2445 = vunpack.c.h.b16 %v367
    %v2446 = vunpack.c.l.b16 %v368
    %v2447 = vunpack.c.h.b16 %v368
    %v2448 = vunpack.c.l.b16 %v369
    %v2449 = vunpack.c.h.b16 %v369
    %v2450 = vunpack.c.l.b16 %v370
    %v2451 = vunpack.c.h.b16 %v370
    %v2452 = vunpack.c.l.b16 %v371
    %v2453 = vunpack.c.h.b16 %v371
    %v2454 = vunpack.c.l.b16 %v372
    %v2455 = vunpack.c.h.b16 %v372
    %v2456 = vunpack.c.l.b16 %v373
    %v2457 = vunpack.c.h.b16 %v373
    %v2458 = vunpack.c.l.b16 %v374
    %v2459 = vunpack.c.h.b16 %v374
    %v2460 = vunpack.c.l.b16 %v375
    %v2461 = vunpack.c.h.b16 %v375
    %v2462 = vunpack.c.l.b16 %v376
    %v2463 = vunpack.c.h.b16 %v376
    %v2464 = vunpack.c.l.b16 %v377
    %v2465 = vunpack.c.h.b16 %v377
    %v2466 = vunpack.c.l.b16 %v378
    %v2467 = vunpack.c.h.b16 %v378
    %v2468 = vunpack.c.l.b16 %v379
    %v2469 = vunpack.c.h.b16 %v379
    %v2470 = vunpack.c.l.b16 %v380
    %v2471 = vunpack.c.h.b16 %v380
    %v2472 = vunpack.c.l.b16 %v381
    %v2473 = vunpack.c.h.b16 %v381
    %v2474 = vunpack.c.l.b16 %v382
    %v2475 = vunpack.c.h.b16 %v382
    %v2476 = vunpack.c.l.b16 %v383
    %v2477 = vunpack.c.h.b16 %v383
    %v2478 = vunpack.c.l.b16 %v384
    %v2479 = vunpack.c.h.b16 %v384
    %v2480 = vunpack.c.l.b16 %v385
    %v2481 = vunpack.c.h.b16 %v385
    %v2482 = vunpack.c.l.b16 %v386
    %v2483 = vunpack.c.h.b16 %v386
    %v2484 = vunpack.c.l.b16 %v387
    %v2485 = vunpack.c.h.b16 %v387
    %v2486 = vunpack.c.l.b16 %v388
    %v2487 = vunpack.c.h.b16 %v388
    %v2488 = vunpack.c.l.b16 %v389
    %v2489 = vunpack.c.h.b16 %v389
    %v2490 = vunpack.c.l.b16 %v390
    %v2491 = vunpack.c.h.b16 %v390
    %v2492 = vunpack.c.l.b16 %v391
    %v2493 = vunpack.c.h.b16 %v391
    %v2494 = vunpack.c.l.b16 %v392
    %v2495 = vunpack.c.h.b16 %v392
    %v2496 = vunpack.c.l.b16 %v393
    %v2497 = vunpack.c.h.b16 %v393
    %v2498 = vunpack.c.l.b16 %v394
    %v2499 = vunpack.c.h.b16 %v394
    %v2500 = vunpack.c.l.b16 %v395
    %v2501 = vunpack.c.h.b16 %v395
    %v2502 = vunpack.c.l.b16 %v396
    %v2503 = vunpack.c.h.b16 %v396
    %v2504 = vunpack.c.l.b16 %v397
    %v2505 = vunpack.c.h.b16 %v397
    %v2506 = vunpack.c.l.b16 %v398
    %v2507 = vunpack.c.h.b16 %v398
    %v2508 = vunpack.c.l.b16 %v399
    %v2509 = vunpack.c.h.b16 %v399
    %v2510 = vunpack.c.l.b16 %v400
    %v2511 = vunpack.c.h.b16 %v400
    %v2512 = vunpack.c.l.b16 %v401
    %v2513 = vunpack.c.h.b16 %v401
    %v2514 = vunpack.c.l.b16 %v402
    %v2515 = vunpack.c.h.b16 %v402
    %v2516 = vunpack.c.l.b16 %v403
    %v2517 = vunpack.c.h.b16 %v403
    %v2518 = vunpack.c.l.b16 %v404
    %v2519 = vunpack.c.h.b16 %v404
    %v2520 = vunpack.c.l.b16 %v405
    %v2521 = vunpack.c.h.b16 %v405
    %v2522 = vunpack.c.l.b16 %v406
    %v2523 = vunpack.c.h.b16 %v406
    %v2524 = vunpack.c.l.b16 %v407
    %v2525 = vunpack.c.h.b16 %v407
    %v2526 = vunpack.c.l.b16 %v408
    %v2527 = vunpack.c.h.b16 %v408
    %v2528 = vunpack.c.l.b16 %v409
    %v2529 = vunpack.c.h.b16 %v409
    %v2530 = vunpack.c.l.b16 %v410
    %v2531 = vunpack.c.h.b16 %v410
    %v2532 = vunpack.c.l.b16 %v411
    %v2533 = vunpack.c.h.b16 %v411
    %v2534 = vunpack.c.l.b16 %v412
    %v2535 = vunpack.c.h.b16 %v412
    %v2536 = vunpack.c.l.b16 %v413
    %v2537 = vunpack.c.h.b16 %v413
    %v2538 = vunpack.c.l.b16 %v414
    %v2539 = vunpack.c.h.b16 %v414
    %v2540 = vunpack.c.l.b16 %v415
    %v2541 = vunpack.c.h.b16 %v415
    %v2542 = vunpack.c.l.b16 %v416
    %v2543 = vunpack.c.h.b16 %v416
    %v2544 = vunpack.c.l.b16 %v417
    %v2545 = vunpack.c.h.b16 %v417
    %v2546 = vunpack.c.l.b16 %v418
    %v2547 = vunpack.c.h.b16 %v418
    %v2548 = vunpack.c.l.b16 %v419
    %v2549 = vunpack.c.h.b16 %v419
    %v2550 = vunpack.c.l.b16 %v420
    %v2551 = vunpack.c.h.b16 %v420
    %v2552 = vunpack.c.l.b16 %v421
    %v2553 = vunpack.c.h.b16 %v421
    %v2554 = vunpack.c.l.b16 %v422
    %v2555 = vunpack.c.h.b16 %v422
    %v2556 = vunpack.c.l.b16 %v423
    %v2557 = vunpack.c.h.b16 %v423
    %v2558 = vunpack.c.l.b16 %v424
    %v2559 = vunpack.c.h.b16 %v424
    %v2560 = vunpack.c.l.b16 %v425
    %v2561 = vunpack.c.h.b16 %v425
    %v2562 = vunpack.c.l.b16 %v426
    %v2563 = vunpack.c.h.b16 %v426
    %v2564 = vunpack.c.l.b16 %v427
    %v2565 = vunpack.c.h.b16 %v427
    %v2566 = vunpack.c.l.b16 %v428
    %v2567 = vunpack.c.h.b16 %v428
    %v2568 = vunpack.c.l.b16 %v429
    %v2569 = vunpack.c.h.b16 %v429
    %v2570 = vunpack.c.l.b16 %v430
    %v2571 = vunpack.c.h.b16 %v430
    %v2572 = vunpack.c.l.b16 %v431
    %v2573 = vunpack.c.h.b16 %v431
    %v2574 = vunpack.c.l.b16 %v432
    %v2575 = vunpack.c.h.b16 %v432
    %v2576 = vunpack.c.l.b16 %v433
    %v2577 = vunpack.c.h.b16 %v433
    %v2578 = vunpack.c.l.b16 %v434
    %v2579 = vunpack.c.h.b16 %v434
    %v2580 = vunpack.c.l.b16 %v435
    %v2581 = vunpack.c.h.b16 %v435
    %v2582 = vunpack.c.l.b16 %v436
    %v2583 = vunpack.c.h.b16 %v436
    %v2584 = vunpack.c.l.b16 %v437
    %v2585 = vunpack.c.h.b16 %v437
    %v2586 = vunpack.c.l.b16 %v438
    %v2587 = vunpack.c.h.b16 %v438
    %v2588 = vunpack.c.l.b16 %v439
    %v2589 = vunpack.c.h.b16 %v439
    %v2590 = vunpack.c.l.b16 %v440
    %v2591 = vunpack.c.h.b16 %v440
    %v2592 = vunpack.c.l.b16 %v441
    %v2593 = vunpack.c.h.b16 %v441
    %v2594 = vunpack.c.l.b16 %v442
    %v2595 = vunpack.c.h.b16 %v442
    %v2596 = vunpack.c.l.b16 %v443
    %v2597 = vunpack.c.h.b16 %v443
    %v2598 = vunpack.c.l.b16 %v444
    %v2599 = vunpack.c.h.b16 %v444
    %v2600 = vunpack.c.l.b16 %v445
    %v2601 = vunpack.c.h.b16 %v445
    %v2602 = vunpack.c.l.b16 %v446
    %v2603 = vunpack.c.h.b16 %v446
    %v2604 = vunpack.c.l.b16 %v447
    %v2605 = vunpack.c.h.b16 %v447
    %v2606 = vunpack.c.l.b16 %v448
    %v2607 = vunpack.c.h.b16 %v448
    %v2608 = vunpack.c.l.b16 %v449
    %v2609 = vunpack.c.h.b16 %v449
    %v2610 = vunpack.c.l.b16 %v450
    %v2611 = vunpack.c.h.b16 %v450
    %v2612 = vunpack.c.l.b16 %v451
    %v2613 = vunpack.c.h.b16 %v451
    %v2614 = vunpack.c.l.b16 %v452
    %v2615 = vunpack.c.h.b16 %v452
    %v2616 = vunpack.c.l.b16 %v453
    %v2617 = vunpack.c.h.b16 %v453
    %v2618 = vunpack.c.l.b16 %v454
    %v2619 = vunpack.c.h.b16 %v454
    %v2620 = vunpack.c.l.b16 %v455
    %v2621 = vunpack.c.h.b16 %v455
    %v2622 = vunpack.c.l.b16 %v456
    %v2623 = vunpack.c.h.b16 %v456
    %v2624 = vunpack.c.l.b16 %v457
    %v2625 = vunpack.c.h.b16 %v457
    %v2626 = vunpack.c.l.b16 %v458
    %v2627 = vunpack.c.h.b16 %v458
    %v2628 = vunpack.c.l.b16 %v459
    %v2629 = vunpack.c.h.b16 %v459
    %v2630 = vunpack.c.l.b16 %v460
    %v2631 = vunpack.c.h.b16 %v460
    %v2632 = vunpack.c.l.b16 %v461
    %v2633 = vunpack.c.h.b16 %v461
    %v2634 = vunpack.c.l.b16 %v462
    %v2635 = vunpack.c.h.b16 %v462
    %v2636 = vunpack.c.l.b16 %v463
    %v2637 = vunpack.c.h.b16 %v463
    %v2638 = vunpack.c.l.b16 %v464
    %v2639 = vunpack.c.h.b16 %v464
    %v2640 = vunpack.c.l.b16 %v465
    %v2641 = vunpack.c.h.b16 %v465
    %v2642 = vunpack.c.l.b16 %v466
    %v2643 = vunpack.c.h.b16 %v466
    %v2644 = vunpack.c.l.b16 %v467
    %v2645 = vunpack.c.h.b16 %v467
    %v2646 = vunpack.c.l.b16 %v468
    %v2647 = vunpack.c.h.b16 %v468
    %v2648 = vunpack.c.l.b16 %v469
    %v2649 = vunpack.c.h.b16 %v469
    %v2650 = vunpack.c.l.b16 %v470
    %v2651 = vunpack.c.h.b16 %v470
    %v2652 = vunpack.c.l.b16 %v471
    %v2653 = vunpack.c.h.b16 %v471
    %v2654 = vunpack.c.l.b16 %v472
    %v2655 = vunpack.c.h.b16 %v472
    %v2656 = vunpack.c.l.b16 %v473
    %v2657 = vunpack.c.h.b16 %v473
    %v2658 = vunpack.c.l.b16 %v474
    %v2659 = vunpack.c.h.b16 %v474
    %v2660 = vunpack.c.l.b16 %v475
    %v2661 = vunpack.c.h.b16 %v475
    %v2662 = vunpack.c.l.b16 %v476
    %v2663 = vunpack.c.h.b16 %v476
    %v2664 = vunpack.c.l.b16 %v477
    %v2665 = vunpack.c.h.b16 %v477
    %v2666 = vunpack.c.l.b16 %v478
    %v2667 = vunpack.c.h.b16 %v478
    %v2668 = vunpack.c.l.b16 %v479
    %v2669 = vunpack.c.h.b16 %v479
    %v2670 = vunpack.c.l.b16 %v480
    %v2671 = vunpack.c.h.b16 %v480
    %v2672 = vunpack.c.l.b16 %v481
    %v2673 = vunpack.c.h.b16 %v481
    %v2674 = vunpack.c.l.b16 %v482
    %v2675 = vunpack.c.h.b16 %v482
    %v2676 = vunpack.c.l.b16 %v483
    %v2677 = vunpack.c.h.b16 %v483
    %v2678 = vunpack.c.l.b16 %v484
    %v2679 = vunpack.c.h.b16 %v484
    %v2680 = vunpack.c.l.b16 %v485
    %v2681 = vunpack.c.h.b16 %v485
    %v2682 = vunpack.c.l.b16 %v486
    %v2683 = vunpack.c.h.b16 %v486
    %v2684 = vunpack.c.l.b16 %v487
    %v2685 = vunpack.c.h.b16 %v487
    %v2686 = vunpack.c.l.b16 %v488
    %v2687 = vunpack.c.h.b16 %v488
    %v2688 = vunpack.c.l.b16 %v489
    %v2689 = vunpack.c.h.b16 %v489
    %v2690 = vunpack.c.l.b16 %v490
    %v2691 = vunpack.c.h.b16 %v490
    %v2692 = vunpack.c.l.b16 %v491
    %v2693 = vunpack.c.h.b16 %v491
    %v2694 = vunpack.c.l.b16 %v492
    %v2695 = vunpack.c.h.b16 %v492
    %v2696 = vunpack.c.l.b16 %v493
    %v2697 = vunpack.c.h.b16 %v493
    %v2698 = vunpack.c.l.b16 %v494
    %v2699 = vunpack.c.h.b16 %v494
    %v2700 = vunpack.c.l.b16 %v495
    %v2701 = vunpack.c.h.b16 %v495
    %v2702 = vunpack.c.l.b16 %v496
    %v2703 = vunpack.c.h.b16 %v496
    %v2704 = vunpack.c.l.b16 %v497
    %v2705 = vunpack.c.h.b16 %v497
    %v2706 = vunpack.c.l.b16 %v498
    %v2707 = vunpack.c.h.b16 %v498
    %v2708 = vunpack.c.l.b16 %v499
    %v2709 = vunpack.c.h.b16 %v499
    %v2710 = vunpack.c.l.b16 %v500
    %v2711 = vunpack.c.h.b16 %v500
    %v2712 = vunpack.c.l.b16 %v501
    %v2713 = vunpack.c.h.b16 %v501
    %v2714 = vunpack.c.l.b16 %v502
    %v2715 = vunpack.c.h.b16 %v502
    %v2716 = vunpack.c.l.b16 %v503
    %v2717 = vunpack.c.h.b16 %v503
    %v2718 = vunpack.c.l.b16 %v504
    %v2719 = vunpack.c.h.b16 %v504
    %v2720 = vunpack.c.l.b16 %v505
    %v2721 = vunpack.c.h.b16 %v505
    %v2722 = vunpack.c.l.b16 %v506
    %v2723 = vunpack.c.h.b16 %v506
    %v2724 = vunpack.c.l.b16 %v507
    %v2725 = vunpack.c.h.b16 %v507
    %v2726 = vunpack.c.l.b16 %v508
    %v2727 = vunpack.c.h.b16 %v508
    %v2728 = vunpack.c.l.b16 %v509
    %v2729 = vunpack.c.h.b16 %v509
    %v2730 = vunpack.c.l.b16 %v510
    %v2731 = vunpack.c.h.b16 %v510
    %v2732 = vunpack.c.l.b16 %v511
    %v2733 = vunpack.c.h.b16 %v511
    %v2734 = vunpack.c.l.b16 %v512
    %v2735 = vunpack.c.h.b16 %v512
    %v2736 = vunpack.c.l.b16 %v513
    %v2737 = vunpack.c.h.b16 %v513
    %v2738 = vunpack.c.l.b16 %v514
    %v2739 = vunpack.c.h.b16 %v514
    %v2740 = vunpack.c.l.b16 %v515
    %v2741 = vunpack.c.h.b16 %v515
    %v2742 = vunpack.c.l.b16 %v516
    %v2743 = vunpack.c.h.b16 %v516
    %v2744 = vunpack.c.l.b16 %v517
    %v2745 = vunpack.c.h.b16 %v517
    %v2746 = vunpack.c.l.b16 %v518
    %v2747 = vunpack.c.h.b16 %v518
    %v2748 = vunpack.c.l.b16 %v519
    %v2749 = vunpack.c.h.b16 %v519
    %v2750 = vunpack.c.l.b16 %v520
    %v2751 = vunpack.c.h.b16 %v520
    %v2752 = vunpack.c.l.b16 %v521
    %v2753 = vunpack.c.h.b16 %v521
    %v2754 = vunpack.c.l.b16 %v522
    %v2755 = vunpack.c.h.b16 %v522
    %v2756 = vunpack.c.l.b16 %v523
    %v2757 = vunpack.c.h.b16 %v523
    %v2758 = vunpack.c.l.b16 %v524
    %v2759 = vunpack.c.h.b16 %v524
    %v2760 = vunpack.c.l.b16 %v525
    %v2761 = vunpack.c.h.b16 %v525
    %v2762 = vunpack.c.l.b16 %v526
    %v2763 = vunpack.c.h.b16 %v526
    %v2764 = vunpack.c.l.b16 %v527
    %v2765 = vunpack.c.h.b16 %v527
    %v2766 = vunpack.c.l.b16 %v528
    %v2767 = vunpack.c.h.b16 %v528
    %v2768 = vunpack.c.l.b16 %v529
    %v2769 = vunpack.c.h.b16 %v529
    %v2770 = vunpack.c.l.b16 %v530
    %v2771 = vunpack.c.h.b16 %v530
    %v2772 = vunpack.c.l.b16 %v531
    %v2773 = vunpack.c.h.b16 %v531
    %v2774 = vunpack.c.l.b16 %v532
    %v2775 = vunpack.c.h.b16 %v532
    %v2776 = vunpack.c.l.b16 %v533
    %v2777 = vunpack.c.h.b16 %v533
    %v2778 = vunpack.c.l.b16 %v534
    %v2779 = vunpack.c.h.b16 %v534
    %v2780 = vunpack.c.l.b16 %v535
    %v2781 = vunpack.c.h.b16 %v535
    %v2782 = vunpack.c.l.b16 %v536
    %v2783 = vunpack.c.h.b16 %v536
    %v2784 = vunpack.c.l.b16 %v537
    %v2785 = vunpack.c.h.b16 %v537
    %v2786 = vunpack.c.l.b16 %v538
    %v2787 = vunpack.c.h.b16 %v538
    %v2788 = vunpack.c.l.b16 %v539
    %v2789 = vunpack.c.h.b16 %v539
    %v2790 = vunpack.c.l.b16 %v540
    %v2791 = vunpack.c.h.b16 %v540
    %v2792 = vunpack.c.l.b16 %v541
    %v2793 = vunpack.c.h.b16 %v541
    %v2794 = vunpack.c.l.b16 %v542
    %v2795 = vunpack.c.h.b16 %v542
    %v2796 = vunpack.c.l.b16 %v543
    %v2797 = vunpack.c.h.b16 %v543
    %v2798 = vunpack.c.l.b16 %v544
    %v2799 = vunpack.c.h.b16 %v544
    %v2800 = vunpack.c.l.b16 %v545
    %v2801 = vunpack.c.h.b16 %v545
    %v2802 = vunpack.c.l.b16 %v546
    %v2803 = vunpack.c.h.b16 %v546
    %v2804 = vunpack.c.l.b16 %v547
    %v2805 = vunpack.c.h.b16 %v547
    %v2806 = vunpack.c.l.b16 %v548
    %v2807 = vunpack.c.h.b16 %v548
    %v2808 = vunpack.c.l.b16 %v549
    %v2809 = vunpack.c.h.b16 %v549
    %v2810 = vunpack.c.l.b16 %v550
    %v2811 = vunpack.c.h.b16 %v550
    %v2812 = vunpack.c.l.b16 %v551
    %v2813 = vunpack.c.h.b16 %v551
    %v2814 = vunpack.c.l.b16 %v552
    %v2815 = vunpack.c.h.b16 %v552
    %v2816 = vunpack.c.l.b16 %v553
    %v2817 = vunpack.c.h.b16 %v553
    %v2818 = vunpack.c.l.b16 %v554
    %v2819 = vunpack.c.h.b16 %v554
    %v2820 = vunpack.c.l.b16 %v555
    %v2821 = vunpack.c.h.b16 %v555
    %v2822 = vunpack.c.l.b16 %v556
    %v2823 = vunpack.c.h.b16 %v556
    %v2824 = vunpack.c.l.b16 %v557
    %v2825 = vunpack.c.h.b16 %v557
    %v2826 = vunpack.c.l.b16 %v558
    %v2827 = vunpack.c.h.b16 %v558
    %v2828 = vunpack.c.l.b16 %v559
    %v2829 = vunpack.c.h.b16 %v559
    %v2830 = vunpack.c.l.b16 %v560
    %v2831 = vunpack.c.h.b16 %v560
    %v2832 = vunpack.c.l.b16 %v561
    %v2833 = vunpack.c.h.b16 %v561
    %v2834 = vunpack.c.l.b16 %v562
    %v2835 = vunpack.c.h.b16 %v562
    %v2836 = vunpack.c.l.b16 %v563
    %v2837 = vunpack.c.h.b16 %v563
    %v2838 = vunpack.c.l.b16 %v564
    %v2839 = vunpack.c.h.b16 %v564
    %v2840 = vunpack.c.l.b16 %v565
    %v2841 = vunpack.c.h.b16 %v565
    %v2842 = vunpack.c.l.b16 %v566
    %v2843 = vunpack.c.h.b16 %v566
    %v2844 = vunpack.c.l.b16 %v567
    %v2845 = vunpack.c.h.b16 %v567
    %v2846 = vunpack.c.l.b16 %v568
    %v2847 = vunpack.c.h.b16 %v568
    %v2848 = vunpack.c.l.b16 %v569
    %v2849 = vunpack.c.h.b16 %v569
    %v2850 = vunpack.c.l.b16 %v570
    %v2851 = vunpack.c.h.b16 %v570
    %v2852 = vunpack.c.l.b16 %v571
    %v2853 = vunpack.c.h.b16 %v571
    %v2854 = vunpack.c.l.b16 %v572
    %v2855 = vunpack.c.h.b16 %v572
    %v2856 = vunpack.c.l.b16 %v573
    %v2857 = vunpack.c.h.b16 %v573
    %v2858 = vunpack.c.l.b16 %v574
    %v2859 = vunpack.c.h.b16 %v574
    %v2860 = vunpack.c.l.b16 %v575
    %v2861 = vunpack.c.h.b16 %v575
    %v2862 = vunpack.c.l.b16 %v576
    %v2863 = vunpack.c.h.b16 %v576
    %v2864 = vunpack.c.l.b16 %v577
    %v2865 = vunpack.c.h.b16 %v577
    %v2866 = vunpack.c.l.b16 %v578
    %v2867 = vunpack.c.h.b16 %v578
    %v2868 = vunpack.c.l.b16 %v579
    %v2869 = vunpack.c.h.b16 %v579
    %v2870 = vunpack.c.l.b16 %v580
    %v2871 = vunpack.c.h.b16 %v580
    %v2872 = vunpack.c.l.b16 %v581
    %v2873 = vunpack.c.h.b16 %v581
    %v2874 = vunpack.c.l.b16 %v582
    %v2875 = vunpack.c.h.b16 %v582
    %v2876 = vunpack.c.l.b16 %v583
    %v2877 = vunpack.c.h.b16 %v583
    %v2878 = vunpack.c.l.b16 %v584
    %v2879 = vunpack.c.h.b16 %v584
    %v2880 = vunpack.c.l.b16 %v585
    %v2881 = vunpack.c.h.b16 %v585
    %v2882 = vunpack.c.l.b16 %v586
    %v2883 = vunpack.c.h.b16 %v586
    %v2884 = vunpack.c.l.b16 %v587
    %v2885 = vunpack.c.h.b16 %v587
    %v2886 = vunpack.c.l.b16 %v588
    %v2887 = vunpack.c.h.b16 %v588
    %v2888 = vunpack.c.l.b16 %v589
    %v2889 = vunpack.c.h.b16 %v589
    %v2890 = vunpack.c.l.b16 %v590
    %v2891 = vunpack.c.h.b16 %v590
    %v2892 = vunpack.c.l.b16 %v591
    %v2893 = vunpack.c.h.b16 %v591
    %v2894 = vunpack.c.l.b16 %v592
    %v2895 = vunpack.c.h.b16 %v592
    %v2896 = vunpack.c.l.b16 %v593
    %v2897 = vunpack.c.h.b16 %v593
    %v2898 = vunpack.c.l.b16 %v594
    %v2899 = vunpack.c.h.b16 %v594
    %v2900 = vunpack.c.l.b16 %v595
    %v2901 = vunpack.c.h.b16 %v595
    %v2902 = vunpack.c.l.b16 %v596
    %v2903 = vunpack.c.h.b16 %v596
    %v2904 = vunpack.c.l.b16 %v597
    %v2905 = vunpack.c.h.b16 %v597
    %v2906 = vunpack.c.l.b16 %v598
    %v2907 = vunpack.c.h.b16 %v598
    %v2908 = vunpack.c.l.b16 %v599
    %v2909 = vunpack.c.h.b16 %v599
    %v2910 = vunpack.c.l.b16 %v600
    %v2911 = vunpack.c.h.b16 %v600
    %v2912 = vunpack.c.l.b16 %v601
    %v2913 = vunpack.c.h.b16 %v601
    %v2914 = vunpack.c.l.b16 %v602
    %v2915 = vunpack.c.h.b16 %v602
    %v2916 = vunpack.c.l.b16 %v603
    %v2917 = vunpack.c.h.b16 %v603
    %v2918 = vunpack.c.l.b16 %v604
    %v2919 = vunpack.c.h.b16 %v604
    %v2920 = vunpack.c.l.b16 %v605
    %v2921 = vunpack.c.h.b16 %v605
    %v2922 = vunpack.c.l.b16 %v606
    %v2923 = vunpack.c.h.b16 %v606
    %v2924 = vunpack.c.l.b16 %v607
    %v2925 = vunpack.c.h.b16 %v607
    %v2926 = vunpack.c.l.b16 %v608
    %v2927 = vunpack.c.h.b16 %v608
    %v2928 = vunpack.c.l.b16 %v609
    %v2929 = vunpack.c.h.b16 %v609
    %v2930 = vunpack.c.l.b16 %v610
    %v2931 = vunpack.c.h.b16 %v610
    %v2932 = vunpack.c.l.b16 %v611
    %v2933 = vunpack.c.h.b16 %v611
    %v2934 = vunpack.c.l.b16 %v612
    %v2935 = vunpack.c.h.b16 %v612
    %v2936 = vunpack.c.l.b16 %v613
    %v2937 = vunpack.c.h.b16 %v613
    %v2938 = vunpack.c.l.b16 %v614
    %v2939 = vunpack.c.h.b16 %v614
    %v2940 = vunpack.c.l.b16 %v615
    %v2941 = vunpack.c.h.b16 %v615
    %v2942 = vunpack.c.l.b16 %v616
    %v2943 = vunpack.c.h.b16 %v616
    %v2944 = vunpack.c.l.b16 %v617
    %v2945 = vunpack.c.h.b16 %v617
    %v2946 = vunpack.c.l.b16 %v618
    %v2947 = vunpack.c.h.b16 %v618
    %v2948 = vunpack.c.l.b16 %v619
    %v2949 = vunpack.c.h.b16 %v619
    %v2950 = vunpack.c.l.b16 %v620
    %v2951 = vunpack.c.h.b16 %v620
    %v2952 = vunpack.c.l.b16 %v621
    %v2953 = vunpack.c.h.b16 %v621
    %v2954 = vunpack.c.l.b16 %v622
    %v2955 = vunpack.c.h.b16 %v622
    %v2956 = vunpack.c.l.b16 %v623
    %v2957 = vunpack.c.h.b16 %v623
    %v2958 = vunpack.c.l.b16 %v624
    %v2959 = vunpack.c.h.b16 %v624
    %v2960 = vunpack.c.l.b16 %v625
    %v2961 = vunpack.c.h.b16 %v625
    %v2962 = vunpack.c.l.b16 %v626
    %v2963 = vunpack.c.h.b16 %v626
    %v2964 = vunpack.c.l.b16 %v627
    %v2965 = vunpack.c.h.b16 %v627
    %v2966 = vunpack.c.l.b16 %v628
    %v2967 = vunpack.c.h.b16 %v628
    %v2968 = vunpack.c.l.b16 %v629
    %v2969 = vunpack.c.h.b16 %v629
    %v2970 = vunpack.c.l.b16 %v630
    %v2971 = vunpack.c.h.b16 %v630
    %v2972 = vunpack.c.l.b16 %v631
    %v2973 = vunpack.c.h.b16 %v631
    %v2974 = vunpack.c.l.b16 %v632
    %v2975 = vunpack.c.h.b16 %v632
    %v2976 = vunpack.c.l.b16 %v633
    %v2977 = vunpack.c.h.b16 %v633
    %v2978 = vunpack.c.l.b16 %v634
    %v2979 = vunpack.c.h.b16 %v634
    %v2980 = vunpack.c.l.b16 %v635
    %v2981 = vunpack.c.h.b16 %v635
    %v2982 = vunpack.c.l.b16 %v636
    %v2983 = vunpack.c.h.b16 %v636
    %v2984 = vunpack.c.l.b16 %v637
    %v2985 = vunpack.c.h.b16 %v637
    %v2986 = vunpack.c.l.b16 %v638
    %v2987 = vunpack.c.h.b16 %v638
    %v2988 = vunpack.c.l.b16 %v639
    %v2989 = vunpack.c.h.b16 %v639
    %v2990 = vunpack.c.l.b16 %v640
    %v2991 = vunpack.c.h.b16 %v640
    %v2992 = vunpack.c.l.b16 %v641
    %v2993 = vunpack.c.h.b16 %v641
    %v2994 = vunpack.c.l.b16 %v642
    %v2995 = vunpack.c.h.b16 %v642
    %v2996 = vunpack.c.l.b16 %v643
    %v2997 = vunpack.c.h.b16 %v643
    %v2998 = vunpack.c.l.b16 %v644
    %v2999 = vunpack.c.h.b16 %v644
    %v3000 = vunpack.c.l.b16 %v645
    %v3001 = vunpack.c.h.b16 %v645
    %v3002 = vunpack.c.l.b16 %v646
    %v3003 = vunpack.c.h.b16 %v646
    %v3004 = vunpack.c.l.b16 %v647
    %v3005 = vunpack.c.h.b16 %v647
    %v3006 = vunpack.c.l.b16 %v648
    %v3007 = vunpack.c.h.b16 %v648
    %v3008 = vunpack.c.l.b16 %v649
    %v3009 = vunpack.c.h.b16 %v649
    %v3010 = vunpack.c.l.b16 %v650
    %v3011 = vunpack.c.h.b16 %v650
    %v3012 = vunpack.c.l.b16 %v651
    %v3013 = vunpack.c.h.b16 %v651
    %v3014 = vunpack.c.l.b16 %v652
    %v3015 = vunpack.c.h.b16 %v652
    %v3016 = vunpack.c.l.b16 %v653
    %v3017 = vunpack.c.h.b16 %v653
    %v3018 = vunpack.c.l.b16 %v654
    %v3019 = vunpack.c.h.b16 %v654
    %v3020 = vunpack.c.l.b16 %v655
    %v3021 = vunpack.c.h.b16 %v655
    %v3022 = vunpack.c.l.b16 %v656
    %v3023 = vunpack.c.h.b16 %v656
    %v3024 = vunpack.c.l.b16 %v657
    %v3025 = vunpack.c.h.b16 %v657
    %v3026 = vunpack.c.l.b16 %v658
    %v3027 = vunpack.c.h.b16 %v658
    %v3028 = vunpack.c.l.b16 %v659
    %v3029 = vunpack.c.h.b16 %v659
    %v3030 = vunpack.c.l.b16 %v660
    %v3031 = vunpack.c.h.b16 %v660
    %v3032 = vunpack.c.l.b16 %v661
    %v3033 = vunpack.c.h.b16 %v661
    %v3034 = vunpack.c.l.b16 %v662
    %v3035 = vunpack.c.h.b16 %v662
    %v3036 = vunpack.c.l.b16 %v663
    %v3037 = vunpack.c.h.b16 %v663
    %v3038 = vunpack.c.l.b16 %v664
    %v3039 = vunpack.c.h.b16 %v664
    %v3040 = vunpack.c.l.b16 %v665
    %v3041 = vunpack.c.h.b16 %v665
    %v3042 = vunpack.c.l.b16 %v666
    %v3043 = vunpack.c.h.b16 %v666
    %v3044 = vunpack.c.l.b16 %v667
    %v3045 = vunpack.c.h.b16 %v667
    %v3046 = vunpack.c.l.b16 %v668
    %v3047 = vunpack.c.h.b16 %v668
    %v3048 = vunpack.c.l.b16 %v669
    %v3049 = vunpack.c.h.b16 %v669
    %v3050 = vunpack.c.l.b16 %v670
    %v3051 = vunpack.c.h.b16 %v670
    %v3052 = vunpack.c.l.b16 %v671
    %v3053 = vunpack.c.h.b16 %v671
    %v3054 = vunpack.c.l.b16 %v672
    %v3055 = vunpack.c.h.b16 %v672
    %v3056 = vunpack.c.l.b16 %v673
    %v3057 = vunpack.c.h.b16 %v673
    %v3058 = vunpack.c.l.b16 %v674
    %v3059 = vunpack.c.h.b16 %v674
    %v3060 = vunpack.c.l.b16 %v675
    %v3061 = vunpack.c.h.b16 %v675
    %v3062 = vunpack.c.l.b16 %v676
    %v3063 = vunpack.c.h.b16 %v676
    %v3064 = vunpack.c.l.b16 %v677
    %v3065 = vunpack.c.h.b16 %v677
    %v3066 = vunpack.c.l.b16 %v678
    %v3067 = vunpack.c.h.b16 %v678
    %v3068 = vunpack.c.l.b16 %v679
    %v3069 = vunpack.c.h.b16 %v679
    %v3070 = vunpack.c.l.b16 %v680
    %v3071 = vunpack.c.h.b16 %v680
    %v3072 = vunpack.c.l.b16 %v681
    %v3073 = vunpack.c.h.b16 %v681
    %v3074 = vunpack.c.l.b16 %v682
    %v3075 = vunpack.c.h.b16 %v682
    %v3076 = vunpack.c.l.b16 %v683
    %v3077 = vunpack.c.h.b16 %v683
    %v3078 = vunpack.c.l.b16 %v684
    %v3079 = vunpack.c.h.b16 %v684
    %v3080 = vunpack.c.l.b16 %v685
    %v3081 = vunpack.c.h.b16 %v685
    %v3082 = vunpack.c.l.b16 %v686
    %v3083 = vunpack.c.h.b16 %v686
    %v3084 = vunpack.c.l.b16 %v687
    %v3085 = vunpack.c.h.b16 %v687
    %v3086 = vunpack.c.l.b16 %v688
    %v3087 = vunpack.c.h.b16 %v688
    %v3088 = vunpack.c.l.b16 %v689
    %v3089 = vunpack.c.h.b16 %v689
    %v3090 = vunpack.c.l.b16 %v690
    %v3091 = vunpack.c.h.b16 %v690
    %v3092 = vunpack.c.l.b16 %v691
    %v3093 = vunpack.c.h.b16 %v691
    %v3094 = vunpack.c.l.b16 %v692
    %v3095 = vunpack.c.h.b16 %v692
    %v3096 = vunpack.c.l.b16 %v693
    %v3097 = vunpack.c.h.b16 %v693
    %v3098 = vunpack.c.l.b16 %v694
    %v3099 = vunpack.c.h.b16 %v694
    %v3100 = vunpack.c.l.b16 %v695
    %v3101 = vunpack.c.h.b16 %v695
    %v3102 = vunpack.c.l.b16 %v696
    %v3103 = vunpack.c.h.b16 %v696
    %v3104 = vunpack.c.l.b16 %v697
    %v3105 = vunpack.c.h.b16 %v697
    %v3106 = vunpack.c.l.b16 %v698
    %v3107 = vunpack.c.h.b16 %v698
    %v3108 = vunpack.c.l.b16 %v699
    %v3109 = vunpack.c.h.b16 %v699
    %v3110 = vunpack.c.l.b16 %v700
    %v3111 = vunpack.c.h.b16 %v700
    %v3112 = vunpack.c.l.b16 %v701
    %v3113 = vunpack.c.h.b16 %v701
    %v3114 = vunpack.c.l.b16 %v702
    %v3115 = vunpack.c.h.b16 %v702
    %v3116 = vunpack.c.l.b16 %v703
    %v3117 = vunpack.c.h.b16 %v703
    %v3118 = vunpack.c.l.b16 %v704
    %v3119 = vunpack.c.h.b16 %v704
    %v3120 = vunpack.c.l.b16 %v705
    %v3121 = vunpack.c.h.b16 %v705
    %v3122 = vunpack.c.l.b16 %v706
    %v3123 = vunpack.c.h.b16 %v706
    %v3124 = vunpack.c.l.b16 %v707
    %v3125 = vunpack.c.h.b16 %v707
    %v3126 = vunpack.c.l.b16 %v708
    %v3127 = vunpack.c.h.b16 %v708
    %v3128 = vunpack.c.l.b16 %v709
    %v3129 = vunpack.c.h.b16 %v709
    %v3130 = vunpack.c.l.b16 %v710
    %v3131 = vunpack.c.h.b16 %v710
    %v3132 = vunpack.c.l.b16 %v711
    %v3133 = vunpack.c.h.b16 %v711
    %v3134 = vunpack.c.l.b16 %v712
    %v3135 = vunpack.c.h.b16 %v712
    %v3136 = vunpack.c.l.b16 %v713
    %v3137 = vunpack.c.h.b16 %v713
    %v3138 = vunpack.c.l.b16 %v714
    %v3139 = vunpack.c.h.b16 %v714
    %v3140 = vunpack.c.l.b16 %v715
    %v3141 = vunpack.c.h.b16 %v715
    %v3142 = vunpack.c.l.b16 %v716
    %v3143 = vunpack.c.h.b16 %v716
    %v3144 = vunpack.c.l.b16 %v717
    %v3145 = vunpack.c.h.b16 %v717
    %v3146 = vunpack.c.l.b16 %v718
    %v3147 = vunpack.c.h.b16 %v718
    %v3148 = vunpack.c.l.b16 %v719
    %v3149 = vunpack.c.h.b16 %v719
    %v3150 = vunpack.c.l.b16 %v720
    %v3151 = vunpack.c.h.b16 %v720
    %v3152 = vunpack.c.l.b16 %v721
    %v3153 = vunpack.c.h.b16 %v721
    %v3154 = vunpack.c.l.b16 %v722
    %v3155 = vunpack.c.h.b16 %v722
    %v3156 = vunpack.c.l.b16 %v723
    %v3157 = vunpack.c.h.b16 %v723
    %v3158 = vunpack.c.l.b16 %v724
    %v3159 = vunpack.c.h.b16 %v724
    %v3160 = vunpack.c.l.b16 %v725
    %v3161 = vunpack.c.h.b16 %v725
    %v3162 = vunpack.c.l.b16 %v726
    %v3163 = vunpack.c.h.b16 %v726
    %v3164 = vunpack.c.l.b16 %v727
    %v3165 = vunpack.c.h.b16 %v727
    %v3166 = vunpack.c.l.b16 %v728
    %v3167 = vunpack.c.h.b16 %v728
    %v3168 = vunpack.c.l.b16 %v729
    %v3169 = vunpack.c.h.b16 %v729
    %v3170 = vunpack.c.l.b16 %v730
    %v3171 = vunpack.c.h.b16 %v730
    %v3172 = vunpack.c.l.b16 %v731
    %v3173 = vunpack.c.h.b16 %v731
    %v3174 = vunpack.c.l.b16 %v732
    %v3175 = vunpack.c.h.b16 %v732
    %v3176 = vunpack.c.l.b16 %v733
    %v3177 = vunpack.c.h.b16 %v733
    %v3178 = vunpack.c.l.b16 %v734
    %v3179 = vunpack.c.h.b16 %v734
    %v3180 = vunpack.c.l.b16 %v735
    %v3181 = vunpack.c.h.b16 %v735
    %v3182 = vunpack.c.l.b16 %v736
    %v3183 = vunpack.c.h.b16 %v736
    %v3184 = vunpack.c.l.b16 %v737
    %v3185 = vunpack.c.h.b16 %v737
    %v3186 = vunpack.c.l.b16 %v738
    %v3187 = vunpack.c.h.b16 %v738
    %v3188 = vunpack.c.l.b16 %v739
    %v3189 = vunpack.c.h.b16 %v739
    %v3190 = vunpack.c.l.b16 %v740
    %v3191 = vunpack.c.h.b16 %v740
    %v3192 = vunpack.c.l.b16 %v741
    %v3193 = vunpack.c.h.b16 %v741
    %v3194 = vunpack.c.l.b16 %v742
    %v3195 = vunpack.c.h.b16 %v742
    %v3196 = vunpack.c.l.b16 %v743
    %v3197 = vunpack.c.h.b16 %v743
    %v3198 = vunpack.c.l.b16 %v744
    %v3199 = vunpack.c.h.b16 %v744
    %v3200 = vunpack.c.l.b16 %v745
    %v3201 = vunpack.c.h.b16 %v745
    %v3202 = vunpack.c.l.b16 %v746
    %v3203 = vunpack.c.h.b16 %v746
    %v3204 = vunpack.c.l.b16 %v747
    %v3205 = vunpack.c.h.b16 %v747
    %v3206 = vunpack.c.l.b16 %v748
    %v3207 = vunpack.c.h.b16 %v748
    %v3208 = vunpack.c.l.b16 %v749
    %v3209 = vunpack.c.h.b16 %v749
    %v3210 = vunpack.c.l.b16 %v750
    %v3211 = vunpack.c.h.b16 %v750
    %v3212 = vunpack.c.l.b16 %v751
    %v3213 = vunpack.c.h.b16 %v751
    %v3214 = vunpack.c.l.b16 %v752
    %v3215 = vunpack.c.h.b16 %v752
    %v3216 = vunpack.c.l.b16 %v753
    %v3217 = vunpack.c.h.b16 %v753
    %v3218 = vunpack.c.l.b16 %v754
    %v3219 = vunpack.c.h.b16 %v754
    %v3220 = vunpack.c.l.b16 %v755
    %v3221 = vunpack.c.h.b16 %v755
    %v3222 = vunpack.c.l.b16 %v756
    %v3223 = vunpack.c.h.b16 %v756
    %v3224 = vunpack.c.l.b16 %v757
    %v3225 = vunpack.c.h.b16 %v757
    %v3226 = vunpack.c.l.b16 %v758
    %v3227 = vunpack.c.h.b16 %v758
    %v3228 = vunpack.c.l.b16 %v759
    %v3229 = vunpack.c.h.b16 %v759
    %v3230 = vunpack.c.l.b16 %v760
    %v3231 = vunpack.c.h.b16 %v760
    %v3232 = vunpack.c.l.b16 %v761
    %v3233 = vunpack.c.h.b16 %v761
    %v3234 = vunpack.c.l.b16 %v762
    %v3235 = vunpack.c.h.b16 %v762
    %v3236 = vunpack.c.l.b16 %v763
    %v3237 = vunpack.c.h.b16 %v763
    %v3238 = vunpack.c.l.b16 %v764
    %v3239 = vunpack.c.h.b16 %v764
    %v3240 = vunpack.c.l.b16 %v765
    %v3241 = vunpack.c.h.b16 %v765
    %v3242 = vunpack.c.l.b16 %v766
    %v3243 = vunpack.c.h.b16 %v766
    %v3244 = vunpack.c.l.b16 %v767
    %v3245 = vunpack.c.h.b16 %v767
    %v3246 = vunpack.c.l.b16 %v768
    %v3247 = vunpack.c.h.b16 %v768
    %v3248 = vunpack.c.l.b16 %v769
    %v3249 = vunpack.c.h.b16 %v769
    %v3250 = vunpack.c.l.b16 %v770
    %v3251 = vunpack.c.h.b16 %v770
    %v3252 = vunpack.c.l.b16 %v771
    %v3253 = vunpack.c.h.b16 %v771
    %v3254 = vunpack.c.l.b16 %v772
    %v3255 = vunpack.c.h.b16 %v772
    %v3256 = vunpack.c.l.b16 %v773
    %v3257 = vunpack.c.h.b16 %v773
    %v3258 = vunpack.c.l.b16 %v774
    %v3259 = vunpack.c.h.b16 %v774
    %v3260 = vunpack.c.l.b16 %v775
    %v3261 = vunpack.c.h.b16 %v775
    %v3262 = vunpack.c.l.b16 %v776
    %v3263 = vunpack.c.h.b16 %v776
    %v3264 = vunpack.c.l.b16 %v777
    %v3265 = vunpack.c.h.b16 %v777
    %v3266 = vunpack.c.l.b16 %v778
    %v3267 = vunpack.c.h.b16 %v778
    %v3268 = vunpack.c.l.b16 %v779
    %v3269 = vunpack.c.h.b16 %v779
    %v3270 = vunpack.c.l.b16 %v780
    %v3271 = vunpack.c.h.b16 %v780
    %v3272 = vunpack.c.l.b16 %v781
    %v3273 = vunpack.c.h.b16 %v781
    %v3274 = vunpack.c.l.b16 %v782
    %v3275 = vunpack.c.h.b16 %v782
    %v3276 = vunpack.c.l.b16 %v783
    %v3277 = vunpack.c.h.b16 %v783
    %v3278 = vunpack.c.l.b16 %v784
    %v3279 = vunpack.c.h.b16 %v784
    %v3280 = vunpack.c.l.b16 %v785
    %v3281 = vunpack.c.h.b16 %v785
    %v3282 = vunpack.c.l.b16 %v786
    %v3283 = vunpack.c.h.b16 %v786
    %v3284 = vunpack.c.l.b16 %v787
    %v3285 = vunpack.c.h.b16 %v787
    %v3286 = vunpack.c.l.b16 %v788
    %v3287 = vunpack.c.h.b16 %v788
    %v3288 = vunpack.c.l.b16 %v789
    %v3289 = vunpack.c.h.b16 %v789
    %v3290 = vunpack.c.l.b16 %v790
    %v3291 = vunpack.c.h.b16 %v790
    %v3292 = vunpack.c.l.b16 %v791
    %v3293 = vunpack.c.h.b16 %v791
    %v3294 = vunpack.c.l.b16 %v792
    %v3295 = vunpack.c.h.b16 %v792
    %v3296 = vunpack.c.l.b16 %v793
    %v3297 = vunpack.c.h.b16 %v793
    %v3298 = vunpack.c.l.b16 %v794
    %v3299 = vunpack.c.h.b16 %v794
    %v3300 = vunpack.c.l.b16 %v795
    %v3301 = vunpack.c.h.b16 %v795
    %v3302 = vunpack.c.l.b16 %v796
    %v3303 = vunpack.c.h.b16 %v796
    %v3304 = vunpack.c.l.b16 %v797
    %v3305 = vunpack.c.h.b16 %v797
    %v3306 = vunpack.c.l.b16 %v798
    %v3307 = vunpack.c.h.b16 %v798
    %v3308 = vunpack.c.l.b16 %v799
    %v3309 = vunpack.c.h.b16 %v799
    %v3310 = vunpack.c.l.b16 %v800
    %v3311 = vunpack.c.h.b16 %v800
    %v3312 = vunpack.c.l.b16 %v801
    %v3313 = vunpack.c.h.b16 %v801
    %v3314 = vunpack.c.l.b16 %v802
    %v3315 = vunpack.c.h.b16 %v802
    %v3316 = vunpack.c.l.b16 %v803
    %v3317 = vunpack.c.h.b16 %v803
    %v3318 = vunpack.c.l.b16 %v804
    %v3319 = vunpack.c.h.b16 %v804
    %v3320 = vunpack.c.l.b16 %v805
    %v3321 = vunpack.c.h.b16 %v805
    %v3322 = vunpack.c.l.b16 %v806
    %v3323 = vunpack.c.h.b16 %v806
    %v3324 = vunpack.c.l.b16 %v807
    %v3325 = vunpack.c.h.b16 %v807
    %v3326 = vunpack.c.l.b16 %v808
    %v3327 = vunpack.c.h.b16 %v808
    %v3328 = vunpack.c.l.b16 %v809
    %v3329 = vunpack.c.h.b16 %v809
    %v3330 = vunpack.c.l.b16 %v810
    %v3331 = vunpack.c.h.b16 %v810
    %v3332 = vunpack.c.l.b16 %v811
    %v3333 = vunpack.c.h.b16 %v811
    %v3334 = vunpack.c.l.b16 %v812
    %v3335 = vunpack.c.h.b16 %v812
    %v3336 = vunpack.c.l.b16 %v813
    %v3337 = vunpack.c.h.b16 %v813
    %v3338 = vunpack.c.l.b16 %v814
    %v3339 = vunpack.c.h.b16 %v814
    %v3340 = vunpack.c.l.b16 %v815
    %v3341 = vunpack.c.h.b16 %v815
    %v3342 = vunpack.c.l.b16 %v816
    %v3343 = vunpack.c.h.b16 %v816
    %v3344 = vunpack.c.l.b16 %v817
    %v3345 = vunpack.c.h.b16 %v817
    %v3346 = vunpack.c.l.b16 %v818
    %v3347 = vunpack.c.h.b16 %v818
    %v3348 = vunpack.c.l.b16 %v819
    %v3349 = vunpack.c.h.b16 %v819
    %v3350 = vunpack.c.l.b16 %v820
    %v3351 = vunpack.c.h.b16 %v820
    %v3352 = vunpack.c.l.b16 %v821
    %v3353 = vunpack.c.h.b16 %v821
    %v3354 = vunpack.c.l.b16 %v822
    %v3355 = vunpack.c.h.b16 %v822
    %v3356 = vunpack.c.l.b16 %v823
    %v3357 = vunpack.c.h.b16 %v823
    %v3358 = vunpack.c.l.b16 %v824
    %v3359 = vunpack.c.h.b16 %v824
    %v3360 = vunpack.c.l.b16 %v825
    %v3361 = vunpack.c.h.b16 %v825
    %v3362 = vunpack.c.l.b16 %v826
    %v3363 = vunpack.c.h.b16 %v826
    %v3364 = vunpack.c.l.b16 %v827
    %v3365 = vunpack.c.h.b16 %v827
    %v3366 = vunpack.c.l.b16 %v828
    %v3367 = vunpack.c.h.b16 %v828
    %v3368 = vunpack.c.l.b16 %v829
    %v3369 = vunpack.c.h.b16 %v829
    %v3370 = vunpack.c.l.b16 %v830
    %v3371 = vunpack.c.h.b16 %v830
    %v3372 = vunpack.c.l.b16 %v831
    %v3373 = vunpack.c.h.b16 %v831
    %v3374 = vunpack.c.l.b16 %v832
    %v3375 = vunpack.c.h.b16 %v832
    %v3376 = vunpack.c.l.b16 %v833
    %v3377 = vunpack.c.h.b16 %v833
    %v3378 = vunpack.c.l.b16 %v834
    %v3379 = vunpack.c.h.b16 %v834
    %v3380 = vunpack.c.l.b16 %v835
    %v3381 = vunpack.c.h.b16 %v835
    %v3382 = vunpack.c.l.b16 %v836
    %v3383 = vunpack.c.h.b16 %v836
    %v3384 = vunpack.c.l.b16 %v837
    %v3385 = vunpack.c.h.b16 %v837
    %v3386 = vunpack.c.l.b16 %v838
    %v3387 = vunpack.c.h.b16 %v838
    %v3388 = vunpack.c.l.b16 %v839
    %v3389 = vunpack.c.h.b16 %v839
    %v3390 = vunpack.c.l.b16 %v840
    %v3391 = vunpack.c.h.b16 %v840
    %v3392 = vunpack.c.l.b16 %v841
    %v3393 = vunpack.c.h.b16 %v841
    %v3394 = vunpack.c.l.b16 %v842
    %v3395 = vunpack.c.h.b16 %v842
    %v3396 = vunpack.c.l.b16 %v843
    %v3397 = vunpack.c.h.b16 %v843
    %v3398 = vunpack.c.l.b16 %v844
    %v3399 = vunpack.c.h.b16 %v844
    %v3400 = vunpack.c.l.b16 %v845
    %v3401 = vunpack.c.h.b16 %v845
    %v3402 = vunpack.c.l.b16 %v846
    %v3403 = vunpack.c.h.b16 %v846
    %v3404 = vunpack.c.l.b16 %v847
    %v3405 = vunpack.c.h.b16 %v847
    %v3406 = vunpack.c.l.b16 %v848
    %v3407 = vunpack.c.h.b16 %v848
    %v3408 = vunpack.c.l.b16 %v849
    %v3409 = vunpack.c.h.b16 %v849
    %v3410 = vunpack.c.l.b16 %v850
    %v3411 = vunpack.c.h.b16 %v850
    %v3412 = vunpack.c.l.b16 %v851
    %v3413 = vunpack.c.h.b16 %v851
    %v3414 = vunpack.c.l.b16 %v852
    %v3415 = vunpack.c.h.b16 %v852
    %v3416 = vunpack.c.l.b16 %v853
    %v3417 = vunpack.c.h.b16 %v853
    %v3418 = vunpack.c.l.b16 %v854
    %v3419 = vunpack.c.h.b16 %v854
    %v3420 = vunpack.c.l.b16 %v855
    %v3421 = vunpack.c.h.b16 %v855
    %v3422 = vunpack.c.l.b16 %v856
    %v3423 = vunpack.c.h.b16 %v856
    %v3424 = vunpack.c.l.b16 %v857
    %v3425 = vunpack.c.h.b16 %v857
    %v3426 = vunpack.c.l.b16 %v858
    %v3427 = vunpack.c.h.b16 %v858
    %v3428 = vunpack.c.l.b16 %v859
    %v3429 = vunpack.c.h.b16 %v859
    %v3430 = vunpack.c.l.b16 %v860
    %v3431 = vunpack.c.h.b16 %v860
    %v3432 = vunpack.c.l.b16 %v861
    %v3433 = vunpack.c.h.b16 %v861
    %v3434 = vunpack.c.l.b16 %v862
    %v3435 = vunpack.c.h.b16 %v862
    %v3436 = vunpack.c.l.b16 %v863
    %v3437 = vunpack.c.h.b16 %v863
    %v3438 = vunpack.c.l.b16 %v864
    %v3439 = vunpack.c.h.b16 %v864
    %v3440 = vunpack.c.l.b16 %v865
    %v3441 = vunpack.c.h.b16 %v865
    %v3442 = vunpack.c.l.b16 %v866
    %v3443 = vunpack.c.h.b16 %v866
    %v3444 = vunpack.c.l.b16 %v867
    %v3445 = vunpack.c.h.b16 %v867
    %v3446 = vunpack.c.l.b16 %v868
    %v3447 = vunpack.c.h.b16 %v868
    %v3448 = vunpack.c.l.b16 %v869
    %v3449 = vunpack.c.h.b16 %v869
    %v3450 = vunpack.c.l.b16 %v870
    %v3451 = vunpack.c.h.b16 %v870
    %v3452 = vunpack.c.l.b16 %v871
    %v3453 = vunpack.c.h.b16 %v871
    %v3454 = vunpack.c.l.b16 %v872
    %v3455 = vunpack.c.h.b16 %v872
    %v3456 = vunpack.c.l.b16 %v873
    %v3457 = vunpack.c.h.b16 %v873
    %v3458 = vunpack.c.l.b16 %v874
    %v3459 = vunpack.c.h.b16 %v874
    %v3460 = vunpack.c.l.b16 %v875
    %v3461 = vunpack.c.h.b16 %v875
    %v3462 = vunpack.c.l.b16 %v876
    %v3463 = vunpack.c.h.b16 %v876
    %v3464 = vunpack.c.l.b16 %v877
    %v3465 = vunpack.c.h.b16 %v877
    %v3466 = vunpack.c.l.b16 %v878
    %v3467 = vunpack.c.h.b16 %v878
    %v3468 = vunpack.c.l.b16 %v879
    %v3469 = vunpack.c.h.b16 %v879
    %v3470 = vunpack.c.l.b16 %v880
    %v3471 = vunpack.c.h.b16 %v880
    %v3472 = vunpack.c.l.b16 %v881
    %v3473 = vunpack.c.h.b16 %v881
    %v3474 = vunpack.c.l.b16 %v882
    %v3475 = vunpack.c.h.b16 %v882
    %v3476 = vunpack.c.l.b16 %v883
    %v3477 = vunpack.c.h.b16 %v883
    %v3478 = vunpack.c.l.b16 %v884
    %v3479 = vunpack.c.h.b16 %v884
    %v3480 = vunpack.c.l.b16 %v885
    %v3481 = vunpack.c.h.b16 %v885
    %v3482 = vunpack.c.l.b16 %v886
    %v3483 = vunpack.c.h.b16 %v886
    %v3484 = vunpack.c.l.b16 %v887
    %v3485 = vunpack.c.h.b16 %v887
    %v3486 = vunpack.c.l.b16 %v888
    %v3487 = vunpack.c.h.b16 %v888
    %v3488 = vunpack.c.l.b16 %v889
    %v3489 = vunpack.c.h.b16 %v889
    %v3490 = vunpack.c.l.b16 %v890
    %v3491 = vunpack.c.h.b16 %v890
    %v3492 = vunpack.c.l.b16 %v891
    %v3493 = vunpack.c.h.b16 %v891
    %v3494 = vunpack.c.l.b16 %v892
    %v3495 = vunpack.c.h.b16 %v892
    %v3496 = vunpack.c.l.b16 %v893
    %v3497 = vunpack.c.h.b16 %v893
    %v3498 = vunpack.c.l.b16 %v894
    %v3499 = vunpack.c.h.b16 %v894
    %v3500 = vunpack.c.l.b16 %v895
    %v3501 = vunpack.c.h.b16 %v895
    %v3502 = vunpack.c.l.b16 %v896
    %v3503 = vunpack.c.h.b16 %v896
    %v3504 = vunpack.c.l.b16 %v897
    %v3505 = vunpack.c.h.b16 %v897
    %v3506 = vunpack.c.l.b16 %v898
    %v3507 = vunpack.c.h.b16 %v898
    %v3508 = vunpack.c.l.b16 %v899
    %v3509 = vunpack.c.h.b16 %v899
    %v3510 = vunpack.c.l.b16 %v900
    %v3511 = vunpack.c.h.b16 %v900
    %v3512 = vunpack.c.l.b16 %v901
    %v3513 = vunpack.c.h.b16 %v901
    %v3514 = vunpack.c.l.b16 %v902
    %v3515 = vunpack.c.h.b16 %v902
    %v3516 = vunpack.c.l.b16 %v903
    %v3517 = vunpack.c.h.b16 %v903
    %v3518 = vunpack.c.l.b16 %v904
    %v3519 = vunpack.c.h.b16 %v904
    %v3520 = vunpack.c.l.b16 %v905
    %v3521 = vunpack.c.h.b16 %v905
    %v3522 = vunpack.c.l.b16 %v906
    %v3523 = vunpack.c.h.b16 %v906
    %v3524 = vunpack.c.l.b16 %v907
    %v3525 = vunpack.c.h.b16 %v907
    %v3526 = vunpack.c.l.b16 %v908
    %v3527 = vunpack.c.h.b16 %v908
    %v3528 = vunpack.c.l.b16 %v909
    %v3529 = vunpack.c.h.b16 %v909
    %v3530 = vunpack.c.l.b16 %v910
    %v3531 = vunpack.c.h.b16 %v910
    %v3532 = vunpack.c.l.b16 %v911
    %v3533 = vunpack.c.h.b16 %v911
    %v3534 = vunpack.c.l.b16 %v912
    %v3535 = vunpack.c.h.b16 %v912
    %v3536 = vunpack.c.l.b16 %v913
    %v3537 = vunpack.c.h.b16 %v913
    %v3538 = vunpack.c.l.b16 %v914
    %v3539 = vunpack.c.h.b16 %v914
    %v3540 = vunpack.c.l.b16 %v915
    %v3541 = vunpack.c.h.b16 %v915
    %v3542 = vunpack.c.l.b16 %v916
    %v3543 = vunpack.c.h.b16 %v916
    %v3544 = vunpack.c.l.b16 %v917
    %v3545 = vunpack.c.h.b16 %v917
    %v3546 = vunpack.c.l.b16 %v918
    %v3547 = vunpack.c.h.b16 %v918
    %v3548 = vunpack.c.l.b16 %v919
    %v3549 = vunpack.c.h.b16 %v919
    %v3550 = vunpack.c.l.b16 %v920
    %v3551 = vunpack.c.h.b16 %v920
    %v3552 = vunpack.c.l.b16 %v921
    %v3553 = vunpack.c.h.b16 %v921
    %v3554 = vunpack.c.l.b16 %v922
    %v3555 = vunpack.c.h.b16 %v922
    %v3556 = vunpack.c.l.b16 %v923
    %v3557 = vunpack.c.h.b16 %v923
    %v3558 = vunpack.c.l.b16 %v924
    %v3559 = vunpack.c.h.b16 %v924
    %v3560 = vunpack.c.l.b16 %v925
    %v3561 = vunpack.c.h.b16 %v925
    %v3562 = vunpack.c.l.b16 %v926
    %v3563 = vunpack.c.h.b16 %v926
    %v3564 = vunpack.c.l.b16 %v927
    %v3565 = vunpack.c.h.b16 %v927
    %v3566 = vunpack.c.l.b16 %v928
    %v3567 = vunpack.c.h.b16 %v928
    %v3568 = vunpack.c.l.b16 %v929
    %v3569 = vunpack.c.h.b16 %v929
    %v3570 = vunpack.c.l.b16 %v930
    %v3571 = vunpack.c.h.b16 %v930
    %v3572 = vunpack.c.l.b16 %v931
    %v3573 = vunpack.c.h.b16 %v931
    %v3574 = vunpack.c.l.b16 %v932
    %v3575 = vunpack.c.h.b16 %v932
    %v3576 = vunpack.c.l.b16 %v933
    %v3577 = vunpack.c.h.b16 %v933
    %v3578 = vunpack.c.l.b16 %v934
    %v3579 = vunpack.c.h.b16 %v934
    %v3580 = vunpack.c.l.b16 %v935
    %v3581 = vunpack.c.h.b16 %v935
    %v3582 = vunpack.c.l.b16 %v936
    %v3583 = vunpack.c.h.b16 %v936
    %v3584 = vunpack.c.l.b16 %v937
    %v3585 = vunpack.c.h.b16 %v937
    %v3586 = vunpack.c.l.b16 %v938
    %v3587 = vunpack.c.h.b16 %v938
    %v3588 = vunpack.c.l.b16 %v939
    %v3589 = vunpack.c.h.b16 %v939
    %v3590 = vunpack.c.l.b16 %v940
    %v3591 = vunpack.c.h.b16 %v940
    %v3592 = vunpack.c.l.b16 %v941
    %v3593 = vunpack.c.h.b16 %v941
    %v3594 = vunpack.c.l.b16 %v942
    %v3595 = vunpack.c.h.b16 %v942
    %v3596 = vunpack.c.l.b16 %v943
    %v3597 = vunpack.c.h.b16 %v943
    %v3598 = vunpack.c.l.b16 %v944
    %v3599 = vunpack.c.h.b16 %v944
    %v3600 = vunpack.c.l.b16 %v945
    %v3601 = vunpack.c.h.b16 %v945
    %v3602 = vunpack.c.l.b16 %v946
    %v3603 = vunpack.c.h.b16 %v946
    %v3604 = vunpack.c.l.b16 %v947
    %v3605 = vunpack.c.h.b16 %v947
    %v3606 = vunpack.c.l.b16 %v948
    %v3607 = vunpack.c.h.b16 %v948
    %v3608 = vunpack.c.l.b16 %v949
    %v3609 = vunpack.c.h.b16 %v949
    %v3610 = vunpack.c.l.b16 %v950
    %v3611 = vunpack.c.h.b16 %v950
    %v3612 = vunpack.c.l.b16 %v951
    %v3613 = vunpack.c.h.b16 %v951
    %v3614 = vunpack.c.l.b16 %v952
    %v3615 = vunpack.c.h.b16 %v952
    %v3616 = vunpack.c.l.b16 %v953
    %v3617 = vunpack.c.h.b16 %v953
    %v3618 = vunpack.c.l.b16 %v954
    %v3619 = vunpack.c.h.b16 %v954
    %v3620 = vunpack.c.l.b16 %v955
    %v3621 = vunpack.c.h.b16 %v955
    %v3622 = vunpack.c.l.b16 %v956
    %v3623 = vunpack.c.h.b16 %v956
    %v3624 = vunpack.c.l.b16 %v957
    %v3625 = vunpack.c.h.b16 %v957
    %v3626 = vunpack.c.l.b16 %v958
    %v3627 = vunpack.c.h.b16 %v958
    %v3628 = vunpack.c.l.b16 %v959
    %v3629 = vunpack.c.h.b16 %v959
    %v3630 = vunpack.c.l.b16 %v960
    %v3631 = vunpack.c.h.b16 %v960
    %v3632 = vunpack.c.l.b16 %v961
    %v3633 = vunpack.c.h.b16 %v961
    %v3634 = vunpack.c.l.b16 %v962
    %v3635 = vunpack.c.h.b16 %v962
    %v3636 = vunpack.c.l.b16 %v963
    %v3637 = vunpack.c.h.b16 %v963
    %v3638 = vunpack.c.l.b16 %v964
    %v3639 = vunpack.c.h.b16 %v964
    %v3640 = vunpack.c.l.b16 %v965
    %v3641 = vunpack.c.h.b16 %v965
    %v3642 = vunpack.c.l.b16 %v966
    %v3643 = vunpack.c.h.b16 %v966
    %v3644 = vunpack.c.l.b16 %v967
    %v3645 = vunpack.c.h.b16 %v967
    %v3646 = vunpack.c.l.b16 %v968
    %v3647 = vunpack.c.h.b16 %v968
    %v3648 = vunpack.c.l.b16 %v969
    %v3649 = vunpack.c.h.b16 %v969
    %v3650 = vunpack.c.l.b16 %v970
    %v3651 = vunpack.c.h.b16 %v970
    %v3652 = vunpack.c.l.b16 %v971
    %v3653 = vunpack.c.h.b16 %v971
    %v3654 = vunpack.c.l.b16 %v972
    %v3655 = vunpack.c.h.b16 %v972
    %v3656 = vunpack.c.l.b16 %v973
    %v3657 = vunpack.c.h.b16 %v973
    %v3658 = vunpack.c.l.b16 %v974
    %v3659 = vunpack.c.h.b16 %v974
    %v3660 = vunpack.c.l.b16 %v975
    %v3661 = vunpack.c.h.b16 %v975
    %v3662 = vunpack.c.l.b16 %v976
    %v3663 = vunpack.c.h.b16 %v976
    %v3664 = vunpack.c.l.b16 %v977
    %v3665 = vunpack.c.h.b16 %v977
    %v3666 = vunpack.c.l.b16 %v978
    %v3667 = vunpack.c.h.b16 %v978
    %v3668 = vunpack.c.l.b16 %v979
    %v3669 = vunpack.c.h.b16 %v979
    %v3670 = vunpack.c.l.b16 %v980
    %v3671 = vunpack.c.h.b16 %v980
    %v3672 = vunpack.c.l.b16 %v981
    %v3673 = vunpack.c.h.b16 %v981
    %v3674 = vunpack.c.l.b16 %v982
    %v3675 = vunpack.c.h.b16 %v982
    %v3676 = vunpack.c.l.b16 %v983
    %v3677 = vunpack.c.h.b16 %v983
    %v3678 = vunpack.c.l.b16 %v984
    %v3679 = vunpack.c.h.b16 %v984
    %v3680 = vunpack.c.l.b16 %v985
    %v3681 = vunpack.c.h.b16 %v985
    %v3682 = vunpack.c.l.b16 %v986
    %v3683 = vunpack.c.h.b16 %v986
    %v3684 = vunpack.c.l.b16 %v987
    %v3685 = vunpack.c.h.b16 %v987
    %v3686 = vunpack.c.l.b16 %v988
    %v3687 = vunpack.c.h.b16 %v988
    %v3688 = vunpack.c.l.b16 %v989
    %v3689 = vunpack.c.h.b16 %v989
    %v3690 = vunpack.c.l.b16 %v990
    %v3691 = vunpack.c.h.b16 %v990
    %v3692 = vunpack.c.l.b16 %v991
    %v3693 = vunpack.c.h.b16 %v991
    %v3694 = vunpack.c.l.b16 %v992
    %v3695 = vunpack.c.h.b16 %v992
    %v3696 = vunpack.c.l.b16 %v993
    %v3697 = vunpack.c.h.b16 %v993
    %v3698 = vunpack.c.l.b16 %v994
    %v3699 = vunpack.c.h.b16 %v994
    %v3700 = vunpack.c.l.b16 %v995
    %v3701 = vunpack.c.h.b16 %v995
    %v3702 = vunpack.c.l.b16 %v996
    %v3703 = vunpack.c.h.b16 %v996
    %v3704 = vunpack.c.l.b16 %v997
    %v3705 = vunpack.c.h.b16 %v997
    %v3706 = vunpack.c.l.b16 %v998
    %v3707 = vunpack.c.h.b16 %v998
    %v3708 = vunpack.c.l.b16 %v999
    %v3709 = vunpack.c.h.b16 %v999
    %v3710 = vunpack.c.l.b16 %v1000
    %v3711 = vunpack.c.h.b16 %v1000
    %v3712 = vunpack.c.l.b16 %v1001
    %v3713 = vunpack.c.h.b16 %v1001
    %v3714 = vunpack.c.l.b16 %v1002
    %v3715 = vunpack.c.h.b16 %v1002
    %v3716 = vunpack.c.l.b16 %v1003
    %v3717 = vunpack.c.h.b16 %v1003
    %v3718 = vunpack.c.l.b16 %v1004
    %v3719 = vunpack.c.h.b16 %v1004
    %v3720 = vunpack.c.l.b16 %v1005
    %v3721 = vunpack.c.h.b16 %v1005
    %v3722 = vunpack.c.l.b16 %v1006
    %v3723 = vunpack.c.h.b16 %v1006
    %v3724 = vunpack.c.l.b16 %v1007
    %v3725 = vunpack.c.h.b16 %v1007
    %v3726 = vunpack.c.l.b16 %v1008
    %v3727 = vunpack.c.h.b16 %v1008
    %v3728 = vunpack.c.l.b16 %v1009
    %v3729 = vunpack.c.h.b16 %v1009
    %v3730 = vunpack.c.l.b16 %v1010
    %v3731 = vunpack.c.h.b16 %v1010
    %v3732 = vunpack.c.l.b16 %v1011
    %v3733 = vunpack.c.h.b16 %v1011
    %v3734 = vunpack.c.l.b16 %v1012
    %v3735 = vunpack.c.h.b16 %v1012
    %v3736 = vunpack.c.l.b16 %v1013
    %v3737 = vunpack.c.h.b16 %v1013
    %v3738 = vunpack.c.l.b16 %v1014
    %v3739 = vunpack.c.h.b16 %v1014
    %v3740 = vunpack.c.l.b16 %v1015
    %v3741 = vunpack.c.h.b16 %v1015
    %v3742 = vunpack.c.l.b16 %v1016
    %v3743 = vunpack.c.h.b16 %v1016
    %v3744 = vunpack.c.l.b16 %v1017
    %v3745 = vunpack.c.h.b16 %v1017
    %v3746 = vunpack.c.l.b16 %v1018
    %v3747 = vunpack.c.h.b16 %v1018
    %v3748 = vunpack.c.l.b16 %v1019
    %v3749 = vunpack.c.h.b16 %v1019
    %v3750 = vunpack.c.l.b16 %v1020
    %v3751 = vunpack.c.h.b16 %v1020
    %v3752 = vunpack.c.l.b16 %v1021
    %v3753 = vunpack.c.h.b16 %v1021
    %v3754 = vunpack.c.l.b16 %v1022
    %v3755 = vunpack.c.h.b16 %v1022
    %v3756 = vunpack.c.l.b16 %v1023
    %v3757 = vunpack.c.h.b16 %v1023
    %v3758 = vunpack.c.l.b16 %v1024
    %v3759 = vunpack.c.h.b16 %v1024
    %v3760 = vunpack.c.l.b16 %v1025
    %v3761 = vunpack.c.h.b16 %v1025
    %v3762 = vunpack.c.l.b16 %v1026
    %v3763 = vunpack.c.h.b16 %v1026
    %v3764 = vunpack.c.l.b16 %v1027
    %v3765 = vunpack.c.h.b16 %v1027
    %v3766 = vunpack.c.l.b16 %v1028
    %v3767 = vunpack.c.h.b16 %v1028
    %v3768 = vunpack.c.l.b16 %v1029
    %v3769 = vunpack.c.h.b16 %v1029
    %v3770 = vunpack.c.l.b16 %v1030
    %v3771 = vunpack.c.h.b16 %v1030
    %v3772 = vunpack.c.l.b16 %v1031
    %v3773 = vunpack.c.h.b16 %v1031
    %v3774 = vunpack.c.l.b16 %v1032
    %v3775 = vunpack.c.h.b16 %v1032
    %v3776 = vunpack.c.l.b16 %v1033
    %v3777 = vunpack.c.h.b16 %v1033
    %v3778 = vunpack.c.l.b16 %v1034
    %v3779 = vunpack.c.h.b16 %v1034
    %v3780 = vunpack.c.l.b16 %v1035
    %v3781 = vunpack.c.h.b16 %v1035
    %v3782 = vunpack.c.l.b16 %v1036
    %v3783 = vunpack.c.h.b16 %v1036
    %v3784 = vunpack.c.l.b16 %v1037
    %v3785 = vunpack.c.h.b16 %v1037
    %v3786 = vunpack.c.l.b16 %v1038
    %v3787 = vunpack.c.h.b16 %v1038
    %v3788 = vunpack.c.l.b16 %v1039
    %v3789 = vunpack.c.h.b16 %v1039
    %v3790 = vunpack.c.l.b16 %v1040
    %v3791 = vunpack.c.h.b16 %v1040
    %v3792 = vunpack.c.l.b16 %v1041
    %v3793 = vunpack.c.h.b16 %v1041
    %v3794 = vunpack.c.l.b16 %v1042
    %v3795 = vunpack.c.h.b16 %v1042
    %v3796 = vunpack.c.l.b16 %v1043
    %v3797 = vunpack.c.h.b16 %v1043
    %v3798 = vunpack.c.l.b16 %v1044
    %v3799 = vunpack.c.h.b16 %v1044
    %v3800 = vunpack.c.l.b16 %v1045
    %v3801 = vunpack.c.h.b16 %v1045
    %v3802 = vunpack.c.l.b16 %v1046
    %v3803 = vunpack.c.h.b16 %v1046
    %v3804 = vunpack.c.l.b16 %v1047
    %v3805 = vunpack.c.h.b16 %v1047
    %v3806 = vunpack.c.l.b16 %v1048
    %v3807 = vunpack.c.h.b16 %v1048
    %v3808 = vunpack.c.l.b16 %v1049
    %v3809 = vunpack.c.h.b16 %v1049
    %v3810 = vunpack.c.l.b16 %v1050
    %v3811 = vunpack.c.h.b16 %v1050
    %v3812 = vunpack.c.l.b16 %v1051
    %v3813 = vunpack.c.h.b16 %v1051
    %v3814 = vunpack.c.l.b16 %v1052
    %v3815 = vunpack.c.h.b16 %v1052
    %v3816 = vunpack.c.l.b16 %v1053
    %v3817 = vunpack.c.h.b16 %v1053
    %v3818 = vunpack.c.l.b16 %v1054
    %v3819 = vunpack.c.h.b16 %v1054
    %v3820 = vunpack.c.l.b16 %v1055
    %v3821 = vunpack.c.h.b16 %v1055
    %v3822 = vunpack.c.l.b16 %v1056
    %v3823 = vunpack.c.h.b16 %v1056
    %v3824 = vunpack.c.l.b16 %v1057
    %v3825 = vunpack.c.h.b16 %v1057
    %v3826 = vunpack.c.l.b16 %v1058
    %v3827 = vunpack.c.h.b16 %v1058
    %v3828 = vunpack.c.l.b16 %v1059
    %v3829 = vunpack.c.h.b16 %v1059
    %v3830 = vunpack.c.l.b16 %v1060
    %v3831 = vunpack.c.h.b16 %v1060
    %v3832 = vunpack.c.l.b16 %v1061
    %v3833 = vunpack.c.h.b16 %v1061
    %v3834 = vunpack.c.l.b16 %v1062
    %v3835 = vunpack.c.h.b16 %v1062
    %v3836 = vunpack.c.l.b16 %v1063
    %v3837 = vunpack.c.h.b16 %v1063
    %v3838 = vunpack.c.l.b16 %v1064
    %v3839 = vunpack.c.h.b16 %v1064
    %v3840 = vunpack.c.l.b16 %v1065
    %v3841 = vunpack.c.h.b16 %v1065
    %v3842 = vunpack.c.l.b16 %v1066
    %v3843 = vunpack.c.h.b16 %v1066
    %v3844 = vunpack.c.l.b16 %v1067
    %v3845 = vunpack.c.h.b16 %v1067
    %v3846 = vunpack.c.l.b16 %v1068
    %v3847 = vunpack.c.h.b16 %v1068
    %v3848 = vunpack.c.l.b16 %v1069
    %v3849 = vunpack.c.h.b16 %v1069
    %v3850 = vunpack.c.l.b16 %v1070
    %v3851 = vunpack.c.h.b16 %v1070
    %v3852 = vunpack.c.l.b16 %v1071
    %v3853 = vunpack.c.h.b16 %v1071
    %v3854 = vunpack.c.l.b16 %v1072
    %v3855 = vunpack.c.h.b16 %v1072
    %v3856 = vunpack.c.l.b16 %v1073
    %v3857 = vunpack.c.h.b16 %v1073
    %v3858 = vunpack.c.l.b16 %v1074
    %v3859 = vunpack.c.h.b16 %v1074
    %v3860 = vunpack.c.l.b16 %v1075
    %v3861 = vunpack.c.h.b16 %v1075
    %v3862 = vunpack.c.l.b16 %v1076
    %v3863 = vunpack.c.h.b16 %v1076
    %v3864 = vunpack.c.l.b16 %v1077
    %v3865 = vunpack.c.h.b16 %v1077
    %v3866 = vunpack.c.l.b16 %v1078
    %v3867 = vunpack.c.h.b16 %v1078
    %v3868 = vunpack.c.l.b16 %v1079
    %v3869 = vunpack.c.h.b16 %v1079
    %v3870 = vunpack.c.l.b16 %v1080
    %v3871 = vunpack.c.h.b16 %v1080
    %v3872 = vunpack.c.l.b16 %v1081
    %v3873 = vunpack.c.h.b16 %v1081
    %v3874 = vunpack.c.l.b16 %v1082
    %v3875 = vunpack.c.h.b16 %v1082
    %v3876 = vunpack.c.l.b16 %v1083
    %v3877 = vunpack.c.h.b16 %v1083
    %v3878 = vunpack.c.l.b16 %v1084
    %v3879 = vunpack.c.h.b16 %v1084
    %v3880 = vunpack.c.l.b16 %v1085
    %v3881 = vunpack.c.h.b16 %v1085
    %v3882 = vunpack.c.l.b16 %v1086
    %v3883 = vunpack.c.h.b16 %v1086
    %v3884 = vunpack.c.l.b16 %v1087
    %v3885 = vunpack.c.h.b16 %v1087
    %v3886 = vunpack.c.l.b16 %v1088
    %v3887 = vunpack.c.h.b16 %v1088
    %v3888 = vunpack.c.l.b16 %v1089
    %v3889 = vunpack.c.h.b16 %v1089
    %v3890 = vunpack.c.l.b16 %v1090
    %v3891 = vunpack.c.h.b16 %v1090
    %v3892 = vunpack.c.l.b16 %v1091
    %v3893 = vunpack.c.h.b16 %v1091
    %v3894 = vunpack.c.l.b16 %v1092
    %v3895 = vunpack.c.h.b16 %v1092
    %v3896 = vunpack.c.l.b16 %v1093
    %v3897 = vunpack.c.h.b16 %v1093
    %v3898 = vunpack.c.l.b16 %v1094
    %v3899 = vunpack.c.h.b16 %v1094
    %v3900 = vunpack.c.l.b16 %v1095
    %v3901 = vunpack.c.h.b16 %v1095
    %v3902 = vunpack.c.l.b16 %v1096
    %v3903 = vunpack.c.h.b16 %v1096
    %v3904 = vunpack.c.l.b16 %v1097
    %v3905 = vunpack.c.h.b16 %v1097
    %v3906 = vunpack.c.l.b16 %v1098
    %v3907 = vunpack.c.h.b16 %v1098
    %v3908 = vunpack.c.l.b16 %v1099
    %v3909 = vunpack.c.h.b16 %v1099
    %v3910 = vunpack.c.l.b16 %v1100
    %v3911 = vunpack.c.h.b16 %v1100
    %v3912 = vunpack.c.l.b16 %v1101
    %v3913 = vunpack.c.h.b16 %v1101
    %v3914 = vunpack.c.l.b16 %v1102
    %v3915 = vunpack.c.h.b16 %v1102
    %v3916 = vunpack.c.l.b16 %v1103
    %v3917 = vunpack.c.h.b16 %v1103
    %v3918 = vunpack.c.l.b16 %v1104
    %v3919 = vunpack.c.h.b16 %v1104
    %v3920 = vunpack.c.l.b16 %v1105
    %v3921 = vunpack.c.h.b16 %v1105
    %v3922 = vunpack.c.l.b16 %v1106
    %v3923 = vunpack.c.h.b16 %v1106
    %v3924 = vunpack.c.l.b16 %v1107
    %v3925 = vunpack.c.h.b16 %v1107
    %v3926 = vunpack.c.l.b16 %v1108
    %v3927 = vunpack.c.h.b16 %v1108
    %v3928 = vunpack.c.l.b16 %v1109
    %v3929 = vunpack.c.h.b16 %v1109
    %v3930 = vpack.c.b16 %v2140, %v2138
    %v3931 = vpack.c.b16 %v2141, %v2139
    %v3932 = vpack.c.b16 %v2144, %v2142
    %v3933 = vpack.c.b16 %v2145, %v2143
    %v3934 = vpack.c.b16 %v2148, %v2146
    %v3935 = vpack.c.b16 %v2149, %v2147
    %v3936 = vpack.c.b16 %v2152, %v2150
    %v3937 = vpack.c.b16 %v2153, %v2151
    %v3938 = vpack.c.b16 %v2156, %v2154
    %v3939 = vpack.c.b16 %v2157, %v2155
    %v3940 = vpack.c.b16 %v2160, %v2158
    %v3941 = vpack.c.b16 %v2161, %v2159
    %v3942 = vpack.c.b16 %v2164, %v2162
    %v3943 = vpack.c.b16 %v2165, %v2163
    %v3944 = vpack.c.b16 %v2168, %v2166
    %v3945 = vpack.c.b16 %v2169, %v2167
    %v3946 = vpack.c.b16 %v2172, %v2170
    %v3947 = vpack.c.b16 %v2173, %v2171
    %v3948 = vpack.c.b16 %v2176, %v2174
    %v3949 = vpack.c.b16 %v2177, %v2175
    %v3950 = vpack.c.b16 %v2180, %v2178
    %v3951 = vpack.c.b16 %v2181, %v2179
    %v3952 = vpack.c.b16 %v2184, %v2182
    %v3953 = vpack.c.b16 %v2185, %v2183
    %v3954 = vpack.c.b16 %v2188, %v2186
    %v3955 = vpack.c.b16 %v2189, %v2187
    %v3956 = vpack.c.b16 %v2192, %v2190
    %v3957 = vpack.c.b16 %v2193, %v2191
    %v3958 = vpack.c.b16 %v2196, %v2194
    %v3959 = vpack.c.b16 %v2197, %v2195
    %v3960 = vpack.c.b16 %v2200, %v2198
    %v3961 = vpack.c.b16 %v2201, %v2199
    %v3962 = vpack.c.b16 %v2204, %v2202
    %v3963 = vpack.c.b16 %v2205, %v2203
    %v3964 = vpack.c.b16 %v2208, %v2206
    %v3965 = vpack.c.b16 %v2209, %v2207
    %v3966 = vpack.c.b16 %v2212, %v2210
    %v3967 = vpack.c.b16 %v2213, %v2211
    %v3968 = vpack.c.b16 %v2216, %v2214
    %v3969 = vpack.c.b16 %v2217, %v2215
    %v3970 = vpack.c.b16 %v2220, %v2218
    %v3971 = vpack.c.b16 %v2221, %v2219
    %v3972 = vpack.c.b16 %v2224, %v2222
    %v3973 = vpack.c.b16 %v2225, %v2223
    %v3974 = vpack.c.b16 %v2228, %v2226
    %v3975 = vpack.c.b16 %v2229, %v2227
    %v3976 = vpack.c.b16 %v2232, %v2230
    %v3977 = vpack.c.b16 %v2233, %v2231
    %v3978 = vpack.c.b16 %v2236, %v2234
    %v3979 = vpack.c.b16 %v2237, %v2235
    %v3980 = vpack.c.b16 %v2240, %v2238
    %v3981 = vpack.c.b16 %v2241, %v2239
    %v3982 = vpack.c.b16 %v2244, %v2242
    %v3983 = vpack.c.b16 %v2245, %v2243
    %v3984 = vpack.c.b16 %v2248, %v2246
    %v3985 = vpack.c.b16 %v2249, %v2247
    %v3986 = vpack.c.b16 %v2252, %v2250
    %v3987 = vpack.c.b16 %v2253, %v2251
    %v3988 = vpack.c.b16 %v2256, %v2254
    %v3989 = vpack.c.b16 %v2257, %v2255
    %v3990 = vpack.c.b16 %v2260, %v2258
    %v3991 = vpack.c.b16 %v2261, %v2259
    %v3992 = vpack.c.b16 %v2264, %v2262
    %v3993 = vpack.c.b16 %v2265, %v2263
    %v3994 = vpack.c.b16 %v2268, %v2266
    %v3995 = vpack.c.b16 %v2269, %v2267
    %v3996 = vpack.c.b16 %v2272, %v2270
    %v3997 = vpack.c.b16 %v2273, %v2271
    %v3998 = vpack.c.b16 %v2276, %v2274
    %v3999 = vpack.c.b16 %v2277, %v2275
    %v4000 = vpack.c.b16 %v2280, %v2278
    %v4001 = vpack.c.b16 %v2281, %v2279
    %v4002 = vpack.c.b16 %v2284, %v2282
    %v4003 = vpack.c.b16 %v2285, %v2283
    %v4004 = vpack.c.b16 %v2288, %v2286
    %v4005 = vpack.c.b16 %v2289, %v2287
    %v4006 = vpack.c.b16 %v2292, %v2290
    %v4007 = vpack.c.b16 %v2293, %v2291
    %v4008 = vpack.c.b16 %v2296, %v2294
    %v4009 = vpack.c.b16 %v2297, %v2295
    %v4010 = vpack.c.b16 %v2300, %v2298
    %v4011 = vpack.c.b16 %v2301, %v2299
    %v4012 = vpack.c.b16 %v2304, %v2302
    %v4013 = vpack.c.b16 %v2305, %v2303
    %v4014 = vpack.c.b16 %v2308, %v2306
    %v4015 = vpack.c.b16 %v2309, %v2307
    %v4016 = vpack.c.b16 %v2312, %v2310
    %v4017 = vpack.c.b16 %v2313, %v2311
    %v4018 = vpack.c.b16 %v2316, %v2314
    %v4019 = vpack.c.b16 %v2317, %v2315
    %v4020 = vpack.c.b16 %v2320, %v2318
    %v4021 = vpack.c.b16 %v2321, %v2319
    %v4022 = vpack.c.b16 %v2324, %v2322
    %v4023 = vpack.c.b16 %v2325, %v2323
    %v4024 = vpack.c.b16 %v2328, %v2326
    %v4025 = vpack.c.b16 %v2329, %v2327
    %v4026 = vpack.c.b16 %v2332, %v2330
    %v4027 = vpack.c.b16 %v2333, %v2331
    %v4028 = vpack.c.b16 %v2336, %v2334
    %v4029 = vpack.c.b16 %v2337, %v2335
    %v4030 = vpack.c.b16 %v2340, %v2338
    %v4031 = vpack.c.b16 %v2341, %v2339
    %v4032 = vpack.c.b16 %v2344, %v2342
    %v4033 = vpack.c.b16 %v2345, %v2343
    %v4034 = vpack.c.b16 %v2348, %v2346
    %v4035 = vpack.c.b16 %v2349, %v2347
    %v4036 = vpack.c.b16 %v2352, %v2350
    %v4037 = vpack.c.b16 %v2353, %v2351
    %v4038 = vpack.c.b16 %v2356, %v2354
    %v4039 = vpack.c.b16 %v2357, %v2355
    %v4040 = vpack.c.b16 %v2360, %v2358
    %v4041 = vpack.c.b16 %v2361, %v2359
    %v4042 = vpack.c.b16 %v2364, %v2362
    %v4043 = vpack.c.b16 %v2365, %v2363
    %v4044 = vpack.c.b16 %v2368, %v2366
    %v4045 = vpack.c.b16 %v2369, %v2367
    %v4046 = vpack.c.b16 %v2372, %v2370
    %v4047 = vpack.c.b16 %v2373, %v2371
    %v4048 = vpack.c.b16 %v2376, %v2374
    %v4049 = vpack.c.b16 %v2377, %v2375
    %v4050 = vpack.c.b16 %v2380, %v2378
    %v4051 = vpack.c.b16 %v2381, %v2379
    %v4052 = vpack.c.b16 %v2384, %v2382
    %v4053 = vpack.c.b16 %v2385, %v2383
    %v4054 = vpack.c.b16 %v2388, %v2386
    %v4055 = vpack.c.b16 %v2389, %v2387
    %v4056 = vpack.c.b16 %v2392, %v2390
    %v4057 = vpack.c.b16 %v2393, %v2391
    %v4058 = vpack.c.b16 %v2396, %v2394
    %v4059 = vpack.c.b16 %v2397, %v2395
    %v4060 = vpack.c.b16 %v2400, %v2398
    %v4061 = vpack.c.b16 %v2401, %v2399
    %v4062 = vpack.c.b16 %v2404, %v2402
    %v4063 = vpack.c.b16 %v2405, %v2403
    %v4064 = vpack.c.b16 %v2408, %v2406
    %v4065 = vpack.c.b16 %v2409, %v2407
    %v4066 = vpack.c.b16 %v2412, %v2410
    %v4067 = vpack.c.b16 %v2413, %v2411
    %v4068 = vpack.c.b16 %v2416, %v2414
    %v4069 = vpack.c.b16 %v2417, %v2415
    %v4070 = vpack.c.b16 %v2420, %v2418
    %v4071 = vpack.c.b16 %v2421, %v2419
    %v4072 = vpack.c.b16 %v2424, %v2422
    %v4073 = vpack.c.b16 %v2425, %v2423
    %v4074 = vpack.c.b16 %v2428, %v2426
    %v4075 = vpack.c.b16 %v2429, %v2427
    %v4076 = vpack.c.b16 %v2432, %v2430
    %v4077 = vpack.c.b16 %v2433, %v2431
    %v4078 = vpack.c.b16 %v2436, %v2434
    %v4079 = vpack.c.b16 %v2437, %v2435
    %v4080 = vpack.c.b16 %v2440, %v2438
    %v4081 = vpack.c.b16 %v2441, %v2439
    %v4082 = vpack.c.b16 %v2444, %v2442
    %v4083 = vpack.c.b16 %v2445, %v2443
    %v4084 = vpack.c.b16 %v2448, %v2446
    %v4085 = vpack.c.b16 %v2449, %v2447
    %v4086 = vpack.c.b16 %v2452, %v2450
    %v4087 = vpack.c.b16 %v2453, %v2451
    %v4088 = vpack.c.b16 %v2456, %v2454
    %v4089 = vpack.c.b16 %v2457, %v2455
    %v4090 = vpack.c.b16 %v2460, %v2458
    %v4091 = vpack.c.b16 %v2461, %v2459
    %v4092 = vpack.c.b16 %v2464, %v2462
    %v4093 = vpack.c.b16 %v2465, %v2463
    %v4094 = vpack.c.b16 %v2468, %v2466
    %v4095 = vpack.c.b16 %v2469, %v2467
    %v4096 = vpack.c.b16 %v2472, %v2470
    %v4097 = vpack.c.b16 %v2473, %v2471
    %v4098 = vpack.c.b16 %v2476, %v2474
    %v4099 = vpack.c.b16 %v2477, %v2475
    %v4100 = vpack.c.b16 %v2480, %v2478
    %v4101 = vpack.c.b16 %v2481, %v2479
    %v4102 = vpack.c.b16 %v2484, %v2482
    %v4103 = vpack.c.b16 %v2485, %v2483
    %v4104 = vpack.c.b16 %v2488, %v2486
    %v4105 = vpack.c.b16 %v2489, %v2487
    %v4106 = vpack.c.b16 %v2492, %v2490
    %v4107 = vpack.c.b16 %v2493, %v2491
    %v4108 = vpack.c.b16 %v2496, %v2494
    %v4109 = vpack.c.b16 %v2497, %v2495
    %v4110 = vpack.c.b16 %v2500, %v2498
    %v4111 = vpack.c.b16 %v2501, %v2499
    %v4112 = vpack.c.b16 %v2504, %v2502
    %v4113 = vpack.c.b16 %v2505, %v2503
    %v4114 = vpack.c.b16 %v2508, %v2506
    %v4115 = vpack.c.b16 %v2509, %v2507
    %v4116 = vpack.c.b16 %v2512, %v2510
    %v4117 = vpack.c.b16 %v2513, %v2511
    %v4118 = vpack.c.b16 %v2516, %v2514
    %v4119 = vpack.c.b16 %v2517, %v2515
    %v4120 = vpack.c.b16 %v2520, %v2518
    %v4121 = vpack.c.b16 %v2521, %v2519
    %v4122 = vpack.c.b16 %v2524, %v2522
    %v4123 = vpack.c.b16 %v2525, %v2523
    %v4124 = vpack.c.b16 %v2528, %v2526
    %v4125 = vpack.c.b16 %v2529, %v2527
    %v4126 = vpack.c.b16 %v2532, %v2530
    %v4127 = vpack.c.b16 %v2533, %v2531
    %v4128 = vpack.c.b16 %v2536, %v2534
    %v4129 = vpack.c.b16 %v2537, %v2535
    %v4130 = vpack.c.b16 %v2540, %v2538
    %v4131 = vpack.c.b16 %v2541, %v2539
    %v4132 = vpack.c.b16 %v2544, %v2542
    %v4133 = vpack.c.b16 %v2545, %v2543
    %v4134 = vpack.c.b16 %v2548, %v2546
    %v4135 = vpack.c.b16 %v2549, %v2547
    %v4136 = vpack.c.b16 %v2552, %v2550
    %v4137 = vpack.c.b16 %v2553, %v2551
    %v4138 = vpack.c.b16 %v2556, %v2554
    %v4139 = vpack.c.b16 %v2557, %v2555
    %v4140 = vpack.c.b16 %v2560, %v2558
    %v4141 = vpack.c.b16 %v2561, %v2559
    %v4142 = vpack.c.b16 %v2564, %v2562
    %v4143 = vpack.c.b16 %v2565, %v2563
    %v4144 = vpack.c.b16 %v2568, %v2566
    %v4145 = vpack.c.b16 %v2569, %v2567
    %v4146 = vpack.c.b16 %v2572, %v2570
    %v4147 = vpack.c.b16 %v2573, %v2571
    %v4148 = vpack.c.b16 %v2576, %v2574
    %v4149 = vpack.c.b16 %v2577, %v2575
    %v4150 = vpack.c.b16 %v2580, %v2578
    %v4151 = vpack.c.b16 %v2581, %v2579
    %v4152 = vpack.c.b16 %v2584, %v2582
    %v4153 = vpack.c.b16 %v2585, %v2583
    %v4154 = vpack.c.b16 %v2588, %v2586
    %v4155 = vpack.c.b16 %v2589, %v2587
    %v4156 = vpack.c.b16 %v2592, %v2590
    %v4157 = vpack.c.b16 %v2593, %v2591
    %v4158 = vpack.c.b16 %v2596, %v2594
    %v4159 = vpack.c.b16 %v2597, %v2595
    %v4160 = vpack.c.b16 %v2600, %v2598
    %v4161 = vpack.c.b16 %v2601, %v2599
    %v4162 = vpack.c.b16 %v2604, %v2602
    %v4163 = vpack.c.b16 %v2605, %v2603
    %v4164 = vpack.c.b16 %v2608, %v2606
    %v4165 = vpack.c.b16 %v2609, %v2607
    %v4166 = vpack.c.b16 %v2612, %v2610
    %v4167 = vpack.c.b16 %v2613, %v2611
    %v4168 = vpack.c.b16 %v2616, %v2614
    %v4169 = vpack.c.b16 %v2617, %v2615
    %v4170 = vpack.c.b16 %v2620, %v2618
    %v4171 = vpack.c.b16 %v2621, %v2619
    %v4172 = vpack.c.b16 %v2624, %v2622
    %v4173 = vpack.c.b16 %v2625, %v2623
    %v4174 = vpack.c.b16 %v2628, %v2626
    %v4175 = vpack.c.b16 %v2629, %v2627
    %v4176 = vpack.c.b16 %v2632, %v2630
    %v4177 = vpack.c.b16 %v2633, %v2631
    %v4178 = vpack.c.b16 %v2636, %v2634
    %v4179 = vpack.c.b16 %v2637, %v2635
    %v4180 = vpack.c.b16 %v2640, %v2638
    %v4181 = vpack.c.b16 %v2641, %v2639
    %v4182 = vpack.c.b16 %v2644, %v2642
    %v4183 = vpack.c.b16 %v2645, %v2643
    %v4184 = vpack.c.b16 %v2648, %v2646
    %v4185 = vpack.c.b16 %v2649, %v2647
    %v4186 = vpack.c.b16 %v2652, %v2650
    %v4187 = vpack.c.b16 %v2653, %v2651
    %v4188 = vpack.c.b16 %v2656, %v2654
    %v4189 = vpack.c.b16 %v2657, %v2655
    %v4190 = vpack.c.b16 %v2660, %v2658
    %v4191 = vpack.c.b16 %v2661, %v2659
    %v4192 = vpack.c.b16 %v2664, %v2662
    %v4193 = vpack.c.b16 %v2665, %v2663
    %v4194 = vpack.c.b16 %v2668, %v2666
    %v4195 = vpack.c.b16 %v2669, %v2667
    %v4196 = vpack.c.b16 %v2672, %v2670
    %v4197 = vpack.c.b16 %v2673, %v2671
    %v4198 = vpack.c.b16 %v2676, %v2674
    %v4199 = vpack.c.b16 %v2677, %v2675
    %v4200 = vpack.c.b16 %v2680, %v2678
    %v4201 = vpack.c.b16 %v2681, %v2679
    %v4202 = vpack.c.b16 %v2684, %v2682
    %v4203 = vpack.c.b16 %v2685, %v2683
    %v4204 = vpack.c.b16 %v2688, %v2686
    %v4205 = vpack.c.b16 %v2689, %v2687
    %v4206 = vpack.c.b16 %v2692, %v2690
    %v4207 = vpack.c.b16 %v2693, %v2691
    %v4208 = vpack.c.b16 %v2696, %v2694
    %v4209 = vpack.c.b16 %v2697, %v2695
    %v4210 = vpack.c.b16 %v2700, %v2698
    %v4211 = vpack.c.b16 %v2701, %v2699
    %v4212 = vpack.c.b16 %v2704, %v2702
    %v4213 = vpack.c.b16 %v2705, %v2703
    %v4214 = vpack.c.b16 %v2708, %v2706
    %v4215 = vpack.c.b16 %v2709, %v2707
    %v4216 = vpack.c.b16 %v2712, %v2710
    %v4217 = vpack.c.b16 %v2713, %v2711
    %v4218 = vpack.c.b16 %v2716, %v2714
    %v4219 = vpack.c.b16 %v2717, %v2715
    %v4220 = vpack.c.b16 %v2720, %v2718
    %v4221 = vpack.c.b16 %v2721, %v2719
    %v4222 = vpack.c.b16 %v2724, %v2722
    %v4223 = vpack.c.b16 %v2725, %v2723
    %v4224 = vpack.c.b16 %v2728, %v2726
    %v4225 = vpack.c.b16 %v2729, %v2727
    %v4226 = vpack.c.b16 %v2732, %v2730
    %v4227 = vpack.c.b16 %v2733, %v2731
    %v4228 = vpack.c.b16 %v2736, %v2734
    %v4229 = vpack.c.b16 %v2737, %v2735
    %v4230 = vpack.c.b16 %v2740, %v2738
    %v4231 = vpack.c.b16 %v2741, %v2739
    %v4232 = vpack.c.b16 %v2744, %v2742
    %v4233 = vpack.c.b16 %v2745, %v2743
    %v4234 = vpack.c.b16 %v2748, %v2746
    %v4235 = vpack.c.b16 %v2749, %v2747
    %v4236 = vpack.c.b16 %v2752, %v2750
    %v4237 = vpack.c.b16 %v2753, %v2751
    %v4238 = vpack.c.b16 %v2756, %v2754
    %v4239 = vpack.c.b16 %v2757, %v2755
    %v4240 = vpack.c.b16 %v2760, %v2758
    %v4241 = vpack.c.b16 %v2761, %v2759
    %v4242 = vpack.c.b16 %v2764, %v2762
    %v4243 = vpack.c.b16 %v2765, %v2763
    %v4244 = vpack.c.b16 %v2768, %v2766
    %v4245 = vpack.c.b16 %v2769, %v2767
    %v4246 = vpack.c.b16 %v2772, %v2770
    %v4247 = vpack.c.b16 %v2773, %v2771
    %v4248 = vpack.c.b16 %v2776, %v2774
    %v4249 = vpack.c.b16 %v2777, %v2775
    %v4250 = vpack.c.b16 %v2780, %v2778
    %v4251 = vpack.c.b16 %v2781, %v2779
    %v4252 = vpack.c.b16 %v2784, %v2782
    %v4253 = vpack.c.b16 %v2785, %v2783
    %v4254 = vpack.c.b16 %v2788, %v2786
    %v4255 = vpack.c.b16 %v2789, %v2787
    %v4256 = vpack.c.b16 %v2792, %v2790
    %v4257 = vpack.c.b16 %v2793, %v2791
    %v4258 = vpack.c.b16 %v2796, %v2794
    %v4259 = vpack.c.b16 %v2797, %v2795
    %v4260 = vpack.c.b16 %v2800, %v2798
    %v4261 = vpack.c.b16 %v2801, %v2799
    %v4262 = vpack.c.b16 %v2804, %v2802
    %v4263 = vpack.c.b16 %v2805, %v2803
    %v4264 = vpack.c.b16 %v2808, %v2806
    %v4265 = vpack.c.b16 %v2809, %v2807
    %v4266 = vpack.c.b16 %v2812, %v2810
    %v4267 = vpack.c.b16 %v2813, %v2811
    %v4268 = vpack.c.b16 %v2816, %v2814
    %v4269 = vpack.c.b16 %v2817, %v2815
    %v4270 = vpack.c.b16 %v2820, %v2818
    %v4271 = vpack.c.b16 %v2821, %v2819
    %v4272 = vpack.c.b16 %v2824, %v2822
    %v4273 = vpack.c.b16 %v2825, %v2823
    %v4274 = vpack.c.b16 %v2828, %v2826
    %v4275 = vpack.c.b16 %v2829, %v2827
    %v4276 = vpack.c.b16 %v2832, %v2830
    %v4277 = vpack.c.b16 %v2833, %v2831
    %v4278 = vpack.c.b16 %v2836, %v2834
    %v4279 = vpack.c.b16 %v2837, %v2835
    %v4280 = vpack.c.b16 %v2840, %v2838
    %v4281 = vpack.c.b16 %v2841, %v2839
    %v4282 = vpack.c.b16 %v2844, %v2842
    %v4283 = vpack.c.b16 %v2845, %v2843
    %v4284 = vpack.c.b16 %v2848, %v2846
    %v4285 = vpack.c.b16 %v2849, %v2847
    %v4286 = vpack.c.b16 %v2852, %v2850
    %v4287 = vpack.c.b16 %v2853, %v2851
    %v4288 = vpack.c.b16 %v2856, %v2854
    %v4289 = vpack.c.b16 %v2857, %v2855
    %v4290 = vpack.c.b16 %v2860, %v2858
    %v4291 = vpack.c.b16 %v2861, %v2859
    %v4292 = vpack.c.b16 %v2864, %v2862
    %v4293 = vpack.c.b16 %v2865, %v2863
    %v4294 = vpack.c.b16 %v2868, %v2866
    %v4295 = vpack.c.b16 %v2869, %v2867
    %v4296 = vpack.c.b16 %v2872, %v2870
    %v4297 = vpack.c.b16 %v2873, %v2871
    %v4298 = vpack.c.b16 %v2876, %v2874
    %v4299 = vpack.c.b16 %v2877, %v2875
    %v4300 = vpack.c.b16 %v2880, %v2878
    %v4301 = vpack.c.b16 %v2881, %v2879
    %v4302 = vpack.c.b16 %v2884, %v2882
    %v4303 = vpack.c.b16 %v2885, %v2883
    %v4304 = vpack.c.b16 %v2888, %v2886
    %v4305 = vpack.c.b16 %v2889, %v2887
    %v4306 = vpack.c.b16 %v2892, %v2890
    %v4307 = vpack.c.b16 %v2893, %v2891
    %v4308 = vpack.c.b16 %v2896, %v2894
    %v4309 = vpack.c.b16 %v2897, %v2895
    %v4310 = vpack.c.b16 %v2900, %v2898
    %v4311 = vpack.c.b16 %v2901, %v2899
    %v4312 = vpack.c.b16 %v2904, %v2902
    %v4313 = vpack.c.b16 %v2905, %v2903
    %v4314 = vpack.c.b16 %v2908, %v2906
    %v4315 = vpack.c.b16 %v2909, %v2907
    %v4316 = vpack.c.b16 %v2912, %v2910
    %v4317 = vpack.c.b16 %v2913, %v2911
    %v4318 = vpack.c.b16 %v2916, %v2914
    %v4319 = vpack.c.b16 %v2917, %v2915
    %v4320 = vpack.c.b16 %v2920, %v2918
    %v4321 = vpack.c.b16 %v2921, %v2919
    %v4322 = vpack.c.b16 %v2924, %v2922
    %v4323 = vpack.c.b16 %v2925, %v2923
    %v4324 = vpack.c.b16 %v2928, %v2926
    %v4325 = vpack.c.b16 %v2929, %v2927
    %v4326 = vpack.c.b16 %v2932, %v2930
    %v4327 = vpack.c.b16 %v2933, %v2931
    %v4328 = vpack.c.b16 %v2936, %v2934
    %v4329 = vpack.c.b16 %v2937, %v2935
    %v4330 = vpack.c.b16 %v2940, %v2938
    %v4331 = vpack.c.b16 %v2941, %v2939
    %v4332 = vpack.c.b16 %v2944, %v2942
    %v4333 = vpack.c.b16 %v2945, %v2943
    %v4334 = vpack.c.b16 %v2948, %v2946
    %v4335 = vpack.c.b16 %v2949, %v2947
    %v4336 = vpack.c.b16 %v2952, %v2950
    %v4337 = vpack.c.b16 %v2953, %v2951
    %v4338 = vpack.c.b16 %v2956, %v2954
    %v4339 = vpack.c.b16 %v2957, %v2955
    %v4340 = vpack.c.b16 %v2960, %v2958
    %v4341 = vpack.c.b16 %v2961, %v2959
    %v4342 = vpack.c.b16 %v2964, %v2962
    %v4343 = vpack.c.b16 %v2965, %v2963
    %v4344 = vpack.c.b16 %v2968, %v2966
    %v4345 = vpack.c.b16 %v2969, %v2967
    %v4346 = vpack.c.b16 %v2972, %v2970
    %v4347 = vpack.c.b16 %v2973, %v2971
    %v4348 = vpack.c.b16 %v2976, %v2974
    %v4349 = vpack.c.b16 %v2977, %v2975
    %v4350 = vpack.c.b16 %v2980, %v2978
    %v4351 = vpack.c.b16 %v2981, %v2979
    %v4352 = vpack.c.b16 %v2984, %v2982
    %v4353 = vpack.c.b16 %v2985, %v2983
    %v4354 = vpack.c.b16 %v2988, %v2986
    %v4355 = vpack.c.b16 %v2989, %v2987
    %v4356 = vpack.c.b16 %v2992, %v2990
    %v4357 = vpack.c.b16 %v2993, %v2991
    %v4358 = vpack.c.b16 %v2996, %v2994
    %v4359 = vpack.c.b16 %v2997, %v2995
    %v4360 = vpack.c.b16 %v3000, %v2998
    %v4361 = vpack.c.b16 %v3001, %v2999
    %v4362 = vpack.c.b16 %v3004, %v3002
    %v4363 = vpack.c.b16 %v3005, %v3003
    %v4364 = vpack.c.b16 %v3008, %v3006
    %v4365 = vpack.c.b16 %v3009, %v3007
    %v4366 = vpack.c.b16 %v3012, %v3010
    %v4367 = vpack.c.b16 %v3013, %v3011
    %v4368 = vpack.c.b16 %v3016, %v3014
    %v4369 = vpack.c.b16 %v3017, %v3015
    %v4370 = vpack.c.b16 %v3020, %v3018
    %v4371 = vpack.c.b16 %v3021, %v3019
    %v4372 = vpack.c.b16 %v3024, %v3022
    %v4373 = vpack.c.b16 %v3025, %v3023
    %v4374 = vpack.c.b16 %v3028, %v3026
    %v4375 = vpack.c.b16 %v3029, %v3027
    %v4376 = vpack.c.b16 %v3032, %v3030
    %v4377 = vpack.c.b16 %v3033, %v3031
    %v4378 = vpack.c.b16 %v3036, %v3034
    %v4379 = vpack.c.b16 %v3037, %v3035
    %v4380 = vpack.c.b16 %v3040, %v3038
    %v4381 = vpack.c.b16 %v3041, %v3039
    %v4382 = vpack.c.b16 %v3044, %v3042
    %v4383 = vpack.c.b16 %v3045, %v3043
    %v4384 = vpack.c.b16 %v3048, %v3046
    %v4385 = vpack.c.b16 %v3049, %v3047
    %v4386 = vpack.c.b16 %v3052, %v3050
    %v4387 = vpack.c.b16 %v3053, %v3051
    %v4388 = vpack.c.b16 %v3056, %v3054
    %v4389 = vpack.c.b16 %v3057, %v3055
    %v4390 = vpack.c.b16 %v3060, %v3058
    %v4391 = vpack.c.b16 %v3061, %v3059
    %v4392 = vpack.c.b16 %v3064, %v3062
    %v4393 = vpack.c.b16 %v3065, %v3063
    %v4394 = vpack.c.b16 %v3068, %v3066
    %v4395 = vpack.c.b16 %v3069, %v3067
    %v4396 = vpack.c.b16 %v3072, %v3070
    %v4397 = vpack.c.b16 %v3073, %v3071
    %v4398 = vpack.c.b16 %v3076, %v3074
    %v4399 = vpack.c.b16 %v3077, %v3075
    %v4400 = vpack.c.b16 %v3080, %v3078
    %v4401 = vpack.c.b16 %v3081, %v3079
    %v4402 = vpack.c.b16 %v3084, %v3082
    %v4403 = vpack.c.b16 %v3085, %v3083
    %v4404 = vpack.c.b16 %v3088, %v3086
    %v4405 = vpack.c.b16 %v3089, %v3087
    %v4406 = vpack.c.b16 %v3092, %v3090
    %v4407 = vpack.c.b16 %v3093, %v3091
    %v4408 = vpack.c.b16 %v3096, %v3094
    %v4409 = vpack.c.b16 %v3097, %v3095
    %v4410 = vpack.c.b16 %v3100, %v3098
    %v4411 = vpack.c.b16 %v3101, %v3099
    %v4412 = vpack.c.b16 %v3104, %v3102
    %v4413 = vpack.c.b16 %v3105, %v3103
    %v4414 = vpack.c.b16 %v3108, %v3106
    %v4415 = vpack.c.b16 %v3109, %v3107
    %v4416 = vpack.c.b16 %v3112, %v3110
    %v4417 = vpack.c.b16 %v3113, %v3111
    %v4418 = vpack.c.b16 %v3116, %v3114
    %v4419 = vpack.c.b16 %v3117, %v3115
    %v4420 = vpack.c.b16 %v3120, %v3118
    %v4421 = vpack.c.b16 %v3121, %v3119
    %v4422 = vpack.c.b16 %v3124, %v3122
    %v4423 = vpack.c.b16 %v3125, %v3123
    %v4424 = vpack.c.b16 %v3128, %v3126
    %v4425 = vpack.c.b16 %v3129, %v3127
    %v4426 = vpack.c.b16 %v3132, %v3130
    %v4427 = vpack.c.b16 %v3133, %v3131
    %v4428 = vpack.c.b16 %v3136, %v3134
    %v4429 = vpack.c.b16 %v3137, %v3135
    %v4430 = vpack.c.b16 %v3140, %v3138
    %v4431 = vpack.c.b16 %v3141, %v3139
    %v4432 = vpack.c.b16 %v3144, %v3142
    %v4433 = vpack.c.b16 %v3145, %v3143
    %v4434 = vpack.c.b16 %v3148, %v3146
    %v4435 = vpack.c.b16 %v3149, %v3147
    %v4436 = vpack.c.b16 %v3152, %v3150
    %v4437 = vpack.c.b16 %v3153, %v3151
    %v4438 = vpack.c.b16 %v3156, %v3154
    %v4439 = vpack.c.b16 %v3157, %v3155
    %v4440 = vpack.c.b16 %v3160, %v3158
    %v4441 = vpack.c.b16 %v3161, %v3159
    %v4442 = vpack.c.b16 %v3164, %v3162
    %v4443 = vpack.c.b16 %v3165, %v3163
    %v4444 = vpack.c.b16 %v3168, %v3166
    %v4445 = vpack.c.b16 %v3169, %v3167
    %v4446 = vpack.c.b16 %v3172, %v3170
    %v4447 = vpack.c.b16 %v3173, %v3171
    %v4448 = vpack.c.b16 %v3176, %v3174
    %v4449 = vpack.c.b16 %v3177, %v3175
    %v4450 = vpack.c.b16 %v3180, %v3178
    %v4451 = vpack.c.b16 %v3181, %v3179
    %v4452 = vpack.c.b16 %v3184, %v3182
    %v4453 = vpack.c.b16 %v3185, %v3183
    %v4454 = vpack.c.b16 %v3188, %v3186
    %v4455 = vpack.c.b16 %v3189, %v3187
    %v4456 = vpack.c.b16 %v3192, %v3190
    %v4457 = vpack.c.b16 %v3193, %v3191
    %v4458 = vpack.c.b16 %v3196, %v3194
    %v4459 = vpack.c.b16 %v3197, %v3195
    %v4460 = vpack.c.b16 %v3200, %v3198
    %v4461 = vpack.c.b16 %v3201, %v3199
    %v4462 = vpack.c.b16 %v3204, %v3202
    %v4463 = vpack.c.b16 %v3205, %v3203
    %v4464 = vpack.c.b16 %v3208, %v3206
    %v4465 = vpack.c.b16 %v3209, %v3207
    %v4466 = vpack.c.b16 %v3212, %v3210
    %v4467 = vpack.c.b16 %v3213, %v3211
    %v4468 = vpack.c.b16 %v3216, %v3214
    %v4469 = vpack.c.b16 %v3217, %v3215
    %v4470 = vpack.c.b16 %v3220, %v3218
    %v4471 = vpack.c.b16 %v3221, %v3219
    %v4472 = vpack.c.b16 %v3224, %v3222
    %v4473 = vpack.c.b16 %v3225, %v3223
    %v4474 = vpack.c.b16 %v3228, %v3226
    %v4475 = vpack.c.b16 %v3229, %v3227
    %v4476 = vpack.c.b16 %v3232, %v3230
    %v4477 = vpack.c.b16 %v3233, %v3231
    %v4478 = vpack.c.b16 %v3236, %v3234
    %v4479 = vpack.c.b16 %v3237, %v3235
    %v4480 = vpack.c.b16 %v3240, %v3238
    %v4481 = vpack.c.b16 %v3241, %v3239
    %v4482 = vpack.c.b16 %v3244, %v3242
    %v4483 = vpack.c.b16 %v3245, %v3243
    %v4484 = vpack.c.b16 %v3248, %v3246
    %v4485 = vpack.c.b16 %v3249, %v3247
    %v4486 = vpack.c.b16 %v3252, %v3250
    %v4487 = vpack.c.b16 %v3253, %v3251
    %v4488 = vpack.c.b16 %v3256, %v3254
    %v4489 = vpack.c.b16 %v3257, %v3255
    %v4490 = vpack.c.b16 %v3260, %v3258
    %v4491 = vpack.c.b16 %v3261, %v3259
    %v4492 = vpack.c.b16 %v3264, %v3262
    %v4493 = vpack.c.b16 %v3265, %v3263
    %v4494 = vpack.c.b16 %v3268, %v3266
    %v4495 = vpack.c.b16 %v3269, %v3267
    %v4496 = vpack.c.b16 %v3272, %v3270
    %v4497 = vpack.c.b16 %v3273, %v3271
    %v4498 = vpack.c.b16 %v3276, %v3274
    %v4499 = vpack.c.b16 %v3277, %v3275
    %v4500 = vpack.c.b16 %v3280, %v3278
    %v4501 = vpack.c.b16 %v3281, %v3279
    %v4502 = vpack.c.b16 %v3284, %v3282
    %v4503 = vpack.c.b16 %v3285, %v3283
    %v4504 = vpack.c.b16 %v3288, %v3286
    %v4505 = vpack.c.b16 %v3289, %v3287
    %v4506 = vpack.c.b16 %v3292, %v3290
    %v4507 = vpack.c.b16 %v3293, %v3291
    %v4508 = vpack.c.b16 %v3296, %v3294
    %v4509 = vpack.c.b16 %v3297, %v3295
    %v4510 = vpack.c.b16 %v3300, %v3298
    %v4511 = vpack.c.b16 %v3301, %v3299
    %v4512 = vpack.c.b16 %v3304, %v3302
    %v4513 = vpack.c.b16 %v3305, %v3303
    %v4514 = vpack.c.b16 %v3308, %v3306
    %v4515 = vpack.c.b16 %v3309, %v3307
    %v4516 = vpack.c.b16 %v3312, %v3310
    %v4517 = vpack.c.b16 %v3313, %v3311
    %v4518 = vpack.c.b16 %v3316, %v3314
    %v4519 = vpack.c.b16 %v3317, %v3315
    %v4520 = vpack.c.b16 %v3320, %v3318
    %v4521 = vpack.c.b16 %v3321, %v3319
    %v4522 = vpack.c.b16 %v3324, %v3322
    %v4523 = vpack.c.b16 %v3325, %v3323
    %v4524 = vpack.c.b16 %v3328, %v3326
    %v4525 = vpack.c.b16 %v3329, %v3327
    %v4526 = vpack.c.b16 %v3332, %v3330
    %v4527 = vpack.c.b16 %v3333, %v3331
    %v4528 = vpack.c.b16 %v3336, %v3334
    %v4529 = vpack.c.b16 %v3337, %v3335
    %v4530 = vpack.c.b16 %v3340, %v3338
    %v4531 = vpack.c.b16 %v3341, %v3339
    %v4532 = vpack.c.b16 %v3344, %v3342
    %v4533 = vpack.c.b16 %v3345, %v3343
    %v4534 = vpack.c.b16 %v3348, %v3346
    %v4535 = vpack.c.b16 %v3349, %v3347
    %v4536 = vpack.c.b16 %v3352, %v3350
    %v4537 = vpack.c.b16 %v3353, %v3351
    %v4538 = vpack.c.b16 %v3356, %v3354
    %v4539 = vpack.c.b16 %v3357, %v3355
    %v4540 = vpack.c.b16 %v3360, %v3358
    %v4541 = vpack.c.b16 %v3361, %v3359
    %v4542 = vpack.c.b16 %v3364, %v3362
    %v4543 = vpack.c.b16 %v3365, %v3363
    %v4544 = vpack.c.b16 %v3368, %v3366
    %v4545 = vpack.c.b16 %v3369, %v3367
    %v4546 = vpack.c.b16 %v3372, %v3370
    %v4547 = vpack.c.b16 %v3373, %v3371
    %v4548 = vpack.c.b16 %v3376, %v3374
    %v4549 = vpack.c.b16 %v3377, %v3375
    %v4550 = vpack.c.b16 %v3380, %v3378
    %v4551 = vpack.c.b16 %v3381, %v3379
    %v4552 = vpack.c.b16 %v3384, %v3382
    %v4553 = vpack.c.b16 %v3385, %v3383
    %v4554 = vpack.c.b16 %v3388, %v3386
    %v4555 = vpack.c.b16 %v3389, %v3387
    %v4556 = vpack.c.b16 %v3392, %v3390
    %v4557 = vpack.c.b16 %v3393, %v3391
    %v4558 = vpack.c.b16 %v3396, %v3394
    %v4559 = vpack.c.b16 %v3397, %v3395
    %v4560 = vpack.c.b16 %v3400, %v3398
    %v4561 = vpack.c.b16 %v3401, %v3399
    %v4562 = vpack.c.b16 %v3404, %v3402
    %v4563 = vpack.c.b16 %v3405, %v3403
    %v4564 = vpack.c.b16 %v3408, %v3406
    %v4565 = vpack.c.b16 %v3409, %v3407
    %v4566 = vpack.c.b16 %v3412, %v3410
    %v4567 = vpack.c.b16 %v3413, %v3411
    %v4568 = vpack.c.b16 %v3416, %v3414
    %v4569 = vpack.c.b16 %v3417, %v3415
    %v4570 = vpack.c.b16 %v3420, %v3418
    %v4571 = vpack.c.b16 %v3421, %v3419
    %v4572 = vpack.c.b16 %v3424, %v3422
    %v4573 = vpack.c.b16 %v3425, %v3423
    %v4574 = vpack.c.b16 %v3428, %v3426
    %v4575 = vpack.c.b16 %v3429, %v3427
    %v4576 = vpack.c.b16 %v3432, %v3430
    %v4577 = vpack.c.b16 %v3433, %v3431
    %v4578 = vpack.c.b16 %v3436, %v3434
    %v4579 = vpack.c.b16 %v3437, %v3435
    %v4580 = vpack.c.b16 %v3440, %v3438
    %v4581 = vpack.c.b16 %v3441, %v3439
    %v4582 = vpack.c.b16 %v3444, %v3442
    %v4583 = vpack.c.b16 %v3445, %v3443
    %v4584 = vpack.c.b16 %v3448, %v3446
    %v4585 = vpack.c.b16 %v3449, %v3447
    %v4586 = vpack.c.b16 %v3452, %v3450
    %v4587 = vpack.c.b16 %v3453, %v3451
    %v4588 = vpack.c.b16 %v3456, %v3454
    %v4589 = vpack.c.b16 %v3457, %v3455
    %v4590 = vpack.c.b16 %v3460, %v3458
    %v4591 = vpack.c.b16 %v3461, %v3459
    %v4592 = vpack.c.b16 %v3464, %v3462
    %v4593 = vpack.c.b16 %v3465, %v3463
    %v4594 = vpack.c.b16 %v3468, %v3466
    %v4595 = vpack.c.b16 %v3469, %v3467
    %v4596 = vpack.c.b16 %v3472, %v3470
    %v4597 = vpack.c.b16 %v3473, %v3471
    %v4598 = vpack.c.b16 %v3476, %v3474
    %v4599 = vpack.c.b16 %v3477, %v3475
    %v4600 = vpack.c.b16 %v3480, %v3478
    %v4601 = vpack.c.b16 %v3481, %v3479
    %v4602 = vpack.c.b16 %v3484, %v3482
    %v4603 = vpack.c.b16 %v3485, %v3483
    %v4604 = vpack.c.b16 %v3488, %v3486
    %v4605 = vpack.c.b16 %v3489, %v3487
    %v4606 = vpack.c.b16 %v3492, %v3490
    %v4607 = vpack.c.b16 %v3493, %v3491
    %v4608 = vpack.c.b16 %v3496, %v3494
    %v4609 = vpack.c.b16 %v3497, %v3495
    %v4610 = vpack.c.b16 %v3500, %v3498
    %v4611 = vpack.c.b16 %v3501, %v3499
    %v4612 = vpack.c.b16 %v3504, %v3502
    %v4613 = vpack.c.b16 %v3505, %v3503
    %v4614 = vpack.c.b16 %v3508, %v3506
    %v4615 = vpack.c.b16 %v3509, %v3507
    %v4616 = vpack.c.b16 %v3512, %v3510
    %v4617 = vpack.c.b16 %v3513, %v3511
    %v4618 = vpack.c.b16 %v3516, %v3514
    %v4619 = vpack.c.b16 %v3517, %v3515
    %v4620 = vpack.c.b16 %v3520, %v3518
    %v4621 = vpack.c.b16 %v3521, %v3519
    %v4622 = vpack.c.b16 %v3524, %v3522
    %v4623 = vpack.c.b16 %v3525, %v3523
    %v4624 = vpack.c.b16 %v3528, %v3526
    %v4625 = vpack.c.b16 %v3529, %v3527
    %v4626 = vpack.c.b16 %v3532, %v3530
    %v4627 = vpack.c.b16 %v3533, %v3531
    %v4628 = vpack.c.b16 %v3536, %v3534
    %v4629 = vpack.c.b16 %v3537, %v3535
    %v4630 = vpack.c.b16 %v3540, %v3538
    %v4631 = vpack.c.b16 %v3541, %v3539
    %v4632 = vpack.c.b16 %v3544, %v3542
    %v4633 = vpack.c.b16 %v3545, %v3543
    %v4634 = vpack.c.b16 %v3548, %v3546
    %v4635 = vpack.c.b16 %v3549, %v3547
    %v4636 = vpack.c.b16 %v3552, %v3550
    %v4637 = vpack.c.b16 %v3553, %v3551
    %v4638 = vpack.c.b16 %v3556, %v3554
    %v4639 = vpack.c.b16 %v3557, %v3555
    %v4640 = vpack.c.b16 %v3560, %v3558
    %v4641 = vpack.c.b16 %v3561, %v3559
    %v4642 = vpack.c.b16 %v3564, %v3562
    %v4643 = vpack.c.b16 %v3565, %v3563
    %v4644 = vpack.c.b16 %v3568, %v3566
    %v4645 = vpack.c.b16 %v3569, %v3567
    %v4646 = vpack.c.b16 %v3572, %v3570
    %v4647 = vpack.c.b16 %v3573, %v3571
    %v4648 = vpack.c.b16 %v3576, %v3574
    %v4649 = vpack.c.b16 %v3577, %v3575
    %v4650 = vpack.c.b16 %v3580, %v3578
    %v4651 = vpack.c.b16 %v3581, %v3579
    %v4652 = vpack.c.b16 %v3584, %v3582
    %v4653 = vpack.c.b16 %v3585, %v3583
    %v4654 = vpack.c.b16 %v3588, %v3586
    %v4655 = vpack.c.b16 %v3589, %v3587
    %v4656 = vpack.c.b16 %v3592, %v3590
    %v4657 = vpack.c.b16 %v3593, %v3591
    %v4658 = vpack.c.b16 %v3596, %v3594
    %v4659 = vpack.c.b16 %v3597, %v3595
    %v4660 = vpack.c.b16 %v3600, %v3598
    %v4661 = vpack.c.b16 %v3601, %v3599
    %v4662 = vpack.c.b16 %v3604, %v3602
    %v4663 = vpack.c.b16 %v3605, %v3603
    %v4664 = vpack.c.b16 %v3608, %v3606
    %v4665 = vpack.c.b16 %v3609, %v3607
    %v4666 = vpack.c.b16 %v3612, %v3610
    %v4667 = vpack.c.b16 %v3613, %v3611
    %v4668 = vpack.c.b16 %v3616, %v3614
    %v4669 = vpack.c.b16 %v3617, %v3615
    %v4670 = vpack.c.b16 %v3620, %v3618
    %v4671 = vpack.c.b16 %v3621, %v3619
    %v4672 = vpack.c.b16 %v3624, %v3622
    %v4673 = vpack.c.b16 %v3625, %v3623
    %v4674 = vpack.c.b16 %v3628, %v3626
    %v4675 = vpack.c.b16 %v3629, %v3627
    %v4676 = vpack.c.b16 %v3632, %v3630
    %v4677 = vpack.c.b16 %v3633, %v3631
    %v4678 = vpack.c.b16 %v3636, %v3634
    %v4679 = vpack.c.b16 %v3637, %v3635
    %v4680 = vpack.c.b16 %v3640, %v3638
    %v4681 = vpack.c.b16 %v3641, %v3639
    %v4682 = vpack.c.b16 %v3644, %v3642
    %v4683 = vpack.c.b16 %v3645, %v3643
    %v4684 = vpack.c.b16 %v3648, %v3646
    %v4685 = vpack.c.b16 %v3649, %v3647
    %v4686 = vpack.c.b16 %v3652, %v3650
    %v4687 = vpack.c.b16 %v3653, %v3651
    %v4688 = vpack.c.b16 %v3656, %v3654
    %v4689 = vpack.c.b16 %v3657, %v3655
    %v4690 = vpack.c.b16 %v3660, %v3658
    %v4691 = vpack.c.b16 %v3661, %v3659
    %v4692 = vpack.c.b16 %v3664, %v3662
    %v4693 = vpack.c.b16 %v3665, %v3663
    %v4694 = vpack.c.b16 %v3668, %v3666
    %v4695 = vpack.c.b16 %v3669, %v3667
    %v4696 = vpack.c.b16 %v3672, %v3670
    %v4697 = vpack.c.b16 %v3673, %v3671
    %v4698 = vpack.c.b16 %v3676, %v3674
    %v4699 = vpack.c.b16 %v3677, %v3675
    %v4700 = vpack.c.b16 %v3680, %v3678
    %v4701 = vpack.c.b16 %v3681, %v3679
    %v4702 = vpack.c.b16 %v3684, %v3682
    %v4703 = vpack.c.b16 %v3685, %v3683
    %v4704 = vpack.c.b16 %v3688, %v3686
    %v4705 = vpack.c.b16 %v3689, %v3687
    %v4706 = vpack.c.b16 %v3692, %v3690
    %v4707 = vpack.c.b16 %v3693, %v3691
    %v4708 = vpack.c.b16 %v3696, %v3694
    %v4709 = vpack.c.b16 %v3697, %v3695
    %v4710 = vpack.c.b16 %v3700, %v3698
    %v4711 = vpack.c.b16 %v3701, %v3699
    %v4712 = vpack.c.b16 %v3704, %v3702
    %v4713 = vpack.c.b16 %v3705, %v3703
    %v4714 = vpack.c.b16 %v3708, %v3706
    %v4715 = vpack.c.b16 %v3709, %v3707
    %v4716 = vpack.c.b16 %v3712, %v3710
    %v4717 = vpack.c.b16 %v3713, %v3711
    %v4718 = vpack.c.b16 %v3716, %v3714
    %v4719 = vpack.c.b16 %v3717, %v3715
    %v4720 = vpack.c.b16 %v3720, %v3718
    %v4721 = vpack.c.b16 %v3721, %v3719
    %v4722 = vpack.c.b16 %v3724, %v3722
    %v4723 = vpack.c.b16 %v3725, %v3723
    %v4724 = vpack.c.b16 %v3728, %v3726
    %v4725 = vpack.c.b16 %v3729, %v3727
    %v4726 = vpack.c.b16 %v3732, %v3730
    %v4727 = vpack.c.b16 %v3733, %v3731
    %v4728 = vpack.c.b16 %v3736, %v3734
    %v4729 = vpack.c.b16 %v3737, %v3735
    %v4730 = vpack.c.b16 %v3740, %v3738
    %v4731 = vpack.c.b16 %v3741, %v3739
    %v4732 = vpack.c.b16 %v3744, %v3742
    %v4733 = vpack.c.b16 %v3745, %v3743
    %v4734 = vpack.c.b16 %v3748, %v3746
    %v4735 = vpack.c.b16 %v3749, %v3747
    %v4736 = vpack.c.b16 %v3752, %v3750
    %v4737 = vpack.c.b16 %v3753, %v3751
    %v4738 = vpack.c.b16 %v3756, %v3754
    %v4739 = vpack.c.b16 %v3757, %v3755
    %v4740 = vpack.c.b16 %v3760, %v3758
    %v4741 = vpack.c.b16 %v3761, %v3759
    %v4742 = vpack.c.b16 %v3764, %v3762
    %v4743 = vpack.c.b16 %v3765, %v3763
    %v4744 = vpack.c.b16 %v3768, %v3766
    %v4745 = vpack.c.b16 %v3769, %v3767
    %v4746 = vpack.c.b16 %v3772, %v3770
    %v4747 = vpack.c.b16 %v3773, %v3771
    %v4748 = vpack.c.b16 %v3776, %v3774
    %v4749 = vpack.c.b16 %v3777, %v3775
    %v4750 = vpack.c.b16 %v3780, %v3778
    %v4751 = vpack.c.b16 %v3781, %v3779
    %v4752 = vpack.c.b16 %v3784, %v3782
    %v4753 = vpack.c.b16 %v3785, %v3783
    %v4754 = vpack.c.b16 %v3788, %v3786
    %v4755 = vpack.c.b16 %v3789, %v3787
    %v4756 = vpack.c.b16 %v3792, %v3790
    %v4757 = vpack.c.b16 %v3793, %v3791
    %v4758 = vpack.c.b16 %v3796, %v3794
    %v4759 = vpack.c.b16 %v3797, %v3795
    %v4760 = vpack.c.b16 %v3800, %v3798
    %v4761 = vpack.c.b16 %v3801, %v3799
    %v4762 = vpack.c.b16 %v3804, %v3802
    %v4763 = vpack.c.b16 %v3805, %v3803
    %v4764 = vpack.c.b16 %v3808, %v3806
    %v4765 = vpack.c.b16 %v3809, %v3807
    %v4766 = vpack.c.b16 %v3812, %v3810
    %v4767 = vpack.c.b16 %v3813, %v3811
    %v4768 = vpack.c.b16 %v3816, %v3814
    %v4769 = vpack.c.b16 %v3817, %v3815
    %v4770 = vpack.c.b16 %v3820, %v3818
    %v4771 = vpack.c.b16 %v3821, %v3819
    %v4772 = vpack.c.b16 %v3824, %v3822
    %v4773 = vpack.c.b16 %v3825, %v3823
    %v4774 = vpack.c.b16 %v3828, %v3826
    %v4775 = vpack.c.b16 %v3829, %v3827
    %v4776 = vpack.c.b16 %v3832, %v3830
    %v4777 = vpack.c.b16 %v3833, %v3831
    %v4778 = vpack.c.b16 %v3836, %v3834
    %v4779 = vpack.c.b16 %v3837, %v3835
    %v4780 = vpack.c.b16 %v3840, %v3838
    %v4781 = vpack.c.b16 %v3841, %v3839
    %v4782 = vpack.c.b16 %v3844, %v3842
    %v4783 = vpack.c.b16 %v3845, %v3843
    %v4784 = vpack.c.b16 %v3848, %v3846
    %v4785 = vpack.c.b16 %v3849, %v3847
    %v4786 = vpack.c.b16 %v3852, %v3850
    %v4787 = vpack.c.b16 %v3853, %v3851
    %v4788 = vpack.c.b16 %v3856, %v3854
    %v4789 = vpack.c.b16 %v3857, %v3855
    %v4790 = vpack.c.b16 %v3860, %v3858
    %v4791 = vpack.c.b16 %v3861, %v3859
    %v4792 = vpack.c.b16 %v3864, %v3862
    %v4793 = vpack.c.b16 %v3865, %v3863
    %v4794 = vpack.c.b16 %v3868, %v3866
    %v4795 = vpack.c.b16 %v3869, %v3867
    %v4796 = vpack.c.b16 %v3872, %v3870
    %v4797 = vpack.c.b16 %v3873, %v3871
    %v4798 = vpack.c.b16 %v3876, %v3874
    %v4799 = vpack.c.b16 %v3877, %v3875
    %v4800 = vpack.c.b16 %v3880, %v3878
    %v4801 = vpack.c.b16 %v3881, %v3879
    %v4802 = vpack.c.b16 %v3884, %v3882
    %v4803 = vpack.c.b16 %v3885, %v3883
    %v4804 = vpack.c.b16 %v3888, %v3886
    %v4805 = vpack.c.b16 %v3889, %v3887
    %v4806 = vpack.c.b16 %v3892, %v3890
    %v4807 = vpack.c.b16 %v3893, %v3891
    %v4808 = vpack.c.b16 %v3896, %v3894
    %v4809 = vpack.c.b16 %v3897, %v3895
    %v4810 = vpack.c.b16 %v3900, %v3898
    %v4811 = vpack.c.b16 %v3901, %v3899
    %v4812 = vpack.c.b16 %v3904, %v3902
    %v4813 = vpack.c.b16 %v3905, %v3903
    %v4814 = vpack.c.b16 %v3908, %v3906
    %v4815 = vpack.c.b16 %v3909, %v3907
    %v4816 = vpack.c.b16 %v3912, %v3910
    %v4817 = vpack.c.b16 %v3913, %v3911
    %v4818 = vpack.c.b16 %v3916, %v3914
    %v4819 = vpack.c.b16 %v3917, %v3915
    %v4820 = vpack.c.b16 %v3920, %v3918
    %v4821 = vpack.c.b16 %v3921, %v3919
    %v4822 = vpack.c.b16 %v3924, %v3922
    %v4823 = vpack.c.b16 %v3925, %v3923
    %v4824 = vpack.c.b16 %v3928, %v3926
    %v4825 = vpack.c.b16 %v3929, %v3927
    %5722 = vmatpush.bf16.msra.mxu0 %v3944
    %5723 = vmatpush.bf16.msra.mxu0 %v3942
    %5724 = vmatpush.bf16.msra.mxu0 %v3940
    %5725 = vmatpush.bf16.msra.mxu0 %v3938
    %5726 = vmatpush.bf16.msra.mxu0 %v3936
    %5727 = vmatpush.bf16.msra.mxu0 %v3934
    %5728 = vmatpush.bf16.msra.mxu0 %v3932
    %5729 = vmatpush.bf16.msra.mxu0 %v3930
    %5730 = vmatmul.bf16.gmra.mxu0 %v1118
    %v5731 = vpop.f32.mrf.mxu0
    %v5732 = vadd.f32 %v1112, %v5731
    %v5733 = vpop.f32.mrf.mxu0
    %5734 = vdwg.mxu0
    %5735 = vmatpush.bf16.msra.mxu0 %v3960
    %5736 = vmatpush.bf16.msra.mxu0 %v3958
    %5737 = vmatpush.bf16.msra.mxu0 %v3956
    %5738 = vmatpush.bf16.msra.mxu0 %v3954
    %5739 = vmatpush.bf16.msra.mxu0 %v3952
    %5740 = vmatpush.bf16.msra.mxu0 %v3950
    %5741 = vmatpush.bf16.msra.mxu0 %v3948
    %5742 = vmatpush.bf16.msra.mxu0 %v3946
    %5743 = vmatmul.bf16.gmra.mxu0 %v1119
    %v5744 = vpop.f32.mrf.mxu0
    %v5745 = vadd.f32 %v5732, %v5744
    %v5746 = vpop.f32.mrf.mxu0
    %5747 = vdwg.mxu0
    %5748 = vmatpush.bf16.msra.mxu0 %v3976
    %5749 = vmatpush.bf16.msra.mxu0 %v3974
    %5750 = vmatpush.bf16.msra.mxu0 %v3972
    %5751 = vmatpush.bf16.msra.mxu0 %v3970
    %5752 = vmatpush.bf16.msra.mxu0 %v3968
    %5753 = vmatpush.bf16.msra.mxu0 %v3966
    %5754 = vmatpush.bf16.msra.mxu0 %v3964
    %5755 = vmatpush.bf16.msra.mxu0 %v3962
    %5756 = vmatmul.bf16.gmra.mxu0 %v1120
    %v5757 = vpop.f32.mrf.mxu0
    %v5758 = vadd.f32 %v5745, %v5757
    %v5759 = vpop.f32.mrf.mxu0
    %5760 = vdwg.mxu0
    %5761 = vmatpush.bf16.msra.mxu0 %v3992
    %5762 = vmatpush.bf16.msra.mxu0 %v3990
    %5763 = vmatpush.bf16.msra.mxu0 %v3988
    %5764 = vmatpush.bf16.msra.mxu0 %v3986
    %5765 = vmatpush.bf16.msra.mxu0 %v3984
    %5766 = vmatpush.bf16.msra.mxu0 %v3982
    %5767 = vmatpush.bf16.msra.mxu0 %v3980
    %5768 = vmatpush.bf16.msra.mxu0 %v3978
    %5769 = vmatmul.bf16.gmra.mxu0 %v1121
    %v5770 = vpop.f32.mrf.mxu0
    %v5771 = vadd.f32 %v5758, %v5770
    %v5772 = vpop.f32.mrf.mxu0
    %5773 = vdwg.mxu0
    %5774 = vmatpush.bf16.msra.mxu0 %v4008
    %5775 = vmatpush.bf16.msra.mxu0 %v4006
    %5776 = vmatpush.bf16.msra.mxu0 %v4004
    %5777 = vmatpush.bf16.msra.mxu0 %v4002
    %5778 = vmatpush.bf16.msra.mxu0 %v4000
    %5779 = vmatpush.bf16.msra.mxu0 %v3998
    %5780 = vmatpush.bf16.msra.mxu0 %v3996
    %5781 = vmatpush.bf16.msra.mxu0 %v3994
    %5782 = vmatmul.bf16.gmra.mxu0 %v1122
    %v5783 = vpop.f32.mrf.mxu0
    %v5784 = vadd.f32 %v5771, %v5783
    %v5785 = vpop.f32.mrf.mxu0
    %5786 = vdwg.mxu0
    %5787 = vmatpush.bf16.msra.mxu0 %v4024
    %5788 = vmatpush.bf16.msra.mxu0 %v4022
    %5789 = vmatpush.bf16.msra.mxu0 %v4020
    %5790 = vmatpush.bf16.msra.mxu0 %v4018
    %5791 = vmatpush.bf16.msra.mxu0 %v4016
    %5792 = vmatpush.bf16.msra.mxu0 %v4014
    %5793 = vmatpush.bf16.msra.mxu0 %v4012
    %5794 = vmatpush.bf16.msra.mxu0 %v4010
    %5795 = vmatmul.bf16.gmra.mxu0 %v1123
    %v5796 = vpop.f32.mrf.mxu0
    %v5797 = vadd.f32 %v5784, %v5796
    %v5798 = vpop.f32.mrf.mxu0
    %5799 = vdwg.mxu0
    %5800 = vmatpush.bf16.msra.mxu0 %v4040
    %5801 = vmatpush.bf16.msra.mxu0 %v4038
    %5802 = vmatpush.bf16.msra.mxu0 %v4036
    %5803 = vmatpush.bf16.msra.mxu0 %v4034
    %5804 = vmatpush.bf16.msra.mxu0 %v4032
    %5805 = vmatpush.bf16.msra.mxu0 %v4030
    %5806 = vmatpush.bf16.msra.mxu0 %v4028
    %5807 = vmatpush.bf16.msra.mxu0 %v4026
    %5808 = vmatmul.bf16.gmra.mxu0 %v1124
    %v5809 = vpop.f32.mrf.mxu0
    %v5810 = vadd.f32 %v5797, %v5809
    %v5811 = vpop.f32.mrf.mxu0
    %5812 = vdwg.mxu0
    %5813 = vmatpush.bf16.msra.mxu0 %v4056
    %5814 = vmatpush.bf16.msra.mxu0 %v4054
    %5815 = vmatpush.bf16.msra.mxu0 %v4052
    %5816 = vmatpush.bf16.msra.mxu0 %v4050
    %5817 = vmatpush.bf16.msra.mxu0 %v4048
    %5818 = vmatpush.bf16.msra.mxu0 %v4046
    %5819 = vmatpush.bf16.msra.mxu0 %v4044
    %5820 = vmatpush.bf16.msra.mxu0 %v4042
    %5821 = vmatmul.bf16.gmra.mxu0 %v1125
    %v5822 = vpop.f32.mrf.mxu0
    %v5823 = vadd.f32 %v5810, %v5822
    %v5824 = vpop.f32.mrf.mxu0
    %5825 = vdwg.mxu0
    %5826 = vmatpush.bf16.msra.mxu0 %v4072
    %5827 = vmatpush.bf16.msra.mxu0 %v4070
    %5828 = vmatpush.bf16.msra.mxu0 %v4068
    %5829 = vmatpush.bf16.msra.mxu0 %v4066
    %5830 = vmatpush.bf16.msra.mxu0 %v4064
    %5831 = vmatpush.bf16.msra.mxu0 %v4062
    %5832 = vmatpush.bf16.msra.mxu0 %v4060
    %5833 = vmatpush.bf16.msra.mxu0 %v4058
    %5834 = vmatmul.bf16.gmra.mxu0 %v1128
    %v5835 = vpop.f32.mrf.mxu0
    %v5836 = vadd.f32 %v5823, %v5835
    %v5837 = vpop.f32.mrf.mxu0
    %5838 = vdwg.mxu0
    %5839 = vmatpush.bf16.msra.mxu0 %v4088
    %5840 = vmatpush.bf16.msra.mxu0 %v4086
    %5841 = vmatpush.bf16.msra.mxu0 %v4084
    %5842 = vmatpush.bf16.msra.mxu0 %v4082
    %5843 = vmatpush.bf16.msra.mxu0 %v4080
    %5844 = vmatpush.bf16.msra.mxu0 %v4078
    %5845 = vmatpush.bf16.msra.mxu0 %v4076
    %5846 = vmatpush.bf16.msra.mxu0 %v4074
    %5847 = vmatmul.bf16.gmra.mxu0 %v1129
    %v5848 = vpop.f32.mrf.mxu0
    %v5849 = vadd.f32 %v5836, %v5848
    %v5850 = vpop.f32.mrf.mxu0
    %5851 = vdwg.mxu0
    %5852 = vmatpush.bf16.msra.mxu0 %v4104
    %5853 = vmatpush.bf16.msra.mxu0 %v4102
    %5854 = vmatpush.bf16.msra.mxu0 %v4100
    %5855 = vmatpush.bf16.msra.mxu0 %v4098
    %5856 = vmatpush.bf16.msra.mxu0 %v4096
    %5857 = vmatpush.bf16.msra.mxu0 %v4094
    %5858 = vmatpush.bf16.msra.mxu0 %v4092
    %5859 = vmatpush.bf16.msra.mxu0 %v4090
    %5860 = vmatmul.bf16.gmra.mxu0 %v1130
    %v5861 = vpop.f32.mrf.mxu0
    %v5862 = vadd.f32 %v5849, %v5861
    %v5863 = vpop.f32.mrf.mxu0
    %5864 = vdwg.mxu0
    %5865 = vmatpush.bf16.msra.mxu0 %v4120
    %5866 = vmatpush.bf16.msra.mxu0 %v4118
    %5867 = vmatpush.bf16.msra.mxu0 %v4116
    %5868 = vmatpush.bf16.msra.mxu0 %v4114
    %5869 = vmatpush.bf16.msra.mxu0 %v4112
    %5870 = vmatpush.bf16.msra.mxu0 %v4110
    %5871 = vmatpush.bf16.msra.mxu0 %v4108
    %5872 = vmatpush.bf16.msra.mxu0 %v4106
    %5873 = vmatmul.bf16.gmra.mxu0 %v1131
    %v5874 = vpop.f32.mrf.mxu0
    %v5875 = vadd.f32 %v5862, %v5874
    %v5876 = vpop.f32.mrf.mxu0
    %5877 = vdwg.mxu0
    %5878 = vmatpush.bf16.msra.mxu0 %v4136
    %5879 = vmatpush.bf16.msra.mxu0 %v4134
    %5880 = vmatpush.bf16.msra.mxu0 %v4132
    %5881 = vmatpush.bf16.msra.mxu0 %v4130
    %5882 = vmatpush.bf16.msra.mxu0 %v4128
    %5883 = vmatpush.bf16.msra.mxu0 %v4126
    %5884 = vmatpush.bf16.msra.mxu0 %v4124
    %5885 = vmatpush.bf16.msra.mxu0 %v4122
    %5886 = vmatmul.bf16.gmra.mxu0 %v1132
    %v5887 = vpop.f32.mrf.mxu0
    %v5888 = vadd.f32 %v5875, %v5887
    %v5889 = vpop.f32.mrf.mxu0
    %5890 = vdwg.mxu0
    %5891 = vmatpush.bf16.msra.mxu0 %v4152
    %5892 = vmatpush.bf16.msra.mxu0 %v4150
    %5893 = vmatpush.bf16.msra.mxu0 %v4148
    %5894 = vmatpush.bf16.msra.mxu0 %v4146
    %5895 = vmatpush.bf16.msra.mxu0 %v4144
    %5896 = vmatpush.bf16.msra.mxu0 %v4142
    %5897 = vmatpush.bf16.msra.mxu0 %v4140
    %5898 = vmatpush.bf16.msra.mxu0 %v4138
    %5899 = vmatmul.bf16.gmra.mxu0 %v1133
    %v5900 = vpop.f32.mrf.mxu0
    %v5901 = vadd.f32 %v5888, %v5900
    %v5902 = vpop.f32.mrf.mxu0
    %5903 = vdwg.mxu0
    %5904 = vmatpush.bf16.msra.mxu0 %v4168
    %5905 = vmatpush.bf16.msra.mxu0 %v4166
    %5906 = vmatpush.bf16.msra.mxu0 %v4164
    %5907 = vmatpush.bf16.msra.mxu0 %v4162
    %5908 = vmatpush.bf16.msra.mxu0 %v4160
    %5909 = vmatpush.bf16.msra.mxu0 %v4158
    %5910 = vmatpush.bf16.msra.mxu0 %v4156
    %5911 = vmatpush.bf16.msra.mxu0 %v4154
    %5912 = vmatmul.bf16.gmra.mxu0 %v1134
    %v5913 = vpop.f32.mrf.mxu0
    %v5914 = vadd.f32 %v5901, %v5913
    %v5915 = vpop.f32.mrf.mxu0
    %5916 = vdwg.mxu0
    %5917 = vmatpush.bf16.msra.mxu0 %v4184
    %5918 = vmatpush.bf16.msra.mxu0 %v4182
    %5919 = vmatpush.bf16.msra.mxu0 %v4180
    %5920 = vmatpush.bf16.msra.mxu0 %v4178
    %5921 = vmatpush.bf16.msra.mxu0 %v4176
    %5922 = vmatpush.bf16.msra.mxu0 %v4174
    %5923 = vmatpush.bf16.msra.mxu0 %v4172
    %5924 = vmatpush.bf16.msra.mxu0 %v4170
    %5925 = vmatmul.bf16.gmra.mxu0 %v1135
    %v5926 = vpop.f32.mrf.mxu0
    %v5927 = vadd.f32 %v5914, %v5926
    %v5928 = vpop.f32.mrf.mxu0
    %5929 = vdwg.mxu0
    %5930 = vmatpush.bf16.msra.mxu0 %v4200
    %5931 = vmatpush.bf16.msra.mxu0 %v4198
    %5932 = vmatpush.bf16.msra.mxu0 %v4196
    %5933 = vmatpush.bf16.msra.mxu0 %v4194
    %5934 = vmatpush.bf16.msra.mxu0 %v4192
    %5935 = vmatpush.bf16.msra.mxu0 %v4190
    %5936 = vmatpush.bf16.msra.mxu0 %v4188
    %5937 = vmatpush.bf16.msra.mxu0 %v4186
    %5938 = vmatmul.bf16.gmra.mxu0 %v1138
    %v5939 = vpop.f32.mrf.mxu0
    %v5940 = vadd.f32 %v5927, %v5939
    %v5941 = vpop.f32.mrf.mxu0
    %5942 = vdwg.mxu0
    %5943 = vmatpush.bf16.msra.mxu0 %v4216
    %5944 = vmatpush.bf16.msra.mxu0 %v4214
    %5945 = vmatpush.bf16.msra.mxu0 %v4212
    %5946 = vmatpush.bf16.msra.mxu0 %v4210
    %5947 = vmatpush.bf16.msra.mxu0 %v4208
    %5948 = vmatpush.bf16.msra.mxu0 %v4206
    %5949 = vmatpush.bf16.msra.mxu0 %v4204
    %5950 = vmatpush.bf16.msra.mxu0 %v4202
    %5951 = vmatmul.bf16.gmra.mxu0 %v1139
    %v5952 = vpop.f32.mrf.mxu0
    %v5953 = vadd.f32 %v5940, %v5952
    %v5954 = vpop.f32.mrf.mxu0
    %5955 = vdwg.mxu0
    %5956 = vmatpush.bf16.msra.mxu0 %v4232
    %5957 = vmatpush.bf16.msra.mxu0 %v4230
    %5958 = vmatpush.bf16.msra.mxu0 %v4228
    %5959 = vmatpush.bf16.msra.mxu0 %v4226
    %5960 = vmatpush.bf16.msra.mxu0 %v4224
    %5961 = vmatpush.bf16.msra.mxu0 %v4222
    %5962 = vmatpush.bf16.msra.mxu0 %v4220
    %5963 = vmatpush.bf16.msra.mxu0 %v4218
    %5964 = vmatmul.bf16.gmra.mxu0 %v1140
    %v5965 = vpop.f32.mrf.mxu0
    %v5966 = vadd.f32 %v5953, %v5965
    %v5967 = vpop.f32.mrf.mxu0
    %5968 = vdwg.mxu0
    %5969 = vmatpush.bf16.msra.mxu0 %v4248
    %5970 = vmatpush.bf16.msra.mxu0 %v4246
    %5971 = vmatpush.bf16.msra.mxu0 %v4244
    %5972 = vmatpush.bf16.msra.mxu0 %v4242
    %5973 = vmatpush.bf16.msra.mxu0 %v4240
    %5974 = vmatpush.bf16.msra.mxu0 %v4238
    %5975 = vmatpush.bf16.msra.mxu0 %v4236
    %5976 = vmatpush.bf16.msra.mxu0 %v4234
    %5977 = vmatmul.bf16.gmra.mxu0 %v1141
    %v5978 = vpop.f32.mrf.mxu0
    %v5979 = vadd.f32 %v5966, %v5978
    %v5980 = vpop.f32.mrf.mxu0
    %5981 = vdwg.mxu0
    %5982 = vmatpush.bf16.msra.mxu0 %v4264
    %5983 = vmatpush.bf16.msra.mxu0 %v4262
    %5984 = vmatpush.bf16.msra.mxu0 %v4260
    %5985 = vmatpush.bf16.msra.mxu0 %v4258
    %5986 = vmatpush.bf16.msra.mxu0 %v4256
    %5987 = vmatpush.bf16.msra.mxu0 %v4254
    %5988 = vmatpush.bf16.msra.mxu0 %v4252
    %5989 = vmatpush.bf16.msra.mxu0 %v4250
    %5990 = vmatmul.bf16.gmra.mxu0 %v1142
    %v5991 = vpop.f32.mrf.mxu0
    %v5992 = vadd.f32 %v5979, %v5991
    %v5993 = vpop.f32.mrf.mxu0
    %5994 = vdwg.mxu0
    %5995 = vmatpush.bf16.msra.mxu0 %v4280
    %5996 = vmatpush.bf16.msra.mxu0 %v4278
    %5997 = vmatpush.bf16.msra.mxu0 %v4276
    %5998 = vmatpush.bf16.msra.mxu0 %v4274
    %5999 = vmatpush.bf16.msra.mxu0 %v4272
    %6000 = vmatpush.bf16.msra.mxu0 %v4270
    %6001 = vmatpush.bf16.msra.mxu0 %v4268
    %6002 = vmatpush.bf16.msra.mxu0 %v4266
    %6003 = vmatmul.bf16.gmra.mxu0 %v1143
    %v6004 = vpop.f32.mrf.mxu0
    %v6005 = vadd.f32 %v5992, %v6004
    %v6006 = vpop.f32.mrf.mxu0
    %6007 = vdwg.mxu0
    %6008 = vmatpush.bf16.msra.mxu0 %v4296
    %6009 = vmatpush.bf16.msra.mxu0 %v4294
    %6010 = vmatpush.bf16.msra.mxu0 %v4292
    %6011 = vmatpush.bf16.msra.mxu0 %v4290
    %6012 = vmatpush.bf16.msra.mxu0 %v4288
    %6013 = vmatpush.bf16.msra.mxu0 %v4286
    %6014 = vmatpush.bf16.msra.mxu0 %v4284
    %6015 = vmatpush.bf16.msra.mxu0 %v4282
    %6016 = vmatmul.bf16.gmra.mxu0 %v1144
    %v6017 = vpop.f32.mrf.mxu0
    %v6018 = vadd.f32 %v6005, %v6017
    %v6019 = vpop.f32.mrf.mxu0
    %6020 = vdwg.mxu0
    %6021 = vmatpush.bf16.msra.mxu0 %v4312
    %6022 = vmatpush.bf16.msra.mxu0 %v4310
    %6023 = vmatpush.bf16.msra.mxu0 %v4308
    %6024 = vmatpush.bf16.msra.mxu0 %v4306
    %6025 = vmatpush.bf16.msra.mxu0 %v4304
    %6026 = vmatpush.bf16.msra.mxu0 %v4302
    %6027 = vmatpush.bf16.msra.mxu0 %v4300
    %6028 = vmatpush.bf16.msra.mxu0 %v4298
    %6029 = vmatmul.bf16.gmra.mxu0 %v1145
    %v6030 = vpop.f32.mrf.mxu0
    %v6031 = vadd.f32 %v6018, %v6030
    %v6032 = vpop.f32.mrf.mxu0
    %6033 = vdwg.mxu0
    %6034 = vmatpush.bf16.msra.mxu0 %v4328
    %6035 = vmatpush.bf16.msra.mxu0 %v4326
    %6036 = vmatpush.bf16.msra.mxu0 %v4324
    %6037 = vmatpush.bf16.msra.mxu0 %v4322
    %6038 = vmatpush.bf16.msra.mxu0 %v4320
    %6039 = vmatpush.bf16.msra.mxu0 %v4318
    %6040 = vmatpush.bf16.msra.mxu0 %v4316
    %6041 = vmatpush.bf16.msra.mxu0 %v4314
    %6042 = vmatmul.bf16.gmra.mxu0 %v1148
    %v6043 = vpop.f32.mrf.mxu0
    %v6044 = vadd.f32 %v6031, %v6043
    %v6045 = vpop.f32.mrf.mxu0
    %6046 = vdwg.mxu0
    %6047 = vmatpush.bf16.msra.mxu0 %v4344
    %6048 = vmatpush.bf16.msra.mxu0 %v4342
    %6049 = vmatpush.bf16.msra.mxu0 %v4340
    %6050 = vmatpush.bf16.msra.mxu0 %v4338
    %6051 = vmatpush.bf16.msra.mxu0 %v4336
    %6052 = vmatpush.bf16.msra.mxu0 %v4334
    %6053 = vmatpush.bf16.msra.mxu0 %v4332
    %6054 = vmatpush.bf16.msra.mxu0 %v4330
    %6055 = vmatmul.bf16.gmra.mxu0 %v1149
    %v6056 = vpop.f32.mrf.mxu0
    %v6057 = vadd.f32 %v6044, %v6056
    %v6058 = vpop.f32.mrf.mxu0
    %6059 = vdwg.mxu0
    %6060 = vmatpush.bf16.msra.mxu0 %v4360
    %6061 = vmatpush.bf16.msra.mxu0 %v4358
    %6062 = vmatpush.bf16.msra.mxu0 %v4356
    %6063 = vmatpush.bf16.msra.mxu0 %v4354
    %6064 = vmatpush.bf16.msra.mxu0 %v4352
    %6065 = vmatpush.bf16.msra.mxu0 %v4350
    %6066 = vmatpush.bf16.msra.mxu0 %v4348
    %6067 = vmatpush.bf16.msra.mxu0 %v4346
    %6068 = vmatmul.bf16.gmra.mxu0 %v1150
    %v6069 = vpop.f32.mrf.mxu0
    %v6070 = vadd.f32 %v6057, %v6069
    %v6071 = vpop.f32.mrf.mxu0
    %6072 = vdwg.mxu0
    %6073 = vmatpush.bf16.msra.mxu0 %v4376
    %6074 = vmatpush.bf16.msra.mxu0 %v4374
    %6075 = vmatpush.bf16.msra.mxu0 %v4372
    %6076 = vmatpush.bf16.msra.mxu0 %v4370
    %6077 = vmatpush.bf16.msra.mxu0 %v4368
    %6078 = vmatpush.bf16.msra.mxu0 %v4366
    %6079 = vmatpush.bf16.msra.mxu0 %v4364
    %6080 = vmatpush.bf16.msra.mxu0 %v4362
    %6081 = vmatmul.bf16.gmra.mxu0 %v1151
    %v6082 = vpop.f32.mrf.mxu0
    %v6083 = vadd.f32 %v6070, %v6082
    %v6084 = vpop.f32.mrf.mxu0
    %6085 = vdwg.mxu0
    %6086 = vmatpush.bf16.msra.mxu0 %v4392
    %6087 = vmatpush.bf16.msra.mxu0 %v4390
    %6088 = vmatpush.bf16.msra.mxu0 %v4388
    %6089 = vmatpush.bf16.msra.mxu0 %v4386
    %6090 = vmatpush.bf16.msra.mxu0 %v4384
    %6091 = vmatpush.bf16.msra.mxu0 %v4382
    %6092 = vmatpush.bf16.msra.mxu0 %v4380
    %6093 = vmatpush.bf16.msra.mxu0 %v4378
    %6094 = vmatmul.bf16.gmra.mxu0 %v1152
    %v6095 = vpop.f32.mrf.mxu0
    %v6096 = vadd.f32 %v6083, %v6095
    %v6097 = vpop.f32.mrf.mxu0
    %6098 = vdwg.mxu0
    %6099 = vmatpush.bf16.msra.mxu0 %v4408
    %6100 = vmatpush.bf16.msra.mxu0 %v4406
    %6101 = vmatpush.bf16.msra.mxu0 %v4404
    %6102 = vmatpush.bf16.msra.mxu0 %v4402
    %6103 = vmatpush.bf16.msra.mxu0 %v4400
    %6104 = vmatpush.bf16.msra.mxu0 %v4398
    %6105 = vmatpush.bf16.msra.mxu0 %v4396
    %6106 = vmatpush.bf16.msra.mxu0 %v4394
    %6107 = vmatmul.bf16.gmra.mxu0 %v1153
    %v6108 = vpop.f32.mrf.mxu0
    %v6109 = vadd.f32 %v6096, %v6108
    %v6110 = vpop.f32.mrf.mxu0
    %6111 = vdwg.mxu0
    %6112 = vmatpush.bf16.msra.mxu0 %v4424
    %6113 = vmatpush.bf16.msra.mxu0 %v4422
    %6114 = vmatpush.bf16.msra.mxu0 %v4420
    %6115 = vmatpush.bf16.msra.mxu0 %v4418
    %6116 = vmatpush.bf16.msra.mxu0 %v4416
    %6117 = vmatpush.bf16.msra.mxu0 %v4414
    %6118 = vmatpush.bf16.msra.mxu0 %v4412
    %6119 = vmatpush.bf16.msra.mxu0 %v4410
    %6120 = vmatmul.bf16.gmra.mxu0 %v1154
    %v6121 = vpop.f32.mrf.mxu0
    %v6122 = vadd.f32 %v6109, %v6121
    %v6123 = vpop.f32.mrf.mxu0
    %6124 = vdwg.mxu0
    %6125 = vmatpush.bf16.msra.mxu0 %v4440
    %6126 = vmatpush.bf16.msra.mxu0 %v4438
    %6127 = vmatpush.bf16.msra.mxu0 %v4436
    %6128 = vmatpush.bf16.msra.mxu0 %v4434
    %6129 = vmatpush.bf16.msra.mxu0 %v4432
    %6130 = vmatpush.bf16.msra.mxu0 %v4430
    %6131 = vmatpush.bf16.msra.mxu0 %v4428
    %6132 = vmatpush.bf16.msra.mxu0 %v4426
    %6133 = vmatmul.bf16.gmra.mxu0 %v1155
    %v6134 = vpop.f32.mrf.mxu0
    %v6135 = vadd.f32 %v6122, %v6134
    %v6136 = vpop.f32.mrf.mxu0
    %6137 = vdwg.mxu0
    %6138 = vmatpush.bf16.msra.mxu0 %v4456
    %6139 = vmatpush.bf16.msra.mxu0 %v4454
    %6140 = vmatpush.bf16.msra.mxu0 %v4452
    %6141 = vmatpush.bf16.msra.mxu0 %v4450
    %6142 = vmatpush.bf16.msra.mxu0 %v4448
    %6143 = vmatpush.bf16.msra.mxu0 %v4446
    %6144 = vmatpush.bf16.msra.mxu0 %v4444
    %6145 = vmatpush.bf16.msra.mxu0 %v4442
    %6146 = vmatmul.bf16.gmra.mxu0 %v1158
    %v6147 = vpop.f32.mrf.mxu0
    %v6148 = vadd.f32 %v6135, %v6147
    %v6149 = vpop.f32.mrf.mxu0
    %6150 = vdwg.mxu0
    %6151 = vmatpush.bf16.msra.mxu0 %v4472
    %6152 = vmatpush.bf16.msra.mxu0 %v4470
    %6153 = vmatpush.bf16.msra.mxu0 %v4468
    %6154 = vmatpush.bf16.msra.mxu0 %v4466
    %6155 = vmatpush.bf16.msra.mxu0 %v4464
    %6156 = vmatpush.bf16.msra.mxu0 %v4462
    %6157 = vmatpush.bf16.msra.mxu0 %v4460
    %6158 = vmatpush.bf16.msra.mxu0 %v4458
    %6159 = vmatmul.bf16.gmra.mxu0 %v1159
    %v6160 = vpop.f32.mrf.mxu0
    %v6161 = vadd.f32 %v6148, %v6160
    %v6162 = vpop.f32.mrf.mxu0
    %6163 = vdwg.mxu0
    %6164 = vmatpush.bf16.msra.mxu0 %v4488
    %6165 = vmatpush.bf16.msra.mxu0 %v4486
    %6166 = vmatpush.bf16.msra.mxu0 %v4484
    %6167 = vmatpush.bf16.msra.mxu0 %v4482
    %6168 = vmatpush.bf16.msra.mxu0 %v4480
    %6169 = vmatpush.bf16.msra.mxu0 %v4478
    %6170 = vmatpush.bf16.msra.mxu0 %v4476
    %6171 = vmatpush.bf16.msra.mxu0 %v4474
    %6172 = vmatmul.bf16.gmra.mxu0 %v1160
    %v6173 = vpop.f32.mrf.mxu0
    %v6174 = vadd.f32 %v6161, %v6173
    %v6175 = vpop.f32.mrf.mxu0
    %6176 = vdwg.mxu0
    %6177 = vmatpush.bf16.msra.mxu0 %v4504
    %6178 = vmatpush.bf16.msra.mxu0 %v4502
    %6179 = vmatpush.bf16.msra.mxu0 %v4500
    %6180 = vmatpush.bf16.msra.mxu0 %v4498
    %6181 = vmatpush.bf16.msra.mxu0 %v4496
    %6182 = vmatpush.bf16.msra.mxu0 %v4494
    %6183 = vmatpush.bf16.msra.mxu0 %v4492
    %6184 = vmatpush.bf16.msra.mxu0 %v4490
    %6185 = vmatmul.bf16.gmra.mxu0 %v1161
    %v6186 = vpop.f32.mrf.mxu0
    %v6187 = vadd.f32 %v6174, %v6186
    %v6188 = vpop.f32.mrf.mxu0
    %6189 = vdwg.mxu0
    %6190 = vmatpush.bf16.msra.mxu0 %v4520
    %6191 = vmatpush.bf16.msra.mxu0 %v4518
    %6192 = vmatpush.bf16.msra.mxu0 %v4516
    %6193 = vmatpush.bf16.msra.mxu0 %v4514
    %6194 = vmatpush.bf16.msra.mxu0 %v4512
    %6195 = vmatpush.bf16.msra.mxu0 %v4510
    %6196 = vmatpush.bf16.msra.mxu0 %v4508
    %6197 = vmatpush.bf16.msra.mxu0 %v4506
    %6198 = vmatmul.bf16.gmra.mxu0 %v1162
    %v6199 = vpop.f32.mrf.mxu0
    %v6200 = vadd.f32 %v6187, %v6199
    %v6201 = vpop.f32.mrf.mxu0
    %6202 = vdwg.mxu0
    %6203 = vmatpush.bf16.msra.mxu0 %v4536
    %6204 = vmatpush.bf16.msra.mxu0 %v4534
    %6205 = vmatpush.bf16.msra.mxu0 %v4532
    %6206 = vmatpush.bf16.msra.mxu0 %v4530
    %6207 = vmatpush.bf16.msra.mxu0 %v4528
    %6208 = vmatpush.bf16.msra.mxu0 %v4526
    %6209 = vmatpush.bf16.msra.mxu0 %v4524
    %6210 = vmatpush.bf16.msra.mxu0 %v4522
    %6211 = vmatmul.bf16.gmra.mxu0 %v1163
    %v6212 = vpop.f32.mrf.mxu0
    %v6213 = vadd.f32 %v6200, %v6212
    %v6214 = vpop.f32.mrf.mxu0
    %6215 = vdwg.mxu0
    %6216 = vmatpush.bf16.msra.mxu0 %v4552
    %6217 = vmatpush.bf16.msra.mxu0 %v4550
    %6218 = vmatpush.bf16.msra.mxu0 %v4548
    %6219 = vmatpush.bf16.msra.mxu0 %v4546
    %6220 = vmatpush.bf16.msra.mxu0 %v4544
    %6221 = vmatpush.bf16.msra.mxu0 %v4542
    %6222 = vmatpush.bf16.msra.mxu0 %v4540
    %6223 = vmatpush.bf16.msra.mxu0 %v4538
    %6224 = vmatmul.bf16.gmra.mxu0 %v1164
    %v6225 = vpop.f32.mrf.mxu0
    %v6226 = vadd.f32 %v6213, %v6225
    %v6227 = vpop.f32.mrf.mxu0
    %6228 = vdwg.mxu0
    %6229 = vmatpush.bf16.msra.mxu0 %v4568
    %6230 = vmatpush.bf16.msra.mxu0 %v4566
    %6231 = vmatpush.bf16.msra.mxu0 %v4564
    %6232 = vmatpush.bf16.msra.mxu0 %v4562
    %6233 = vmatpush.bf16.msra.mxu0 %v4560
    %6234 = vmatpush.bf16.msra.mxu0 %v4558
    %6235 = vmatpush.bf16.msra.mxu0 %v4556
    %6236 = vmatpush.bf16.msra.mxu0 %v4554
    %6237 = vmatmul.bf16.gmra.mxu0 %v1165
    %v6238 = vpop.f32.mrf.mxu0
    %v6239 = vadd.f32 %v6226, %v6238
    %v6240 = vpop.f32.mrf.mxu0
    %6241 = vdwg.mxu0
    %6242 = vmatpush.bf16.msra.mxu0 %v4584
    %6243 = vmatpush.bf16.msra.mxu0 %v4582
    %6244 = vmatpush.bf16.msra.mxu0 %v4580
    %6245 = vmatpush.bf16.msra.mxu0 %v4578
    %6246 = vmatpush.bf16.msra.mxu0 %v4576
    %6247 = vmatpush.bf16.msra.mxu0 %v4574
    %6248 = vmatpush.bf16.msra.mxu0 %v4572
    %6249 = vmatpush.bf16.msra.mxu0 %v4570
    %6250 = vmatmul.bf16.gmra.mxu0 %v1168
    %v6251 = vpop.f32.mrf.mxu0
    %v6252 = vadd.f32 %v6239, %v6251
    %v6253 = vpop.f32.mrf.mxu0
    %6254 = vdwg.mxu0
    %6255 = vmatpush.bf16.msra.mxu0 %v4600
    %6256 = vmatpush.bf16.msra.mxu0 %v4598
    %6257 = vmatpush.bf16.msra.mxu0 %v4596
    %6258 = vmatpush.bf16.msra.mxu0 %v4594
    %6259 = vmatpush.bf16.msra.mxu0 %v4592
    %6260 = vmatpush.bf16.msra.mxu0 %v4590
    %6261 = vmatpush.bf16.msra.mxu0 %v4588
    %6262 = vmatpush.bf16.msra.mxu0 %v4586
    %6263 = vmatmul.bf16.gmra.mxu0 %v1169
    %v6264 = vpop.f32.mrf.mxu0
    %v6265 = vadd.f32 %v6252, %v6264
    %v6266 = vpop.f32.mrf.mxu0
    %6267 = vdwg.mxu0
    %6268 = vmatpush.bf16.msra.mxu0 %v4616
    %6269 = vmatpush.bf16.msra.mxu0 %v4614
    %6270 = vmatpush.bf16.msra.mxu0 %v4612
    %6271 = vmatpush.bf16.msra.mxu0 %v4610
    %6272 = vmatpush.bf16.msra.mxu0 %v4608
    %6273 = vmatpush.bf16.msra.mxu0 %v4606
    %6274 = vmatpush.bf16.msra.mxu0 %v4604
    %6275 = vmatpush.bf16.msra.mxu0 %v4602
    %6276 = vmatmul.bf16.gmra.mxu0 %v1170
    %v6277 = vpop.f32.mrf.mxu0
    %v6278 = vadd.f32 %v6265, %v6277
    %v6279 = vpop.f32.mrf.mxu0
    %6280 = vdwg.mxu0
    %6281 = vmatpush.bf16.msra.mxu0 %v4632
    %6282 = vmatpush.bf16.msra.mxu0 %v4630
    %6283 = vmatpush.bf16.msra.mxu0 %v4628
    %6284 = vmatpush.bf16.msra.mxu0 %v4626
    %6285 = vmatpush.bf16.msra.mxu0 %v4624
    %6286 = vmatpush.bf16.msra.mxu0 %v4622
    %6287 = vmatpush.bf16.msra.mxu0 %v4620
    %6288 = vmatpush.bf16.msra.mxu0 %v4618
    %6289 = vmatmul.bf16.gmra.mxu0 %v1171
    %v6290 = vpop.f32.mrf.mxu0
    %v6291 = vadd.f32 %v6278, %v6290
    %v6292 = vpop.f32.mrf.mxu0
    %6293 = vdwg.mxu0
    %6294 = vmatpush.bf16.msra.mxu0 %v4648
    %6295 = vmatpush.bf16.msra.mxu0 %v4646
    %6296 = vmatpush.bf16.msra.mxu0 %v4644
    %6297 = vmatpush.bf16.msra.mxu0 %v4642
    %6298 = vmatpush.bf16.msra.mxu0 %v4640
    %6299 = vmatpush.bf16.msra.mxu0 %v4638
    %6300 = vmatpush.bf16.msra.mxu0 %v4636
    %6301 = vmatpush.bf16.msra.mxu0 %v4634
    %6302 = vmatmul.bf16.gmra.mxu0 %v1172
    %v6303 = vpop.f32.mrf.mxu0
    %v6304 = vadd.f32 %v6291, %v6303
    %v6305 = vpop.f32.mrf.mxu0
    %6306 = vdwg.mxu0
    %6307 = vmatpush.bf16.msra.mxu0 %v4664
    %6308 = vmatpush.bf16.msra.mxu0 %v4662
    %6309 = vmatpush.bf16.msra.mxu0 %v4660
    %6310 = vmatpush.bf16.msra.mxu0 %v4658
    %6311 = vmatpush.bf16.msra.mxu0 %v4656
    %6312 = vmatpush.bf16.msra.mxu0 %v4654
    %6313 = vmatpush.bf16.msra.mxu0 %v4652
    %6314 = vmatpush.bf16.msra.mxu0 %v4650
    %6315 = vmatmul.bf16.gmra.mxu0 %v1173
    %v6316 = vpop.f32.mrf.mxu0
    %v6317 = vadd.f32 %v6304, %v6316
    %v6318 = vpop.f32.mrf.mxu0
    %6319 = vdwg.mxu0
    %6320 = vmatpush.bf16.msra.mxu0 %v4680
    %6321 = vmatpush.bf16.msra.mxu0 %v4678
    %6322 = vmatpush.bf16.msra.mxu0 %v4676
    %6323 = vmatpush.bf16.msra.mxu0 %v4674
    %6324 = vmatpush.bf16.msra.mxu0 %v4672
    %6325 = vmatpush.bf16.msra.mxu0 %v4670
    %6326 = vmatpush.bf16.msra.mxu0 %v4668
    %6327 = vmatpush.bf16.msra.mxu0 %v4666
    %6328 = vmatmul.bf16.gmra.mxu0 %v1174
    %v6329 = vpop.f32.mrf.mxu0
    %v6330 = vadd.f32 %v6317, %v6329
    %v6331 = vpop.f32.mrf.mxu0
    %6332 = vdwg.mxu0
    %6333 = vmatpush.bf16.msra.mxu0 %v4696
    %6334 = vmatpush.bf16.msra.mxu0 %v4694
    %6335 = vmatpush.bf16.msra.mxu0 %v4692
    %6336 = vmatpush.bf16.msra.mxu0 %v4690
    %6337 = vmatpush.bf16.msra.mxu0 %v4688
    %6338 = vmatpush.bf16.msra.mxu0 %v4686
    %6339 = vmatpush.bf16.msra.mxu0 %v4684
    %6340 = vmatpush.bf16.msra.mxu0 %v4682
    %6341 = vmatmul.bf16.gmra.mxu0 %v1175
    %v6342 = vpop.f32.mrf.mxu0
    %v6343 = vadd.f32 %v6330, %v6342
    %v6344 = vpop.f32.mrf.mxu0
    %6345 = vdwg.mxu0
    %6346 = vmatpush.bf16.msra.mxu0 %v4712
    %6347 = vmatpush.bf16.msra.mxu0 %v4710
    %6348 = vmatpush.bf16.msra.mxu0 %v4708
    %6349 = vmatpush.bf16.msra.mxu0 %v4706
    %6350 = vmatpush.bf16.msra.mxu0 %v4704
    %6351 = vmatpush.bf16.msra.mxu0 %v4702
    %6352 = vmatpush.bf16.msra.mxu0 %v4700
    %6353 = vmatpush.bf16.msra.mxu0 %v4698
    %6354 = vmatmul.bf16.gmra.mxu0 %v1178
    %v6355 = vpop.f32.mrf.mxu0
    %v6356 = vadd.f32 %v6343, %v6355
    %v6357 = vpop.f32.mrf.mxu0
    %6358 = vdwg.mxu0
    %6359 = vmatpush.bf16.msra.mxu0 %v4728
    %6360 = vmatpush.bf16.msra.mxu0 %v4726
    %6361 = vmatpush.bf16.msra.mxu0 %v4724
    %6362 = vmatpush.bf16.msra.mxu0 %v4722
    %6363 = vmatpush.bf16.msra.mxu0 %v4720
    %6364 = vmatpush.bf16.msra.mxu0 %v4718
    %6365 = vmatpush.bf16.msra.mxu0 %v4716
    %6366 = vmatpush.bf16.msra.mxu0 %v4714
    %6367 = vmatmul.bf16.gmra.mxu0 %v1179
    %v6368 = vpop.f32.mrf.mxu0
    %v6369 = vadd.f32 %v6356, %v6368
    %v6370 = vpop.f32.mrf.mxu0
    %6371 = vdwg.mxu0
    %6372 = vmatpush.bf16.msra.mxu0 %v4744
    %6373 = vmatpush.bf16.msra.mxu0 %v4742
    %6374 = vmatpush.bf16.msra.mxu0 %v4740
    %6375 = vmatpush.bf16.msra.mxu0 %v4738
    %6376 = vmatpush.bf16.msra.mxu0 %v4736
    %6377 = vmatpush.bf16.msra.mxu0 %v4734
    %6378 = vmatpush.bf16.msra.mxu0 %v4732
    %6379 = vmatpush.bf16.msra.mxu0 %v4730
    %6380 = vmatmul.bf16.gmra.mxu0 %v1180
    %v6381 = vpop.f32.mrf.mxu0
    %v6382 = vadd.f32 %v6369, %v6381
    %v6383 = vpop.f32.mrf.mxu0
    %6384 = vdwg.mxu0
    %6385 = vmatpush.bf16.msra.mxu0 %v4760
    %6386 = vmatpush.bf16.msra.mxu0 %v4758
    %6387 = vmatpush.bf16.msra.mxu0 %v4756
    %6388 = vmatpush.bf16.msra.mxu0 %v4754
    %6389 = vmatpush.bf16.msra.mxu0 %v4752
    %6390 = vmatpush.bf16.msra.mxu0 %v4750
    %6391 = vmatpush.bf16.msra.mxu0 %v4748
    %6392 = vmatpush.bf16.msra.mxu0 %v4746
    %6393 = vmatmul.bf16.gmra.mxu0 %v1181
    %v6394 = vpop.f32.mrf.mxu0
    %v6395 = vadd.f32 %v6382, %v6394
    %v6396 = vpop.f32.mrf.mxu0
    %6397 = vdwg.mxu0
    %6398 = vmatpush.bf16.msra.mxu0 %v4776
    %6399 = vmatpush.bf16.msra.mxu0 %v4774
    %6400 = vmatpush.bf16.msra.mxu0 %v4772
    %6401 = vmatpush.bf16.msra.mxu0 %v4770
    %6402 = vmatpush.bf16.msra.mxu0 %v4768
    %6403 = vmatpush.bf16.msra.mxu0 %v4766
    %6404 = vmatpush.bf16.msra.mxu0 %v4764
    %6405 = vmatpush.bf16.msra.mxu0 %v4762
    %6406 = vmatmul.bf16.gmra.mxu0 %v1182
    %v6407 = vpop.f32.mrf.mxu0
    %v6408 = vadd.f32 %v6395, %v6407
    %v6409 = vpop.f32.mrf.mxu0
    %6410 = vdwg.mxu0
    %6411 = vmatpush.bf16.msra.mxu0 %v4792
    %6412 = vmatpush.bf16.msra.mxu0 %v4790
    %6413 = vmatpush.bf16.msra.mxu0 %v4788
    %6414 = vmatpush.bf16.msra.mxu0 %v4786
    %6415 = vmatpush.bf16.msra.mxu0 %v4784
    %6416 = vmatpush.bf16.msra.mxu0 %v4782
    %6417 = vmatpush.bf16.msra.mxu0 %v4780
    %6418 = vmatpush.bf16.msra.mxu0 %v4778
    %6419 = vmatmul.bf16.gmra.mxu0 %v1183
    %v6420 = vpop.f32.mrf.mxu0
    %v6421 = vadd.f32 %v6408, %v6420
    %v6422 = vpop.f32.mrf.mxu0
    %6423 = vdwg.mxu0
    %6424 = vmatpush.bf16.msra.mxu0 %v4808
    %6425 = vmatpush.bf16.msra.mxu0 %v4806
    %6426 = vmatpush.bf16.msra.mxu0 %v4804
    %6427 = vmatpush.bf16.msra.mxu0 %v4802
    %6428 = vmatpush.bf16.msra.mxu0 %v4800
    %6429 = vmatpush.bf16.msra.mxu0 %v4798
    %6430 = vmatpush.bf16.msra.mxu0 %v4796
    %6431 = vmatpush.bf16.msra.mxu0 %v4794
    %6432 = vmatmul.bf16.gmra.mxu0 %v1184
    %v6433 = vpop.f32.mrf.mxu0
    %v6434 = vadd.f32 %v6421, %v6433
    %v6435 = vpop.f32.mrf.mxu0
    %6436 = vdwg.mxu0
    %6437 = vmatpush.bf16.msra.mxu0 %v4824
    %6438 = vmatpush.bf16.msra.mxu0 %v4822
    %6439 = vmatpush.bf16.msra.mxu0 %v4820
    %6440 = vmatpush.bf16.msra.mxu0 %v4818
    %6441 = vmatpush.bf16.msra.mxu0 %v4816
    %6442 = vmatpush.bf16.msra.mxu0 %v4814
    %6443 = vmatpush.bf16.msra.mxu0 %v4812
    %6444 = vmatpush.bf16.msra.mxu0 %v4810
    %6445 = vmatmul.bf16.gmra.mxu0 %v1185
    %v6446 = vpop.f32.mrf.mxu0
    %v6447 = vadd.f32 %v6434, %v6446
    %v6448 = vpop.f32.mrf.mxu0
    %6449 = vdwg.mxu0
    %6450 = vmatpush.bf16.msra.mxu0 %v3945
    %6451 = vmatpush.bf16.msra.mxu0 %v3943
    %6452 = vmatpush.bf16.msra.mxu0 %v3941
    %6453 = vmatpush.bf16.msra.mxu0 %v3939
    %6454 = vmatpush.bf16.msra.mxu0 %v3937
    %6455 = vmatpush.bf16.msra.mxu0 %v3935
    %6456 = vmatpush.bf16.msra.mxu0 %v3933
    %6457 = vmatpush.bf16.msra.mxu0 %v3931
    %6458 = vmatmul.bf16.gmra.mxu0 %v1118
    %v6459 = vpop.f32.mrf.mxu0
    %v6460 = vadd.f32 %v1113, %v6459
    %v6461 = vpop.f32.mrf.mxu0
    %6462 = vdwg.mxu0
    %6463 = vmatpush.bf16.msra.mxu0 %v3961
    %6464 = vmatpush.bf16.msra.mxu0 %v3959
    %6465 = vmatpush.bf16.msra.mxu0 %v3957
    %6466 = vmatpush.bf16.msra.mxu0 %v3955
    %6467 = vmatpush.bf16.msra.mxu0 %v3953
    %6468 = vmatpush.bf16.msra.mxu0 %v3951
    %6469 = vmatpush.bf16.msra.mxu0 %v3949
    %6470 = vmatpush.bf16.msra.mxu0 %v3947
    %6471 = vmatmul.bf16.gmra.mxu0 %v1119
    %v6472 = vpop.f32.mrf.mxu0
    %v6473 = vadd.f32 %v6460, %v6472
    %v6474 = vpop.f32.mrf.mxu0
    %6475 = vdwg.mxu0
    %6476 = vmatpush.bf16.msra.mxu0 %v3977
    %6477 = vmatpush.bf16.msra.mxu0 %v3975
    %6478 = vmatpush.bf16.msra.mxu0 %v3973
    %6479 = vmatpush.bf16.msra.mxu0 %v3971
    %6480 = vmatpush.bf16.msra.mxu0 %v3969
    %6481 = vmatpush.bf16.msra.mxu0 %v3967
    %6482 = vmatpush.bf16.msra.mxu0 %v3965
    %6483 = vmatpush.bf16.msra.mxu0 %v3963
    %6484 = vmatmul.bf16.gmra.mxu0 %v1120
    %v6485 = vpop.f32.mrf.mxu0
    %v6486 = vadd.f32 %v6473, %v6485
    %v6487 = vpop.f32.mrf.mxu0
    %6488 = vdwg.mxu0
    %6489 = vmatpush.bf16.msra.mxu0 %v3993
    %6490 = vmatpush.bf16.msra.mxu0 %v3991
    %6491 = vmatpush.bf16.msra.mxu0 %v3989
    %6492 = vmatpush.bf16.msra.mxu0 %v3987
    %6493 = vmatpush.bf16.msra.mxu0 %v3985
    %6494 = vmatpush.bf16.msra.mxu0 %v3983
    %6495 = vmatpush.bf16.msra.mxu0 %v3981
    %6496 = vmatpush.bf16.msra.mxu0 %v3979
    %6497 = vmatmul.bf16.gmra.mxu0 %v1121
    %v6498 = vpop.f32.mrf.mxu0
    %v6499 = vadd.f32 %v6486, %v6498
    %v6500 = vpop.f32.mrf.mxu0
    %6501 = vdwg.mxu0
    %6502 = vmatpush.bf16.msra.mxu0 %v4009
    %6503 = vmatpush.bf16.msra.mxu0 %v4007
    %6504 = vmatpush.bf16.msra.mxu0 %v4005
    %6505 = vmatpush.bf16.msra.mxu0 %v4003
    %6506 = vmatpush.bf16.msra.mxu0 %v4001
    %6507 = vmatpush.bf16.msra.mxu0 %v3999
    %6508 = vmatpush.bf16.msra.mxu0 %v3997
    %6509 = vmatpush.bf16.msra.mxu0 %v3995
    %6510 = vmatmul.bf16.gmra.mxu0 %v1122
    %v6511 = vpop.f32.mrf.mxu0
    %v6512 = vadd.f32 %v6499, %v6511
    %v6513 = vpop.f32.mrf.mxu0
    %6514 = vdwg.mxu0
    %6515 = vmatpush.bf16.msra.mxu0 %v4025
    %6516 = vmatpush.bf16.msra.mxu0 %v4023
    %6517 = vmatpush.bf16.msra.mxu0 %v4021
    %6518 = vmatpush.bf16.msra.mxu0 %v4019
    %6519 = vmatpush.bf16.msra.mxu0 %v4017
    %6520 = vmatpush.bf16.msra.mxu0 %v4015
    %6521 = vmatpush.bf16.msra.mxu0 %v4013
    %6522 = vmatpush.bf16.msra.mxu0 %v4011
    %6523 = vmatmul.bf16.gmra.mxu0 %v1123
    %v6524 = vpop.f32.mrf.mxu0
    %v6525 = vadd.f32 %v6512, %v6524
    %v6526 = vpop.f32.mrf.mxu0
    %6527 = vdwg.mxu0
    %6528 = vmatpush.bf16.msra.mxu0 %v4041
    %6529 = vmatpush.bf16.msra.mxu0 %v4039
    %6530 = vmatpush.bf16.msra.mxu0 %v4037
    %6531 = vmatpush.bf16.msra.mxu0 %v4035
    %6532 = vmatpush.bf16.msra.mxu0 %v4033
    %6533 = vmatpush.bf16.msra.mxu0 %v4031
    %6534 = vmatpush.bf16.msra.mxu0 %v4029
    %6535 = vmatpush.bf16.msra.mxu0 %v4027
    %6536 = vmatmul.bf16.gmra.mxu0 %v1124
    %v6537 = vpop.f32.mrf.mxu0
    %v6538 = vadd.f32 %v6525, %v6537
    %v6539 = vpop.f32.mrf.mxu0
    %6540 = vdwg.mxu0
    %6541 = vmatpush.bf16.msra.mxu0 %v4057
    %6542 = vmatpush.bf16.msra.mxu0 %v4055
    %6543 = vmatpush.bf16.msra.mxu0 %v4053
    %6544 = vmatpush.bf16.msra.mxu0 %v4051
    %6545 = vmatpush.bf16.msra.mxu0 %v4049
    %6546 = vmatpush.bf16.msra.mxu0 %v4047
    %6547 = vmatpush.bf16.msra.mxu0 %v4045
    %6548 = vmatpush.bf16.msra.mxu0 %v4043
    %6549 = vmatmul.bf16.gmra.mxu0 %v1125
    %v6550 = vpop.f32.mrf.mxu0
    %v6551 = vadd.f32 %v6538, %v6550
    %v6552 = vpop.f32.mrf.mxu0
    %6553 = vdwg.mxu0
    %6554 = vmatpush.bf16.msra.mxu0 %v4073
    %6555 = vmatpush.bf16.msra.mxu0 %v4071
    %6556 = vmatpush.bf16.msra.mxu0 %v4069
    %6557 = vmatpush.bf16.msra.mxu0 %v4067
    %6558 = vmatpush.bf16.msra.mxu0 %v4065
    %6559 = vmatpush.bf16.msra.mxu0 %v4063
    %6560 = vmatpush.bf16.msra.mxu0 %v4061
    %6561 = vmatpush.bf16.msra.mxu0 %v4059
    %6562 = vmatmul.bf16.gmra.mxu0 %v1128
    %v6563 = vpop.f32.mrf.mxu0
    %v6564 = vadd.f32 %v6551, %v6563
    %v6565 = vpop.f32.mrf.mxu0
    %6566 = vdwg.mxu0
    %6567 = vmatpush.bf16.msra.mxu0 %v4089
    %6568 = vmatpush.bf16.msra.mxu0 %v4087
    %6569 = vmatpush.bf16.msra.mxu0 %v4085
    %6570 = vmatpush.bf16.msra.mxu0 %v4083
    %6571 = vmatpush.bf16.msra.mxu0 %v4081
    %6572 = vmatpush.bf16.msra.mxu0 %v4079
    %6573 = vmatpush.bf16.msra.mxu0 %v4077
    %6574 = vmatpush.bf16.msra.mxu0 %v4075
    %6575 = vmatmul.bf16.gmra.mxu0 %v1129
    %v6576 = vpop.f32.mrf.mxu0
    %v6577 = vadd.f32 %v6564, %v6576
    %v6578 = vpop.f32.mrf.mxu0
    %6579 = vdwg.mxu0
    %6580 = vmatpush.bf16.msra.mxu0 %v4105
    %6581 = vmatpush.bf16.msra.mxu0 %v4103
    %6582 = vmatpush.bf16.msra.mxu0 %v4101
    %6583 = vmatpush.bf16.msra.mxu0 %v4099
    %6584 = vmatpush.bf16.msra.mxu0 %v4097
    %6585 = vmatpush.bf16.msra.mxu0 %v4095
    %6586 = vmatpush.bf16.msra.mxu0 %v4093
    %6587 = vmatpush.bf16.msra.mxu0 %v4091
    %6588 = vmatmul.bf16.gmra.mxu0 %v1130
    %v6589 = vpop.f32.mrf.mxu0
    %v6590 = vadd.f32 %v6577, %v6589
    %v6591 = vpop.f32.mrf.mxu0
    %6592 = vdwg.mxu0
    %6593 = vmatpush.bf16.msra.mxu0 %v4121
    %6594 = vmatpush.bf16.msra.mxu0 %v4119
    %6595 = vmatpush.bf16.msra.mxu0 %v4117
    %6596 = vmatpush.bf16.msra.mxu0 %v4115
    %6597 = vmatpush.bf16.msra.mxu0 %v4113
    %6598 = vmatpush.bf16.msra.mxu0 %v4111
    %6599 = vmatpush.bf16.msra.mxu0 %v4109
    %6600 = vmatpush.bf16.msra.mxu0 %v4107
    %6601 = vmatmul.bf16.gmra.mxu0 %v1131
    %v6602 = vpop.f32.mrf.mxu0
    %v6603 = vadd.f32 %v6590, %v6602
    %v6604 = vpop.f32.mrf.mxu0
    %6605 = vdwg.mxu0
    %6606 = vmatpush.bf16.msra.mxu0 %v4137
    %6607 = vmatpush.bf16.msra.mxu0 %v4135
    %6608 = vmatpush.bf16.msra.mxu0 %v4133
    %6609 = vmatpush.bf16.msra.mxu0 %v4131
    %6610 = vmatpush.bf16.msra.mxu0 %v4129
    %6611 = vmatpush.bf16.msra.mxu0 %v4127
    %6612 = vmatpush.bf16.msra.mxu0 %v4125
    %6613 = vmatpush.bf16.msra.mxu0 %v4123
    %6614 = vmatmul.bf16.gmra.mxu0 %v1132
    %v6615 = vpop.f32.mrf.mxu0
    %v6616 = vadd.f32 %v6603, %v6615
    %v6617 = vpop.f32.mrf.mxu0
    %6618 = vdwg.mxu0
    %6619 = vmatpush.bf16.msra.mxu0 %v4153
    %6620 = vmatpush.bf16.msra.mxu0 %v4151
    %6621 = vmatpush.bf16.msra.mxu0 %v4149
    %6622 = vmatpush.bf16.msra.mxu0 %v4147
    %6623 = vmatpush.bf16.msra.mxu0 %v4145
    %6624 = vmatpush.bf16.msra.mxu0 %v4143
    %6625 = vmatpush.bf16.msra.mxu0 %v4141
    %6626 = vmatpush.bf16.msra.mxu0 %v4139
    %6627 = vmatmul.bf16.gmra.mxu0 %v1133
    %v6628 = vpop.f32.mrf.mxu0
    %v6629 = vadd.f32 %v6616, %v6628
    %v6630 = vpop.f32.mrf.mxu0
    %6631 = vdwg.mxu0
    %6632 = vmatpush.bf16.msra.mxu0 %v4169
    %6633 = vmatpush.bf16.msra.mxu0 %v4167
    %6634 = vmatpush.bf16.msra.mxu0 %v4165
    %6635 = vmatpush.bf16.msra.mxu0 %v4163
    %6636 = vmatpush.bf16.msra.mxu0 %v4161
    %6637 = vmatpush.bf16.msra.mxu0 %v4159
    %6638 = vmatpush.bf16.msra.mxu0 %v4157
    %6639 = vmatpush.bf16.msra.mxu0 %v4155
    %6640 = vmatmul.bf16.gmra.mxu0 %v1134
    %v6641 = vpop.f32.mrf.mxu0
    %v6642 = vadd.f32 %v6629, %v6641
    %v6643 = vpop.f32.mrf.mxu0
    %6644 = vdwg.mxu0
    %6645 = vmatpush.bf16.msra.mxu0 %v4185
    %6646 = vmatpush.bf16.msra.mxu0 %v4183
    %6647 = vmatpush.bf16.msra.mxu0 %v4181
    %6648 = vmatpush.bf16.msra.mxu0 %v4179
    %6649 = vmatpush.bf16.msra.mxu0 %v4177
    %6650 = vmatpush.bf16.msra.mxu0 %v4175
    %6651 = vmatpush.bf16.msra.mxu0 %v4173
    %6652 = vmatpush.bf16.msra.mxu0 %v4171
    %6653 = vmatmul.bf16.gmra.mxu0 %v1135
    %v6654 = vpop.f32.mrf.mxu0
    %v6655 = vadd.f32 %v6642, %v6654
    %v6656 = vpop.f32.mrf.mxu0
    %6657 = vdwg.mxu0
    %6658 = vmatpush.bf16.msra.mxu0 %v4201
    %6659 = vmatpush.bf16.msra.mxu0 %v4199
    %6660 = vmatpush.bf16.msra.mxu0 %v4197
    %6661 = vmatpush.bf16.msra.mxu0 %v4195
    %6662 = vmatpush.bf16.msra.mxu0 %v4193
    %6663 = vmatpush.bf16.msra.mxu0 %v4191
    %6664 = vmatpush.bf16.msra.mxu0 %v4189
    %6665 = vmatpush.bf16.msra.mxu0 %v4187
    %6666 = vmatmul.bf16.gmra.mxu0 %v1138
    %v6667 = vpop.f32.mrf.mxu0
    %v6668 = vadd.f32 %v6655, %v6667
    %v6669 = vpop.f32.mrf.mxu0
    %6670 = vdwg.mxu0
    %6671 = vmatpush.bf16.msra.mxu0 %v4217
    %6672 = vmatpush.bf16.msra.mxu0 %v4215
    %6673 = vmatpush.bf16.msra.mxu0 %v4213
    %6674 = vmatpush.bf16.msra.mxu0 %v4211
    %6675 = vmatpush.bf16.msra.mxu0 %v4209
    %6676 = vmatpush.bf16.msra.mxu0 %v4207
    %6677 = vmatpush.bf16.msra.mxu0 %v4205
    %6678 = vmatpush.bf16.msra.mxu0 %v4203
    %6679 = vmatmul.bf16.gmra.mxu0 %v1139
    %v6680 = vpop.f32.mrf.mxu0
    %v6681 = vadd.f32 %v6668, %v6680
    %v6682 = vpop.f32.mrf.mxu0
    %6683 = vdwg.mxu0
    %6684 = vmatpush.bf16.msra.mxu0 %v4233
    %6685 = vmatpush.bf16.msra.mxu0 %v4231
    %6686 = vmatpush.bf16.msra.mxu0 %v4229
    %6687 = vmatpush.bf16.msra.mxu0 %v4227
    %6688 = vmatpush.bf16.msra.mxu0 %v4225
    %6689 = vmatpush.bf16.msra.mxu0 %v4223
    %6690 = vmatpush.bf16.msra.mxu0 %v4221
    %6691 = vmatpush.bf16.msra.mxu0 %v4219
    %6692 = vmatmul.bf16.gmra.mxu0 %v1140
    %v6693 = vpop.f32.mrf.mxu0
    %v6694 = vadd.f32 %v6681, %v6693
    %v6695 = vpop.f32.mrf.mxu0
    %6696 = vdwg.mxu0
    %6697 = vmatpush.bf16.msra.mxu0 %v4249
    %6698 = vmatpush.bf16.msra.mxu0 %v4247
    %6699 = vmatpush.bf16.msra.mxu0 %v4245
    %6700 = vmatpush.bf16.msra.mxu0 %v4243
    %6701 = vmatpush.bf16.msra.mxu0 %v4241
    %6702 = vmatpush.bf16.msra.mxu0 %v4239
    %6703 = vmatpush.bf16.msra.mxu0 %v4237
    %6704 = vmatpush.bf16.msra.mxu0 %v4235
    %6705 = vmatmul.bf16.gmra.mxu0 %v1141
    %v6706 = vpop.f32.mrf.mxu0
    %v6707 = vadd.f32 %v6694, %v6706
    %v6708 = vpop.f32.mrf.mxu0
    %6709 = vdwg.mxu0
    %6710 = vmatpush.bf16.msra.mxu0 %v4265
    %6711 = vmatpush.bf16.msra.mxu0 %v4263
    %6712 = vmatpush.bf16.msra.mxu0 %v4261
    %6713 = vmatpush.bf16.msra.mxu0 %v4259
    %6714 = vmatpush.bf16.msra.mxu0 %v4257
    %6715 = vmatpush.bf16.msra.mxu0 %v4255
    %6716 = vmatpush.bf16.msra.mxu0 %v4253
    %6717 = vmatpush.bf16.msra.mxu0 %v4251
    %6718 = vmatmul.bf16.gmra.mxu0 %v1142
    %v6719 = vpop.f32.mrf.mxu0
    %v6720 = vadd.f32 %v6707, %v6719
    %v6721 = vpop.f32.mrf.mxu0
    %6722 = vdwg.mxu0
    %6723 = vmatpush.bf16.msra.mxu0 %v4281
    %6724 = vmatpush.bf16.msra.mxu0 %v4279
    %6725 = vmatpush.bf16.msra.mxu0 %v4277
    %6726 = vmatpush.bf16.msra.mxu0 %v4275
    %6727 = vmatpush.bf16.msra.mxu0 %v4273
    %6728 = vmatpush.bf16.msra.mxu0 %v4271
    %6729 = vmatpush.bf16.msra.mxu0 %v4269
    %6730 = vmatpush.bf16.msra.mxu0 %v4267
    %6731 = vmatmul.bf16.gmra.mxu0 %v1143
    %v6732 = vpop.f32.mrf.mxu0
    %v6733 = vadd.f32 %v6720, %v6732
    %v6734 = vpop.f32.mrf.mxu0
    %6735 = vdwg.mxu0
    %6736 = vmatpush.bf16.msra.mxu0 %v4297
    %6737 = vmatpush.bf16.msra.mxu0 %v4295
    %6738 = vmatpush.bf16.msra.mxu0 %v4293
    %6739 = vmatpush.bf16.msra.mxu0 %v4291
    %6740 = vmatpush.bf16.msra.mxu0 %v4289
    %6741 = vmatpush.bf16.msra.mxu0 %v4287
    %6742 = vmatpush.bf16.msra.mxu0 %v4285
    %6743 = vmatpush.bf16.msra.mxu0 %v4283
    %6744 = vmatmul.bf16.gmra.mxu0 %v1144
    %v6745 = vpop.f32.mrf.mxu0
    %v6746 = vadd.f32 %v6733, %v6745
    %v6747 = vpop.f32.mrf.mxu0
    %6748 = vdwg.mxu0
    %6749 = vmatpush.bf16.msra.mxu0 %v4313
    %6750 = vmatpush.bf16.msra.mxu0 %v4311
    %6751 = vmatpush.bf16.msra.mxu0 %v4309
    %6752 = vmatpush.bf16.msra.mxu0 %v4307
    %6753 = vmatpush.bf16.msra.mxu0 %v4305
    %6754 = vmatpush.bf16.msra.mxu0 %v4303
    %6755 = vmatpush.bf16.msra.mxu0 %v4301
    %6756 = vmatpush.bf16.msra.mxu0 %v4299
    %6757 = vmatmul.bf16.gmra.mxu0 %v1145
    %v6758 = vpop.f32.mrf.mxu0
    %v6759 = vadd.f32 %v6746, %v6758
    %v6760 = vpop.f32.mrf.mxu0
    %6761 = vdwg.mxu0
    %6762 = vmatpush.bf16.msra.mxu0 %v4329
    %6763 = vmatpush.bf16.msra.mxu0 %v4327
    %6764 = vmatpush.bf16.msra.mxu0 %v4325
    %6765 = vmatpush.bf16.msra.mxu0 %v4323
    %6766 = vmatpush.bf16.msra.mxu0 %v4321
    %6767 = vmatpush.bf16.msra.mxu0 %v4319
    %6768 = vmatpush.bf16.msra.mxu0 %v4317
    %6769 = vmatpush.bf16.msra.mxu0 %v4315
    %6770 = vmatmul.bf16.gmra.mxu0 %v1148
    %v6771 = vpop.f32.mrf.mxu0
    %v6772 = vadd.f32 %v6759, %v6771
    %v6773 = vpop.f32.mrf.mxu0
    %6774 = vdwg.mxu0
    %6775 = vmatpush.bf16.msra.mxu0 %v4345
    %6776 = vmatpush.bf16.msra.mxu0 %v4343
    %6777 = vmatpush.bf16.msra.mxu0 %v4341
    %6778 = vmatpush.bf16.msra.mxu0 %v4339
    %6779 = vmatpush.bf16.msra.mxu0 %v4337
    %6780 = vmatpush.bf16.msra.mxu0 %v4335
    %6781 = vmatpush.bf16.msra.mxu0 %v4333
    %6782 = vmatpush.bf16.msra.mxu0 %v4331
    %6783 = vmatmul.bf16.gmra.mxu0 %v1149
    %v6784 = vpop.f32.mrf.mxu0
    %v6785 = vadd.f32 %v6772, %v6784
    %v6786 = vpop.f32.mrf.mxu0
    %6787 = vdwg.mxu0
    %6788 = vmatpush.bf16.msra.mxu0 %v4361
    %6789 = vmatpush.bf16.msra.mxu0 %v4359
    %6790 = vmatpush.bf16.msra.mxu0 %v4357
    %6791 = vmatpush.bf16.msra.mxu0 %v4355
    %6792 = vmatpush.bf16.msra.mxu0 %v4353
    %6793 = vmatpush.bf16.msra.mxu0 %v4351
    %6794 = vmatpush.bf16.msra.mxu0 %v4349
    %6795 = vmatpush.bf16.msra.mxu0 %v4347
    %6796 = vmatmul.bf16.gmra.mxu0 %v1150
    %v6797 = vpop.f32.mrf.mxu0
    %v6798 = vadd.f32 %v6785, %v6797
    %v6799 = vpop.f32.mrf.mxu0
    %6800 = vdwg.mxu0
    %6801 = vmatpush.bf16.msra.mxu0 %v4377
    %6802 = vmatpush.bf16.msra.mxu0 %v4375
    %6803 = vmatpush.bf16.msra.mxu0 %v4373
    %6804 = vmatpush.bf16.msra.mxu0 %v4371
    %6805 = vmatpush.bf16.msra.mxu0 %v4369
    %6806 = vmatpush.bf16.msra.mxu0 %v4367
    %6807 = vmatpush.bf16.msra.mxu0 %v4365
    %6808 = vmatpush.bf16.msra.mxu0 %v4363
    %6809 = vmatmul.bf16.gmra.mxu0 %v1151
    %v6810 = vpop.f32.mrf.mxu0
    %v6811 = vadd.f32 %v6798, %v6810
    %v6812 = vpop.f32.mrf.mxu0
    %6813 = vdwg.mxu0
    %6814 = vmatpush.bf16.msra.mxu0 %v4393
    %6815 = vmatpush.bf16.msra.mxu0 %v4391
    %6816 = vmatpush.bf16.msra.mxu0 %v4389
    %6817 = vmatpush.bf16.msra.mxu0 %v4387
    %6818 = vmatpush.bf16.msra.mxu0 %v4385
    %6819 = vmatpush.bf16.msra.mxu0 %v4383
    %6820 = vmatpush.bf16.msra.mxu0 %v4381
    %6821 = vmatpush.bf16.msra.mxu0 %v4379
    %6822 = vmatmul.bf16.gmra.mxu0 %v1152
    %v6823 = vpop.f32.mrf.mxu0
    %v6824 = vadd.f32 %v6811, %v6823
    %v6825 = vpop.f32.mrf.mxu0
    %6826 = vdwg.mxu0
    %6827 = vmatpush.bf16.msra.mxu0 %v4409
    %6828 = vmatpush.bf16.msra.mxu0 %v4407
    %6829 = vmatpush.bf16.msra.mxu0 %v4405
    %6830 = vmatpush.bf16.msra.mxu0 %v4403
    %6831 = vmatpush.bf16.msra.mxu0 %v4401
    %6832 = vmatpush.bf16.msra.mxu0 %v4399
    %6833 = vmatpush.bf16.msra.mxu0 %v4397
    %6834 = vmatpush.bf16.msra.mxu0 %v4395
    %6835 = vmatmul.bf16.gmra.mxu0 %v1153
    %v6836 = vpop.f32.mrf.mxu0
    %v6837 = vadd.f32 %v6824, %v6836
    %v6838 = vpop.f32.mrf.mxu0
    %6839 = vdwg.mxu0
    %6840 = vmatpush.bf16.msra.mxu0 %v4425
    %6841 = vmatpush.bf16.msra.mxu0 %v4423
    %6842 = vmatpush.bf16.msra.mxu0 %v4421
    %6843 = vmatpush.bf16.msra.mxu0 %v4419
    %6844 = vmatpush.bf16.msra.mxu0 %v4417
    %6845 = vmatpush.bf16.msra.mxu0 %v4415
    %6846 = vmatpush.bf16.msra.mxu0 %v4413
    %6847 = vmatpush.bf16.msra.mxu0 %v4411
    %6848 = vmatmul.bf16.gmra.mxu0 %v1154
    %v6849 = vpop.f32.mrf.mxu0
    %v6850 = vadd.f32 %v6837, %v6849
    %v6851 = vpop.f32.mrf.mxu0
    %6852 = vdwg.mxu0
    %6853 = vmatpush.bf16.msra.mxu0 %v4441
    %6854 = vmatpush.bf16.msra.mxu0 %v4439
    %6855 = vmatpush.bf16.msra.mxu0 %v4437
    %6856 = vmatpush.bf16.msra.mxu0 %v4435
    %6857 = vmatpush.bf16.msra.mxu0 %v4433
    %6858 = vmatpush.bf16.msra.mxu0 %v4431
    %6859 = vmatpush.bf16.msra.mxu0 %v4429
    %6860 = vmatpush.bf16.msra.mxu0 %v4427
    %6861 = vmatmul.bf16.gmra.mxu0 %v1155
    %v6862 = vpop.f32.mrf.mxu0
    %v6863 = vadd.f32 %v6850, %v6862
    %v6864 = vpop.f32.mrf.mxu0
    %6865 = vdwg.mxu0
    %6866 = vmatpush.bf16.msra.mxu0 %v4457
    %6867 = vmatpush.bf16.msra.mxu0 %v4455
    %6868 = vmatpush.bf16.msra.mxu0 %v4453
    %6869 = vmatpush.bf16.msra.mxu0 %v4451
    %6870 = vmatpush.bf16.msra.mxu0 %v4449
    %6871 = vmatpush.bf16.msra.mxu0 %v4447
    %6872 = vmatpush.bf16.msra.mxu0 %v4445
    %6873 = vmatpush.bf16.msra.mxu0 %v4443
    %6874 = vmatmul.bf16.gmra.mxu0 %v1158
    %v6875 = vpop.f32.mrf.mxu0
    %v6876 = vadd.f32 %v6863, %v6875
    %v6877 = vpop.f32.mrf.mxu0
    %6878 = vdwg.mxu0
    %6879 = vmatpush.bf16.msra.mxu0 %v4473
    %6880 = vmatpush.bf16.msra.mxu0 %v4471
    %6881 = vmatpush.bf16.msra.mxu0 %v4469
    %6882 = vmatpush.bf16.msra.mxu0 %v4467
    %6883 = vmatpush.bf16.msra.mxu0 %v4465
    %6884 = vmatpush.bf16.msra.mxu0 %v4463
    %6885 = vmatpush.bf16.msra.mxu0 %v4461
    %6886 = vmatpush.bf16.msra.mxu0 %v4459
    %6887 = vmatmul.bf16.gmra.mxu0 %v1159
    %v6888 = vpop.f32.mrf.mxu0
    %v6889 = vadd.f32 %v6876, %v6888
    %v6890 = vpop.f32.mrf.mxu0
    %6891 = vdwg.mxu0
    %6892 = vmatpush.bf16.msra.mxu0 %v4489
    %6893 = vmatpush.bf16.msra.mxu0 %v4487
    %6894 = vmatpush.bf16.msra.mxu0 %v4485
    %6895 = vmatpush.bf16.msra.mxu0 %v4483
    %6896 = vmatpush.bf16.msra.mxu0 %v4481
    %6897 = vmatpush.bf16.msra.mxu0 %v4479
    %6898 = vmatpush.bf16.msra.mxu0 %v4477
    %6899 = vmatpush.bf16.msra.mxu0 %v4475
    %6900 = vmatmul.bf16.gmra.mxu0 %v1160
    %v6901 = vpop.f32.mrf.mxu0
    %v6902 = vadd.f32 %v6889, %v6901
    %v6903 = vpop.f32.mrf.mxu0
    %6904 = vdwg.mxu0
    %6905 = vmatpush.bf16.msra.mxu0 %v4505
    %6906 = vmatpush.bf16.msra.mxu0 %v4503
    %6907 = vmatpush.bf16.msra.mxu0 %v4501
    %6908 = vmatpush.bf16.msra.mxu0 %v4499
    %6909 = vmatpush.bf16.msra.mxu0 %v4497
    %6910 = vmatpush.bf16.msra.mxu0 %v4495
    %6911 = vmatpush.bf16.msra.mxu0 %v4493
    %6912 = vmatpush.bf16.msra.mxu0 %v4491
    %6913 = vmatmul.bf16.gmra.mxu0 %v1161
    %v6914 = vpop.f32.mrf.mxu0
    %v6915 = vadd.f32 %v6902, %v6914
    %v6916 = vpop.f32.mrf.mxu0
    %6917 = vdwg.mxu0
    %6918 = vmatpush.bf16.msra.mxu0 %v4521
    %6919 = vmatpush.bf16.msra.mxu0 %v4519
    %6920 = vmatpush.bf16.msra.mxu0 %v4517
    %6921 = vmatpush.bf16.msra.mxu0 %v4515
    %6922 = vmatpush.bf16.msra.mxu0 %v4513
    %6923 = vmatpush.bf16.msra.mxu0 %v4511
    %6924 = vmatpush.bf16.msra.mxu0 %v4509
    %6925 = vmatpush.bf16.msra.mxu0 %v4507
    %6926 = vmatmul.bf16.gmra.mxu0 %v1162
    %v6927 = vpop.f32.mrf.mxu0
    %v6928 = vadd.f32 %v6915, %v6927
    %v6929 = vpop.f32.mrf.mxu0
    %6930 = vdwg.mxu0
    %6931 = vmatpush.bf16.msra.mxu0 %v4537
    %6932 = vmatpush.bf16.msra.mxu0 %v4535
    %6933 = vmatpush.bf16.msra.mxu0 %v4533
    %6934 = vmatpush.bf16.msra.mxu0 %v4531
    %6935 = vmatpush.bf16.msra.mxu0 %v4529
    %6936 = vmatpush.bf16.msra.mxu0 %v4527
    %6937 = vmatpush.bf16.msra.mxu0 %v4525
    %6938 = vmatpush.bf16.msra.mxu0 %v4523
    %6939 = vmatmul.bf16.gmra.mxu0 %v1163
    %v6940 = vpop.f32.mrf.mxu0
    %v6941 = vadd.f32 %v6928, %v6940
    %v6942 = vpop.f32.mrf.mxu0
    %6943 = vdwg.mxu0
    %6944 = vmatpush.bf16.msra.mxu0 %v4553
    %6945 = vmatpush.bf16.msra.mxu0 %v4551
    %6946 = vmatpush.bf16.msra.mxu0 %v4549
    %6947 = vmatpush.bf16.msra.mxu0 %v4547
    %6948 = vmatpush.bf16.msra.mxu0 %v4545
    %6949 = vmatpush.bf16.msra.mxu0 %v4543
    %6950 = vmatpush.bf16.msra.mxu0 %v4541
    %6951 = vmatpush.bf16.msra.mxu0 %v4539
    %6952 = vmatmul.bf16.gmra.mxu0 %v1164
    %v6953 = vpop.f32.mrf.mxu0
    %v6954 = vadd.f32 %v6941, %v6953
    %v6955 = vpop.f32.mrf.mxu0
    %6956 = vdwg.mxu0
    %6957 = vmatpush.bf16.msra.mxu0 %v4569
    %6958 = vmatpush.bf16.msra.mxu0 %v4567
    %6959 = vmatpush.bf16.msra.mxu0 %v4565
    %6960 = vmatpush.bf16.msra.mxu0 %v4563
    %6961 = vmatpush.bf16.msra.mxu0 %v4561
    %6962 = vmatpush.bf16.msra.mxu0 %v4559
    %6963 = vmatpush.bf16.msra.mxu0 %v4557
    %6964 = vmatpush.bf16.msra.mxu0 %v4555
    %6965 = vmatmul.bf16.gmra.mxu0 %v1165
    %v6966 = vpop.f32.mrf.mxu0
    %v6967 = vadd.f32 %v6954, %v6966
    %v6968 = vpop.f32.mrf.mxu0
    %6969 = vdwg.mxu0
    %6970 = vmatpush.bf16.msra.mxu0 %v4585
    %6971 = vmatpush.bf16.msra.mxu0 %v4583
    %6972 = vmatpush.bf16.msra.mxu0 %v4581
    %6973 = vmatpush.bf16.msra.mxu0 %v4579
    %6974 = vmatpush.bf16.msra.mxu0 %v4577
    %6975 = vmatpush.bf16.msra.mxu0 %v4575
    %6976 = vmatpush.bf16.msra.mxu0 %v4573
    %6977 = vmatpush.bf16.msra.mxu0 %v4571
    %6978 = vmatmul.bf16.gmra.mxu0 %v1168
    %v6979 = vpop.f32.mrf.mxu0
    %v6980 = vadd.f32 %v6967, %v6979
    %v6981 = vpop.f32.mrf.mxu0
    %6982 = vdwg.mxu0
    %6983 = vmatpush.bf16.msra.mxu0 %v4601
    %6984 = vmatpush.bf16.msra.mxu0 %v4599
    %6985 = vmatpush.bf16.msra.mxu0 %v4597
    %6986 = vmatpush.bf16.msra.mxu0 %v4595
    %6987 = vmatpush.bf16.msra.mxu0 %v4593
    %6988 = vmatpush.bf16.msra.mxu0 %v4591
    %6989 = vmatpush.bf16.msra.mxu0 %v4589
    %6990 = vmatpush.bf16.msra.mxu0 %v4587
    %6991 = vmatmul.bf16.gmra.mxu0 %v1169
    %v6992 = vpop.f32.mrf.mxu0
    %v6993 = vadd.f32 %v6980, %v6992
    %v6994 = vpop.f32.mrf.mxu0
    %6995 = vdwg.mxu0
    %6996 = vmatpush.bf16.msra.mxu0 %v4617
    %6997 = vmatpush.bf16.msra.mxu0 %v4615
    %6998 = vmatpush.bf16.msra.mxu0 %v4613
    %6999 = vmatpush.bf16.msra.mxu0 %v4611
    %7000 = vmatpush.bf16.msra.mxu0 %v4609
    %7001 = vmatpush.bf16.msra.mxu0 %v4607
    %7002 = vmatpush.bf16.msra.mxu0 %v4605
    %7003 = vmatpush.bf16.msra.mxu0 %v4603
    %7004 = vmatmul.bf16.gmra.mxu0 %v1170
    %v7005 = vpop.f32.mrf.mxu0
    %v7006 = vadd.f32 %v6993, %v7005
    %v7007 = vpop.f32.mrf.mxu0
    %7008 = vdwg.mxu0
    %7009 = vmatpush.bf16.msra.mxu0 %v4633
    %7010 = vmatpush.bf16.msra.mxu0 %v4631
    %7011 = vmatpush.bf16.msra.mxu0 %v4629
    %7012 = vmatpush.bf16.msra.mxu0 %v4627
    %7013 = vmatpush.bf16.msra.mxu0 %v4625
    %7014 = vmatpush.bf16.msra.mxu0 %v4623
    %7015 = vmatpush.bf16.msra.mxu0 %v4621
    %7016 = vmatpush.bf16.msra.mxu0 %v4619
    %7017 = vmatmul.bf16.gmra.mxu0 %v1171
    %v7018 = vpop.f32.mrf.mxu0
    %v7019 = vadd.f32 %v7006, %v7018
    %v7020 = vpop.f32.mrf.mxu0
    %7021 = vdwg.mxu0
    %7022 = vmatpush.bf16.msra.mxu0 %v4649
    %7023 = vmatpush.bf16.msra.mxu0 %v4647
    %7024 = vmatpush.bf16.msra.mxu0 %v4645
    %7025 = vmatpush.bf16.msra.mxu0 %v4643
    %7026 = vmatpush.bf16.msra.mxu0 %v4641
    %7027 = vmatpush.bf16.msra.mxu0 %v4639
    %7028 = vmatpush.bf16.msra.mxu0 %v4637
    %7029 = vmatpush.bf16.msra.mxu0 %v4635
    %7030 = vmatmul.bf16.gmra.mxu0 %v1172
    %v7031 = vpop.f32.mrf.mxu0
    %v7032 = vadd.f32 %v7019, %v7031
    %v7033 = vpop.f32.mrf.mxu0
    %7034 = vdwg.mxu0
    %7035 = vmatpush.bf16.msra.mxu0 %v4665
    %7036 = vmatpush.bf16.msra.mxu0 %v4663
    %7037 = vmatpush.bf16.msra.mxu0 %v4661
    %7038 = vmatpush.bf16.msra.mxu0 %v4659
    %7039 = vmatpush.bf16.msra.mxu0 %v4657
    %7040 = vmatpush.bf16.msra.mxu0 %v4655
    %7041 = vmatpush.bf16.msra.mxu0 %v4653
    %7042 = vmatpush.bf16.msra.mxu0 %v4651
    %7043 = vmatmul.bf16.gmra.mxu0 %v1173
    %v7044 = vpop.f32.mrf.mxu0
    %v7045 = vadd.f32 %v7032, %v7044
    %v7046 = vpop.f32.mrf.mxu0
    %7047 = vdwg.mxu0
    %7048 = vmatpush.bf16.msra.mxu0 %v4681
    %7049 = vmatpush.bf16.msra.mxu0 %v4679
    %7050 = vmatpush.bf16.msra.mxu0 %v4677
    %7051 = vmatpush.bf16.msra.mxu0 %v4675
    %7052 = vmatpush.bf16.msra.mxu0 %v4673
    %7053 = vmatpush.bf16.msra.mxu0 %v4671
    %7054 = vmatpush.bf16.msra.mxu0 %v4669
    %7055 = vmatpush.bf16.msra.mxu0 %v4667
    %7056 = vmatmul.bf16.gmra.mxu0 %v1174
    %v7057 = vpop.f32.mrf.mxu0
    %v7058 = vadd.f32 %v7045, %v7057
    %v7059 = vpop.f32.mrf.mxu0
    %7060 = vdwg.mxu0
    %7061 = vmatpush.bf16.msra.mxu0 %v4697
    %7062 = vmatpush.bf16.msra.mxu0 %v4695
    %7063 = vmatpush.bf16.msra.mxu0 %v4693
    %7064 = vmatpush.bf16.msra.mxu0 %v4691
    %7065 = vmatpush.bf16.msra.mxu0 %v4689
    %7066 = vmatpush.bf16.msra.mxu0 %v4687
    %7067 = vmatpush.bf16.msra.mxu0 %v4685
    %7068 = vmatpush.bf16.msra.mxu0 %v4683
    %7069 = vmatmul.bf16.gmra.mxu0 %v1175
    %v7070 = vpop.f32.mrf.mxu0
    %v7071 = vadd.f32 %v7058, %v7070
    %v7072 = vpop.f32.mrf.mxu0
    %7073 = vdwg.mxu0
    %7074 = vmatpush.bf16.msra.mxu0 %v4713
    %7075 = vmatpush.bf16.msra.mxu0 %v4711
    %7076 = vmatpush.bf16.msra.mxu0 %v4709
    %7077 = vmatpush.bf16.msra.mxu0 %v4707
    %7078 = vmatpush.bf16.msra.mxu0 %v4705
    %7079 = vmatpush.bf16.msra.mxu0 %v4703
    %7080 = vmatpush.bf16.msra.mxu0 %v4701
    %7081 = vmatpush.bf16.msra.mxu0 %v4699
    %7082 = vmatmul.bf16.gmra.mxu0 %v1178
    %v7083 = vpop.f32.mrf.mxu0
    %v7084 = vadd.f32 %v7071, %v7083
    %v7085 = vpop.f32.mrf.mxu0
    %7086 = vdwg.mxu0
    %7087 = vmatpush.bf16.msra.mxu0 %v4729
    %7088 = vmatpush.bf16.msra.mxu0 %v4727
    %7089 = vmatpush.bf16.msra.mxu0 %v4725
    %7090 = vmatpush.bf16.msra.mxu0 %v4723
    %7091 = vmatpush.bf16.msra.mxu0 %v4721
    %7092 = vmatpush.bf16.msra.mxu0 %v4719
    %7093 = vmatpush.bf16.msra.mxu0 %v4717
    %7094 = vmatpush.bf16.msra.mxu0 %v4715
    %7095 = vmatmul.bf16.gmra.mxu0 %v1179
    %v7096 = vpop.f32.mrf.mxu0
    %v7097 = vadd.f32 %v7084, %v7096
    %v7098 = vpop.f32.mrf.mxu0
    %7099 = vdwg.mxu0
    %7100 = vmatpush.bf16.msra.mxu0 %v4745
    %7101 = vmatpush.bf16.msra.mxu0 %v4743
    %7102 = vmatpush.bf16.msra.mxu0 %v4741
    %7103 = vmatpush.bf16.msra.mxu0 %v4739
    %7104 = vmatpush.bf16.msra.mxu0 %v4737
    %7105 = vmatpush.bf16.msra.mxu0 %v4735
    %7106 = vmatpush.bf16.msra.mxu0 %v4733
    %7107 = vmatpush.bf16.msra.mxu0 %v4731
    %7108 = vmatmul.bf16.gmra.mxu0 %v1180
    %v7109 = vpop.f32.mrf.mxu0
    %v7110 = vadd.f32 %v7097, %v7109
    %v7111 = vpop.f32.mrf.mxu0
    %7112 = vdwg.mxu0
    %7113 = vmatpush.bf16.msra.mxu0 %v4761
    %7114 = vmatpush.bf16.msra.mxu0 %v4759
    %7115 = vmatpush.bf16.msra.mxu0 %v4757
    %7116 = vmatpush.bf16.msra.mxu0 %v4755
    %7117 = vmatpush.bf16.msra.mxu0 %v4753
    %7118 = vmatpush.bf16.msra.mxu0 %v4751
    %7119 = vmatpush.bf16.msra.mxu0 %v4749
    %7120 = vmatpush.bf16.msra.mxu0 %v4747
    %7121 = vmatmul.bf16.gmra.mxu0 %v1181
    %v7122 = vpop.f32.mrf.mxu0
    %v7123 = vadd.f32 %v7110, %v7122
    %v7124 = vpop.f32.mrf.mxu0
    %7125 = vdwg.mxu0
    %7126 = vmatpush.bf16.msra.mxu0 %v4777
    %7127 = vmatpush.bf16.msra.mxu0 %v4775
    %7128 = vmatpush.bf16.msra.mxu0 %v4773
    %7129 = vmatpush.bf16.msra.mxu0 %v4771
    %7130 = vmatpush.bf16.msra.mxu0 %v4769
    %7131 = vmatpush.bf16.msra.mxu0 %v4767
    %7132 = vmatpush.bf16.msra.mxu0 %v4765
    %7133 = vmatpush.bf16.msra.mxu0 %v4763
    %7134 = vmatmul.bf16.gmra.mxu0 %v1182
    %v7135 = vpop.f32.mrf.mxu0
    %v7136 = vadd.f32 %v7123, %v7135
    %v7137 = vpop.f32.mrf.mxu0
    %7138 = vdwg.mxu0
    %7139 = vmatpush.bf16.msra.mxu0 %v4793
    %7140 = vmatpush.bf16.msra.mxu0 %v4791
    %7141 = vmatpush.bf16.msra.mxu0 %v4789
    %7142 = vmatpush.bf16.msra.mxu0 %v4787
    %7143 = vmatpush.bf16.msra.mxu0 %v4785
    %7144 = vmatpush.bf16.msra.mxu0 %v4783
    %7145 = vmatpush.bf16.msra.mxu0 %v4781
    %7146 = vmatpush.bf16.msra.mxu0 %v4779
    %7147 = vmatmul.bf16.gmra.mxu0 %v1183
    %v7148 = vpop.f32.mrf.mxu0
    %v7149 = vadd.f32 %v7136, %v7148
    %v7150 = vpop.f32.mrf.mxu0
    %7151 = vdwg.mxu0
    %7152 = vmatpush.bf16.msra.mxu0 %v4809
    %7153 = vmatpush.bf16.msra.mxu0 %v4807
    %7154 = vmatpush.bf16.msra.mxu0 %v4805
    %7155 = vmatpush.bf16.msra.mxu0 %v4803
    %7156 = vmatpush.bf16.msra.mxu0 %v4801
    %7157 = vmatpush.bf16.msra.mxu0 %v4799
    %7158 = vmatpush.bf16.msra.mxu0 %v4797
    %7159 = vmatpush.bf16.msra.mxu0 %v4795
    %7160 = vmatmul.bf16.gmra.mxu0 %v1184
    %v7161 = vpop.f32.mrf.mxu0
    %v7162 = vadd.f32 %v7149, %v7161
    %v7163 = vpop.f32.mrf.mxu0
    %7164 = vdwg.mxu0
    %7165 = vmatpush.bf16.msra.mxu0 %v4825
    %7166 = vmatpush.bf16.msra.mxu0 %v4823
    %7167 = vmatpush.bf16.msra.mxu0 %v4821
    %7168 = vmatpush.bf16.msra.mxu0 %v4819
    %7169 = vmatpush.bf16.msra.mxu0 %v4817
    %7170 = vmatpush.bf16.msra.mxu0 %v4815
    %7171 = vmatpush.bf16.msra.mxu0 %v4813
    %7172 = vmatpush.bf16.msra.mxu0 %v4811
    %7173 = vmatmul.bf16.gmra.mxu0 %v1185
    %v7174 = vpop.f32.mrf.mxu0
    %v7175 = vadd.f32 %v7162, %v7174
    %v7176 = vpop.f32.mrf.mxu0
    %7177 = vdwg.mxu0
    %v7178 = vmax.f32 %v6447, 0.0
    %v7179 = vmax.f32 %v7175, 0.0
    %v7180 = vpack.c.bf16 %v7178, %v7178
    %v7181 = vpack.c.bf16 %v7179, %v7179
    %v7182 = vld [vmem:[#allocation7] sm:$0xf]
    %v7183 = vld [vmem:[#allocation7 + $0x4] sm:$0xf]
    %v7184 = vld [vmem:[#allocation7 + $0x8] sm:$0xf]
    %v7185 = vld [vmem:[#allocation7 + $0xc] sm:$0xf]
    %v7186 = vld [vmem:[#allocation7 + $0x10] sm:$0xf]
    %v7187 = vld [vmem:[#allocation7 + $0x14] sm:$0xf]
    %v7188 = vld [vmem:[#allocation7 + $0x18] sm:$0xf]
    %v7189 = vld [vmem:[#allocation7 + $0x1c] sm:$0xf]
    %v7190 = vld [vmem:[#allocation7 + $0x20] sm:$0xf]
    %v7191 = vld [vmem:[#allocation7 + $0x24] sm:$0xf]
    %v7192 = vld [vmem:[#allocation7 + $0x28] sm:$0xf]
    %v7193 = vld [vmem:[#allocation7 + $0x2c] sm:$0xf]
    %v7194 = vld [vmem:[#allocation7 + $0x30] sm:$0xf]
    %v7195 = vld [vmem:[#allocation7 + $0x34] sm:$0xf]
    %v7196 = vld [vmem:[#allocation7 + $0x38] sm:$0xf]
    %v7197 = vld [vmem:[#allocation7 + $0x3c] sm:$0xf]
    %v7198 = vld [vmem:[#allocation7 + $0x40] sm:$0xf]
    %v7199 = vld [vmem:[#allocation7 + $0x44] sm:$0xf]
    %v7200 = vld [vmem:[#allocation7 + $0x48] sm:$0xf]
    %v7201 = vld [vmem:[#allocation7 + $0x4c] sm:$0xf]
    %v7202 = vld [vmem:[#allocation7 + $0x50] sm:$0xf]
    %v7203 = vld [vmem:[#allocation7 + $0x54] sm:$0xf]
    %v7204 = vld [vmem:[#allocation7 + $0x58] sm:$0xf]
    %v7205 = vld [vmem:[#allocation7 + $0x5c] sm:$0xf]
    %v7206 = vld [vmem:[#allocation7 + $0x60] sm:$0xf]
    %v7207 = vld [vmem:[#allocation7 + $0x64] sm:$0xf]
    %v7208 = vld [vmem:[#allocation7 + $0x68] sm:$0xf]
    %v7209 = vld [vmem:[#allocation7 + $0x6c] sm:$0xf]
    %v7210 = vld [vmem:[#allocation7 + $0x70] sm:$0xf]
    %v7211 = vld [vmem:[#allocation7 + $0x74] sm:$0xf]
    %v7212 = vld [vmem:[#allocation7 + $0x78] sm:$0xf]
    %v7213 = vld [vmem:[#allocation7 + $0x7c] sm:$0xf]
    %v7214 = vld [vmem:[#allocation8] sm:$0x1]
    %v7216 = vperm.slane %v7214, 0
    %v7250 = vunpack.c.l.b16 %v7182
    %v7251 = vunpack.c.l.b16 %v7183
    %v7252 = vunpack.c.l.b16 %v7184
    %v7253 = vunpack.c.l.b16 %v7185
    %v7254 = vunpack.c.l.b16 %v7186
    %v7255 = vunpack.c.l.b16 %v7187
    %v7256 = vunpack.c.l.b16 %v7188
    %v7257 = vunpack.c.l.b16 %v7189
    %v7258 = vunpack.c.l.b16 %v7190
    %v7259 = vunpack.c.l.b16 %v7191
    %v7260 = vunpack.c.l.b16 %v7192
    %v7261 = vunpack.c.l.b16 %v7193
    %v7262 = vunpack.c.l.b16 %v7194
    %v7263 = vunpack.c.l.b16 %v7195
    %v7264 = vunpack.c.l.b16 %v7196
    %v7265 = vunpack.c.l.b16 %v7197
    %v7266 = vunpack.c.l.b16 %v7198
    %v7267 = vunpack.c.l.b16 %v7199
    %v7268 = vunpack.c.l.b16 %v7200
    %v7269 = vunpack.c.l.b16 %v7201
    %v7270 = vunpack.c.l.b16 %v7202
    %v7271 = vunpack.c.l.b16 %v7203
    %v7272 = vunpack.c.l.b16 %v7204
    %v7273 = vunpack.c.l.b16 %v7205
    %v7274 = vunpack.c.l.b16 %v7206
    %v7275 = vunpack.c.l.b16 %v7207
    %v7276 = vunpack.c.l.b16 %v7208
    %v7277 = vunpack.c.l.b16 %v7209
    %v7278 = vunpack.c.l.b16 %v7210
    %v7279 = vunpack.c.l.b16 %v7211
    %v7280 = vunpack.c.l.b16 %v7212
    %v7281 = vunpack.c.l.b16 %v7213
    %v7282 = vpack.c.b16 %v7251, %v7250
    %v7283 = vpack.c.b16 %v7253, %v7252
    %v7284 = vpack.c.b16 %v7255, %v7254
    %v7285 = vpack.c.b16 %v7257, %v7256
    %v7286 = vpack.c.b16 %v7259, %v7258
    %v7287 = vpack.c.b16 %v7261, %v7260
    %v7288 = vpack.c.b16 %v7263, %v7262
    %v7289 = vpack.c.b16 %v7265, %v7264
    %v7290 = vpack.c.b16 %v7267, %v7266
    %v7291 = vpack.c.b16 %v7269, %v7268
    %v7292 = vpack.c.b16 %v7271, %v7270
    %v7293 = vpack.c.b16 %v7273, %v7272
    %v7294 = vpack.c.b16 %v7275, %v7274
    %v7295 = vpack.c.b16 %v7277, %v7276
    %v7296 = vpack.c.b16 %v7279, %v7278
    %v7297 = vpack.c.b16 %v7281, %v7280
    %7314 = vmatpush.bf16.msra.mxu0 %v7289
    %7315 = vmatpush.bf16.msra.mxu0 %v7288
    %7316 = vmatpush.bf16.msra.mxu0 %v7287
    %7317 = vmatpush.bf16.msra.mxu0 %v7286
    %7318 = vmatpush.bf16.msra.mxu0 %v7285
    %7319 = vmatpush.bf16.msra.mxu0 %v7284
    %7320 = vmatpush.bf16.msra.mxu0 %v7283
    %7321 = vmatpush.bf16.msra.mxu0 %v7282
    %7322 = vmatmul.bf16.gmra.mxu0 %v7180
    %v7323 = vpop.f32.mrf.mxu0
    %v7324 = vadd.f32 %v7216, %v7323
    %v7325 = vpop.f32.mrf.mxu0
    %7326 = vdwg.mxu0
    %7327 = vmatpush.bf16.msra.mxu0 %v7297
    %7328 = vmatpush.bf16.msra.mxu0 %v7296
    %7329 = vmatpush.bf16.msra.mxu0 %v7295
    %7330 = vmatpush.bf16.msra.mxu0 %v7294
    %7331 = vmatpush.bf16.msra.mxu0 %v7293
    %7332 = vmatpush.bf16.msra.mxu0 %v7292
    %7333 = vmatpush.bf16.msra.mxu0 %v7291
    %7334 = vmatpush.bf16.msra.mxu0 %v7290
    %7335 = vmatmul.bf16.gmra.mxu0 %v7181
    %v7336 = vpop.f32.mrf.mxu0
    %v7337 = vadd.f32 %v7324, %v7336
    %v7338 = vpop.f32.mrf.mxu0
    %7339 = vdwg.mxu0
    %v7340 = vld [vmem:[%s5] sm:$0x7f]
    %v7341 = vld [vmem:[#allocation10] sm:$0xf]
    %v7342 = vld [vmem:[#allocation10 + $0x4] sm:$0xf]
    %v7343 = vld [vmem:[#allocation10 + $0x8] sm:$0xf]
    %v7344 = vld [vmem:[#allocation10 + $0xc] sm:$0xf]
    %v7345 = vld [vmem:[#allocation10 + $0x10] sm:$0xf]
    %v7346 = vld [vmem:[#allocation10 + $0x14] sm:$0xf]
    %v7347 = vld [vmem:[#allocation10 + $0x18] sm:$0xf]
    %v7348 = vld [vmem:[#allocation10 + $0x1c] sm:$0xf]
    %v7349 = vld [vmem:[#allocation10 + $0x20] sm:$0xf]
    %v7350 = vld [vmem:[#allocation10 + $0x24] sm:$0xf]
    %v7351 = vld [vmem:[#allocation10 + $0x28] sm:$0xf]
    %v7352 = vld [vmem:[#allocation10 + $0x2c] sm:$0xf]
    %v7353 = vld [vmem:[#allocation10 + $0x30] sm:$0xf]
    %v7354 = vld [vmem:[#allocation10 + $0x34] sm:$0xf]
    %v7355 = vld [vmem:[#allocation10 + $0x38] sm:$0xf]
    %v7356 = vld [vmem:[#allocation10 + $0x3c] sm:$0xf]
    %v7357 = vld [vmem:[#allocation10 + $0x40] sm:$0xf]
    %v7358 = vld [vmem:[#allocation10 + $0x44] sm:$0xf]
    %v7359 = vld [vmem:[#allocation10 + $0x48] sm:$0xf]
    %v7360 = vld [vmem:[#allocation10 + $0x4c] sm:$0xf]
    %v7361 = vld [vmem:[#allocation10 + $0x50] sm:$0xf]
    %v7362 = vld [vmem:[#allocation10 + $0x54] sm:$0xf]
    %v7363 = vld [vmem:[#allocation10 + $0x58] sm:$0xf]
    %v7364 = vld [vmem:[#allocation10 + $0x5c] sm:$0xf]
    %v7365 = vld [vmem:[#allocation10 + $0x60] sm:$0xf]
    %v7366 = vld [vmem:[#allocation10 + $0x64] sm:$0xf]
    %v7367 = vld [vmem:[#allocation10 + $0x68] sm:$0xf]
    %v7368 = vld [vmem:[#allocation10 + $0x6c] sm:$0xf]
    %v7369 = vld [vmem:[#allocation10 + $0x70] sm:$0xf]
    %v7370 = vld [vmem:[#allocation10 + $0x74] sm:$0xf]
    %v7371 = vld [vmem:[#allocation10 + $0x78] sm:$0xf]
    %v7372 = vld [vmem:[#allocation10 + $0x7c] sm:$0xf]
    %v7373 = vld [vmem:[#allocation10 + $0x80] sm:$0xf]
    %v7374 = vld [vmem:[#allocation10 + $0x84] sm:$0xf]
    %v7375 = vld [vmem:[#allocation10 + $0x88] sm:$0xf]
    %v7376 = vld [vmem:[#allocation10 + $0x8c] sm:$0xf]
    %v7377 = vld [vmem:[#allocation10 + $0x90] sm:$0xf]
    %v7378 = vld [vmem:[#allocation10 + $0x94] sm:$0xf]
    %v7379 = vld [vmem:[#allocation10 + $0x98] sm:$0xf]
    %v7380 = vld [vmem:[#allocation10 + $0x9c] sm:$0xf]
    %v7381 = vld [vmem:[#allocation10 + $0xa0] sm:$0xf]
    %v7382 = vld [vmem:[#allocation10 + $0xa4] sm:$0xf]
    %v7383 = vld [vmem:[#allocation10 + $0xa8] sm:$0xf]
    %v7384 = vld [vmem:[#allocation10 + $0xac] sm:$0xf]
    %v7385 = vld [vmem:[#allocation10 + $0xb0] sm:$0xf]
    %v7386 = vld [vmem:[#allocation10 + $0xb4] sm:$0xf]
    %v7387 = vld [vmem:[#allocation10 + $0xb8] sm:$0xf]
    %v7388 = vld [vmem:[#allocation10 + $0xbc] sm:$0xf]
    %v7389 = vld [vmem:[#allocation10 + $0xc0] sm:$0xf]
    %v7390 = vld [vmem:[#allocation10 + $0xc4] sm:$0xf]
    %v7391 = vld [vmem:[#allocation10 + $0xc8] sm:$0xf]
    %v7392 = vld [vmem:[#allocation10 + $0xcc] sm:$0xf]
    %v7393 = vld [vmem:[#allocation10 + $0xd0] sm:$0xf]
    %v7394 = vld [vmem:[#allocation10 + $0xd4] sm:$0xf]
    %v7395 = vld [vmem:[#allocation10 + $0xd8] sm:$0xf]
    %v7396 = vld [vmem:[#allocation10 + $0xdc] sm:$0xf]
    %v7397 = vld [vmem:[#allocation10 + $0xe0] sm:$0xf]
    %v7398 = vld [vmem:[#allocation10 + $0xe4] sm:$0xf]
    %v7399 = vld [vmem:[#allocation10 + $0xe8] sm:$0xf]
    %v7400 = vld [vmem:[#allocation10 + $0xec] sm:$0xf]
    %v7401 = vld [vmem:[#allocation10 + $0xf0] sm:$0xf]
    %v7402 = vld [vmem:[#allocation10 + $0xf4] sm:$0xf]
    %v7403 = vld [vmem:[#allocation10 + $0xf8] sm:$0xf]
    %v7404 = vld [vmem:[#allocation10 + $0xfc] sm:$0xf]
    %v7405 = vld [vmem:[#allocation10 + $0x100] sm:$0xf]
    %v7406 = vld [vmem:[#allocation10 + $0x104] sm:$0xf]
    %v7407 = vld [vmem:[#allocation10 + $0x108] sm:$0xf]
    %v7408 = vld [vmem:[#allocation10 + $0x10c] sm:$0xf]
    %v7409 = vld [vmem:[#allocation10 + $0x110] sm:$0xf]
    %v7410 = vld [vmem:[#allocation10 + $0x114] sm:$0xf]
    %v7411 = vld [vmem:[#allocation10 + $0x118] sm:$0xf]
    %v7412 = vld [vmem:[#allocation10 + $0x11c] sm:$0xf]
    %v7413 = vld [vmem:[#allocation10 + $0x120] sm:$0xf]
    %v7414 = vld [vmem:[#allocation10 + $0x124] sm:$0xf]
    %v7415 = vld [vmem:[#allocation10 + $0x128] sm:$0xf]
    %v7416 = vld [vmem:[#allocation10 + $0x12c] sm:$0xf]
    %v7417 = vld [vmem:[#allocation10 + $0x130] sm:$0xf]
    %v7418 = vld [vmem:[#allocation10 + $0x134] sm:$0xf]
    %v7419 = vld [vmem:[#allocation10 + $0x138] sm:$0xf]
    %v7420 = vld [vmem:[#allocation10 + $0x13c] sm:$0xf]
    %v7421 = vld [vmem:[#allocation10 + $0x140] sm:$0xf]
    %v7422 = vld [vmem:[#allocation10 + $0x144] sm:$0xf]
    %v7423 = vld [vmem:[#allocation10 + $0x148] sm:$0xf]
    %v7424 = vld [vmem:[#allocation10 + $0x14c] sm:$0xf]
    %v7425 = vld [vmem:[#allocation10 + $0x150] sm:$0xf]
    %v7426 = vld [vmem:[#allocation10 + $0x154] sm:$0xf]
    %v7427 = vld [vmem:[#allocation10 + $0x158] sm:$0xf]
    %v7428 = vld [vmem:[#allocation10 + $0x15c] sm:$0xf]
    %v7429 = vld [vmem:[#allocation10 + $0x160] sm:$0xf]
    %v7430 = vld [vmem:[#allocation10 + $0x164] sm:$0xf]
    %v7431 = vld [vmem:[#allocation10 + $0x168] sm:$0xf]
    %v7432 = vld [vmem:[#allocation10 + $0x16c] sm:$0xf]
    %v7433 = vld [vmem:[#allocation10 + $0x170] sm:$0xf]
    %v7434 = vld [vmem:[#allocation10 + $0x174] sm:$0xf]
    %v7435 = vld [vmem:[#allocation10 + $0x178] sm:$0xf]
    %v7436 = vld [vmem:[#allocation10 + $0x17c] sm:$0xf]
    %v7437 = vld [vmem:[#allocation10 + $0x180] sm:$0xf]
    %v7438 = vld [vmem:[#allocation10 + $0x184] sm:$0xf]
    %v7439 = vld [vmem:[#allocation10 + $0x188] sm:$0xf]
    %v7440 = vld [vmem:[#allocation10 + $0x18c] sm:$0xf]
    %v7441 = vld [vmem:[#allocation10 + $0x190] sm:$0xf]
    %v7442 = vld [vmem:[#allocation10 + $0x194] sm:$0xf]
    %v7443 = vld [vmem:[#allocation10 + $0x198] sm:$0xf]
    %v7444 = vld [vmem:[#allocation10 + $0x19c] sm:$0xf]
    %v7445 = vld [vmem:[#allocation10 + $0x1a0] sm:$0xf]
    %v7446 = vld [vmem:[#allocation11] sm:$0x1]
    %v7448 = vperm.slane %v7446, 0
    %7451 = vst [vmem:[#allocation1] ss:$9 sm:$0xff] %v7340
    %v7452 = vld [vmem:[#allocation1] sm:$0xff]
    %v7453 = vld [vmem:[#allocation1 + $0x9] sm:$0xff]
    %v7454 = vld [vmem:[#allocation1 + $0x12] sm:$0xff]
    %v7455 = vld [vmem:[#allocation1 + $0x1b] sm:$0xff]
    %v7456 = vld [vmem:[#allocation1 + $0x24] sm:$0xff]
    %v7457 = vld [vmem:[#allocation1 + $0x2d] sm:$0xff]
    %v7458 = vld [vmem:[#allocation1 + $0x36] sm:$0xff]
    %v7570 = vunpack.c.l.b16 %v7341
    %v7571 = vunpack.c.l.b16 %v7342
    %v7572 = vunpack.c.l.b16 %v7343
    %v7573 = vunpack.c.l.b16 %v7344
    %v7574 = vunpack.c.l.b16 %v7345
    %v7575 = vunpack.c.l.b16 %v7346
    %v7576 = vunpack.c.l.b16 %v7347
    %v7577 = vunpack.c.l.b16 %v7348
    %v7578 = vunpack.c.l.b16 %v7349
    %v7579 = vunpack.c.l.b16 %v7350
    %v7580 = vunpack.c.l.b16 %v7351
    %v7581 = vunpack.c.l.b16 %v7352
    %v7582 = vunpack.c.l.b16 %v7353
    %v7583 = vunpack.c.l.b16 %v7354
    %v7584 = vunpack.c.l.b16 %v7355
    %v7585 = vunpack.c.l.b16 %v7356
    %v7586 = vunpack.c.l.b16 %v7357
    %v7587 = vunpack.c.l.b16 %v7358
    %v7588 = vunpack.c.l.b16 %v7359
    %v7589 = vunpack.c.l.b16 %v7360
    %v7590 = vunpack.c.l.b16 %v7361
    %v7591 = vunpack.c.l.b16 %v7362
    %v7592 = vunpack.c.l.b16 %v7363
    %v7593 = vunpack.c.l.b16 %v7364
    %v7594 = vunpack.c.l.b16 %v7365
    %v7595 = vunpack.c.l.b16 %v7366
    %v7596 = vunpack.c.l.b16 %v7367
    %v7597 = vunpack.c.l.b16 %v7368
    %v7598 = vunpack.c.l.b16 %v7369
    %v7599 = vunpack.c.l.b16 %v7370
    %v7600 = vunpack.c.l.b16 %v7371
    %v7601 = vunpack.c.l.b16 %v7372
    %v7602 = vunpack.c.l.b16 %v7373
    %v7603 = vunpack.c.l.b16 %v7374
    %v7604 = vunpack.c.l.b16 %v7375
    %v7605 = vunpack.c.l.b16 %v7376
    %v7606 = vunpack.c.l.b16 %v7377
    %v7607 = vunpack.c.l.b16 %v7378
    %v7608 = vunpack.c.l.b16 %v7379
    %v7609 = vunpack.c.l.b16 %v7380
    %v7610 = vunpack.c.l.b16 %v7381
    %v7611 = vunpack.c.l.b16 %v7382
    %v7612 = vunpack.c.l.b16 %v7383
    %v7613 = vunpack.c.l.b16 %v7384
    %v7614 = vunpack.c.l.b16 %v7385
    %v7615 = vunpack.c.l.b16 %v7386
    %v7616 = vunpack.c.l.b16 %v7387
    %v7617 = vunpack.c.l.b16 %v7388
    %v7618 = vunpack.c.l.b16 %v7389
    %v7619 = vunpack.c.l.b16 %v7390
    %v7620 = vunpack.c.l.b16 %v7391
    %v7621 = vunpack.c.l.b16 %v7392
    %v7622 = vunpack.c.l.b16 %v7393
    %v7623 = vunpack.c.l.b16 %v7394
    %v7624 = vunpack.c.l.b16 %v7395
    %v7625 = vunpack.c.l.b16 %v7396
    %v7626 = vunpack.c.l.b16 %v7397
    %v7627 = vunpack.c.l.b16 %v7398
    %v7628 = vunpack.c.l.b16 %v7399
    %v7629 = vunpack.c.l.b16 %v7400
    %v7630 = vunpack.c.l.b16 %v7401
    %v7631 = vunpack.c.l.b16 %v7402
    %v7632 = vunpack.c.l.b16 %v7403
    %v7633 = vunpack.c.l.b16 %v7404
    %v7634 = vunpack.c.l.b16 %v7405
    %v7635 = vunpack.c.l.b16 %v7406
    %v7636 = vunpack.c.l.b16 %v7407
    %v7637 = vunpack.c.l.b16 %v7408
    %v7638 = vunpack.c.l.b16 %v7409
    %v7639 = vunpack.c.l.b16 %v7410
    %v7640 = vunpack.c.l.b16 %v7411
    %v7641 = vunpack.c.l.b16 %v7412
    %v7642 = vunpack.c.l.b16 %v7413
    %v7643 = vunpack.c.l.b16 %v7414
    %v7644 = vunpack.c.l.b16 %v7415
    %v7645 = vunpack.c.l.b16 %v7416
    %v7646 = vunpack.c.l.b16 %v7417
    %v7647 = vunpack.c.l.b16 %v7418
    %v7648 = vunpack.c.l.b16 %v7419
    %v7649 = vunpack.c.l.b16 %v7420
    %v7650 = vunpack.c.l.b16 %v7421
    %v7651 = vunpack.c.l.b16 %v7422
    %v7652 = vunpack.c.l.b16 %v7423
    %v7653 = vunpack.c.l.b16 %v7424
    %v7654 = vunpack.c.l.b16 %v7425
    %v7655 = vunpack.c.l.b16 %v7426
    %v7656 = vunpack.c.l.b16 %v7427
    %v7657 = vunpack.c.l.b16 %v7428
    %v7658 = vunpack.c.l.b16 %v7429
    %v7659 = vunpack.c.l.b16 %v7430
    %v7660 = vunpack.c.l.b16 %v7431
    %v7661 = vunpack.c.l.b16 %v7432
    %v7662 = vunpack.c.l.b16 %v7433
    %v7663 = vunpack.c.l.b16 %v7434
    %v7664 = vunpack.c.l.b16 %v7435
    %v7665 = vunpack.c.l.b16 %v7436
    %v7666 = vunpack.c.l.b16 %v7437
    %v7667 = vunpack.c.l.b16 %v7438
    %v7668 = vunpack.c.l.b16 %v7439
    %v7669 = vunpack.c.l.b16 %v7440
    %v7670 = vunpack.c.l.b16 %v7441
    %v7671 = vunpack.c.l.b16 %v7442
    %v7672 = vunpack.c.l.b16 %v7443
    %v7673 = vunpack.c.l.b16 %v7444
    %v7674 = vunpack.c.l.b16 %v7445
    %v7675 = vpack.c.b16 %v7571, %v7570
    %v7676 = vpack.c.b16 %v7573, %v7572
    %v7677 = vpack.c.b16 %v7575, %v7574
    %v7678 = vpack.c.b16 %v7577, %v7576
    %v7679 = vpack.c.b16 %v7579, %v7578
    %v7680 = vpack.c.b16 %v7581, %v7580
    %v7681 = vpack.c.b16 %v7583, %v7582
    %v7682 = vpack.c.b16 %v7585, %v7584
    %v7683 = vpack.c.b16 %v7587, %v7586
    %v7684 = vpack.c.b16 %v7589, %v7588
    %v7685 = vpack.c.b16 %v7591, %v7590
    %v7686 = vpack.c.b16 %v7593, %v7592
    %v7687 = vpack.c.b16 %v7595, %v7594
    %v7688 = vpack.c.b16 %v7597, %v7596
    %v7689 = vpack.c.b16 %v7599, %v7598
    %v7690 = vpack.c.b16 %v7601, %v7600
    %v7691 = vpack.c.b16 %v7603, %v7602
    %v7692 = vpack.c.b16 %v7605, %v7604
    %v7693 = vpack.c.b16 %v7607, %v7606
    %v7694 = vpack.c.b16 %v7609, %v7608
    %v7695 = vpack.c.b16 %v7611, %v7610
    %v7696 = vpack.c.b16 %v7613, %v7612
    %v7697 = vpack.c.b16 %v7615, %v7614
    %v7698 = vpack.c.b16 %v7617, %v7616
    %v7699 = vpack.c.b16 %v7619, %v7618
    %v7700 = vpack.c.b16 %v7621, %v7620
    %v7701 = vpack.c.b16 %v7623, %v7622
    %v7702 = vpack.c.b16 %v7625, %v7624
    %v7703 = vpack.c.b16 %v7627, %v7626
    %v7704 = vpack.c.b16 %v7629, %v7628
    %v7705 = vpack.c.b16 %v7631, %v7630
    %v7706 = vpack.c.b16 %v7633, %v7632
    %v7707 = vpack.c.b16 %v7635, %v7634
    %v7708 = vpack.c.b16 %v7637, %v7636
    %v7709 = vpack.c.b16 %v7639, %v7638
    %v7710 = vpack.c.b16 %v7641, %v7640
    %v7711 = vpack.c.b16 %v7643, %v7642
    %v7712 = vpack.c.b16 %v7645, %v7644
    %v7713 = vpack.c.b16 %v7647, %v7646
    %v7714 = vpack.c.b16 %v7649, %v7648
    %v7715 = vpack.c.b16 %v7651, %v7650
    %v7716 = vpack.c.b16 %v7653, %v7652
    %v7717 = vpack.c.b16 %v7655, %v7654
    %v7718 = vpack.c.b16 %v7657, %v7656
    %v7719 = vpack.c.b16 %v7659, %v7658
    %v7720 = vpack.c.b16 %v7661, %v7660
    %v7721 = vpack.c.b16 %v7663, %v7662
    %v7722 = vpack.c.b16 %v7665, %v7664
    %v7723 = vpack.c.b16 %v7667, %v7666
    %v7724 = vpack.c.b16 %v7669, %v7668
    %v7725 = vpack.c.b16 %v7671, %v7670
    %v7726 = vpack.c.b16 %v7673, %v7672
    %v7727 = vpack.c.b16 %v7674, %v7674
    %vm7780 = vcmask 588800
    %v7781 = vsel %vm7780, %v7458, 0
    %vm7783 = vcmask 1043456
    %v7785 = vsel %vm7783, %v7727, 0
    %7787 = vmatpush.bf16.msra.mxu0 %v7682
    %7788 = vmatpush.bf16.msra.mxu0 %v7681
    %7789 = vmatpush.bf16.msra.mxu0 %v7680
    %7790 = vmatpush.bf16.msra.mxu0 %v7679
    %7791 = vmatpush.bf16.msra.mxu0 %v7678
    %7792 = vmatpush.bf16.msra.mxu0 %v7677
    %7793 = vmatpush.bf16.msra.mxu0 %v7676
    %7794 = vmatpush.bf16.msra.mxu0 %v7675
    %7795 = vmatmul.bf16.gmra.mxu0 %v7452
    %v7796 = vpop.f32.mrf.mxu0
    %v7797 = vadd.f32 %v7448, %v7796
    %v7798 = vpop.f32.mrf.mxu0
    %7799 = vdwg.mxu0
    %7800 = vmatpush.bf16.msra.mxu0 %v7690
    %7801 = vmatpush.bf16.msra.mxu0 %v7689
    %7802 = vmatpush.bf16.msra.mxu0 %v7688
    %7803 = vmatpush.bf16.msra.mxu0 %v7687
    %7804 = vmatpush.bf16.msra.mxu0 %v7686
    %7805 = vmatpush.bf16.msra.mxu0 %v7685
    %7806 = vmatpush.bf16.msra.mxu0 %v7684
    %7807 = vmatpush.bf16.msra.mxu0 %v7683
    %7808 = vmatmul.bf16.gmra.mxu0 %v7453
    %v7809 = vpop.f32.mrf.mxu0
    %v7810 = vadd.f32 %v7797, %v7809
    %v7811 = vpop.f32.mrf.mxu0
    %7812 = vdwg.mxu0
    %7813 = vmatpush.bf16.msra.mxu0 %v7698
    %7814 = vmatpush.bf16.msra.mxu0 %v7697
    %7815 = vmatpush.bf16.msra.mxu0 %v7696
    %7816 = vmatpush.bf16.msra.mxu0 %v7695
    %7817 = vmatpush.bf16.msra.mxu0 %v7694
    %7818 = vmatpush.bf16.msra.mxu0 %v7693
    %7819 = vmatpush.bf16.msra.mxu0 %v7692
    %7820 = vmatpush.bf16.msra.mxu0 %v7691
    %7821 = vmatmul.bf16.gmra.mxu0 %v7454
    %v7822 = vpop.f32.mrf.mxu0
    %v7823 = vadd.f32 %v7810, %v7822
    %v7824 = vpop.f32.mrf.mxu0
    %7825 = vdwg.mxu0
    %7826 = vmatpush.bf16.msra.mxu0 %v7706
    %7827 = vmatpush.bf16.msra.mxu0 %v7705
    %7828 = vmatpush.bf16.msra.mxu0 %v7704
    %7829 = vmatpush.bf16.msra.mxu0 %v7703
    %7830 = vmatpush.bf16.msra.mxu0 %v7702
    %7831 = vmatpush.bf16.msra.mxu0 %v7701
    %7832 = vmatpush.bf16.msra.mxu0 %v7700
    %7833 = vmatpush.bf16.msra.mxu0 %v7699
    %7834 = vmatmul.bf16.gmra.mxu0 %v7455
    %v7835 = vpop.f32.mrf.mxu0
    %v7836 = vadd.f32 %v7823, %v7835
    %v7837 = vpop.f32.mrf.mxu0
    %7838 = vdwg.mxu0
    %7839 = vmatpush.bf16.msra.mxu0 %v7714
    %7840 = vmatpush.bf16.msra.mxu0 %v7713
    %7841 = vmatpush.bf16.msra.mxu0 %v7712
    %7842 = vmatpush.bf16.msra.mxu0 %v7711
    %7843 = vmatpush.bf16.msra.mxu0 %v7710
    %7844 = vmatpush.bf16.msra.mxu0 %v7709
    %7845 = vmatpush.bf16.msra.mxu0 %v7708
    %7846 = vmatpush.bf16.msra.mxu0 %v7707
    %7847 = vmatmul.bf16.gmra.mxu0 %v7456
    %v7848 = vpop.f32.mrf.mxu0
    %v7849 = vadd.f32 %v7836, %v7848
    %v7850 = vpop.f32.mrf.mxu0
    %7851 = vdwg.mxu0
    %7852 = vmatpush.bf16.msra.mxu0 %v7722
    %7853 = vmatpush.bf16.msra.mxu0 %v7721
    %7854 = vmatpush.bf16.msra.mxu0 %v7720
    %7855 = vmatpush.bf16.msra.mxu0 %v7719
    %7856 = vmatpush.bf16.msra.mxu0 %v7718
    %7857 = vmatpush.bf16.msra.mxu0 %v7717
    %7858 = vmatpush.bf16.msra.mxu0 %v7716
    %7859 = vmatpush.bf16.msra.mxu0 %v7715
    %7860 = vmatmul.bf16.gmra.mxu0 %v7457
    %v7861 = vpop.f32.mrf.mxu0
    %v7862 = vadd.f32 %v7849, %v7861
    %v7863 = vpop.f32.mrf.mxu0
    %7864 = vdwg.mxu0
    %7865 = vmatpush.bf16.msra.mxu0 0
    %7866 = vmatpush.bf16.msra.mxu0 0
    %7867 = vmatpush.bf16.msra.mxu0 0
    %7868 = vmatpush.bf16.msra.mxu0 %v7785
    %7869 = vmatpush.bf16.msra.mxu0 %v7726
    %7870 = vmatpush.bf16.msra.mxu0 %v7725
    %7871 = vmatpush.bf16.msra.mxu0 %v7724
    %7872 = vmatpush.bf16.msra.mxu0 %v7723
    %7873 = vmatmul.bf16.gmra.mxu0 %v7781
    %v7874 = vpop.f32.mrf.mxu0
    %v7875 = vadd.f32 %v7862, %v7874
    %v7876 = vpop.f32.mrf.mxu0
    %7877 = vdwg.mxu0
    %v7878 = vmax.f32 %v7875, 0.0
    %v7879 = vpack.c.bf16 %v7878, %v7878
    %v7880 = vld [vmem:[#allocation13] sm:$0xf]
    %v7881 = vld [vmem:[#allocation13 + $0x4] sm:$0xf]
    %v7882 = vld [vmem:[#allocation13 + $0x8] sm:$0xf]
    %v7883 = vld [vmem:[#allocation13 + $0xc] sm:$0xf]
    %v7884 = vld [vmem:[#allocation13 + $0x10] sm:$0xf]
    %v7885 = vld [vmem:[#allocation13 + $0x14] sm:$0xf]
    %v7886 = vld [vmem:[#allocation13 + $0x18] sm:$0xf]
    %v7887 = vld [vmem:[#allocation13 + $0x1c] sm:$0xf]
    %v7888 = vld [vmem:[#allocation13 + $0x20] sm:$0xf]
    %v7889 = vld [vmem:[#allocation13 + $0x24] sm:$0xf]
    %v7890 = vld [vmem:[#allocation13 + $0x28] sm:$0xf]
    %v7891 = vld [vmem:[#allocation13 + $0x2c] sm:$0xf]
    %v7892 = vld [vmem:[#allocation13 + $0x30] sm:$0xf]
    %v7893 = vld [vmem:[#allocation13 + $0x34] sm:$0xf]
    %v7894 = vld [vmem:[#allocation13 + $0x38] sm:$0xf]
    %v7895 = vld [vmem:[#allocation13 + $0x3c] sm:$0xf]
    %v7896 = vld [vmem:[#allocation14] sm:$0x1]
    %v7898 = vperm.slane %v7896, 0
    %v7916 = vunpack.c.l.b16 %v7880
    %v7917 = vunpack.c.l.b16 %v7881
    %v7918 = vunpack.c.l.b16 %v7882
    %v7919 = vunpack.c.l.b16 %v7883
    %v7920 = vunpack.c.l.b16 %v7884
    %v7921 = vunpack.c.l.b16 %v7885
    %v7922 = vunpack.c.l.b16 %v7886
    %v7923 = vunpack.c.l.b16 %v7887
    %v7924 = vunpack.c.l.b16 %v7888
    %v7925 = vunpack.c.l.b16 %v7889
    %v7926 = vunpack.c.l.b16 %v7890
    %v7927 = vunpack.c.l.b16 %v7891
    %v7928 = vunpack.c.l.b16 %v7892
    %v7929 = vunpack.c.l.b16 %v7893
    %v7930 = vunpack.c.l.b16 %v7894
    %v7931 = vunpack.c.l.b16 %v7895
    %v7932 = vpack.c.b16 %v7917, %v7916
    %v7933 = vpack.c.b16 %v7919, %v7918
    %v7934 = vpack.c.b16 %v7921, %v7920
    %v7935 = vpack.c.b16 %v7923, %v7922
    %v7936 = vpack.c.b16 %v7925, %v7924
    %v7937 = vpack.c.b16 %v7927, %v7926
    %v7938 = vpack.c.b16 %v7929, %v7928
    %v7939 = vpack.c.b16 %v7931, %v7930
    %7948 = vmatpush.bf16.msra.mxu0 %v7939
    %7949 = vmatpush.bf16.msra.mxu0 %v7938
    %7950 = vmatpush.bf16.msra.mxu0 %v7937
    %7951 = vmatpush.bf16.msra.mxu0 %v7936
    %7952 = vmatpush.bf16.msra.mxu0 %v7935
    %7953 = vmatpush.bf16.msra.mxu0 %v7934
    %7954 = vmatpush.bf16.msra.mxu0 %v7933
    %7955 = vmatpush.bf16.msra.mxu0 %v7932
    %7956 = vmatmul.bf16.gmra.mxu0 %v7879
    %v7957 = vpop.f32.mrf.mxu0
    %v7958 = vadd.f32 %v7898, %v7957
    %v7959 = vpop.f32.mrf.mxu0
    %7960 = vdwg.mxu0
    %v7961 = vpack.c.bf16 %v7958, %v7958
    %v7962 = vld [vmem:[#allocation16] sm:$0xf]
    %v7963 = vld [vmem:[#allocation16 + $0x4] sm:$0xf]
    %v7964 = vld [vmem:[#allocation16 + $0x8] sm:$0xf]
    %v7965 = vld [vmem:[#allocation16 + $0xc] sm:$0xf]
    %v7966 = vld [vmem:[#allocation16 + $0x10] sm:$0xf]
    %v7967 = vld [vmem:[#allocation16 + $0x14] sm:$0xf]
    %v7968 = vld [vmem:[#allocation16 + $0x18] sm:$0xf]
    %v7969 = vld [vmem:[#allocation16 + $0x1c] sm:$0xf]
    %v7970 = vld [vmem:[#allocation16 + $0x20] sm:$0xf]
    %v7971 = vld [vmem:[#allocation16 + $0x24] sm:$0xf]
    %v7972 = vld [vmem:[#allocation16 + $0x28] sm:$0xf]
    %v7973 = vld [vmem:[#allocation16 + $0x2c] sm:$0xf]
    %v7974 = vld [vmem:[#allocation16 + $0x30] sm:$0xf]
    %v7975 = vld [vmem:[#allocation16 + $0x34] sm:$0xf]
    %v7976 = vld [vmem:[#allocation16 + $0x38] sm:$0xf]
    %v7977 = vld [vmem:[#allocation16 + $0x3c] sm:$0xf]
    %v7978 = vpack.c.bf16 %v7337, %v7337
    %v7979 = vld [vmem:[#allocation17] sm:$0xf]
    %v7980 = vld [vmem:[#allocation17 + $0x4] sm:$0xf]
    %v7981 = vld [vmem:[#allocation17 + $0x8] sm:$0xf]
    %v7982 = vld [vmem:[#allocation17 + $0xc] sm:$0xf]
    %v7983 = vld [vmem:[#allocation17 + $0x10] sm:$0xf]
    %v7984 = vld [vmem:[#allocation17 + $0x14] sm:$0xf]
    %v7985 = vld [vmem:[#allocation17 + $0x18] sm:$0xf]
    %v7986 = vld [vmem:[#allocation17 + $0x1c] sm:$0xf]
    %v7987 = vld [vmem:[#allocation17 + $0x20] sm:$0xf]
    %v7988 = vld [vmem:[#allocation17 + $0x24] sm:$0xf]
    %v7989 = vld [vmem:[#allocation17 + $0x28] sm:$0xf]
    %v7990 = vld [vmem:[#allocation17 + $0x2c] sm:$0xf]
    %v7991 = vld [vmem:[#allocation17 + $0x30] sm:$0xf]
    %v7992 = vld [vmem:[#allocation17 + $0x34] sm:$0xf]
    %v7993 = vld [vmem:[#allocation17 + $0x38] sm:$0xf]
    %v7994 = vld [vmem:[#allocation17 + $0x3c] sm:$0xf]
    %v8011 = vunpack.c.l.b16 %v7979
    %v8012 = vunpack.c.l.b16 %v7980
    %v8013 = vunpack.c.l.b16 %v7981
    %v8014 = vunpack.c.l.b16 %v7982
    %v8015 = vunpack.c.l.b16 %v7983
    %v8016 = vunpack.c.l.b16 %v7984
    %v8017 = vunpack.c.l.b16 %v7985
    %v8018 = vunpack.c.l.b16 %v7986
    %v8019 = vunpack.c.l.b16 %v7987
    %v8020 = vunpack.c.l.b16 %v7988
    %v8021 = vunpack.c.l.b16 %v7989
    %v8022 = vunpack.c.l.b16 %v7990
    %v8023 = vunpack.c.l.b16 %v7991
    %v8024 = vunpack.c.l.b16 %v7992
    %v8025 = vunpack.c.l.b16 %v7993
    %v8026 = vunpack.c.l.b16 %v7994
    %v8027 = vpack.c.b16 %v8012, %v8011
    %v8028 = vpack.c.b16 %v8014, %v8013
    %v8029 = vpack.c.b16 %v8016, %v8015
    %v8030 = vpack.c.b16 %v8018, %v8017
    %v8031 = vpack.c.b16 %v8020, %v8019
    %v8032 = vpack.c.b16 %v8022, %v8021
    %v8033 = vpack.c.b16 %v8024, %v8023
    %v8034 = vpack.c.b16 %v8026, %v8025
    %8043 = vmatpush.bf16.msra.mxu0 %v8034
    %8044 = vmatpush.bf16.msra.mxu0 %v8033
    %8045 = vmatpush.bf16.msra.mxu0 %v8032
    %8046 = vmatpush.bf16.msra.mxu0 %v8031
    %8047 = vmatpush.bf16.msra.mxu0 %v8030
    %8048 = vmatpush.bf16.msra.mxu0 %v8029
    %8049 = vmatpush.bf16.msra.mxu0 %v8028
    %8050 = vmatpush.bf16.msra.mxu0 %v8027
    %8051 = vmatmul.bf16.gmra.mxu0 %v7978
    %v8052 = vpop.f32.mrf.mxu0
    %v8053 = vadd.f32 0.0, %v8052
    %v8054 = vpop.f32.mrf.mxu0
    %8055 = vdwg.mxu0
    %v8072 = vunpack.c.l.b16 %v7962
    %v8073 = vunpack.c.l.b16 %v7963
    %v8074 = vunpack.c.l.b16 %v7964
    %v8075 = vunpack.c.l.b16 %v7965
    %v8076 = vunpack.c.l.b16 %v7966
    %v8077 = vunpack.c.l.b16 %v7967
    %v8078 = vunpack.c.l.b16 %v7968
    %v8079 = vunpack.c.l.b16 %v7969
    %v8080 = vunpack.c.l.b16 %v7970
    %v8081 = vunpack.c.l.b16 %v7971
    %v8082 = vunpack.c.l.b16 %v7972
    %v8083 = vunpack.c.l.b16 %v7973
    %v8084 = vunpack.c.l.b16 %v7974
    %v8085 = vunpack.c.l.b16 %v7975
    %v8086 = vunpack.c.l.b16 %v7976
    %v8087 = vunpack.c.l.b16 %v7977
    %v8088 = vpack.c.b16 %v8073, %v8072
    %v8089 = vpack.c.b16 %v8075, %v8074
    %v8090 = vpack.c.b16 %v8077, %v8076
    %v8091 = vpack.c.b16 %v8079, %v8078
    %v8092 = vpack.c.b16 %v8081, %v8080
    %v8093 = vpack.c.b16 %v8083, %v8082
    %v8094 = vpack.c.b16 %v8085, %v8084
    %v8095 = vpack.c.b16 %v8087, %v8086
    %8104 = vmatpush.bf16.msra.mxu0 %v8095
    %8105 = vmatpush.bf16.msra.mxu0 %v8094
    %8106 = vmatpush.bf16.msra.mxu0 %v8093
    %8107 = vmatpush.bf16.msra.mxu0 %v8092
    %8108 = vmatpush.bf16.msra.mxu0 %v8091
    %8109 = vmatpush.bf16.msra.mxu0 %v8090
    %8110 = vmatpush.bf16.msra.mxu0 %v8089
    %8111 = vmatpush.bf16.msra.mxu0 %v8088
    %8112 = vmatmul.bf16.gmra.mxu0 %v7961
    %v8113 = vpop.f32.mrf.mxu0
    %v8114 = vadd.f32 %v8053, %v8113
    %v8115 = vpop.f32.mrf.mxu0
    %8116 = vdwg.mxu0
    %v8117 = vld [vmem:[#allocation19] sm:$0x1]
    %v8119 = vperm.slane %v8117, 0
    %v8121 = vadd.f32 %v8114, %v8119
    %8122 = vst [vmem:[#allocation20] sm:$0x3] %v8121
    // Predicated region
    $region98: #{mdpr_forward.5} parent=1 // pred_check
      _
    $region99: #{mdpr_forward.5} parent=1 // pred_check_branch
      %8124 = sbr.rel (0) target = $region101
    $region100: #{mdpr_forward.5} parent=1 // pred_region
      %8126 = vsyncadd [#allocation4], 0
      %s8128 = sshll.u32 [#allocation20], 4
      %s8129 = int_to_ptr.vmem [resolvable:$true] %s8128
      %s8130 = sshll.u32 %s13, 4
      %s8131 = int_to_ptr.hbm [resolvable:$true] %s8130
      %8133 = dma.vmem_to_hbm [thread:$0]  %s8129, 32, %s8131, [#allocation4]
    $region101: #{mdpr_forward.5} parent=1 // pred_fallthru
      _
    // Predicated region
    $region102: #{mdpr_forward.5} parent=1 // pred_check
      _
    $region103: #{mdpr_forward.5} parent=1 // pred_check_branch
      %8135 = sbr.rel (0) target = $region105
    $region104: #{mdpr_forward.5} parent=1 // pred_region
      %8137 = dma.done [#allocation4], 32
    $region105: #{mdpr_forward.5} parent=1 // pred_fallthru
      _
    %8138 = vsyncpa [#allocation3], 1
    %8139 = vsyncpa [#allocation6], 1
    %8140 = vsyncpa [#allocation9], 1
    %8141 = vsyncpa [#allocation12], 1
    %8142 = vsyncpa [#allocation15], 1
    %8143 = vsyncpa [#allocation18], 1
    %8144 = vsyncpa [#allocation4], 1

</llo_original>
